<compile_context>
chip_gen: v6e
topology: v6e:2x2x1
jax: 0.10.0
libtpu: 0.0.40
codegen_flags: <defaults>
</compile_context>

<pallas_src>
import functools

import jax
import jax.numpy as jnp
from jax import lax
from jax.experimental import pallas as pl
from jax.experimental.pallas import tpu as pltpu

LEAKY_SLOPE = 0.2
BN_EPS = 1e-5
COMPUTE_DTYPE = jnp.bfloat16   # MXU operand dtype (accumulation stays float32)


def _full_spec(shape):
    nd = len(shape)
    return pl.BlockSpec(shape, lambda *_: (0,) * nd)


def _fused_block_kernel(x_ref, w1_ref, w2_ref, g_ref, b_ref, m_ref, o_ref, h_ref,
                        *, core, margin, wp, hpwp, inv_m):
    """Fused conv1+BN+LReLU -> conv2+BN+LReLU -> 2x2x2 max-pool.

    x_ref : (Cin_pad, L) f32 flattened zero-padded activation slab, L = core + 2*margin,
            with `margin` zero lanes on each side (margin >= largest tap offset).
    w1_ref: (Cout, 27*Cin_pad) bf16 GEMM weights (tap-major / cin-minor).
    w2_ref: (Cout, 27*Cout)    bf16 GEMM weights.
    g_ref, b_ref : (Cout, 1) f32 shared BN gamma / beta.
    m_ref : (1, core) f32 -- 1.0 at interior voxels, 0.0 on the zero-padding ring.
    o_ref : (Cout, core) f32 -- separably max-pooled values at every flattened position.
    h_ref : (Cout, L) f32 VMEM scratch: conv1's output as conv2's padded input slab.
    """
    mask = m_ref[...]

    def conv_bn_lrelu(src_ref, w_ref):
        # im2col: 27 lane-shifted views stacked along the contracted axis -> one MXU GEMM.
        taps = []
        for kd in (-1, 0, 1):
            for kh in (-1, 0, 1):
                for kw in (-1, 0, 1):
                    start = margin + kd * hpwp + kh * wp + kw
                    taps.append(src_ref[:, start:start + core])
        patches = jnp.concatenate(taps, axis=0).astype(COMPUTE_DTYPE)   # (27*Ci, core)
        y = jnp.dot(w_ref[...], patches,
                    preferred_element_type=jnp.float32)                  # (Cout, core) f32

        # One-pass masked batch statistics (padding ring excluded), biased variance.
        ym = y * mask
        mean = jnp.sum(ym, axis=1, keepdims=True) * inv_m
        ex2 = jnp.sum(ym * y, axis=1, keepdims=True) * inv_m
        var = ex2 - mean * mean
        # Fold BN into per-channel scale/shift: y*s + t  (one mul + one add per element).
        scale = g_ref[...] * lax.rsqrt(var + BN_EPS)
        shift = b_ref[...] - mean * scale
        y = y * scale + shift
        return jnp.where(y >= 0.0, y, LEAKY_SLOPE * y)                   # LeakyReLU(0.2)

    # --- conv1 + BN + LeakyReLU ---
    act1 = conv_bn_lrelu(x_ref, w1_ref)                                  # (Cout, core) f32

    # Stash as conv2's zero-padded input slab: halos zeroed, ring re-zeroed by the mask.
    cmid = h_ref.shape[0]
    halo = jnp.zeros((cmid, margin), h_ref.dtype)
    h_ref[:, 0:margin] = halo
    h_ref[:, margin + core:margin + core + margin] = halo
    h_ref[:, margin:margin + core] = (act1 * mask).astype(h_ref.dtype)

    # --- conv2 + BN + LeakyReLU ---
    act2 = conv_bn_lrelu(h_ref, w2_ref)                                  # (Cout, core) f32

    # --- fused separable 2x2x2 max-pool: pairwise max along W, then H, then D.
    # Column p of m3 = max of the 2x2x2 window whose first voxel is flattened position p.
    # The wrapper keeps only window-start positions (all 8 constituents are interior
    # voxels, so padding-ring junk never reaches the extracted values).
    m1 = jnp.maximum(act2[:, 0:core - 1], act2[:, 1:core])               # pair along W
    wlen2 = (core - 1) - wp
    m2 = jnp.maximum(m1[:, 0:wlen2], m1[:, wp:wp + wlen2])               # pair along H
    wlen3 = wlen2 - hpwp
    m3 = jnp.maximum(m2[:, 0:wlen3], m2[:, hpwp:hpwp + wlen3])           # pair along D
    cout = act2.shape[0]
    o_ref[:, 0:wlen3] = m3
    o_ref[:, wlen3:core] = jnp.zeros((cout, core - wlen3), o_ref.dtype)  # never extracted


def contracting_block_3d(x_ncdhw, params):
    """Forward pass of ContractingBlock3D(input_channels=C, use_bn=True, use_dropout=False).

    x_ncdhw: (N, C, D, H, W) float32, PyTorch NCDHW layout, D/H/W even.
    params:
      w1: (3,3,3, C,  2C) conv1 weight, DHWIO (= torch weight.permute(2,3,4,1,0))
      b1: (2C,)           conv1 bias  (unused: cancels exactly under training-mode BN)
      w2: (3,3,3, 2C, 2C) conv2 weight, DHWIO
      b2: (2C,)           conv2 bias  (unused: cancels exactly under training-mode BN)
      gamma, beta: (2C,)  shared BatchNorm3d affine parameters
    Returns (N, 2C, D//2, H//2, W//2) float32.
    """
    N, cin, D, H, W = x_ncdhw.shape
    cout = 2 * cin
    assert D % 2 == 0 and H % 2 == 0 and W % 2 == 0, "even spatial dims required"
    assert cout % 8 == 0, "input_channels must be a multiple of 4 (8-row-aligned channel slabs)"

    Dp, Hp, Wp = D + 2, H + 2, W + 2
    hpwp = Hp * Wp
    core = N * Dp * hpwp                              # flattened padded volume
    margin = pl.cdiv(hpwp + Wp + 1, 128) * 128        # lane-aligned halo >= largest tap offset
    L = core + 2 * margin
    inv_m = 1.0 / float(N * D * H * W)                # BN count: interior voxels per channel
    cin_pad = ((cin + 7) // 8) * 8                    # 8-row-aligned channel groups

    # --- one-time layout plumbing (XLA): NCDHW -> channel-major flattened padded slab ---
    xc = jnp.transpose(x_ncdhw, (1, 0, 2, 3, 4)).astype(jnp.float32)      # (Cin, N, D, H, W)
    xc = jnp.pad(xc, ((0, cin_pad - cin), (0, 0), (1, 1), (1, 1), (1, 1)))
    x_flat = jnp.pad(xc.reshape(cin_pad, core), ((0, 0), (margin, margin)))

    # Interior-voxel mask: keeps the padding ring out of the BN statistics and re-zeroes it
    # in conv1's output slab (which is conv2's zero-padded input).
    mask = jnp.pad(jnp.ones((N, D, H, W), jnp.float32),
                   ((0, 0), (1, 1), (1, 1), (1, 1))).reshape(1, core)

    def gemm_weights(w, ci_pad):
        # DHWIO (3,3,3,Ci,Co) -> (Co, 27*ci_pad) bf16, tap-major / cin-minor, zero-pad channels.
        ci, co = w.shape[3], w.shape[4]
        w27 = jnp.pad(w.reshape(27, ci, co), ((0, 0), (0, ci_pad - ci), (0, 0)))
        return (jnp.transpose(w27, (2, 0, 1))
                .reshape(co, 27 * ci_pad).astype(COMPUTE_DTYPE))

    gamma = params['gamma'].reshape(cout, 1).astype(jnp.float32)
    beta = params['beta'].reshape(cout, 1).astype(jnp.float32)

    kernel = functools.partial(_fused_block_kernel, core=core, margin=margin,
                               wp=Wp, hpwp=hpwp, inv_m=inv_m)

    pooled = pl.pallas_call(
        kernel,
        grid=(1,),
        in_specs=[_full_spec((cin_pad, L)),
                  _full_spec((cout, 27 * cin_pad)),
                  _full_spec((cout, 27 * cout)),
                  _full_spec((cout, 1)), _full_spec((cout, 1)),
                  _full_spec((1, core))],
        out_specs=_full_spec((cout, core)),
        out_shape=jax.ShapeDtypeStruct((cout, core), jnp.float32),
        scratch_shapes=[pltpu.VMEM((cout, L), jnp.float32)],
        compiler_params=pltpu.CompilerParams(
            dimension_semantics=("arbitrary",),
            vmem_limit_bytes=32 * 1024 * 1024),
    )(x_flat,
      gemm_weights(params['w1'], cin_pad),
      gemm_weights(params['w2'], cout),
      gamma, beta, mask)

    # --- layout plumbing: keep the pooling-window starts, back to NCDHW ---
    pooled = pooled.reshape(cout, N, Dp, Hp, Wp)[:, :, 1:1 + D:2, 1:1 + H:2, 1:1 + W:2]
    return jnp.transpose(pooled, (1, 0, 2, 3, 4))


def _ref_forward(x_ncdhw, p):
    """Pure-JAX reference with the same precision choices (bf16 MXU operands, f32 math)."""
    x = jnp.transpose(x_ncdhw, (0, 2, 3, 4, 1))                       # NCDHW -> NDHWC

    def conv(x, w, b):
        y = lax.conv_general_dilated(
            x.astype(COMPUTE_DTYPE), w.astype(COMPUTE_DTYPE),
            window_strides=(1, 1, 1), padding=((1, 1),) * 3,
            dimension_numbers=('NDHWC', 'DHWIO', 'NDHWC'),
            preferred_element_type=jnp.float32)
        return y + b                                                  # bias kept (cancels in BN)

    def bn(y, g, b):
        m = jnp.mean(y, axis=(0, 1, 2, 3), keepdims=True)
        v = jnp.mean((y - m) ** 2, axis=(0, 1, 2, 3), keepdims=True)
        return (y - m) * lax.rsqrt(v + BN_EPS) * g + b

    act = lambda z: jnp.where(z >= 0, z, LEAKY_SLOPE * z)
    h = act(bn(conv(x, p['w1'], p['b1']), p['gamma'], p['beta']))
    h = act(bn(conv(h, p['w2'], p['b2']), p['gamma'], p['beta']))
    n, d, hh, w, c = h.shape
    h = h.reshape(n, d // 2, 2, hh // 2, 2, w // 2, 2, c).max(axis=(2, 4, 6))
    return jnp.transpose(h, (0, 4, 1, 2, 3))


if __name__ == "__main__":
    key = jax.random.PRNGKey(0)
    kx, k1, k2, k3, k4, k5, k6 = jax.random.split(key, 7)

    N, Cin, D, H, W = 2, 4, 8, 8, 8
    Cout = 2 * Cin

    x = jax.random.normal(kx, (N, Cin, D, H, W), jnp.float32)
    params = dict(
        w1=0.1 * jax.random.normal(k1, (3, 3, 3, Cin, Cout), jnp.float32),
        b1=0.1 * jax.random.normal(k2, (Cout,), jnp.float32),
        w2=0.1 * jax.random.normal(k3, (3, 3, 3, Cout, Cout), jnp.float32),
        b2=0.1 * jax.random.normal(k4, (Cout,), jnp.float32),
        gamma=1.0 + 0.1 * jax.random.normal(k5, (Cout,), jnp.float32),
        beta=0.1 * jax.random.normal(k6, (Cout,), jnp.float32),
    )

    out = jax.block_until_ready(jax.jit(contracting_block_3d)(x, params))
    assert out.shape == (N, Cout, D // 2, H // 2, W // 2), out.shape

    ref = jax.block_until_ready(jax.jit(_ref_forward)(x, params))
    max_err = float(jnp.max(jnp.abs(out - ref)))
    assert jnp.allclose(out, ref, rtol=2e-3, atol=2e-3), f"max abs err={max_err}"

    print("KERNEL_OK")
</pallas_src>

<mosaic_0001>
module attributes {stable_mosaic.version = 11 : i64} {
  func.func @_fused_block_kernel(%arg0: i32, %arg1: memref<8x2256xf32, #tpu.memory_space<vmem>>, %arg2: memref<8x216xbf16, #tpu.memory_space<vmem>>, %arg3: memref<8x216xbf16, #tpu.memory_space<vmem>>, %arg4: memref<8x1xf32, #tpu.memory_space<vmem>>, %arg5: memref<8x1xf32, #tpu.memory_space<vmem>>, %arg6: memref<1x2000xf32, #tpu.memory_space<vmem>>, %arg7: memref<8x2000xf32, #tpu.memory_space<vmem>>, %arg8: memref<8x2256xf32, #tpu.memory_space<vmem>>) attributes {dimension_semantics = [#tpu.dimension_semantics<arbitrary>], iteration_bounds = array<i64: 1>, scalar_prefetch = 0 : i64, scratch_operands = 1 : i64, tpu.core_type = #tpu.core_type<tc>, window_params = [{pipeline_mode = #tpu.pipeline_mode<synchronous>, transform_indices = @transform_0, window_bounds = array<i64: 8, 2256>}, {pipeline_mode = #tpu.pipeline_mode<synchronous>, transform_indices = @transform_1, window_bounds = array<i64: 8, 216>}, {pipeline_mode = #tpu.pipeline_mode<synchronous>, transform_indices = @transform_2, window_bounds = array<i64: 8, 216>}, {pipeline_mode = #tpu.pipeline_mode<synchronous>, transform_indices = @transform_3, window_bounds = array<i64: 8, 1>}, {pipeline_mode = #tpu.pipeline_mode<synchronous>, transform_indices = @transform_4, window_bounds = array<i64: 8, 1>}, {pipeline_mode = #tpu.pipeline_mode<synchronous>, transform_indices = @transform_5, window_bounds = array<i64: 1, 2000>}, {pipeline_mode = #tpu.pipeline_mode<synchronous>, transform_indices = @transform_6, window_bounds = array<i64: 8, 2000>}]} {
    %c0 = arith.constant 0 : index
    %c0_0 = arith.constant 0 : index
    %0 = vector.load %arg6[%c0, %c0_0] : memref<1x2000xf32, #tpu.memory_space<vmem>>, vector<1x2000xf32>
    %c0_1 = arith.constant 0 : index
    %c17 = arith.constant 17 : index
    %1 = vector.load %arg1[%c0_1, %c17] : memref<8x2256xf32, #tpu.memory_space<vmem>>, vector<8x2000xf32>
    %c0_2 = arith.constant 0 : index
    %c18 = arith.constant 18 : index
    %2 = vector.load %arg1[%c0_2, %c18] : memref<8x2256xf32, #tpu.memory_space<vmem>>, vector<8x2000xf32>
    %c0_3 = arith.constant 0 : index
    %c19 = arith.constant 19 : index
    %3 = vector.load %arg1[%c0_3, %c19] : memref<8x2256xf32, #tpu.memory_space<vmem>>, vector<8x2000xf32>
    %c0_4 = arith.constant 0 : index
    %c27 = arith.constant 27 : index
    %4 = vector.load %arg1[%c0_4, %c27] : memref<8x2256xf32, #tpu.memory_space<vmem>>, vector<8x2000xf32>
    %c0_5 = arith.constant 0 : index
    %c28 = arith.constant 28 : index
    %5 = vector.load %arg1[%c0_5, %c28] : memref<8x2256xf32, #tpu.memory_space<vmem>>, vector<8x2000xf32>
    %c0_6 = arith.constant 0 : index
    %c29 = arith.constant 29 : index
    %6 = vector.load %arg1[%c0_6, %c29] : memref<8x2256xf32, #tpu.memory_space<vmem>>, vector<8x2000xf32>
    %c0_7 = arith.constant 0 : index
    %c37 = arith.constant 37 : index
    %7 = vector.load %arg1[%c0_7, %c37] : memref<8x2256xf32, #tpu.memory_space<vmem>>, vector<8x2000xf32>
    %c0_8 = arith.constant 0 : index
    %c38 = arith.constant 38 : index
    %8 = vector.load %arg1[%c0_8, %c38] : memref<8x2256xf32, #tpu.memory_space<vmem>>, vector<8x2000xf32>
    %c0_9 = arith.constant 0 : index
    %c39 = arith.constant 39 : index
    %9 = vector.load %arg1[%c0_9, %c39] : memref<8x2256xf32, #tpu.memory_space<vmem>>, vector<8x2000xf32>
    %c0_10 = arith.constant 0 : index
    %c117 = arith.constant 117 : index
    %10 = vector.load %arg1[%c0_10, %c117] : memref<8x2256xf32, #tpu.memory_space<vmem>>, vector<8x2000xf32>
    %c0_11 = arith.constant 0 : index
    %c118 = arith.constant 118 : index
    %11 = vector.load %arg1[%c0_11, %c118] : memref<8x2256xf32, #tpu.memory_space<vmem>>, vector<8x2000xf32>
    %c0_12 = arith.constant 0 : index
    %c119 = arith.constant 119 : index
    %12 = vector.load %arg1[%c0_12, %c119] : memref<8x2256xf32, #tpu.memory_space<vmem>>, vector<8x2000xf32>
    %c0_13 = arith.constant 0 : index
    %c127 = arith.constant 127 : index
    %13 = vector.load %arg1[%c0_13, %c127] : memref<8x2256xf32, #tpu.memory_space<vmem>>, vector<8x2000xf32>
    %c0_14 = arith.constant 0 : index
    %c128 = arith.constant 128 : index
    %14 = vector.load %arg1[%c0_14, %c128] : memref<8x2256xf32, #tpu.memory_space<vmem>>, vector<8x2000xf32>
    %c0_15 = arith.constant 0 : index
    %c129 = arith.constant 129 : index
    %15 = vector.load %arg1[%c0_15, %c129] : memref<8x2256xf32, #tpu.memory_space<vmem>>, vector<8x2000xf32>
    %c0_16 = arith.constant 0 : index
    %c137 = arith.constant 137 : index
    %16 = vector.load %arg1[%c0_16, %c137] : memref<8x2256xf32, #tpu.memory_space<vmem>>, vector<8x2000xf32>
    %c0_17 = arith.constant 0 : index
    %c138 = arith.constant 138 : index
    %17 = vector.load %arg1[%c0_17, %c138] : memref<8x2256xf32, #tpu.memory_space<vmem>>, vector<8x2000xf32>
    %c0_18 = arith.constant 0 : index
    %c139 = arith.constant 139 : index
    %18 = vector.load %arg1[%c0_18, %c139] : memref<8x2256xf32, #tpu.memory_space<vmem>>, vector<8x2000xf32>
    %c0_19 = arith.constant 0 : index
    %c217 = arith.constant 217 : index
    %19 = vector.load %arg1[%c0_19, %c217] : memref<8x2256xf32, #tpu.memory_space<vmem>>, vector<8x2000xf32>
    %c0_20 = arith.constant 0 : index
    %c218 = arith.constant 218 : index
    %20 = vector.load %arg1[%c0_20, %c218] : memref<8x2256xf32, #tpu.memory_space<vmem>>, vector<8x2000xf32>
    %c0_21 = arith.constant 0 : index
    %c219 = arith.constant 219 : index
    %21 = vector.load %arg1[%c0_21, %c219] : memref<8x2256xf32, #tpu.memory_space<vmem>>, vector<8x2000xf32>
    %c0_22 = arith.constant 0 : index
    %c227 = arith.constant 227 : index
    %22 = vector.load %arg1[%c0_22, %c227] : memref<8x2256xf32, #tpu.memory_space<vmem>>, vector<8x2000xf32>
    %c0_23 = arith.constant 0 : index
    %c228 = arith.constant 228 : index
    %23 = vector.load %arg1[%c0_23, %c228] : memref<8x2256xf32, #tpu.memory_space<vmem>>, vector<8x2000xf32>
    %c0_24 = arith.constant 0 : index
    %c229 = arith.constant 229 : index
    %24 = vector.load %arg1[%c0_24, %c229] : memref<8x2256xf32, #tpu.memory_space<vmem>>, vector<8x2000xf32>
    %c0_25 = arith.constant 0 : index
    %c237 = arith.constant 237 : index
    %25 = vector.load %arg1[%c0_25, %c237] : memref<8x2256xf32, #tpu.memory_space<vmem>>, vector<8x2000xf32>
    %c0_26 = arith.constant 0 : index
    %c238 = arith.constant 238 : index
    %26 = vector.load %arg1[%c0_26, %c238] : memref<8x2256xf32, #tpu.memory_space<vmem>>, vector<8x2000xf32>
    %c0_27 = arith.constant 0 : index
    %c239 = arith.constant 239 : index
    %27 = vector.load %arg1[%c0_27, %c239] : memref<8x2256xf32, #tpu.memory_space<vmem>>, vector<8x2000xf32>
    %28 = tpu.concatenate %1, %2, %3, %4, %5, %6, %7, %8, %9, %10, %11, %12, %13, %14, %15, %16 in 0 : vector<8x2000xf32>, vector<8x2000xf32>, vector<8x2000xf32>, vector<8x2000xf32>, vector<8x2000xf32>, vector<8x2000xf32>, vector<8x2000xf32>, vector<8x2000xf32>, vector<8x2000xf32>, vector<8x2000xf32>, vector<8x2000xf32>, vector<8x2000xf32>, vector<8x2000xf32>, vector<8x2000xf32>, vector<8x2000xf32>, vector<8x2000xf32> -> vector<128x2000xf32>
    %29 = tpu.concatenate %17, %18, %19, %20, %21, %22, %23, %24, %25, %26, %27 in 0 : vector<8x2000xf32>, vector<8x2000xf32>, vector<8x2000xf32>, vector<8x2000xf32>, vector<8x2000xf32>, vector<8x2000xf32>, vector<8x2000xf32>, vector<8x2000xf32>, vector<8x2000xf32>, vector<8x2000xf32>, vector<8x2000xf32> -> vector<88x2000xf32>
    %30 = tpu.concatenate %28, %29 in 0 : vector<128x2000xf32>, vector<88x2000xf32> -> vector<216x2000xf32>
    %31 = arith.truncf %30 : vector<216x2000xf32> to vector<216x2000xbf16>
    %c0_28 = arith.constant 0 : index
    %c0_29 = arith.constant 0 : index
    %32 = vector.load %arg2[%c0_28, %c0_29] : memref<8x216xbf16, #tpu.memory_space<vmem>>, vector<8x216xbf16>
    %cst = arith.constant dense<0.000000e+00> : vector<8x2000xf32>
    %33 = tpu.matmul %32, %31, %cst {dimension_numbers = #tpu.dot_dimension_numbers<[1], [0], [0], [1], [0, 0, 1, 1], [], []>} : vector<8x216xbf16>, vector<216x2000xbf16>, vector<8x2000xf32> -> vector<8x2000xf32>
    %34 = vector.broadcast %0 : vector<1x2000xf32> to vector<8x2000xf32>
    %35 = arith.mulf %33, %34 : vector<8x2000xf32>
    %cst_30 = arith.constant dense<0.000000e+00> : vector<8xf32>
    %36 = vector.multi_reduction <add>, %35, %cst_30 [1] : vector<8x2000xf32> to vector<8xf32>
    %37 = vector.shape_cast %36 : vector<8xf32> to vector<8x1xf32>
    %cst_31 = arith.constant 9.765625E-4 : f32
    %38 = vector.broadcast %cst_31 : f32 to vector<8x1xf32>
    %39 = arith.mulf %37, %38 : vector<8x1xf32>
    %40 = arith.mulf %35, %33 : vector<8x2000xf32>
    %cst_32 = arith.constant dense<0.000000e+00> : vector<8xf32>
    %41 = vector.multi_reduction <add>, %40, %cst_32 [1] : vector<8x2000xf32> to vector<8xf32>
    %42 = vector.shape_cast %41 : vector<8xf32> to vector<8x1xf32>
    %cst_33 = arith.constant 9.765625E-4 : f32
    %43 = vector.broadcast %cst_33 : f32 to vector<8x1xf32>
    %44 = arith.mulf %42, %43 : vector<8x1xf32>
    %45 = arith.mulf %39, %39 : vector<8x1xf32>
    %46 = arith.subf %44, %45 : vector<8x1xf32>
    %c0_34 = arith.constant 0 : index
    %c0_35 = arith.constant 0 : index
    %47 = vector.load %arg4[%c0_34, %c0_35] : memref<8x1xf32, #tpu.memory_space<vmem>>, vector<8x1xf32>
    %cst_36 = arith.constant 9.99999974E-6 : f32
    %48 = vector.broadcast %cst_36 : f32 to vector<8x1xf32>
    %49 = arith.addf %46, %48 : vector<8x1xf32>
    %50 = math.rsqrt %49 : vector<8x1xf32>
    %51 = arith.mulf %47, %50 : vector<8x1xf32>
    %c0_37 = arith.constant 0 : index
    %c0_38 = arith.constant 0 : index
    %52 = vector.load %arg5[%c0_37, %c0_38] : memref<8x1xf32, #tpu.memory_space<vmem>>, vector<8x1xf32>
    %53 = arith.mulf %39, %51 : vector<8x1xf32>
    %54 = arith.subf %52, %53 : vector<8x1xf32>
    %55 = vector.broadcast %51 : vector<8x1xf32> to vector<8x2000xf32>
    %56 = arith.mulf %33, %55 : vector<8x2000xf32>
    %57 = vector.broadcast %54 : vector<8x1xf32> to vector<8x2000xf32>
    %58 = arith.addf %56, %57 : vector<8x2000xf32>
    %cst_39 = arith.constant 0.000000e+00 : f32
    %59 = vector.broadcast %cst_39 : f32 to vector<8x2000xf32>
    %60 = arith.cmpf oge, %58, %59 : vector<8x2000xf32>
    %cst_40 = arith.constant 2.000000e-01 : f32
    %61 = vector.broadcast %cst_40 : f32 to vector<8x2000xf32>
    %62 = arith.mulf %61, %58 : vector<8x2000xf32>
    %63 = arith.select %60, %58, %62 : vector<8x2000xi1>, vector<8x2000xf32>
    %cst_41 = arith.constant 0.000000e+00 : f32
    %64 = vector.broadcast %cst_41 : f32 to vector<8x128xf32>
    %c0_42 = arith.constant 0 : index
    %c0_43 = arith.constant 0 : index
    %65 = vector.load %arg8[%c0_42, %c0_43] : memref<8x2256xf32, #tpu.memory_space<vmem>>, vector<8x128xf32>
    tpu.vector_store %arg8[%c0_42, %c0_43], %64 {strides = array<i32>} : memref<8x2256xf32, #tpu.memory_space<vmem>>, vector<8x128xf32>,
    %c0_44 = arith.constant 0 : index
    %c2128 = arith.constant 2128 : index
    %66 = vector.load %arg8[%c0_44, %c2128] : memref<8x2256xf32, #tpu.memory_space<vmem>>, vector<8x128xf32>
    tpu.vector_store %arg8[%c0_44, %c2128], %64 {strides = array<i32>} : memref<8x2256xf32, #tpu.memory_space<vmem>>, vector<8x128xf32>,
    %67 = vector.broadcast %0 : vector<1x2000xf32> to vector<8x2000xf32>
    %68 = arith.mulf %63, %67 : vector<8x2000xf32>
    %c0_45 = arith.constant 0 : index
    %c128_46 = arith.constant 128 : index
    %69 = vector.load %arg8[%c0_45, %c128_46] : memref<8x2256xf32, #tpu.memory_space<vmem>>, vector<8x2000xf32>
    tpu.vector_store %arg8[%c0_45, %c128_46], %68 {strides = array<i32>} : memref<8x2256xf32, #tpu.memory_space<vmem>>, vector<8x2000xf32>,
    %c0_47 = arith.constant 0 : index
    %c17_48 = arith.constant 17 : index
    %70 = vector.load %arg8[%c0_47, %c17_48] : memref<8x2256xf32, #tpu.memory_space<vmem>>, vector<8x2000xf32>
    %c0_49 = arith.constant 0 : index
    %c18_50 = arith.constant 18 : index
    %71 = vector.load %arg8[%c0_49, %c18_50] : memref<8x2256xf32, #tpu.memory_space<vmem>>, vector<8x2000xf32>
    %c0_51 = arith.constant 0 : index
    %c19_52 = arith.constant 19 : index
    %72 = vector.load %arg8[%c0_51, %c19_52] : memref<8x2256xf32, #tpu.memory_space<vmem>>, vector<8x2000xf32>
    %c0_53 = arith.constant 0 : index
    %c27_54 = arith.constant 27 : index
    %73 = vector.load %arg8[%c0_53, %c27_54] : memref<8x2256xf32, #tpu.memory_space<vmem>>, vector<8x2000xf32>
    %c0_55 = arith.constant 0 : index
    %c28_56 = arith.constant 28 : index
    %74 = vector.load %arg8[%c0_55, %c28_56] : memref<8x2256xf32, #tpu.memory_space<vmem>>, vector<8x2000xf32>
    %c0_57 = arith.constant 0 : index
    %c29_58 = arith.constant 29 : index
    %75 = vector.load %arg8[%c0_57, %c29_58] : memref<8x2256xf32, #tpu.memory_space<vmem>>, vector<8x2000xf32>
    %c0_59 = arith.constant 0 : index
    %c37_60 = arith.constant 37 : index
    %76 = vector.load %arg8[%c0_59, %c37_60] : memref<8x2256xf32, #tpu.memory_space<vmem>>, vector<8x2000xf32>
    %c0_61 = arith.constant 0 : index
    %c38_62 = arith.constant 38 : index
    %77 = vector.load %arg8[%c0_61, %c38_62] : memref<8x2256xf32, #tpu.memory_space<vmem>>, vector<8x2000xf32>
    %c0_63 = arith.constant 0 : index
    %c39_64 = arith.constant 39 : index
    %78 = vector.load %arg8[%c0_63, %c39_64] : memref<8x2256xf32, #tpu.memory_space<vmem>>, vector<8x2000xf32>
    %c0_65 = arith.constant 0 : index
    %c117_66 = arith.constant 117 : index
    %79 = vector.load %arg8[%c0_65, %c117_66] : memref<8x2256xf32, #tpu.memory_space<vmem>>, vector<8x2000xf32>
    %c0_67 = arith.constant 0 : index
    %c118_68 = arith.constant 118 : index
    %80 = vector.load %arg8[%c0_67, %c118_68] : memref<8x2256xf32, #tpu.memory_space<vmem>>, vector<8x2000xf32>
    %c0_69 = arith.constant 0 : index
    %c119_70 = arith.constant 119 : index
    %81 = vector.load %arg8[%c0_69, %c119_70] : memref<8x2256xf32, #tpu.memory_space<vmem>>, vector<8x2000xf32>
    %c0_71 = arith.constant 0 : index
    %c127_72 = arith.constant 127 : index
    %82 = vector.load %arg8[%c0_71, %c127_72] : memref<8x2256xf32, #tpu.memory_space<vmem>>, vector<8x2000xf32>
    %c0_73 = arith.constant 0 : index
    %c128_74 = arith.constant 128 : index
    %83 = vector.load %arg8[%c0_73, %c128_74] : memref<8x2256xf32, #tpu.memory_space<vmem>>, vector<8x2000xf32>
    %c0_75 = arith.constant 0 : index
    %c129_76 = arith.constant 129 : index
    %84 = vector.load %arg8[%c0_75, %c129_76] : memref<8x2256xf32, #tpu.memory_space<vmem>>, vector<8x2000xf32>
    %c0_77 = arith.constant 0 : index
    %c137_78 = arith.constant 137 : index
    %85 = vector.load %arg8[%c0_77, %c137_78] : memref<8x2256xf32, #tpu.memory_space<vmem>>, vector<8x2000xf32>
    %c0_79 = arith.constant 0 : index
    %c138_80 = arith.constant 138 : index
    %86 = vector.load %arg8[%c0_79, %c138_80] : memref<8x2256xf32, #tpu.memory_space<vmem>>, vector<8x2000xf32>
    %c0_81 = arith.constant 0 : index
    %c139_82 = arith.constant 139 : index
    %87 = vector.load %arg8[%c0_81, %c139_82] : memref<8x2256xf32, #tpu.memory_space<vmem>>, vector<8x2000xf32>
    %c0_83 = arith.constant 0 : index
    %c217_84 = arith.constant 217 : index
    %88 = vector.load %arg8[%c0_83, %c217_84] : memref<8x2256xf32, #tpu.memory_space<vmem>>, vector<8x2000xf32>
    %c0_85 = arith.constant 0 : index
    %c218_86 = arith.constant 218 : index
    %89 = vector.load %arg8[%c0_85, %c218_86] : memref<8x2256xf32, #tpu.memory_space<vmem>>, vector<8x2000xf32>
    %c0_87 = arith.constant 0 : index
    %c219_88 = arith.constant 219 : index
    %90 = vector.load %arg8[%c0_87, %c219_88] : memref<8x2256xf32, #tpu.memory_space<vmem>>, vector<8x2000xf32>
    %c0_89 = arith.constant 0 : index
    %c227_90 = arith.constant 227 : index
    %91 = vector.load %arg8[%c0_89, %c227_90] : memref<8x2256xf32, #tpu.memory_space<vmem>>, vector<8x2000xf32>
    %c0_91 = arith.constant 0 : index
    %c228_92 = arith.constant 228 : index
    %92 = vector.load %arg8[%c0_91, %c228_92] : memref<8x2256xf32, #tpu.memory_space<vmem>>, vector<8x2000xf32>
    %c0_93 = arith.constant 0 : index
    %c229_94 = arith.constant 229 : index
    %93 = vector.load %arg8[%c0_93, %c229_94] : memref<8x2256xf32, #tpu.memory_space<vmem>>, vector<8x2000xf32>
    %c0_95 = arith.constant 0 : index
    %c237_96 = arith.constant 237 : index
    %94 = vector.load %arg8[%c0_95, %c237_96] : memref<8x2256xf32, #tpu.memory_space<vmem>>, vector<8x2000xf32>
    %c0_97 = arith.constant 0 : index
    %c238_98 = arith.constant 238 : index
    %95 = vector.load %arg8[%c0_97, %c238_98] : memref<8x2256xf32, #tpu.memory_space<vmem>>, vector<8x2000xf32>
    %c0_99 = arith.constant 0 : index
    %c239_100 = arith.constant 239 : index
    %96 = vector.load %arg8[%c0_99, %c239_100] : memref<8x2256xf32, #tpu.memory_space<vmem>>, vector<8x2000xf32>
    %97 = tpu.concatenate %70, %71, %72, %73, %74, %75, %76, %77, %78, %79, %80, %81, %82, %83, %84, %85 in 0 : vector<8x2000xf32>, vector<8x2000xf32>, vector<8x2000xf32>, vector<8x2000xf32>, vector<8x2000xf32>, vector<8x2000xf32>, vector<8x2000xf32>, vector<8x2000xf32>, vector<8x2000xf32>, vector<8x2000xf32>, vector<8x2000xf32>, vector<8x2000xf32>, vector<8x2000xf32>, vector<8x2000xf32>, vector<8x2000xf32>, vector<8x2000xf32> -> vector<128x2000xf32>
    %98 = tpu.concatenate %86, %87, %88, %89, %90, %91, %92, %93, %94, %95, %96 in 0 : vector<8x2000xf32>, vector<8x2000xf32>, vector<8x2000xf32>, vector<8x2000xf32>, vector<8x2000xf32>, vector<8x2000xf32>, vector<8x2000xf32>, vector<8x2000xf32>, vector<8x2000xf32>, vector<8x2000xf32>, vector<8x2000xf32> -> vector<88x2000xf32>
    %99 = tpu.concatenate %97, %98 in 0 : vector<128x2000xf32>, vector<88x2000xf32> -> vector<216x2000xf32>
    %100 = arith.truncf %99 : vector<216x2000xf32> to vector<216x2000xbf16>
    %c0_101 = arith.constant 0 : index
    %c0_102 = arith.constant 0 : index
    %101 = vector.load %arg3[%c0_101, %c0_102] : memref<8x216xbf16, #tpu.memory_space<vmem>>, vector<8x216xbf16>
    %cst_103 = arith.constant dense<0.000000e+00> : vector<8x2000xf32>
    %102 = tpu.matmul %101, %100, %cst_103 {dimension_numbers = #tpu.dot_dimension_numbers<[1], [0], [0], [1], [0, 0, 1, 1], [], []>} : vector<8x216xbf16>, vector<216x2000xbf16>, vector<8x2000xf32> -> vector<8x2000xf32>
    %103 = vector.broadcast %0 : vector<1x2000xf32> to vector<8x2000xf32>
    %104 = arith.mulf %102, %103 : vector<8x2000xf32>
    %cst_104 = arith.constant dense<0.000000e+00> : vector<8xf32>
    %105 = vector.multi_reduction <add>, %104, %cst_104 [1] : vector<8x2000xf32> to vector<8xf32>
    %106 = vector.shape_cast %105 : vector<8xf32> to vector<8x1xf32>
    %cst_105 = arith.constant 9.765625E-4 : f32
    %107 = vector.broadcast %cst_105 : f32 to vector<8x1xf32>
    %108 = arith.mulf %106, %107 : vector<8x1xf32>
    %109 = arith.mulf %104, %102 : vector<8x2000xf32>
    %cst_106 = arith.constant dense<0.000000e+00> : vector<8xf32>
    %110 = vector.multi_reduction <add>, %109, %cst_106 [1] : vector<8x2000xf32> to vector<8xf32>
    %111 = vector.shape_cast %110 : vector<8xf32> to vector<8x1xf32>
    %cst_107 = arith.constant 9.765625E-4 : f32
    %112 = vector.broadcast %cst_107 : f32 to vector<8x1xf32>
    %113 = arith.mulf %111, %112 : vector<8x1xf32>
    %114 = arith.mulf %108, %108 : vector<8x1xf32>
    %115 = arith.subf %113, %114 : vector<8x1xf32>
    %c0_108 = arith.constant 0 : index
    %c0_109 = arith.constant 0 : index
    %116 = vector.load %arg4[%c0_108, %c0_109] : memref<8x1xf32, #tpu.memory_space<vmem>>, vector<8x1xf32>
    %cst_110 = arith.constant 9.99999974E-6 : f32
    %117 = vector.broadcast %cst_110 : f32 to vector<8x1xf32>
    %118 = arith.addf %115, %117 : vector<8x1xf32>
    %119 = math.rsqrt %118 : vector<8x1xf32>
    %120 = arith.mulf %116, %119 : vector<8x1xf32>
    %c0_111 = arith.constant 0 : index
    %c0_112 = arith.constant 0 : index
    %121 = vector.load %arg5[%c0_111, %c0_112] : memref<8x1xf32, #tpu.memory_space<vmem>>, vector<8x1xf32>
    %122 = arith.mulf %108, %120 : vector<8x1xf32>
    %123 = arith.subf %121, %122 : vector<8x1xf32>
    %124 = vector.broadcast %120 : vector<8x1xf32> to vector<8x2000xf32>
    %125 = arith.mulf %102, %124 : vector<8x2000xf32>
    %126 = vector.broadcast %123 : vector<8x1xf32> to vector<8x2000xf32>
    %127 = arith.addf %125, %126 : vector<8x2000xf32>
    %cst_113 = arith.constant 0.000000e+00 : f32
    %128 = vector.broadcast %cst_113 : f32 to vector<8x2000xf32>
    %129 = arith.cmpf oge, %127, %128 : vector<8x2000xf32>
    %cst_114 = arith.constant 2.000000e-01 : f32
    %130 = vector.broadcast %cst_114 : f32 to vector<8x2000xf32>
    %131 = arith.mulf %130, %127 : vector<8x2000xf32>
    %132 = arith.select %129, %127, %131 : vector<8x2000xi1>, vector<8x2000xf32>
    %133 = vector.extract_strided_slice %132 {offsets = [0, 0], sizes = [8, 1999], strides = [1, 1]} : vector<8x2000xf32> to vector<8x1999xf32>
    %134 = vector.extract_strided_slice %132 {offsets = [0, 1], sizes = [8, 1999], strides = [1, 1]} : vector<8x2000xf32> to vector<8x1999xf32>
    %135 = arith.maximumf %133, %134 : vector<8x1999xf32>
    %136 = vector.extract_strided_slice %135 {offsets = [0, 0], sizes = [8, 1989], strides = [1, 1]} : vector<8x1999xf32> to vector<8x1989xf32>
    %137 = vector.extract_strided_slice %135 {offsets = [0, 10], sizes = [8, 1989], strides = [1, 1]} : vector<8x1999xf32> to vector<8x1989xf32>
    %138 = arith.maximumf %136, %137 : vector<8x1989xf32>
    %139 = vector.extract_strided_slice %138 {offsets = [0, 0], sizes = [8, 1889], strides = [1, 1]} : vector<8x1989xf32> to vector<8x1889xf32>
    %140 = vector.extract_strided_slice %138 {offsets = [0, 100], sizes = [8, 1889], strides = [1, 1]} : vector<8x1989xf32> to vector<8x1889xf32>
    %141 = arith.maximumf %139, %140 : vector<8x1889xf32>
    %c0_115 = arith.constant 0 : index
    %c0_116 = arith.constant 0 : index
    %142 = vector.load %arg7[%c0_115, %c0_116] : memref<8x2000xf32, #tpu.memory_space<vmem>>, vector<8x1889xf32>
    tpu.vector_store %arg7[%c0_115, %c0_116], %141 {strides = array<i32>} : memref<8x2000xf32, #tpu.memory_space<vmem>>, vector<8x1889xf32>,
    %cst_117 = arith.constant 0.000000e+00 : f32
    %143 = vector.broadcast %cst_117 : f32 to vector<8x111xf32>
    %c0_118 = arith.constant 0 : index
    %c1889 = arith.constant 1889 : index
    %144 = vector.load %arg7[%c0_118, %c1889] : memref<8x2000xf32, #tpu.memory_space<vmem>>, vector<8x111xf32>
    tpu.vector_store %arg7[%c0_118, %c1889], %143 {strides = array<i32>} : memref<8x2000xf32, #tpu.memory_space<vmem>>, vector<8x111xf32>,
    return
  }
  func.func @transform_0(%arg0: i32) -> (i32, i32) {
    %c0_i32 = arith.constant 0 : i32
    %c0_i32_0 = arith.constant 0 : i32
    %c0_i32_1 = arith.constant 0 : i32
    return %c0_i32, %c0_i32_0 : i32, i32
  }
  func.func @transform_1(%arg0: i32) -> (i32, i32) {
    %c0_i32 = arith.constant 0 : i32
    %c0_i32_0 = arith.constant 0 : i32
    %c0_i32_1 = arith.constant 0 : i32
    return %c0_i32, %c0_i32_0 : i32, i32
  }
  func.func @transform_2(%arg0: i32) -> (i32, i32) {
    %c0_i32 = arith.constant 0 : i32
    %c0_i32_0 = arith.constant 0 : i32
    %c0_i32_1 = arith.constant 0 : i32
    return %c0_i32, %c0_i32_0 : i32, i32
  }
  func.func @transform_3(%arg0: i32) -> (i32, i32) {
    %c0_i32 = arith.constant 0 : i32
    %c0_i32_0 = arith.constant 0 : i32
    %c0_i32_1 = arith.constant 0 : i32
    return %c0_i32, %c0_i32_0 : i32, i32
  }
  func.func @transform_4(%arg0: i32) -> (i32, i32) {
    %c0_i32 = arith.constant 0 : i32
    %c0_i32_0 = arith.constant 0 : i32
    %c0_i32_1 = arith.constant 0 : i32
    return %c0_i32, %c0_i32_0 : i32, i32
  }
  func.func @transform_5(%arg0: i32) -> (i32, i32) {
    %c0_i32 = arith.constant 0 : i32
    %c0_i32_0 = arith.constant 0 : i32
    %c0_i32_1 = arith.constant 0 : i32
    return %c0_i32, %c0_i32_0 : i32, i32
  }
  func.func @transform_6(%arg0: i32) -> (i32, i32) {
    %c0_i32 = arith.constant 0 : i32
    %c0_i32_0 = arith.constant 0 : i32
    %c0_i32_1 = arith.constant 0 : i32
    return %c0_i32, %c0_i32_0 : i32, i32
  }
}

</mosaic_0001>

<llo_original>
// kernel: contracting_block_3d.1
$region0: #{contracting_block_3d.1}
  #allocation0 [shape = 'u32[]', space=smem, size = 0x4, offset = 0x4, fixed_abs, tag = 'smem constant byte address 0x4 - core index']
  #allocation1 [shape = 'u32[144,128]{1,0:T(1,128)}', space=vmem, size = 0x12000, scoped, tag = 'internal scratch']
  #allocation2 [shape = 'f32[8,2256]{1,0:T(8,128)}', space=vmem, size = 0x12000, scoped, tag = 'scratch operand']
  %s0 = inlined_call_operand.vmem [shape: f32[8,2256], index: 0, kind: input, shape index: {}]
  %s1 = inlined_call_operand.vmem [shape: bf16[8,216], index: 1, kind: input, shape index: {}]
  %s2 = inlined_call_operand.vmem [shape: bf16[8,216], index: 2, kind: input, shape index: {}]
  %s3 = inlined_call_operand.vmem [shape: f32[8,1], index: 3, kind: input, shape index: {}]
  %s4 = inlined_call_operand.vmem [shape: f32[8,1], index: 4, kind: input, shape index: {}]
  %s5 = inlined_call_operand.vmem [shape: f32[1,2000], index: 5, kind: input, shape index: {}]
  %s6 = inlined_call_operand.vmem [shape: f32[8,2000], index: 6, kind: output, shape index: {}]
  %s7 = sld [smem:[#allocation0]]
  $region34: #{contracting_block_3d.1} parent=0
    _
  %s9 = ssub.s32 1, %s7
  %s10 = scalar_select 0, %s9, %s7
  // Predicated region
  $region2: #{contracting_block_3d.1} parent=0 // pred_check
    _
  $region3: #{contracting_block_3d.1} parent=0 // pred_check_branch
    %12 = sbr.rel (0) target = $region5
  $region4: #{contracting_block_3d.1} parent=0 // pred_region
    _
  $region5: #{contracting_block_3d.1} parent=0 // pred_fallthru
    _
  // Predicated region
  $region6: #{contracting_block_3d.1} parent=0 // pred_check
    _
  $region7: #{contracting_block_3d.1} parent=0 // pred_check_branch
    %14 = sbr.rel (0) target = $region9
  $region8: #{contracting_block_3d.1} parent=0 // pred_region
    _
  $region9: #{contracting_block_3d.1} parent=0 // pred_fallthru
    _
  // Predicated region
  $region10: #{contracting_block_3d.1} parent=0 // pred_check
    _
  $region11: #{contracting_block_3d.1} parent=0 // pred_check_branch
    %16 = sbr.rel (0) target = $region13
  $region12: #{contracting_block_3d.1} parent=0 // pred_region
    _
  $region13: #{contracting_block_3d.1} parent=0 // pred_fallthru
    _
  // Predicated region
  $region14: #{contracting_block_3d.1} parent=0 // pred_check
    _
  $region15: #{contracting_block_3d.1} parent=0 // pred_check_branch
    %18 = sbr.rel (0) target = $region17
  $region16: #{contracting_block_3d.1} parent=0 // pred_region
    _
  $region17: #{contracting_block_3d.1} parent=0 // pred_fallthru
    _
  // Predicated region
  $region18: #{contracting_block_3d.1} parent=0 // pred_check
    _
  $region19: #{contracting_block_3d.1} parent=0 // pred_check_branch
    %20 = sbr.rel (0) target = $region21
  $region20: #{contracting_block_3d.1} parent=0 // pred_region
    _
  $region21: #{contracting_block_3d.1} parent=0 // pred_fallthru
    _
  // Predicated region
  $region22: #{contracting_block_3d.1} parent=0 // pred_check
    _
  $region23: #{contracting_block_3d.1} parent=0 // pred_check_branch
    %22 = sbr.rel (0) target = $region25
  $region24: #{contracting_block_3d.1} parent=0 // pred_region
    _
  $region25: #{contracting_block_3d.1} parent=0 // pred_fallthru
    _
  %v24 = vld [vmem:[%s5] sm:$0xff]
  %v25 = vld [vmem:[%s5 + $0x8] sm:$0xff]
  %v26 = vld [vmem:[%s0] sm:$0xff]
  %v27 = vld [vmem:[%s0 + $0x8] sm:$0xff]
  %v28 = vld [vmem:[%s0 + $0x10] sm:$0xff]
  %v29 = vld [vmem:[%s0 + $0x18] sm:$0xff]
  %v30 = vld [vmem:[%s0 + $0x20] sm:$0xff]
  %v31 = vld [vmem:[%s0 + $0x28] sm:$0xff]
  %v32 = vld [vmem:[%s0 + $0x30] sm:$0xff]
  %v33 = vld [vmem:[%s0 + $0x38] sm:$0xff]
  %v34 = vld [vmem:[%s0 + $0x40] sm:$0xff]
  %v35 = vld [vmem:[%s0 + $0x48] sm:$0xff]
  %v36 = vld [vmem:[%s0 + $0x50] sm:$0xff]
  %v37 = vld [vmem:[%s0 + $0x58] sm:$0xff]
  %v38 = vld [vmem:[%s0 + $0x60] sm:$0xff]
  %v39 = vld [vmem:[%s0 + $0x68] sm:$0xff]
  %v40 = vld [vmem:[%s0 + $0x70] sm:$0xff]
  %v41 = vld [vmem:[%s0 + $0x78] sm:$0xff]
  %v42 = vld [vmem:[%s0 + $0x80] sm:$0xff]
  %v43 = vld [vmem:[%s0 + $0x88] sm:$0xff]
  %60 = vrot.lane.b32.xlu0 %v26, 127
  %v61 = vpop.permute.xlu0 %60
  %62 = vrot.lane.b32.xlu0 %v27, 127
  %v63 = vpop.permute.xlu0 %62
  %64 = vrot.lane.b32.xlu0 %v28, 127
  %v65 = vpop.permute.xlu0 %64
  %66 = vrot.lane.b32.xlu0 %v29, 127
  %v67 = vpop.permute.xlu0 %66
  %68 = vrot.lane.b32.xlu0 %v30, 127
  %v69 = vpop.permute.xlu0 %68
  %70 = vrot.lane.b32.xlu0 %v31, 127
  %v71 = vpop.permute.xlu0 %70
  %72 = vrot.lane.b32.xlu0 %v32, 127
  %v73 = vpop.permute.xlu0 %72
  %74 = vrot.lane.b32.xlu0 %v33, 127
  %v75 = vpop.permute.xlu0 %74
  %76 = vrot.lane.b32.xlu0 %v34, 127
  %v77 = vpop.permute.xlu0 %76
  %78 = vrot.lane.b32.xlu0 %v35, 127
  %v79 = vpop.permute.xlu0 %78
  %80 = vrot.lane.b32.xlu0 %v36, 127
  %v81 = vpop.permute.xlu0 %80
  %82 = vrot.lane.b32.xlu0 %v37, 127
  %v83 = vpop.permute.xlu0 %82
  %84 = vrot.lane.b32.xlu0 %v38, 127
  %v85 = vpop.permute.xlu0 %84
  %86 = vrot.lane.b32.xlu0 %v39, 127
  %v87 = vpop.permute.xlu0 %86
  %88 = vrot.lane.b32.xlu0 %v40, 127
  %v89 = vpop.permute.xlu0 %88
  %90 = vrot.lane.b32.xlu0 %v41, 127
  %v91 = vpop.permute.xlu0 %90
  %vm92 = vcmask 1039360
  %v93 = vsel %vm92, %v61, %v63
  %v94 = vsel %vm92, %v63, %v65
  %v95 = vsel %vm92, %v65, %v67
  %v96 = vsel %vm92, %v67, %v69
  %v97 = vsel %vm92, %v69, %v71
  %v98 = vsel %vm92, %v71, %v73
  %v99 = vsel %vm92, %v73, %v75
  %v100 = vsel %vm92, %v75, %v77
  %v101 = vsel %vm92, %v77, %v79
  %v102 = vsel %vm92, %v79, %v81
  %v103 = vsel %vm92, %v81, %v83
  %v104 = vsel %vm92, %v83, %v85
  %v105 = vsel %vm92, %v85, %v87
  %v106 = vsel %vm92, %v87, %v89
  %v107 = vsel %vm92, %v89, %v91
  %124 = vrot.lane.b32.xlu0 %v26, 126
  %v125 = vpop.permute.xlu0 %124
  %126 = vrot.lane.b32.xlu0 %v27, 126
  %v127 = vpop.permute.xlu0 %126
  %128 = vrot.lane.b32.xlu0 %v28, 126
  %v129 = vpop.permute.xlu0 %128
  %130 = vrot.lane.b32.xlu0 %v29, 126
  %v131 = vpop.permute.xlu0 %130
  %132 = vrot.lane.b32.xlu0 %v30, 126
  %v133 = vpop.permute.xlu0 %132
  %134 = vrot.lane.b32.xlu0 %v31, 126
  %v135 = vpop.permute.xlu0 %134
  %136 = vrot.lane.b32.xlu0 %v32, 126
  %v137 = vpop.permute.xlu0 %136
  %138 = vrot.lane.b32.xlu0 %v33, 126
  %v139 = vpop.permute.xlu0 %138
  %140 = vrot.lane.b32.xlu0 %v34, 126
  %v141 = vpop.permute.xlu0 %140
  %142 = vrot.lane.b32.xlu0 %v35, 126
  %v143 = vpop.permute.xlu0 %142
  %144 = vrot.lane.b32.xlu0 %v36, 126
  %v145 = vpop.permute.xlu0 %144
  %146 = vrot.lane.b32.xlu0 %v37, 126
  %v147 = vpop.permute.xlu0 %146
  %148 = vrot.lane.b32.xlu0 %v38, 126
  %v149 = vpop.permute.xlu0 %148
  %150 = vrot.lane.b32.xlu0 %v39, 126
  %v151 = vpop.permute.xlu0 %150
  %152 = vrot.lane.b32.xlu0 %v40, 126
  %v153 = vpop.permute.xlu0 %152
  %154 = vrot.lane.b32.xlu0 %v41, 126
  %v155 = vpop.permute.xlu0 %154
  %vm156 = vcmask 1031168
  %v157 = vsel %vm156, %v125, %v127
  %v158 = vsel %vm156, %v127, %v129
  %v159 = vsel %vm156, %v129, %v131
  %v160 = vsel %vm156, %v131, %v133
  %v161 = vsel %vm156, %v133, %v135
  %v162 = vsel %vm156, %v135, %v137
  %v163 = vsel %vm156, %v137, %v139
  %v164 = vsel %vm156, %v139, %v141
  %v165 = vsel %vm156, %v141, %v143
  %v166 = vsel %vm156, %v143, %v145
  %v167 = vsel %vm156, %v145, %v147
  %v168 = vsel %vm156, %v147, %v149
  %v169 = vsel %vm156, %v149, %v151
  %v170 = vsel %vm156, %v151, %v153
  %v171 = vsel %vm156, %v153, %v155
  %188 = vrot.lane.b32.xlu0 %v26, 118
  %v189 = vpop.permute.xlu0 %188
  %190 = vrot.lane.b32.xlu0 %v27, 118
  %v191 = vpop.permute.xlu0 %190
  %192 = vrot.lane.b32.xlu0 %v28, 118
  %v193 = vpop.permute.xlu0 %192
  %194 = vrot.lane.b32.xlu0 %v29, 118
  %v195 = vpop.permute.xlu0 %194
  %196 = vrot.lane.b32.xlu0 %v30, 118
  %v197 = vpop.permute.xlu0 %196
  %198 = vrot.lane.b32.xlu0 %v31, 118
  %v199 = vpop.permute.xlu0 %198
  %200 = vrot.lane.b32.xlu0 %v32, 118
  %v201 = vpop.permute.xlu0 %200
  %202 = vrot.lane.b32.xlu0 %v33, 118
  %v203 = vpop.permute.xlu0 %202
  %204 = vrot.lane.b32.xlu0 %v34, 118
  %v205 = vpop.permute.xlu0 %204
  %206 = vrot.lane.b32.xlu0 %v35, 118
  %v207 = vpop.permute.xlu0 %206
  %208 = vrot.lane.b32.xlu0 %v36, 118
  %v209 = vpop.permute.xlu0 %208
  %210 = vrot.lane.b32.xlu0 %v37, 118
  %v211 = vpop.permute.xlu0 %210
  %212 = vrot.lane.b32.xlu0 %v38, 118
  %v213 = vpop.permute.xlu0 %212
  %214 = vrot.lane.b32.xlu0 %v39, 118
  %v215 = vpop.permute.xlu0 %214
  %216 = vrot.lane.b32.xlu0 %v40, 118
  %v217 = vpop.permute.xlu0 %216
  %218 = vrot.lane.b32.xlu0 %v41, 118
  %v219 = vpop.permute.xlu0 %218
  %vm220 = vcmask 965632
  %v221 = vsel %vm220, %v189, %v191
  %v222 = vsel %vm220, %v191, %v193
  %v223 = vsel %vm220, %v193, %v195
  %v224 = vsel %vm220, %v195, %v197
  %v225 = vsel %vm220, %v197, %v199
  %v226 = vsel %vm220, %v199, %v201
  %v227 = vsel %vm220, %v201, %v203
  %v228 = vsel %vm220, %v203, %v205
  %v229 = vsel %vm220, %v205, %v207
  %v230 = vsel %vm220, %v207, %v209
  %v231 = vsel %vm220, %v209, %v211
  %v232 = vsel %vm220, %v211, %v213
  %v233 = vsel %vm220, %v213, %v215
  %v234 = vsel %vm220, %v215, %v217
  %v235 = vsel %vm220, %v217, %v219
  %252 = vrot.lane.b32.xlu0 %v26, 117
  %v253 = vpop.permute.xlu0 %252
  %254 = vrot.lane.b32.xlu0 %v27, 117
  %v255 = vpop.permute.xlu0 %254
  %256 = vrot.lane.b32.xlu0 %v28, 117
  %v257 = vpop.permute.xlu0 %256
  %258 = vrot.lane.b32.xlu0 %v29, 117
  %v259 = vpop.permute.xlu0 %258
  %260 = vrot.lane.b32.xlu0 %v30, 117
  %v261 = vpop.permute.xlu0 %260
  %262 = vrot.lane.b32.xlu0 %v31, 117
  %v263 = vpop.permute.xlu0 %262
  %264 = vrot.lane.b32.xlu0 %v32, 117
  %v265 = vpop.permute.xlu0 %264
  %266 = vrot.lane.b32.xlu0 %v33, 117
  %v267 = vpop.permute.xlu0 %266
  %268 = vrot.lane.b32.xlu0 %v34, 117
  %v269 = vpop.permute.xlu0 %268
  %270 = vrot.lane.b32.xlu0 %v35, 117
  %v271 = vpop.permute.xlu0 %270
  %272 = vrot.lane.b32.xlu0 %v36, 117
  %v273 = vpop.permute.xlu0 %272
  %274 = vrot.lane.b32.xlu0 %v37, 117
  %v275 = vpop.permute.xlu0 %274
  %276 = vrot.lane.b32.xlu0 %v38, 117
  %v277 = vpop.permute.xlu0 %276
  %278 = vrot.lane.b32.xlu0 %v39, 117
  %v279 = vpop.permute.xlu0 %278
  %280 = vrot.lane.b32.xlu0 %v40, 117
  %v281 = vpop.permute.xlu0 %280
  %282 = vrot.lane.b32.xlu0 %v41, 117
  %v283 = vpop.permute.xlu0 %282
  %vm284 = vcmask 957440
  %v285 = vsel %vm284, %v253, %v255
  %v286 = vsel %vm284, %v255, %v257
  %v287 = vsel %vm284, %v257, %v259
  %v288 = vsel %vm284, %v259, %v261
  %v289 = vsel %vm284, %v261, %v263
  %v290 = vsel %vm284, %v263, %v265
  %v291 = vsel %vm284, %v265, %v267
  %v292 = vsel %vm284, %v267, %v269
  %v293 = vsel %vm284, %v269, %v271
  %v294 = vsel %vm284, %v271, %v273
  %v295 = vsel %vm284, %v273, %v275
  %v296 = vsel %vm284, %v275, %v277
  %v297 = vsel %vm284, %v277, %v279
  %v298 = vsel %vm284, %v279, %v281
  %v299 = vsel %vm284, %v281, %v283
  %316 = vrot.lane.b32.xlu0 %v26, 116
  %v317 = vpop.permute.xlu0 %316
  %318 = vrot.lane.b32.xlu0 %v27, 116
  %v319 = vpop.permute.xlu0 %318
  %320 = vrot.lane.b32.xlu0 %v28, 116
  %v321 = vpop.permute.xlu0 %320
  %322 = vrot.lane.b32.xlu0 %v29, 116
  %v323 = vpop.permute.xlu0 %322
  %324 = vrot.lane.b32.xlu0 %v30, 116
  %v325 = vpop.permute.xlu0 %324
  %326 = vrot.lane.b32.xlu0 %v31, 116
  %v327 = vpop.permute.xlu0 %326
  %328 = vrot.lane.b32.xlu0 %v32, 116
  %v329 = vpop.permute.xlu0 %328
  %330 = vrot.lane.b32.xlu0 %v33, 116
  %v331 = vpop.permute.xlu0 %330
  %332 = vrot.lane.b32.xlu0 %v34, 116
  %v333 = vpop.permute.xlu0 %332
  %334 = vrot.lane.b32.xlu0 %v35, 116
  %v335 = vpop.permute.xlu0 %334
  %336 = vrot.lane.b32.xlu0 %v36, 116
  %v337 = vpop.permute.xlu0 %336
  %338 = vrot.lane.b32.xlu0 %v37, 116
  %v339 = vpop.permute.xlu0 %338
  %340 = vrot.lane.b32.xlu0 %v38, 116
  %v341 = vpop.permute.xlu0 %340
  %342 = vrot.lane.b32.xlu0 %v39, 116
  %v343 = vpop.permute.xlu0 %342
  %344 = vrot.lane.b32.xlu0 %v40, 116
  %v345 = vpop.permute.xlu0 %344
  %346 = vrot.lane.b32.xlu0 %v41, 116
  %v347 = vpop.permute.xlu0 %346
  %vm348 = vcmask 949248
  %v349 = vsel %vm348, %v317, %v319
  %v350 = vsel %vm348, %v319, %v321
  %v351 = vsel %vm348, %v321, %v323
  %v352 = vsel %vm348, %v323, %v325
  %v353 = vsel %vm348, %v325, %v327
  %v354 = vsel %vm348, %v327, %v329
  %v355 = vsel %vm348, %v329, %v331
  %v356 = vsel %vm348, %v331, %v333
  %v357 = vsel %vm348, %v333, %v335
  %v358 = vsel %vm348, %v335, %v337
  %v359 = vsel %vm348, %v337, %v339
  %v360 = vsel %vm348, %v339, %v341
  %v361 = vsel %vm348, %v341, %v343
  %v362 = vsel %vm348, %v343, %v345
  %v363 = vsel %vm348, %v345, %v347
  %380 = vrot.lane.b32.xlu0 %v26, 108
  %v381 = vpop.permute.xlu0 %380
  %382 = vrot.lane.b32.xlu0 %v27, 108
  %v383 = vpop.permute.xlu0 %382
  %384 = vrot.lane.b32.xlu0 %v28, 108
  %v385 = vpop.permute.xlu0 %384
  %386 = vrot.lane.b32.xlu0 %v29, 108
  %v387 = vpop.permute.xlu0 %386
  %388 = vrot.lane.b32.xlu0 %v30, 108
  %v389 = vpop.permute.xlu0 %388
  %390 = vrot.lane.b32.xlu0 %v31, 108
  %v391 = vpop.permute.xlu0 %390
  %392 = vrot.lane.b32.xlu0 %v32, 108
  %v393 = vpop.permute.xlu0 %392
  %394 = vrot.lane.b32.xlu0 %v33, 108
  %v395 = vpop.permute.xlu0 %394
  %396 = vrot.lane.b32.xlu0 %v34, 108
  %v397 = vpop.permute.xlu0 %396
  %398 = vrot.lane.b32.xlu0 %v35, 108
  %v399 = vpop.permute.xlu0 %398
  %400 = vrot.lane.b32.xlu0 %v36, 108
  %v401 = vpop.permute.xlu0 %400
  %402 = vrot.lane.b32.xlu0 %v37, 108
  %v403 = vpop.permute.xlu0 %402
  %404 = vrot.lane.b32.xlu0 %v38, 108
  %v405 = vpop.permute.xlu0 %404
  %406 = vrot.lane.b32.xlu0 %v39, 108
  %v407 = vpop.permute.xlu0 %406
  %408 = vrot.lane.b32.xlu0 %v40, 108
  %v409 = vpop.permute.xlu0 %408
  %410 = vrot.lane.b32.xlu0 %v41, 108
  %v411 = vpop.permute.xlu0 %410
  %vm412 = vcmask 883712
  %v413 = vsel %vm412, %v381, %v383
  %v414 = vsel %vm412, %v383, %v385
  %v415 = vsel %vm412, %v385, %v387
  %v416 = vsel %vm412, %v387, %v389
  %v417 = vsel %vm412, %v389, %v391
  %v418 = vsel %vm412, %v391, %v393
  %v419 = vsel %vm412, %v393, %v395
  %v420 = vsel %vm412, %v395, %v397
  %v421 = vsel %vm412, %v397, %v399
  %v422 = vsel %vm412, %v399, %v401
  %v423 = vsel %vm412, %v401, %v403
  %v424 = vsel %vm412, %v403, %v405
  %v425 = vsel %vm412, %v405, %v407
  %v426 = vsel %vm412, %v407, %v409
  %v427 = vsel %vm412, %v409, %v411
  %444 = vrot.lane.b32.xlu0 %v26, 107
  %v445 = vpop.permute.xlu0 %444
  %446 = vrot.lane.b32.xlu0 %v27, 107
  %v447 = vpop.permute.xlu0 %446
  %448 = vrot.lane.b32.xlu0 %v28, 107
  %v449 = vpop.permute.xlu0 %448
  %450 = vrot.lane.b32.xlu0 %v29, 107
  %v451 = vpop.permute.xlu0 %450
  %452 = vrot.lane.b32.xlu0 %v30, 107
  %v453 = vpop.permute.xlu0 %452
  %454 = vrot.lane.b32.xlu0 %v31, 107
  %v455 = vpop.permute.xlu0 %454
  %456 = vrot.lane.b32.xlu0 %v32, 107
  %v457 = vpop.permute.xlu0 %456
  %458 = vrot.lane.b32.xlu0 %v33, 107
  %v459 = vpop.permute.xlu0 %458
  %460 = vrot.lane.b32.xlu0 %v34, 107
  %v461 = vpop.permute.xlu0 %460
  %462 = vrot.lane.b32.xlu0 %v35, 107
  %v463 = vpop.permute.xlu0 %462
  %464 = vrot.lane.b32.xlu0 %v36, 107
  %v465 = vpop.permute.xlu0 %464
  %466 = vrot.lane.b32.xlu0 %v37, 107
  %v467 = vpop.permute.xlu0 %466
  %468 = vrot.lane.b32.xlu0 %v38, 107
  %v469 = vpop.permute.xlu0 %468
  %470 = vrot.lane.b32.xlu0 %v39, 107
  %v471 = vpop.permute.xlu0 %470
  %472 = vrot.lane.b32.xlu0 %v40, 107
  %v473 = vpop.permute.xlu0 %472
  %474 = vrot.lane.b32.xlu0 %v41, 107
  %v475 = vpop.permute.xlu0 %474
  %vm476 = vcmask 875520
  %v477 = vsel %vm476, %v445, %v447
  %v478 = vsel %vm476, %v447, %v449
  %v479 = vsel %vm476, %v449, %v451
  %v480 = vsel %vm476, %v451, %v453
  %v481 = vsel %vm476, %v453, %v455
  %v482 = vsel %vm476, %v455, %v457
  %v483 = vsel %vm476, %v457, %v459
  %v484 = vsel %vm476, %v459, %v461
  %v485 = vsel %vm476, %v461, %v463
  %v486 = vsel %vm476, %v463, %v465
  %v487 = vsel %vm476, %v465, %v467
  %v488 = vsel %vm476, %v467, %v469
  %v489 = vsel %vm476, %v469, %v471
  %v490 = vsel %vm476, %v471, %v473
  %v491 = vsel %vm476, %v473, %v475
  %508 = vrot.lane.b32.xlu0 %v26, 106
  %v509 = vpop.permute.xlu0 %508
  %510 = vrot.lane.b32.xlu0 %v27, 106
  %v511 = vpop.permute.xlu0 %510
  %512 = vrot.lane.b32.xlu0 %v28, 106
  %v513 = vpop.permute.xlu0 %512
  %514 = vrot.lane.b32.xlu0 %v29, 106
  %v515 = vpop.permute.xlu0 %514
  %516 = vrot.lane.b32.xlu0 %v30, 106
  %v517 = vpop.permute.xlu0 %516
  %518 = vrot.lane.b32.xlu0 %v31, 106
  %v519 = vpop.permute.xlu0 %518
  %520 = vrot.lane.b32.xlu0 %v32, 106
  %v521 = vpop.permute.xlu0 %520
  %522 = vrot.lane.b32.xlu0 %v33, 106
  %v523 = vpop.permute.xlu0 %522
  %524 = vrot.lane.b32.xlu0 %v34, 106
  %v525 = vpop.permute.xlu0 %524
  %526 = vrot.lane.b32.xlu0 %v35, 106
  %v527 = vpop.permute.xlu0 %526
  %528 = vrot.lane.b32.xlu0 %v36, 106
  %v529 = vpop.permute.xlu0 %528
  %530 = vrot.lane.b32.xlu0 %v37, 106
  %v531 = vpop.permute.xlu0 %530
  %532 = vrot.lane.b32.xlu0 %v38, 106
  %v533 = vpop.permute.xlu0 %532
  %534 = vrot.lane.b32.xlu0 %v39, 106
  %v535 = vpop.permute.xlu0 %534
  %536 = vrot.lane.b32.xlu0 %v40, 106
  %v537 = vpop.permute.xlu0 %536
  %538 = vrot.lane.b32.xlu0 %v41, 106
  %v539 = vpop.permute.xlu0 %538
  %vm540 = vcmask 867328
  %v541 = vsel %vm540, %v509, %v511
  %v542 = vsel %vm540, %v511, %v513
  %v543 = vsel %vm540, %v513, %v515
  %v544 = vsel %vm540, %v515, %v517
  %v545 = vsel %vm540, %v517, %v519
  %v546 = vsel %vm540, %v519, %v521
  %v547 = vsel %vm540, %v521, %v523
  %v548 = vsel %vm540, %v523, %v525
  %v549 = vsel %vm540, %v525, %v527
  %v550 = vsel %vm540, %v527, %v529
  %v551 = vsel %vm540, %v529, %v531
  %v552 = vsel %vm540, %v531, %v533
  %v553 = vsel %vm540, %v533, %v535
  %v554 = vsel %vm540, %v535, %v537
  %v555 = vsel %vm540, %v537, %v539
  %573 = vrot.lane.b32.xlu0 %v26, 28
  %v574 = vpop.permute.xlu0 %573
  %575 = vrot.lane.b32.xlu0 %v27, 28
  %v576 = vpop.permute.xlu0 %575
  %577 = vrot.lane.b32.xlu0 %v28, 28
  %v578 = vpop.permute.xlu0 %577
  %579 = vrot.lane.b32.xlu0 %v29, 28
  %v580 = vpop.permute.xlu0 %579
  %581 = vrot.lane.b32.xlu0 %v30, 28
  %v582 = vpop.permute.xlu0 %581
  %583 = vrot.lane.b32.xlu0 %v31, 28
  %v584 = vpop.permute.xlu0 %583
  %585 = vrot.lane.b32.xlu0 %v32, 28
  %v586 = vpop.permute.xlu0 %585
  %587 = vrot.lane.b32.xlu0 %v33, 28
  %v588 = vpop.permute.xlu0 %587
  %589 = vrot.lane.b32.xlu0 %v34, 28
  %v590 = vpop.permute.xlu0 %589
  %591 = vrot.lane.b32.xlu0 %v35, 28
  %v592 = vpop.permute.xlu0 %591
  %593 = vrot.lane.b32.xlu0 %v36, 28
  %v594 = vpop.permute.xlu0 %593
  %595 = vrot.lane.b32.xlu0 %v37, 28
  %v596 = vpop.permute.xlu0 %595
  %597 = vrot.lane.b32.xlu0 %v38, 28
  %v598 = vpop.permute.xlu0 %597
  %599 = vrot.lane.b32.xlu0 %v39, 28
  %v600 = vpop.permute.xlu0 %599
  %601 = vrot.lane.b32.xlu0 %v40, 28
  %v602 = vpop.permute.xlu0 %601
  %603 = vrot.lane.b32.xlu0 %v41, 28
  %v604 = vpop.permute.xlu0 %603
  %605 = vrot.lane.b32.xlu0 %v42, 28
  %v606 = vpop.permute.xlu0 %605
  %vm607 = vcmask 228352
  %v608 = vsel %vm607, %v574, %v576
  %v609 = vsel %vm607, %v576, %v578
  %v610 = vsel %vm607, %v578, %v580
  %v611 = vsel %vm607, %v580, %v582
  %v612 = vsel %vm607, %v582, %v584
  %v613 = vsel %vm607, %v584, %v586
  %v614 = vsel %vm607, %v586, %v588
  %v615 = vsel %vm607, %v588, %v590
  %v616 = vsel %vm607, %v590, %v592
  %v617 = vsel %vm607, %v592, %v594
  %v618 = vsel %vm607, %v594, %v596
  %v619 = vsel %vm607, %v596, %v598
  %v620 = vsel %vm607, %v598, %v600
  %v621 = vsel %vm607, %v600, %v602
  %v622 = vsel %vm607, %v602, %v604
  %v623 = vsel %vm607, %v604, %v606
  %640 = vrot.lane.b32.xlu0 %v26, 27
  %v641 = vpop.permute.xlu0 %640
  %642 = vrot.lane.b32.xlu0 %v27, 27
  %v643 = vpop.permute.xlu0 %642
  %644 = vrot.lane.b32.xlu0 %v28, 27
  %v645 = vpop.permute.xlu0 %644
  %646 = vrot.lane.b32.xlu0 %v29, 27
  %v647 = vpop.permute.xlu0 %646
  %648 = vrot.lane.b32.xlu0 %v30, 27
  %v649 = vpop.permute.xlu0 %648
  %650 = vrot.lane.b32.xlu0 %v31, 27
  %v651 = vpop.permute.xlu0 %650
  %652 = vrot.lane.b32.xlu0 %v32, 27
  %v653 = vpop.permute.xlu0 %652
  %654 = vrot.lane.b32.xlu0 %v33, 27
  %v655 = vpop.permute.xlu0 %654
  %656 = vrot.lane.b32.xlu0 %v34, 27
  %v657 = vpop.permute.xlu0 %656
  %658 = vrot.lane.b32.xlu0 %v35, 27
  %v659 = vpop.permute.xlu0 %658
  %660 = vrot.lane.b32.xlu0 %v36, 27
  %v661 = vpop.permute.xlu0 %660
  %662 = vrot.lane.b32.xlu0 %v37, 27
  %v663 = vpop.permute.xlu0 %662
  %664 = vrot.lane.b32.xlu0 %v38, 27
  %v665 = vpop.permute.xlu0 %664
  %666 = vrot.lane.b32.xlu0 %v39, 27
  %v667 = vpop.permute.xlu0 %666
  %668 = vrot.lane.b32.xlu0 %v40, 27
  %v669 = vpop.permute.xlu0 %668
  %670 = vrot.lane.b32.xlu0 %v41, 27
  %v671 = vpop.permute.xlu0 %670
  %672 = vrot.lane.b32.xlu0 %v42, 27
  %v673 = vpop.permute.xlu0 %672
  %vm674 = vcmask 220160
  %v675 = vsel %vm674, %v641, %v643
  %v676 = vsel %vm674, %v643, %v645
  %v677 = vsel %vm674, %v645, %v647
  %v678 = vsel %vm674, %v647, %v649
  %v679 = vsel %vm674, %v649, %v651
  %v680 = vsel %vm674, %v651, %v653
  %v681 = vsel %vm674, %v653, %v655
  %v682 = vsel %vm674, %v655, %v657
  %v683 = vsel %vm674, %v657, %v659
  %v684 = vsel %vm674, %v659, %v661
  %v685 = vsel %vm674, %v661, %v663
  %v686 = vsel %vm674, %v663, %v665
  %v687 = vsel %vm674, %v665, %v667
  %v688 = vsel %vm674, %v667, %v669
  %v689 = vsel %vm674, %v669, %v671
  %v690 = vsel %vm674, %v671, %v673
  %707 = vrot.lane.b32.xlu0 %v26, 26
  %v708 = vpop.permute.xlu0 %707
  %709 = vrot.lane.b32.xlu0 %v27, 26
  %v710 = vpop.permute.xlu0 %709
  %711 = vrot.lane.b32.xlu0 %v28, 26
  %v712 = vpop.permute.xlu0 %711
  %713 = vrot.lane.b32.xlu0 %v29, 26
  %v714 = vpop.permute.xlu0 %713
  %715 = vrot.lane.b32.xlu0 %v30, 26
  %v716 = vpop.permute.xlu0 %715
  %717 = vrot.lane.b32.xlu0 %v31, 26
  %v718 = vpop.permute.xlu0 %717
  %719 = vrot.lane.b32.xlu0 %v32, 26
  %v720 = vpop.permute.xlu0 %719
  %721 = vrot.lane.b32.xlu0 %v33, 26
  %v722 = vpop.permute.xlu0 %721
  %723 = vrot.lane.b32.xlu0 %v34, 26
  %v724 = vpop.permute.xlu0 %723
  %725 = vrot.lane.b32.xlu0 %v35, 26
  %v726 = vpop.permute.xlu0 %725
  %727 = vrot.lane.b32.xlu0 %v36, 26
  %v728 = vpop.permute.xlu0 %727
  %729 = vrot.lane.b32.xlu0 %v37, 26
  %v730 = vpop.permute.xlu0 %729
  %731 = vrot.lane.b32.xlu0 %v38, 26
  %v732 = vpop.permute.xlu0 %731
  %733 = vrot.lane.b32.xlu0 %v39, 26
  %v734 = vpop.permute.xlu0 %733
  %735 = vrot.lane.b32.xlu0 %v40, 26
  %v736 = vpop.permute.xlu0 %735
  %737 = vrot.lane.b32.xlu0 %v41, 26
  %v738 = vpop.permute.xlu0 %737
  %739 = vrot.lane.b32.xlu0 %v42, 26
  %v740 = vpop.permute.xlu0 %739
  %vm741 = vcmask 211968
  %v742 = vsel %vm741, %v708, %v710
  %v743 = vsel %vm741, %v710, %v712
  %v744 = vsel %vm741, %v712, %v714
  %v745 = vsel %vm741, %v714, %v716
  %v746 = vsel %vm741, %v716, %v718
  %v747 = vsel %vm741, %v718, %v720
  %v748 = vsel %vm741, %v720, %v722
  %v749 = vsel %vm741, %v722, %v724
  %v750 = vsel %vm741, %v724, %v726
  %v751 = vsel %vm741, %v726, %v728
  %v752 = vsel %vm741, %v728, %v730
  %v753 = vsel %vm741, %v730, %v732
  %v754 = vsel %vm741, %v732, %v734
  %v755 = vsel %vm741, %v734, %v736
  %v756 = vsel %vm741, %v736, %v738
  %v757 = vsel %vm741, %v738, %v740
  %774 = vrot.lane.b32.xlu0 %v26, 18
  %v775 = vpop.permute.xlu0 %774
  %776 = vrot.lane.b32.xlu0 %v27, 18
  %v777 = vpop.permute.xlu0 %776
  %778 = vrot.lane.b32.xlu0 %v28, 18
  %v779 = vpop.permute.xlu0 %778
  %780 = vrot.lane.b32.xlu0 %v29, 18
  %v781 = vpop.permute.xlu0 %780
  %782 = vrot.lane.b32.xlu0 %v30, 18
  %v783 = vpop.permute.xlu0 %782
  %784 = vrot.lane.b32.xlu0 %v31, 18
  %v785 = vpop.permute.xlu0 %784
  %786 = vrot.lane.b32.xlu0 %v32, 18
  %v787 = vpop.permute.xlu0 %786
  %788 = vrot.lane.b32.xlu0 %v33, 18
  %v789 = vpop.permute.xlu0 %788
  %790 = vrot.lane.b32.xlu0 %v34, 18
  %v791 = vpop.permute.xlu0 %790
  %792 = vrot.lane.b32.xlu0 %v35, 18
  %v793 = vpop.permute.xlu0 %792
  %794 = vrot.lane.b32.xlu0 %v36, 18
  %v795 = vpop.permute.xlu0 %794
  %796 = vrot.lane.b32.xlu0 %v37, 18
  %v797 = vpop.permute.xlu0 %796
  %798 = vrot.lane.b32.xlu0 %v38, 18
  %v799 = vpop.permute.xlu0 %798
  %800 = vrot.lane.b32.xlu0 %v39, 18
  %v801 = vpop.permute.xlu0 %800
  %802 = vrot.lane.b32.xlu0 %v40, 18
  %v803 = vpop.permute.xlu0 %802
  %804 = vrot.lane.b32.xlu0 %v41, 18
  %v805 = vpop.permute.xlu0 %804
  %806 = vrot.lane.b32.xlu0 %v42, 18
  %v807 = vpop.permute.xlu0 %806
  %vm808 = vcmask 146432
  %v809 = vsel %vm808, %v775, %v777
  %v810 = vsel %vm808, %v777, %v779
  %v811 = vsel %vm808, %v779, %v781
  %v812 = vsel %vm808, %v781, %v783
  %v813 = vsel %vm808, %v783, %v785
  %v814 = vsel %vm808, %v785, %v787
  %v815 = vsel %vm808, %v787, %v789
  %v816 = vsel %vm808, %v789, %v791
  %v817 = vsel %vm808, %v791, %v793
  %v818 = vsel %vm808, %v793, %v795
  %v819 = vsel %vm808, %v795, %v797
  %v820 = vsel %vm808, %v797, %v799
  %v821 = vsel %vm808, %v799, %v801
  %v822 = vsel %vm808, %v801, %v803
  %v823 = vsel %vm808, %v803, %v805
  %v824 = vsel %vm808, %v805, %v807
  %841 = vrot.lane.b32.xlu0 %v27, 17
  %v842 = vpop.permute.xlu0 %841
  %843 = vrot.lane.b32.xlu0 %v28, 17
  %v844 = vpop.permute.xlu0 %843
  %845 = vrot.lane.b32.xlu0 %v29, 17
  %v846 = vpop.permute.xlu0 %845
  %847 = vrot.lane.b32.xlu0 %v30, 17
  %v848 = vpop.permute.xlu0 %847
  %849 = vrot.lane.b32.xlu0 %v31, 17
  %v850 = vpop.permute.xlu0 %849
  %851 = vrot.lane.b32.xlu0 %v32, 17
  %v852 = vpop.permute.xlu0 %851
  %853 = vrot.lane.b32.xlu0 %v33, 17
  %v854 = vpop.permute.xlu0 %853
  %855 = vrot.lane.b32.xlu0 %v34, 17
  %v856 = vpop.permute.xlu0 %855
  %857 = vrot.lane.b32.xlu0 %v35, 17
  %v858 = vpop.permute.xlu0 %857
  %859 = vrot.lane.b32.xlu0 %v36, 17
  %v860 = vpop.permute.xlu0 %859
  %861 = vrot.lane.b32.xlu0 %v37, 17
  %v862 = vpop.permute.xlu0 %861
  %863 = vrot.lane.b32.xlu0 %v38, 17
  %v864 = vpop.permute.xlu0 %863
  %865 = vrot.lane.b32.xlu0 %v39, 17
  %v866 = vpop.permute.xlu0 %865
  %867 = vrot.lane.b32.xlu0 %v40, 17
  %v868 = vpop.permute.xlu0 %867
  %869 = vrot.lane.b32.xlu0 %v41, 17
  %v870 = vpop.permute.xlu0 %869
  %871 = vrot.lane.b32.xlu0 %v42, 17
  %v872 = vpop.permute.xlu0 %871
  %vm873 = vcmask 138240
  %v874 = vsel %vm873, %v842, %v844
  %v875 = vsel %vm873, %v844, %v846
  %v876 = vsel %vm873, %v846, %v848
  %v877 = vsel %vm873, %v848, %v850
  %v878 = vsel %vm873, %v850, %v852
  %v879 = vsel %vm873, %v852, %v854
  %v880 = vsel %vm873, %v854, %v856
  %v881 = vsel %vm873, %v856, %v858
  %v882 = vsel %vm873, %v858, %v860
  %v883 = vsel %vm873, %v860, %v862
  %v884 = vsel %vm873, %v862, %v864
  %v885 = vsel %vm873, %v864, %v866
  %v886 = vsel %vm873, %v866, %v868
  %v887 = vsel %vm873, %v868, %v870
  %v888 = vsel %vm873, %v870, %v872
  %905 = vrot.lane.b32.xlu0 %v27, 16
  %v906 = vpop.permute.xlu0 %905
  %907 = vrot.lane.b32.xlu0 %v28, 16
  %v908 = vpop.permute.xlu0 %907
  %909 = vrot.lane.b32.xlu0 %v29, 16
  %v910 = vpop.permute.xlu0 %909
  %911 = vrot.lane.b32.xlu0 %v30, 16
  %v912 = vpop.permute.xlu0 %911
  %913 = vrot.lane.b32.xlu0 %v31, 16
  %v914 = vpop.permute.xlu0 %913
  %915 = vrot.lane.b32.xlu0 %v32, 16
  %v916 = vpop.permute.xlu0 %915
  %917 = vrot.lane.b32.xlu0 %v33, 16
  %v918 = vpop.permute.xlu0 %917
  %919 = vrot.lane.b32.xlu0 %v34, 16
  %v920 = vpop.permute.xlu0 %919
  %921 = vrot.lane.b32.xlu0 %v35, 16
  %v922 = vpop.permute.xlu0 %921
  %923 = vrot.lane.b32.xlu0 %v36, 16
  %v924 = vpop.permute.xlu0 %923
  %925 = vrot.lane.b32.xlu0 %v37, 16
  %v926 = vpop.permute.xlu0 %925
  %927 = vrot.lane.b32.xlu0 %v38, 16
  %v928 = vpop.permute.xlu0 %927
  %929 = vrot.lane.b32.xlu0 %v39, 16
  %v930 = vpop.permute.xlu0 %929
  %931 = vrot.lane.b32.xlu0 %v40, 16
  %v932 = vpop.permute.xlu0 %931
  %933 = vrot.lane.b32.xlu0 %v41, 16
  %v934 = vpop.permute.xlu0 %933
  %935 = vrot.lane.b32.xlu0 %v42, 16
  %v936 = vpop.permute.xlu0 %935
  %vm937 = vcmask 130048
  %v938 = vsel %vm937, %v906, %v908
  %v939 = vsel %vm937, %v908, %v910
  %v940 = vsel %vm937, %v910, %v912
  %v941 = vsel %vm937, %v912, %v914
  %v942 = vsel %vm937, %v914, %v916
  %v943 = vsel %vm937, %v916, %v918
  %v944 = vsel %vm937, %v918, %v920
  %v945 = vsel %vm937, %v920, %v922
  %v946 = vsel %vm937, %v922, %v924
  %v947 = vsel %vm937, %v924, %v926
  %v948 = vsel %vm937, %v926, %v928
  %v949 = vsel %vm937, %v928, %v930
  %v950 = vsel %vm937, %v930, %v932
  %v951 = vsel %vm937, %v932, %v934
  %v952 = vsel %vm937, %v934, %v936
  %969 = vrot.lane.b32.xlu0 %v27, 8
  %v970 = vpop.permute.xlu0 %969
  %971 = vrot.lane.b32.xlu0 %v28, 8
  %v972 = vpop.permute.xlu0 %971
  %973 = vrot.lane.b32.xlu0 %v29, 8
  %v974 = vpop.permute.xlu0 %973
  %975 = vrot.lane.b32.xlu0 %v30, 8
  %v976 = vpop.permute.xlu0 %975
  %977 = vrot.lane.b32.xlu0 %v31, 8
  %v978 = vpop.permute.xlu0 %977
  %979 = vrot.lane.b32.xlu0 %v32, 8
  %v980 = vpop.permute.xlu0 %979
  %981 = vrot.lane.b32.xlu0 %v33, 8
  %v982 = vpop.permute.xlu0 %981
  %983 = vrot.lane.b32.xlu0 %v34, 8
  %v984 = vpop.permute.xlu0 %983
  %985 = vrot.lane.b32.xlu0 %v35, 8
  %v986 = vpop.permute.xlu0 %985
  %987 = vrot.lane.b32.xlu0 %v36, 8
  %v988 = vpop.permute.xlu0 %987
  %989 = vrot.lane.b32.xlu0 %v37, 8
  %v990 = vpop.permute.xlu0 %989
  %991 = vrot.lane.b32.xlu0 %v38, 8
  %v992 = vpop.permute.xlu0 %991
  %993 = vrot.lane.b32.xlu0 %v39, 8
  %v994 = vpop.permute.xlu0 %993
  %995 = vrot.lane.b32.xlu0 %v40, 8
  %v996 = vpop.permute.xlu0 %995
  %997 = vrot.lane.b32.xlu0 %v41, 8
  %v998 = vpop.permute.xlu0 %997
  %999 = vrot.lane.b32.xlu0 %v42, 8
  %v1000 = vpop.permute.xlu0 %999
  %vm1001 = vcmask 64512
  %v1002 = vsel %vm1001, %v970, %v972
  %v1003 = vsel %vm1001, %v972, %v974
  %v1004 = vsel %vm1001, %v974, %v976
  %v1005 = vsel %vm1001, %v976, %v978
  %v1006 = vsel %vm1001, %v978, %v980
  %v1007 = vsel %vm1001, %v980, %v982
  %v1008 = vsel %vm1001, %v982, %v984
  %v1009 = vsel %vm1001, %v984, %v986
  %v1010 = vsel %vm1001, %v986, %v988
  %v1011 = vsel %vm1001, %v988, %v990
  %v1012 = vsel %vm1001, %v990, %v992
  %v1013 = vsel %vm1001, %v992, %v994
  %v1014 = vsel %vm1001, %v994, %v996
  %v1015 = vsel %vm1001, %v996, %v998
  %v1016 = vsel %vm1001, %v998, %v1000
  %1033 = vrot.lane.b32.xlu0 %v42, 127
  %v1034 = vpop.permute.xlu0 %1033
  %v1035 = vsel %vm92, %v91, %v1034
  %1037 = vrot.lane.b32.xlu0 %v27, 49
  %v1038 = vpop.permute.xlu0 %1037
  %1039 = vrot.lane.b32.xlu0 %v28, 49
  %v1040 = vpop.permute.xlu0 %1039
  %1041 = vrot.lane.b32.xlu0 %v29, 49
  %v1042 = vpop.permute.xlu0 %1041
  %1043 = vrot.lane.b32.xlu0 %v30, 49
  %v1044 = vpop.permute.xlu0 %1043
  %1045 = vrot.lane.b32.xlu0 %v31, 49
  %v1046 = vpop.permute.xlu0 %1045
  %1047 = vrot.lane.b32.xlu0 %v32, 49
  %v1048 = vpop.permute.xlu0 %1047
  %1049 = vrot.lane.b32.xlu0 %v33, 49
  %v1050 = vpop.permute.xlu0 %1049
  %1051 = vrot.lane.b32.xlu0 %v34, 49
  %v1052 = vpop.permute.xlu0 %1051
  %1053 = vrot.lane.b32.xlu0 %v35, 49
  %v1054 = vpop.permute.xlu0 %1053
  %1055 = vrot.lane.b32.xlu0 %v36, 49
  %v1056 = vpop.permute.xlu0 %1055
  %1057 = vrot.lane.b32.xlu0 %v37, 49
  %v1058 = vpop.permute.xlu0 %1057
  %1059 = vrot.lane.b32.xlu0 %v38, 49
  %v1060 = vpop.permute.xlu0 %1059
  %1061 = vrot.lane.b32.xlu0 %v39, 49
  %v1062 = vpop.permute.xlu0 %1061
  %1063 = vrot.lane.b32.xlu0 %v40, 49
  %v1064 = vpop.permute.xlu0 %1063
  %1065 = vrot.lane.b32.xlu0 %v41, 49
  %v1066 = vpop.permute.xlu0 %1065
  %1067 = vrot.lane.b32.xlu0 %v42, 49
  %v1068 = vpop.permute.xlu0 %1067
  %1069 = vrot.lane.b32.xlu0 %v43, 49
  %v1070 = vpop.permute.xlu0 %1069
  %vm1071 = vcmask 400384
  %v1072 = vsel %vm1071, %v1038, %v1040
  %v1073 = vsel %vm1071, %v1040, %v1042
  %v1074 = vsel %vm1071, %v1042, %v1044
  %v1075 = vsel %vm1071, %v1044, %v1046
  %v1076 = vsel %vm1071, %v1046, %v1048
  %v1077 = vsel %vm1071, %v1048, %v1050
  %v1078 = vsel %vm1071, %v1050, %v1052
  %v1079 = vsel %vm1071, %v1052, %v1054
  %v1080 = vsel %vm1071, %v1054, %v1056
  %v1081 = vsel %vm1071, %v1056, %v1058
  %v1082 = vsel %vm1071, %v1058, %v1060
  %v1083 = vsel %vm1071, %v1060, %v1062
  %v1084 = vsel %vm1071, %v1062, %v1064
  %v1085 = vsel %vm1071, %v1064, %v1066
  %v1086 = vsel %vm1071, %v1066, %v1068
  %v1087 = vsel %vm1071, %v1068, %v1070
  %1088 = vrot.lane.b32.xlu0 %v27, 48
  %v1089 = vpop.permute.xlu0 %1088
  %1090 = vrot.lane.b32.xlu0 %v28, 48
  %v1091 = vpop.permute.xlu0 %1090
  %1092 = vrot.lane.b32.xlu0 %v29, 48
  %v1093 = vpop.permute.xlu0 %1092
  %1094 = vrot.lane.b32.xlu0 %v30, 48
  %v1095 = vpop.permute.xlu0 %1094
  %1096 = vrot.lane.b32.xlu0 %v31, 48
  %v1097 = vpop.permute.xlu0 %1096
  %1098 = vrot.lane.b32.xlu0 %v32, 48
  %v1099 = vpop.permute.xlu0 %1098
  %1100 = vrot.lane.b32.xlu0 %v33, 48
  %v1101 = vpop.permute.xlu0 %1100
  %1102 = vrot.lane.b32.xlu0 %v34, 48
  %v1103 = vpop.permute.xlu0 %1102
  %1104 = vrot.lane.b32.xlu0 %v35, 48
  %v1105 = vpop.permute.xlu0 %1104
  %1106 = vrot.lane.b32.xlu0 %v36, 48
  %v1107 = vpop.permute.xlu0 %1106
  %1108 = vrot.lane.b32.xlu0 %v37, 48
  %v1109 = vpop.permute.xlu0 %1108
  %1110 = vrot.lane.b32.xlu0 %v38, 48
  %v1111 = vpop.permute.xlu0 %1110
  %1112 = vrot.lane.b32.xlu0 %v39, 48
  %v1113 = vpop.permute.xlu0 %1112
  %1114 = vrot.lane.b32.xlu0 %v40, 48
  %v1115 = vpop.permute.xlu0 %1114
  %1116 = vrot.lane.b32.xlu0 %v41, 48
  %v1117 = vpop.permute.xlu0 %1116
  %1118 = vrot.lane.b32.xlu0 %v42, 48
  %v1119 = vpop.permute.xlu0 %1118
  %1120 = vrot.lane.b32.xlu0 %v43, 48
  %v1121 = vpop.permute.xlu0 %1120
  %vm1122 = vcmask 392192
  %v1123 = vsel %vm1122, %v1089, %v1091
  %v1124 = vsel %vm1122, %v1091, %v1093
  %v1125 = vsel %vm1122, %v1093, %v1095
  %v1126 = vsel %vm1122, %v1095, %v1097
  %v1127 = vsel %vm1122, %v1097, %v1099
  %v1128 = vsel %vm1122, %v1099, %v1101
  %v1129 = vsel %vm1122, %v1101, %v1103
  %v1130 = vsel %vm1122, %v1103, %v1105
  %v1131 = vsel %vm1122, %v1105, %v1107
  %v1132 = vsel %vm1122, %v1107, %v1109
  %v1133 = vsel %vm1122, %v1109, %v1111
  %v1134 = vsel %vm1122, %v1111, %v1113
  %v1135 = vsel %vm1122, %v1113, %v1115
  %v1136 = vsel %vm1122, %v1115, %v1117
  %v1137 = vsel %vm1122, %v1117, %v1119
  %v1138 = vsel %vm1122, %v1119, %v1121
  %1139 = vrot.lane.b32.xlu0 %v27, 47
  %v1140 = vpop.permute.xlu0 %1139
  %1141 = vrot.lane.b32.xlu0 %v28, 47
  %v1142 = vpop.permute.xlu0 %1141
  %1143 = vrot.lane.b32.xlu0 %v29, 47
  %v1144 = vpop.permute.xlu0 %1143
  %1145 = vrot.lane.b32.xlu0 %v30, 47
  %v1146 = vpop.permute.xlu0 %1145
  %1147 = vrot.lane.b32.xlu0 %v31, 47
  %v1148 = vpop.permute.xlu0 %1147
  %1149 = vrot.lane.b32.xlu0 %v32, 47
  %v1150 = vpop.permute.xlu0 %1149
  %1151 = vrot.lane.b32.xlu0 %v33, 47
  %v1152 = vpop.permute.xlu0 %1151
  %1153 = vrot.lane.b32.xlu0 %v34, 47
  %v1154 = vpop.permute.xlu0 %1153
  %1155 = vrot.lane.b32.xlu0 %v35, 47
  %v1156 = vpop.permute.xlu0 %1155
  %1157 = vrot.lane.b32.xlu0 %v36, 47
  %v1158 = vpop.permute.xlu0 %1157
  %1159 = vrot.lane.b32.xlu0 %v37, 47
  %v1160 = vpop.permute.xlu0 %1159
  %1161 = vrot.lane.b32.xlu0 %v38, 47
  %v1162 = vpop.permute.xlu0 %1161
  %1163 = vrot.lane.b32.xlu0 %v39, 47
  %v1164 = vpop.permute.xlu0 %1163
  %1165 = vrot.lane.b32.xlu0 %v40, 47
  %v1166 = vpop.permute.xlu0 %1165
  %1167 = vrot.lane.b32.xlu0 %v41, 47
  %v1168 = vpop.permute.xlu0 %1167
  %1169 = vrot.lane.b32.xlu0 %v42, 47
  %v1170 = vpop.permute.xlu0 %1169
  %1171 = vrot.lane.b32.xlu0 %v43, 47
  %v1172 = vpop.permute.xlu0 %1171
  %vm1173 = vcmask 384000
  %v1174 = vsel %vm1173, %v1140, %v1142
  %v1175 = vsel %vm1173, %v1142, %v1144
  %v1176 = vsel %vm1173, %v1144, %v1146
  %v1177 = vsel %vm1173, %v1146, %v1148
  %v1178 = vsel %vm1173, %v1148, %v1150
  %v1179 = vsel %vm1173, %v1150, %v1152
  %v1180 = vsel %vm1173, %v1152, %v1154
  %v1181 = vsel %vm1173, %v1154, %v1156
  %v1182 = vsel %vm1173, %v1156, %v1158
  %v1183 = vsel %vm1173, %v1158, %v1160
  %v1184 = vsel %vm1173, %v1160, %v1162
  %v1185 = vsel %vm1173, %v1162, %v1164
  %v1186 = vsel %vm1173, %v1164, %v1166
  %v1187 = vsel %vm1173, %v1166, %v1168
  %v1188 = vsel %vm1173, %v1168, %v1170
  %v1189 = vsel %vm1173, %v1170, %v1172
  %1190 = vrot.lane.b32.xlu0 %v27, 39
  %v1191 = vpop.permute.xlu0 %1190
  %1192 = vrot.lane.b32.xlu0 %v28, 39
  %v1193 = vpop.permute.xlu0 %1192
  %1194 = vrot.lane.b32.xlu0 %v29, 39
  %v1195 = vpop.permute.xlu0 %1194
  %1196 = vrot.lane.b32.xlu0 %v30, 39
  %v1197 = vpop.permute.xlu0 %1196
  %1198 = vrot.lane.b32.xlu0 %v31, 39
  %v1199 = vpop.permute.xlu0 %1198
  %1200 = vrot.lane.b32.xlu0 %v32, 39
  %v1201 = vpop.permute.xlu0 %1200
  %1202 = vrot.lane.b32.xlu0 %v33, 39
  %v1203 = vpop.permute.xlu0 %1202
  %1204 = vrot.lane.b32.xlu0 %v34, 39
  %v1205 = vpop.permute.xlu0 %1204
  %1206 = vrot.lane.b32.xlu0 %v35, 39
  %v1207 = vpop.permute.xlu0 %1206
  %1208 = vrot.lane.b32.xlu0 %v36, 39
  %v1209 = vpop.permute.xlu0 %1208
  %1210 = vrot.lane.b32.xlu0 %v37, 39
  %v1211 = vpop.permute.xlu0 %1210
  %1212 = vrot.lane.b32.xlu0 %v38, 39
  %v1213 = vpop.permute.xlu0 %1212
  %1214 = vrot.lane.b32.xlu0 %v39, 39
  %v1215 = vpop.permute.xlu0 %1214
  %1216 = vrot.lane.b32.xlu0 %v40, 39
  %v1217 = vpop.permute.xlu0 %1216
  %1218 = vrot.lane.b32.xlu0 %v41, 39
  %v1219 = vpop.permute.xlu0 %1218
  %1220 = vrot.lane.b32.xlu0 %v42, 39
  %v1221 = vpop.permute.xlu0 %1220
  %1222 = vrot.lane.b32.xlu0 %v43, 39
  %v1223 = vpop.permute.xlu0 %1222
  %vm1224 = vcmask 318464
  %v1225 = vsel %vm1224, %v1191, %v1193
  %v1226 = vsel %vm1224, %v1193, %v1195
  %v1227 = vsel %vm1224, %v1195, %v1197
  %v1228 = vsel %vm1224, %v1197, %v1199
  %v1229 = vsel %vm1224, %v1199, %v1201
  %v1230 = vsel %vm1224, %v1201, %v1203
  %v1231 = vsel %vm1224, %v1203, %v1205
  %v1232 = vsel %vm1224, %v1205, %v1207
  %v1233 = vsel %vm1224, %v1207, %v1209
  %v1234 = vsel %vm1224, %v1209, %v1211
  %v1235 = vsel %vm1224, %v1211, %v1213
  %v1236 = vsel %vm1224, %v1213, %v1215
  %v1237 = vsel %vm1224, %v1215, %v1217
  %v1238 = vsel %vm1224, %v1217, %v1219
  %v1239 = vsel %vm1224, %v1219, %v1221
  %v1240 = vsel %vm1224, %v1221, %v1223
  %1241 = vrot.lane.b32.xlu0 %v27, 38
  %v1242 = vpop.permute.xlu0 %1241
  %1243 = vrot.lane.b32.xlu0 %v28, 38
  %v1244 = vpop.permute.xlu0 %1243
  %1245 = vrot.lane.b32.xlu0 %v29, 38
  %v1246 = vpop.permute.xlu0 %1245
  %1247 = vrot.lane.b32.xlu0 %v30, 38
  %v1248 = vpop.permute.xlu0 %1247
  %1249 = vrot.lane.b32.xlu0 %v31, 38
  %v1250 = vpop.permute.xlu0 %1249
  %1251 = vrot.lane.b32.xlu0 %v32, 38
  %v1252 = vpop.permute.xlu0 %1251
  %1253 = vrot.lane.b32.xlu0 %v33, 38
  %v1254 = vpop.permute.xlu0 %1253
  %1255 = vrot.lane.b32.xlu0 %v34, 38
  %v1256 = vpop.permute.xlu0 %1255
  %1257 = vrot.lane.b32.xlu0 %v35, 38
  %v1258 = vpop.permute.xlu0 %1257
  %1259 = vrot.lane.b32.xlu0 %v36, 38
  %v1260 = vpop.permute.xlu0 %1259
  %1261 = vrot.lane.b32.xlu0 %v37, 38
  %v1262 = vpop.permute.xlu0 %1261
  %1263 = vrot.lane.b32.xlu0 %v38, 38
  %v1264 = vpop.permute.xlu0 %1263
  %1265 = vrot.lane.b32.xlu0 %v39, 38
  %v1266 = vpop.permute.xlu0 %1265
  %1267 = vrot.lane.b32.xlu0 %v40, 38
  %v1268 = vpop.permute.xlu0 %1267
  %1269 = vrot.lane.b32.xlu0 %v41, 38
  %v1270 = vpop.permute.xlu0 %1269
  %1271 = vrot.lane.b32.xlu0 %v42, 38
  %v1272 = vpop.permute.xlu0 %1271
  %1273 = vrot.lane.b32.xlu0 %v43, 38
  %v1274 = vpop.permute.xlu0 %1273
  %vm1275 = vcmask 310272
  %v1276 = vsel %vm1275, %v1242, %v1244
  %v1277 = vsel %vm1275, %v1244, %v1246
  %v1278 = vsel %vm1275, %v1246, %v1248
  %v1279 = vsel %vm1275, %v1248, %v1250
  %v1280 = vsel %vm1275, %v1250, %v1252
  %v1281 = vsel %vm1275, %v1252, %v1254
  %v1282 = vsel %vm1275, %v1254, %v1256
  %v1283 = vsel %vm1275, %v1256, %v1258
  %v1284 = vsel %vm1275, %v1258, %v1260
  %v1285 = vsel %vm1275, %v1260, %v1262
  %v1286 = vsel %vm1275, %v1262, %v1264
  %v1287 = vsel %vm1275, %v1264, %v1266
  %v1288 = vsel %vm1275, %v1266, %v1268
  %v1289 = vsel %vm1275, %v1268, %v1270
  %v1290 = vsel %vm1275, %v1270, %v1272
  %v1291 = vsel %vm1275, %v1272, %v1274
  %1292 = vrot.lane.b32.xlu0 %v27, 37
  %v1293 = vpop.permute.xlu0 %1292
  %1294 = vrot.lane.b32.xlu0 %v28, 37
  %v1295 = vpop.permute.xlu0 %1294
  %1296 = vrot.lane.b32.xlu0 %v29, 37
  %v1297 = vpop.permute.xlu0 %1296
  %1298 = vrot.lane.b32.xlu0 %v30, 37
  %v1299 = vpop.permute.xlu0 %1298
  %1300 = vrot.lane.b32.xlu0 %v31, 37
  %v1301 = vpop.permute.xlu0 %1300
  %1302 = vrot.lane.b32.xlu0 %v32, 37
  %v1303 = vpop.permute.xlu0 %1302
  %1304 = vrot.lane.b32.xlu0 %v33, 37
  %v1305 = vpop.permute.xlu0 %1304
  %1306 = vrot.lane.b32.xlu0 %v34, 37
  %v1307 = vpop.permute.xlu0 %1306
  %1308 = vrot.lane.b32.xlu0 %v35, 37
  %v1309 = vpop.permute.xlu0 %1308
  %1310 = vrot.lane.b32.xlu0 %v36, 37
  %v1311 = vpop.permute.xlu0 %1310
  %1312 = vrot.lane.b32.xlu0 %v37, 37
  %v1313 = vpop.permute.xlu0 %1312
  %1314 = vrot.lane.b32.xlu0 %v38, 37
  %v1315 = vpop.permute.xlu0 %1314
  %1316 = vrot.lane.b32.xlu0 %v39, 37
  %v1317 = vpop.permute.xlu0 %1316
  %1318 = vrot.lane.b32.xlu0 %v40, 37
  %v1319 = vpop.permute.xlu0 %1318
  %1320 = vrot.lane.b32.xlu0 %v41, 37
  %v1321 = vpop.permute.xlu0 %1320
  %1322 = vrot.lane.b32.xlu0 %v42, 37
  %v1323 = vpop.permute.xlu0 %1322
  %1324 = vrot.lane.b32.xlu0 %v43, 37
  %v1325 = vpop.permute.xlu0 %1324
  %vm1326 = vcmask 302080
  %v1327 = vsel %vm1326, %v1293, %v1295
  %v1328 = vsel %vm1326, %v1295, %v1297
  %v1329 = vsel %vm1326, %v1297, %v1299
  %v1330 = vsel %vm1326, %v1299, %v1301
  %v1331 = vsel %vm1326, %v1301, %v1303
  %v1332 = vsel %vm1326, %v1303, %v1305
  %v1333 = vsel %vm1326, %v1305, %v1307
  %v1334 = vsel %vm1326, %v1307, %v1309
  %v1335 = vsel %vm1326, %v1309, %v1311
  %v1336 = vsel %vm1326, %v1311, %v1313
  %v1337 = vsel %vm1326, %v1313, %v1315
  %v1338 = vsel %vm1326, %v1315, %v1317
  %v1339 = vsel %vm1326, %v1317, %v1319
  %v1340 = vsel %vm1326, %v1319, %v1321
  %v1341 = vsel %vm1326, %v1321, %v1323
  %v1342 = vsel %vm1326, %v1323, %v1325
  %1343 = vrot.lane.b32.xlu0 %v27, 29
  %v1344 = vpop.permute.xlu0 %1343
  %1345 = vrot.lane.b32.xlu0 %v28, 29
  %v1346 = vpop.permute.xlu0 %1345
  %1347 = vrot.lane.b32.xlu0 %v29, 29
  %v1348 = vpop.permute.xlu0 %1347
  %1349 = vrot.lane.b32.xlu0 %v30, 29
  %v1350 = vpop.permute.xlu0 %1349
  %1351 = vrot.lane.b32.xlu0 %v31, 29
  %v1352 = vpop.permute.xlu0 %1351
  %1353 = vrot.lane.b32.xlu0 %v32, 29
  %v1354 = vpop.permute.xlu0 %1353
  %1355 = vrot.lane.b32.xlu0 %v33, 29
  %v1356 = vpop.permute.xlu0 %1355
  %1357 = vrot.lane.b32.xlu0 %v34, 29
  %v1358 = vpop.permute.xlu0 %1357
  %1359 = vrot.lane.b32.xlu0 %v35, 29
  %v1360 = vpop.permute.xlu0 %1359
  %1361 = vrot.lane.b32.xlu0 %v36, 29
  %v1362 = vpop.permute.xlu0 %1361
  %1363 = vrot.lane.b32.xlu0 %v37, 29
  %v1364 = vpop.permute.xlu0 %1363
  %1365 = vrot.lane.b32.xlu0 %v38, 29
  %v1366 = vpop.permute.xlu0 %1365
  %1367 = vrot.lane.b32.xlu0 %v39, 29
  %v1368 = vpop.permute.xlu0 %1367
  %1369 = vrot.lane.b32.xlu0 %v40, 29
  %v1370 = vpop.permute.xlu0 %1369
  %1371 = vrot.lane.b32.xlu0 %v41, 29
  %v1372 = vpop.permute.xlu0 %1371
  %1373 = vrot.lane.b32.xlu0 %v42, 29
  %v1374 = vpop.permute.xlu0 %1373
  %1375 = vrot.lane.b32.xlu0 %v43, 29
  %v1376 = vpop.permute.xlu0 %1375
  %vm1377 = vcmask 236544
  %v1378 = vsel %vm1377, %v1344, %v1346
  %v1379 = vsel %vm1377, %v1346, %v1348
  %v1380 = vsel %vm1377, %v1348, %v1350
  %v1381 = vsel %vm1377, %v1350, %v1352
  %v1382 = vsel %vm1377, %v1352, %v1354
  %v1383 = vsel %vm1377, %v1354, %v1356
  %v1384 = vsel %vm1377, %v1356, %v1358
  %v1385 = vsel %vm1377, %v1358, %v1360
  %v1386 = vsel %vm1377, %v1360, %v1362
  %v1387 = vsel %vm1377, %v1362, %v1364
  %v1388 = vsel %vm1377, %v1364, %v1366
  %v1389 = vsel %vm1377, %v1366, %v1368
  %v1390 = vsel %vm1377, %v1368, %v1370
  %v1391 = vsel %vm1377, %v1370, %v1372
  %v1392 = vsel %vm1377, %v1372, %v1374
  %v1393 = vsel %vm1377, %v1374, %v1376
  %1394 = vrot.lane.b32.xlu0 %v43, 28
  %v1395 = vpop.permute.xlu0 %1394
  %v1396 = vsel %vm607, %v606, %v1395
  %1397 = vrot.lane.b32.xlu0 %v43, 27
  %v1398 = vpop.permute.xlu0 %1397
  %v1399 = vsel %vm674, %v673, %v1398
  %1400 = vrot.lane.b32.xlu0 %v27, 7
  %v1401 = vpop.permute.xlu0 %1400
  %1402 = vrot.lane.b32.xlu0 %v28, 7
  %v1403 = vpop.permute.xlu0 %1402
  %1404 = vrot.lane.b32.xlu0 %v29, 7
  %v1405 = vpop.permute.xlu0 %1404
  %1406 = vrot.lane.b32.xlu0 %v30, 7
  %v1407 = vpop.permute.xlu0 %1406
  %1408 = vrot.lane.b32.xlu0 %v31, 7
  %v1409 = vpop.permute.xlu0 %1408
  %1410 = vrot.lane.b32.xlu0 %v32, 7
  %v1411 = vpop.permute.xlu0 %1410
  %1412 = vrot.lane.b32.xlu0 %v33, 7
  %v1413 = vpop.permute.xlu0 %1412
  %1414 = vrot.lane.b32.xlu0 %v34, 7
  %v1415 = vpop.permute.xlu0 %1414
  %1416 = vrot.lane.b32.xlu0 %v35, 7
  %v1417 = vpop.permute.xlu0 %1416
  %1418 = vrot.lane.b32.xlu0 %v36, 7
  %v1419 = vpop.permute.xlu0 %1418
  %1420 = vrot.lane.b32.xlu0 %v37, 7
  %v1421 = vpop.permute.xlu0 %1420
  %1422 = vrot.lane.b32.xlu0 %v38, 7
  %v1423 = vpop.permute.xlu0 %1422
  %1424 = vrot.lane.b32.xlu0 %v39, 7
  %v1425 = vpop.permute.xlu0 %1424
  %1426 = vrot.lane.b32.xlu0 %v40, 7
  %v1427 = vpop.permute.xlu0 %1426
  %1428 = vrot.lane.b32.xlu0 %v41, 7
  %v1429 = vpop.permute.xlu0 %1428
  %1430 = vrot.lane.b32.xlu0 %v42, 7
  %v1431 = vpop.permute.xlu0 %1430
  %1432 = vrot.lane.b32.xlu0 %v94, 7
  %v1433 = vpop.permute.xlu0 %1432
  %1434 = vrot.lane.b32.xlu0 %v95, 7
  %v1435 = vpop.permute.xlu0 %1434
  %1436 = vrot.lane.b32.xlu0 %v96, 7
  %v1437 = vpop.permute.xlu0 %1436
  %1438 = vrot.lane.b32.xlu0 %v97, 7
  %v1439 = vpop.permute.xlu0 %1438
  %1440 = vrot.lane.b32.xlu0 %v98, 7
  %v1441 = vpop.permute.xlu0 %1440
  %1442 = vrot.lane.b32.xlu0 %v99, 7
  %v1443 = vpop.permute.xlu0 %1442
  %1444 = vrot.lane.b32.xlu0 %v100, 7
  %v1445 = vpop.permute.xlu0 %1444
  %1446 = vrot.lane.b32.xlu0 %v101, 7
  %v1447 = vpop.permute.xlu0 %1446
  %1448 = vrot.lane.b32.xlu0 %v102, 7
  %v1449 = vpop.permute.xlu0 %1448
  %1450 = vrot.lane.b32.xlu0 %v103, 7
  %v1451 = vpop.permute.xlu0 %1450
  %1452 = vrot.lane.b32.xlu0 %v104, 7
  %v1453 = vpop.permute.xlu0 %1452
  %1454 = vrot.lane.b32.xlu0 %v105, 7
  %v1455 = vpop.permute.xlu0 %1454
  %1456 = vrot.lane.b32.xlu0 %v106, 7
  %v1457 = vpop.permute.xlu0 %1456
  %1458 = vrot.lane.b32.xlu0 %v107, 7
  %v1459 = vpop.permute.xlu0 %1458
  %1460 = vrot.lane.b32.xlu0 %v1035, 7
  %v1461 = vpop.permute.xlu0 %1460
  %1462 = vrot.lane.b32.xlu0 %v1034, 7
  %v1463 = vpop.permute.xlu0 %1462
  %1464 = vrot.lane.b32.xlu0 %v1072, 7
  %v1465 = vpop.permute.xlu0 %1464
  %1466 = vrot.lane.b32.xlu0 %v1073, 7
  %v1467 = vpop.permute.xlu0 %1466
  %1468 = vrot.lane.b32.xlu0 %v1074, 7
  %v1469 = vpop.permute.xlu0 %1468
  %1470 = vrot.lane.b32.xlu0 %v1075, 7
  %v1471 = vpop.permute.xlu0 %1470
  %1472 = vrot.lane.b32.xlu0 %v1076, 7
  %v1473 = vpop.permute.xlu0 %1472
  %1474 = vrot.lane.b32.xlu0 %v1077, 7
  %v1475 = vpop.permute.xlu0 %1474
  %1476 = vrot.lane.b32.xlu0 %v1078, 7
  %v1477 = vpop.permute.xlu0 %1476
  %1478 = vrot.lane.b32.xlu0 %v1079, 7
  %v1479 = vpop.permute.xlu0 %1478
  %1480 = vrot.lane.b32.xlu0 %v1080, 7
  %v1481 = vpop.permute.xlu0 %1480
  %1482 = vrot.lane.b32.xlu0 %v1081, 7
  %v1483 = vpop.permute.xlu0 %1482
  %1484 = vrot.lane.b32.xlu0 %v1082, 7
  %v1485 = vpop.permute.xlu0 %1484
  %1486 = vrot.lane.b32.xlu0 %v1083, 7
  %v1487 = vpop.permute.xlu0 %1486
  %1488 = vrot.lane.b32.xlu0 %v1084, 7
  %v1489 = vpop.permute.xlu0 %1488
  %1490 = vrot.lane.b32.xlu0 %v1085, 7
  %v1491 = vpop.permute.xlu0 %1490
  %1492 = vrot.lane.b32.xlu0 %v1086, 7
  %v1493 = vpop.permute.xlu0 %1492
  %1494 = vrot.lane.b32.xlu0 %v1087, 7
  %v1495 = vpop.permute.xlu0 %1494
  %1496 = vrot.lane.b32.xlu0 %v1123, 7
  %v1497 = vpop.permute.xlu0 %1496
  %1498 = vrot.lane.b32.xlu0 %v1124, 7
  %v1499 = vpop.permute.xlu0 %1498
  %1500 = vrot.lane.b32.xlu0 %v1125, 7
  %v1501 = vpop.permute.xlu0 %1500
  %1502 = vrot.lane.b32.xlu0 %v1126, 7
  %v1503 = vpop.permute.xlu0 %1502
  %1504 = vrot.lane.b32.xlu0 %v1127, 7
  %v1505 = vpop.permute.xlu0 %1504
  %1506 = vrot.lane.b32.xlu0 %v1128, 7
  %v1507 = vpop.permute.xlu0 %1506
  %1508 = vrot.lane.b32.xlu0 %v1129, 7
  %v1509 = vpop.permute.xlu0 %1508
  %1510 = vrot.lane.b32.xlu0 %v1130, 7
  %v1511 = vpop.permute.xlu0 %1510
  %1512 = vrot.lane.b32.xlu0 %v1131, 7
  %v1513 = vpop.permute.xlu0 %1512
  %1514 = vrot.lane.b32.xlu0 %v1132, 7
  %v1515 = vpop.permute.xlu0 %1514
  %1516 = vrot.lane.b32.xlu0 %v1133, 7
  %v1517 = vpop.permute.xlu0 %1516
  %1518 = vrot.lane.b32.xlu0 %v1134, 7
  %v1519 = vpop.permute.xlu0 %1518
  %1520 = vrot.lane.b32.xlu0 %v1135, 7
  %v1521 = vpop.permute.xlu0 %1520
  %1522 = vrot.lane.b32.xlu0 %v1136, 7
  %v1523 = vpop.permute.xlu0 %1522
  %1524 = vrot.lane.b32.xlu0 %v1137, 7
  %v1525 = vpop.permute.xlu0 %1524
  %1526 = vrot.lane.b32.xlu0 %v1138, 7
  %v1527 = vpop.permute.xlu0 %1526
  %1528 = vrot.lane.b32.xlu0 %v1174, 7
  %v1529 = vpop.permute.xlu0 %1528
  %1530 = vrot.lane.b32.xlu0 %v1175, 7
  %v1531 = vpop.permute.xlu0 %1530
  %1532 = vrot.lane.b32.xlu0 %v1176, 7
  %v1533 = vpop.permute.xlu0 %1532
  %1534 = vrot.lane.b32.xlu0 %v1177, 7
  %v1535 = vpop.permute.xlu0 %1534
  %1536 = vrot.lane.b32.xlu0 %v1178, 7
  %v1537 = vpop.permute.xlu0 %1536
  %1538 = vrot.lane.b32.xlu0 %v1179, 7
  %v1539 = vpop.permute.xlu0 %1538
  %1540 = vrot.lane.b32.xlu0 %v1180, 7
  %v1541 = vpop.permute.xlu0 %1540
  %1542 = vrot.lane.b32.xlu0 %v1181, 7
  %v1543 = vpop.permute.xlu0 %1542
  %1544 = vrot.lane.b32.xlu0 %v1182, 7
  %v1545 = vpop.permute.xlu0 %1544
  %1546 = vrot.lane.b32.xlu0 %v1183, 7
  %v1547 = vpop.permute.xlu0 %1546
  %1548 = vrot.lane.b32.xlu0 %v1184, 7
  %v1549 = vpop.permute.xlu0 %1548
  %1550 = vrot.lane.b32.xlu0 %v1185, 7
  %v1551 = vpop.permute.xlu0 %1550
  %1552 = vrot.lane.b32.xlu0 %v1186, 7
  %v1553 = vpop.permute.xlu0 %1552
  %1554 = vrot.lane.b32.xlu0 %v1187, 7
  %v1555 = vpop.permute.xlu0 %1554
  %1556 = vrot.lane.b32.xlu0 %v1188, 7
  %v1557 = vpop.permute.xlu0 %1556
  %1558 = vrot.lane.b32.xlu0 %v1189, 7
  %v1559 = vpop.permute.xlu0 %1558
  %1560 = vrot.lane.b32.xlu0 %v1225, 7
  %v1561 = vpop.permute.xlu0 %1560
  %1562 = vrot.lane.b32.xlu0 %v1226, 7
  %v1563 = vpop.permute.xlu0 %1562
  %1564 = vrot.lane.b32.xlu0 %v1227, 7
  %v1565 = vpop.permute.xlu0 %1564
  %1566 = vrot.lane.b32.xlu0 %v1228, 7
  %v1567 = vpop.permute.xlu0 %1566
  %1568 = vrot.lane.b32.xlu0 %v1229, 7
  %v1569 = vpop.permute.xlu0 %1568
  %1570 = vrot.lane.b32.xlu0 %v1230, 7
  %v1571 = vpop.permute.xlu0 %1570
  %1572 = vrot.lane.b32.xlu0 %v1231, 7
  %v1573 = vpop.permute.xlu0 %1572
  %1574 = vrot.lane.b32.xlu0 %v1232, 7
  %v1575 = vpop.permute.xlu0 %1574
  %1576 = vrot.lane.b32.xlu0 %v1233, 7
  %v1577 = vpop.permute.xlu0 %1576
  %1578 = vrot.lane.b32.xlu0 %v1234, 7
  %v1579 = vpop.permute.xlu0 %1578
  %1580 = vrot.lane.b32.xlu0 %v1235, 7
  %v1581 = vpop.permute.xlu0 %1580
  %1582 = vrot.lane.b32.xlu0 %v1236, 7
  %v1583 = vpop.permute.xlu0 %1582
  %1584 = vrot.lane.b32.xlu0 %v1237, 7
  %v1585 = vpop.permute.xlu0 %1584
  %1586 = vrot.lane.b32.xlu0 %v1238, 7
  %v1587 = vpop.permute.xlu0 %1586
  %1588 = vrot.lane.b32.xlu0 %v1239, 7
  %v1589 = vpop.permute.xlu0 %1588
  %1590 = vrot.lane.b32.xlu0 %v1240, 7
  %v1591 = vpop.permute.xlu0 %1590
  %1592 = vrot.lane.b32.xlu0 %v1276, 7
  %v1593 = vpop.permute.xlu0 %1592
  %1594 = vrot.lane.b32.xlu0 %v1277, 7
  %v1595 = vpop.permute.xlu0 %1594
  %1596 = vrot.lane.b32.xlu0 %v1278, 7
  %v1597 = vpop.permute.xlu0 %1596
  %1598 = vrot.lane.b32.xlu0 %v1279, 7
  %v1599 = vpop.permute.xlu0 %1598
  %1600 = vrot.lane.b32.xlu0 %v1280, 7
  %v1601 = vpop.permute.xlu0 %1600
  %1602 = vrot.lane.b32.xlu0 %v1281, 7
  %v1603 = vpop.permute.xlu0 %1602
  %1604 = vrot.lane.b32.xlu0 %v1282, 7
  %v1605 = vpop.permute.xlu0 %1604
  %1606 = vrot.lane.b32.xlu0 %v1283, 7
  %v1607 = vpop.permute.xlu0 %1606
  %1608 = vrot.lane.b32.xlu0 %v1284, 7
  %v1609 = vpop.permute.xlu0 %1608
  %1610 = vrot.lane.b32.xlu0 %v1285, 7
  %v1611 = vpop.permute.xlu0 %1610
  %1612 = vrot.lane.b32.xlu0 %v1286, 7
  %v1613 = vpop.permute.xlu0 %1612
  %1614 = vrot.lane.b32.xlu0 %v1287, 7
  %v1615 = vpop.permute.xlu0 %1614
  %1616 = vrot.lane.b32.xlu0 %v1288, 7
  %v1617 = vpop.permute.xlu0 %1616
  %1618 = vrot.lane.b32.xlu0 %v1289, 7
  %v1619 = vpop.permute.xlu0 %1618
  %1620 = vrot.lane.b32.xlu0 %v1290, 7
  %v1621 = vpop.permute.xlu0 %1620
  %1622 = vrot.lane.b32.xlu0 %v1291, 7
  %v1623 = vpop.permute.xlu0 %1622
  %1624 = vrot.lane.b32.xlu0 %v1327, 7
  %v1625 = vpop.permute.xlu0 %1624
  %1626 = vrot.lane.b32.xlu0 %v1328, 7
  %v1627 = vpop.permute.xlu0 %1626
  %1628 = vrot.lane.b32.xlu0 %v1329, 7
  %v1629 = vpop.permute.xlu0 %1628
  %1630 = vrot.lane.b32.xlu0 %v1330, 7
  %v1631 = vpop.permute.xlu0 %1630
  %1632 = vrot.lane.b32.xlu0 %v1331, 7
  %v1633 = vpop.permute.xlu0 %1632
  %1634 = vrot.lane.b32.xlu0 %v1332, 7
  %v1635 = vpop.permute.xlu0 %1634
  %1636 = vrot.lane.b32.xlu0 %v1333, 7
  %v1637 = vpop.permute.xlu0 %1636
  %1638 = vrot.lane.b32.xlu0 %v1334, 7
  %v1639 = vpop.permute.xlu0 %1638
  %1640 = vrot.lane.b32.xlu0 %v1335, 7
  %v1641 = vpop.permute.xlu0 %1640
  %1642 = vrot.lane.b32.xlu0 %v1336, 7
  %v1643 = vpop.permute.xlu0 %1642
  %1644 = vrot.lane.b32.xlu0 %v1337, 7
  %v1645 = vpop.permute.xlu0 %1644
  %1646 = vrot.lane.b32.xlu0 %v1338, 7
  %v1647 = vpop.permute.xlu0 %1646
  %1648 = vrot.lane.b32.xlu0 %v1339, 7
  %v1649 = vpop.permute.xlu0 %1648
  %1650 = vrot.lane.b32.xlu0 %v1340, 7
  %v1651 = vpop.permute.xlu0 %1650
  %1652 = vrot.lane.b32.xlu0 %v1341, 7
  %v1653 = vpop.permute.xlu0 %1652
  %1654 = vrot.lane.b32.xlu0 %v1342, 7
  %v1655 = vpop.permute.xlu0 %1654
  %1656 = vrot.lane.b32.xlu0 %v1378, 7
  %v1657 = vpop.permute.xlu0 %1656
  %1658 = vrot.lane.b32.xlu0 %v1379, 7
  %v1659 = vpop.permute.xlu0 %1658
  %1660 = vrot.lane.b32.xlu0 %v1380, 7
  %v1661 = vpop.permute.xlu0 %1660
  %1662 = vrot.lane.b32.xlu0 %v1381, 7
  %v1663 = vpop.permute.xlu0 %1662
  %1664 = vrot.lane.b32.xlu0 %v1382, 7
  %v1665 = vpop.permute.xlu0 %1664
  %1666 = vrot.lane.b32.xlu0 %v1383, 7
  %v1667 = vpop.permute.xlu0 %1666
  %1668 = vrot.lane.b32.xlu0 %v1384, 7
  %v1669 = vpop.permute.xlu0 %1668
  %1670 = vrot.lane.b32.xlu0 %v1385, 7
  %v1671 = vpop.permute.xlu0 %1670
  %1672 = vrot.lane.b32.xlu0 %v1386, 7
  %v1673 = vpop.permute.xlu0 %1672
  %1674 = vrot.lane.b32.xlu0 %v1387, 7
  %v1675 = vpop.permute.xlu0 %1674
  %1676 = vrot.lane.b32.xlu0 %v1388, 7
  %v1677 = vpop.permute.xlu0 %1676
  %1678 = vrot.lane.b32.xlu0 %v1389, 7
  %v1679 = vpop.permute.xlu0 %1678
  %1680 = vrot.lane.b32.xlu0 %v1390, 7
  %v1681 = vpop.permute.xlu0 %1680
  %1682 = vrot.lane.b32.xlu0 %v1391, 7
  %v1683 = vpop.permute.xlu0 %1682
  %1684 = vrot.lane.b32.xlu0 %v1392, 7
  %v1685 = vpop.permute.xlu0 %1684
  %1686 = vrot.lane.b32.xlu0 %v1393, 7
  %v1687 = vpop.permute.xlu0 %1686
  %1688 = vrot.lane.b32.xlu0 %v609, 7
  %v1689 = vpop.permute.xlu0 %1688
  %1690 = vrot.lane.b32.xlu0 %v610, 7
  %v1691 = vpop.permute.xlu0 %1690
  %1692 = vrot.lane.b32.xlu0 %v611, 7
  %v1693 = vpop.permute.xlu0 %1692
  %1694 = vrot.lane.b32.xlu0 %v612, 7
  %v1695 = vpop.permute.xlu0 %1694
  %1696 = vrot.lane.b32.xlu0 %v613, 7
  %v1697 = vpop.permute.xlu0 %1696
  %1698 = vrot.lane.b32.xlu0 %v614, 7
  %v1699 = vpop.permute.xlu0 %1698
  %1700 = vrot.lane.b32.xlu0 %v615, 7
  %v1701 = vpop.permute.xlu0 %1700
  %1702 = vrot.lane.b32.xlu0 %v616, 7
  %v1703 = vpop.permute.xlu0 %1702
  %1704 = vrot.lane.b32.xlu0 %v617, 7
  %v1705 = vpop.permute.xlu0 %1704
  %1706 = vrot.lane.b32.xlu0 %v618, 7
  %v1707 = vpop.permute.xlu0 %1706
  %1708 = vrot.lane.b32.xlu0 %v619, 7
  %v1709 = vpop.permute.xlu0 %1708
  %1710 = vrot.lane.b32.xlu0 %v620, 7
  %v1711 = vpop.permute.xlu0 %1710
  %1712 = vrot.lane.b32.xlu0 %v621, 7
  %v1713 = vpop.permute.xlu0 %1712
  %1714 = vrot.lane.b32.xlu0 %v622, 7
  %v1715 = vpop.permute.xlu0 %1714
  %1716 = vrot.lane.b32.xlu0 %v623, 7
  %v1717 = vpop.permute.xlu0 %1716
  %1718 = vrot.lane.b32.xlu0 %v1396, 7
  %v1719 = vpop.permute.xlu0 %1718
  %1720 = vrot.lane.b32.xlu0 %v676, 7
  %v1721 = vpop.permute.xlu0 %1720
  %1722 = vrot.lane.b32.xlu0 %v677, 7
  %v1723 = vpop.permute.xlu0 %1722
  %1724 = vrot.lane.b32.xlu0 %v678, 7
  %v1725 = vpop.permute.xlu0 %1724
  %1726 = vrot.lane.b32.xlu0 %v679, 7
  %v1727 = vpop.permute.xlu0 %1726
  %1728 = vrot.lane.b32.xlu0 %v680, 7
  %v1729 = vpop.permute.xlu0 %1728
  %1730 = vrot.lane.b32.xlu0 %v681, 7
  %v1731 = vpop.permute.xlu0 %1730
  %1732 = vrot.lane.b32.xlu0 %v682, 7
  %v1733 = vpop.permute.xlu0 %1732
  %1734 = vrot.lane.b32.xlu0 %v683, 7
  %v1735 = vpop.permute.xlu0 %1734
  %1736 = vrot.lane.b32.xlu0 %v684, 7
  %v1737 = vpop.permute.xlu0 %1736
  %1738 = vrot.lane.b32.xlu0 %v685, 7
  %v1739 = vpop.permute.xlu0 %1738
  %1740 = vrot.lane.b32.xlu0 %v686, 7
  %v1741 = vpop.permute.xlu0 %1740
  %1742 = vrot.lane.b32.xlu0 %v687, 7
  %v1743 = vpop.permute.xlu0 %1742
  %1744 = vrot.lane.b32.xlu0 %v688, 7
  %v1745 = vpop.permute.xlu0 %1744
  %1746 = vrot.lane.b32.xlu0 %v689, 7
  %v1747 = vpop.permute.xlu0 %1746
  %1748 = vrot.lane.b32.xlu0 %v690, 7
  %v1749 = vpop.permute.xlu0 %1748
  %1750 = vrot.lane.b32.xlu0 %v1399, 7
  %v1751 = vpop.permute.xlu0 %1750
  %vm1752 = vcmask 56320
  %v1753 = vsel %vm1752, %v1401, %v1403
  %v1754 = vsel %vm1752, %v1403, %v1405
  %v1755 = vsel %vm1752, %v1405, %v1407
  %v1756 = vsel %vm1752, %v1407, %v1409
  %v1757 = vsel %vm1752, %v1409, %v1411
  %v1758 = vsel %vm1752, %v1411, %v1413
  %v1759 = vsel %vm1752, %v1413, %v1415
  %v1760 = vsel %vm1752, %v1415, %v1417
  %v1761 = vsel %vm1752, %v1417, %v1419
  %v1762 = vsel %vm1752, %v1419, %v1421
  %v1763 = vsel %vm1752, %v1421, %v1423
  %v1764 = vsel %vm1752, %v1423, %v1425
  %v1765 = vsel %vm1752, %v1425, %v1427
  %v1766 = vsel %vm1752, %v1427, %v1429
  %v1767 = vsel %vm1752, %v1429, %v1431
  %v1768 = vsel %vm1752, %v1433, %v1435
  %v1769 = vsel %vm1752, %v1435, %v1437
  %v1770 = vsel %vm1752, %v1437, %v1439
  %v1771 = vsel %vm1752, %v1439, %v1441
  %v1772 = vsel %vm1752, %v1441, %v1443
  %v1773 = vsel %vm1752, %v1443, %v1445
  %v1774 = vsel %vm1752, %v1445, %v1447
  %v1775 = vsel %vm1752, %v1447, %v1449
  %v1776 = vsel %vm1752, %v1449, %v1451
  %v1777 = vsel %vm1752, %v1451, %v1453
  %v1778 = vsel %vm1752, %v1453, %v1455
  %v1779 = vsel %vm1752, %v1455, %v1457
  %v1780 = vsel %vm1752, %v1457, %v1459
  %v1781 = vsel %vm1752, %v1459, %v1461
  %v1782 = vsel %vm1752, %v1461, %v1463
  %v1783 = vsel %vm1752, %v1465, %v1467
  %v1784 = vsel %vm1752, %v1467, %v1469
  %v1785 = vsel %vm1752, %v1469, %v1471
  %v1786 = vsel %vm1752, %v1471, %v1473
  %v1787 = vsel %vm1752, %v1473, %v1475
  %v1788 = vsel %vm1752, %v1475, %v1477
  %v1789 = vsel %vm1752, %v1477, %v1479
  %v1790 = vsel %vm1752, %v1479, %v1481
  %v1791 = vsel %vm1752, %v1481, %v1483
  %v1792 = vsel %vm1752, %v1483, %v1485
  %v1793 = vsel %vm1752, %v1485, %v1487
  %v1794 = vsel %vm1752, %v1487, %v1489
  %v1795 = vsel %vm1752, %v1489, %v1491
  %v1796 = vsel %vm1752, %v1491, %v1493
  %v1797 = vsel %vm1752, %v1493, %v1495
  %v1798 = vsel %vm1752, %v1497, %v1499
  %v1799 = vsel %vm1752, %v1499, %v1501
  %v1800 = vsel %vm1752, %v1501, %v1503
  %v1801 = vsel %vm1752, %v1503, %v1505
  %v1802 = vsel %vm1752, %v1505, %v1507
  %v1803 = vsel %vm1752, %v1507, %v1509
  %v1804 = vsel %vm1752, %v1509, %v1511
  %v1805 = vsel %vm1752, %v1511, %v1513
  %v1806 = vsel %vm1752, %v1513, %v1515
  %v1807 = vsel %vm1752, %v1515, %v1517
  %v1808 = vsel %vm1752, %v1517, %v1519
  %v1809 = vsel %vm1752, %v1519, %v1521
  %v1810 = vsel %vm1752, %v1521, %v1523
  %v1811 = vsel %vm1752, %v1523, %v1525
  %v1812 = vsel %vm1752, %v1525, %v1527
  %v1813 = vsel %vm1752, %v1529, %v1531
  %v1814 = vsel %vm1752, %v1531, %v1533
  %v1815 = vsel %vm1752, %v1533, %v1535
  %v1816 = vsel %vm1752, %v1535, %v1537
  %v1817 = vsel %vm1752, %v1537, %v1539
  %v1818 = vsel %vm1752, %v1539, %v1541
  %v1819 = vsel %vm1752, %v1541, %v1543
  %v1820 = vsel %vm1752, %v1543, %v1545
  %v1821 = vsel %vm1752, %v1545, %v1547
  %v1822 = vsel %vm1752, %v1547, %v1549
  %v1823 = vsel %vm1752, %v1549, %v1551
  %v1824 = vsel %vm1752, %v1551, %v1553
  %v1825 = vsel %vm1752, %v1553, %v1555
  %v1826 = vsel %vm1752, %v1555, %v1557
  %v1827 = vsel %vm1752, %v1557, %v1559
  %v1828 = vsel %vm1752, %v1561, %v1563
  %v1829 = vsel %vm1752, %v1563, %v1565
  %v1830 = vsel %vm1752, %v1565, %v1567
  %v1831 = vsel %vm1752, %v1567, %v1569
  %v1832 = vsel %vm1752, %v1569, %v1571
  %v1833 = vsel %vm1752, %v1571, %v1573
  %v1834 = vsel %vm1752, %v1573, %v1575
  %v1835 = vsel %vm1752, %v1575, %v1577
  %v1836 = vsel %vm1752, %v1577, %v1579
  %v1837 = vsel %vm1752, %v1579, %v1581
  %v1838 = vsel %vm1752, %v1581, %v1583
  %v1839 = vsel %vm1752, %v1583, %v1585
  %v1840 = vsel %vm1752, %v1585, %v1587
  %v1841 = vsel %vm1752, %v1587, %v1589
  %v1842 = vsel %vm1752, %v1589, %v1591
  %v1843 = vsel %vm1752, %v1593, %v1595
  %v1844 = vsel %vm1752, %v1595, %v1597
  %v1845 = vsel %vm1752, %v1597, %v1599
  %v1846 = vsel %vm1752, %v1599, %v1601
  %v1847 = vsel %vm1752, %v1601, %v1603
  %v1848 = vsel %vm1752, %v1603, %v1605
  %v1849 = vsel %vm1752, %v1605, %v1607
  %v1850 = vsel %vm1752, %v1607, %v1609
  %v1851 = vsel %vm1752, %v1609, %v1611
  %v1852 = vsel %vm1752, %v1611, %v1613
  %v1853 = vsel %vm1752, %v1613, %v1615
  %v1854 = vsel %vm1752, %v1615, %v1617
  %v1855 = vsel %vm1752, %v1617, %v1619
  %v1856 = vsel %vm1752, %v1619, %v1621
  %v1857 = vsel %vm1752, %v1621, %v1623
  %v1858 = vsel %vm1752, %v1625, %v1627
  %v1859 = vsel %vm1752, %v1627, %v1629
  %v1860 = vsel %vm1752, %v1629, %v1631
  %v1861 = vsel %vm1752, %v1631, %v1633
  %v1862 = vsel %vm1752, %v1633, %v1635
  %v1863 = vsel %vm1752, %v1635, %v1637
  %v1864 = vsel %vm1752, %v1637, %v1639
  %v1865 = vsel %vm1752, %v1639, %v1641
  %v1866 = vsel %vm1752, %v1641, %v1643
  %v1867 = vsel %vm1752, %v1643, %v1645
  %v1868 = vsel %vm1752, %v1645, %v1647
  %v1869 = vsel %vm1752, %v1647, %v1649
  %v1870 = vsel %vm1752, %v1649, %v1651
  %v1871 = vsel %vm1752, %v1651, %v1653
  %v1872 = vsel %vm1752, %v1653, %v1655
  %v1873 = vsel %vm1752, %v1657, %v1659
  %v1874 = vsel %vm1752, %v1659, %v1661
  %v1875 = vsel %vm1752, %v1661, %v1663
  %v1876 = vsel %vm1752, %v1663, %v1665
  %v1877 = vsel %vm1752, %v1665, %v1667
  %v1878 = vsel %vm1752, %v1667, %v1669
  %v1879 = vsel %vm1752, %v1669, %v1671
  %v1880 = vsel %vm1752, %v1671, %v1673
  %v1881 = vsel %vm1752, %v1673, %v1675
  %v1882 = vsel %vm1752, %v1675, %v1677
  %v1883 = vsel %vm1752, %v1677, %v1679
  %v1884 = vsel %vm1752, %v1679, %v1681
  %v1885 = vsel %vm1752, %v1681, %v1683
  %v1886 = vsel %vm1752, %v1683, %v1685
  %v1887 = vsel %vm1752, %v1685, %v1687
  %v1888 = vsel %vm1752, %v1689, %v1691
  %v1889 = vsel %vm1752, %v1691, %v1693
  %v1890 = vsel %vm1752, %v1693, %v1695
  %v1891 = vsel %vm1752, %v1695, %v1697
  %v1892 = vsel %vm1752, %v1697, %v1699
  %v1893 = vsel %vm1752, %v1699, %v1701
  %v1894 = vsel %vm1752, %v1701, %v1703
  %v1895 = vsel %vm1752, %v1703, %v1705
  %v1896 = vsel %vm1752, %v1705, %v1707
  %v1897 = vsel %vm1752, %v1707, %v1709
  %v1898 = vsel %vm1752, %v1709, %v1711
  %v1899 = vsel %vm1752, %v1711, %v1713
  %v1900 = vsel %vm1752, %v1713, %v1715
  %v1901 = vsel %vm1752, %v1715, %v1717
  %v1902 = vsel %vm1752, %v1717, %v1719
  %v1903 = vsel %vm1752, %v1721, %v1723
  %v1904 = vsel %vm1752, %v1723, %v1725
  %v1905 = vsel %vm1752, %v1725, %v1727
  %v1906 = vsel %vm1752, %v1727, %v1729
  %v1907 = vsel %vm1752, %v1729, %v1731
  %v1908 = vsel %vm1752, %v1731, %v1733
  %v1909 = vsel %vm1752, %v1733, %v1735
  %v1910 = vsel %vm1752, %v1735, %v1737
  %v1911 = vsel %vm1752, %v1737, %v1739
  %v1912 = vsel %vm1752, %v1739, %v1741
  %v1913 = vsel %vm1752, %v1741, %v1743
  %v1914 = vsel %vm1752, %v1743, %v1745
  %v1915 = vsel %vm1752, %v1745, %v1747
  %v1916 = vsel %vm1752, %v1747, %v1749
  %v1917 = vsel %vm1752, %v1749, %v1751
  %v2094 = vpack.c.bf16 %v93, %v26
  %v2095 = vpack.c.bf16 %v94, %v27
  %v2096 = vpack.c.bf16 %v95, %v28
  %v2097 = vpack.c.bf16 %v96, %v29
  %v2098 = vpack.c.bf16 %v97, %v30
  %v2099 = vpack.c.bf16 %v98, %v31
  %v2100 = vpack.c.bf16 %v99, %v32
  %v2101 = vpack.c.bf16 %v100, %v33
  %v2102 = vpack.c.bf16 %v101, %v34
  %v2103 = vpack.c.bf16 %v102, %v35
  %v2104 = vpack.c.bf16 %v103, %v36
  %v2105 = vpack.c.bf16 %v104, %v37
  %v2106 = vpack.c.bf16 %v105, %v38
  %v2107 = vpack.c.bf16 %v106, %v39
  %v2108 = vpack.c.bf16 %v107, %v40
  %v2109 = vpack.c.bf16 %v91, %v41
  %v2110 = vpack.c.bf16 %v221, %v157
  %v2111 = vpack.c.bf16 %v222, %v158
  %v2112 = vpack.c.bf16 %v223, %v159
  %v2113 = vpack.c.bf16 %v224, %v160
  %v2114 = vpack.c.bf16 %v225, %v161
  %v2115 = vpack.c.bf16 %v226, %v162
  %v2116 = vpack.c.bf16 %v227, %v163
  %v2117 = vpack.c.bf16 %v228, %v164
  %v2118 = vpack.c.bf16 %v229, %v165
  %v2119 = vpack.c.bf16 %v230, %v166
  %v2120 = vpack.c.bf16 %v231, %v167
  %v2121 = vpack.c.bf16 %v232, %v168
  %v2122 = vpack.c.bf16 %v233, %v169
  %v2123 = vpack.c.bf16 %v234, %v170
  %v2124 = vpack.c.bf16 %v235, %v171
  %v2125 = vpack.c.bf16 %v219, %v155
  %v2126 = vpack.c.bf16 %v349, %v285
  %v2127 = vpack.c.bf16 %v350, %v286
  %v2128 = vpack.c.bf16 %v351, %v287
  %v2129 = vpack.c.bf16 %v352, %v288
  %v2130 = vpack.c.bf16 %v353, %v289
  %v2131 = vpack.c.bf16 %v354, %v290
  %v2132 = vpack.c.bf16 %v355, %v291
  %v2133 = vpack.c.bf16 %v356, %v292
  %v2134 = vpack.c.bf16 %v357, %v293
  %v2135 = vpack.c.bf16 %v358, %v294
  %v2136 = vpack.c.bf16 %v359, %v295
  %v2137 = vpack.c.bf16 %v360, %v296
  %v2138 = vpack.c.bf16 %v361, %v297
  %v2139 = vpack.c.bf16 %v362, %v298
  %v2140 = vpack.c.bf16 %v363, %v299
  %v2141 = vpack.c.bf16 %v347, %v283
  %v2142 = vpack.c.bf16 %v477, %v413
  %v2143 = vpack.c.bf16 %v478, %v414
  %v2144 = vpack.c.bf16 %v479, %v415
  %v2145 = vpack.c.bf16 %v480, %v416
  %v2146 = vpack.c.bf16 %v481, %v417
  %v2147 = vpack.c.bf16 %v482, %v418
  %v2148 = vpack.c.bf16 %v483, %v419
  %v2149 = vpack.c.bf16 %v484, %v420
  %v2150 = vpack.c.bf16 %v485, %v421
  %v2151 = vpack.c.bf16 %v486, %v422
  %v2152 = vpack.c.bf16 %v487, %v423
  %v2153 = vpack.c.bf16 %v488, %v424
  %v2154 = vpack.c.bf16 %v489, %v425
  %v2155 = vpack.c.bf16 %v490, %v426
  %v2156 = vpack.c.bf16 %v491, %v427
  %v2157 = vpack.c.bf16 %v475, %v411
  %v2158 = vpack.c.bf16 %v608, %v541
  %v2159 = vpack.c.bf16 %v609, %v542
  %v2160 = vpack.c.bf16 %v610, %v543
  %v2161 = vpack.c.bf16 %v611, %v544
  %v2162 = vpack.c.bf16 %v612, %v545
  %v2163 = vpack.c.bf16 %v613, %v546
  %v2164 = vpack.c.bf16 %v614, %v547
  %v2165 = vpack.c.bf16 %v615, %v548
  %v2166 = vpack.c.bf16 %v616, %v549
  %v2167 = vpack.c.bf16 %v617, %v550
  %v2168 = vpack.c.bf16 %v618, %v551
  %v2169 = vpack.c.bf16 %v619, %v552
  %v2170 = vpack.c.bf16 %v620, %v553
  %v2171 = vpack.c.bf16 %v621, %v554
  %v2172 = vpack.c.bf16 %v622, %v555
  %v2173 = vpack.c.bf16 %v623, %v539
  %v2174 = vpack.c.bf16 %v742, %v675
  %v2175 = vpack.c.bf16 %v743, %v676
  %v2176 = vpack.c.bf16 %v744, %v677
  %v2177 = vpack.c.bf16 %v745, %v678
  %v2178 = vpack.c.bf16 %v746, %v679
  %v2179 = vpack.c.bf16 %v747, %v680
  %v2180 = vpack.c.bf16 %v748, %v681
  %v2181 = vpack.c.bf16 %v749, %v682
  %v2182 = vpack.c.bf16 %v750, %v683
  %v2183 = vpack.c.bf16 %v751, %v684
  %v2184 = vpack.c.bf16 %v752, %v685
  %v2185 = vpack.c.bf16 %v753, %v686
  %v2186 = vpack.c.bf16 %v754, %v687
  %v2187 = vpack.c.bf16 %v755, %v688
  %v2188 = vpack.c.bf16 %v756, %v689
  %v2189 = vpack.c.bf16 %v757, %v690
  %v2190 = vpack.c.bf16 %v842, %v809
  %v2191 = vpack.c.bf16 %v874, %v810
  %v2192 = vpack.c.bf16 %v875, %v811
  %v2193 = vpack.c.bf16 %v876, %v812
  %v2194 = vpack.c.bf16 %v877, %v813
  %v2195 = vpack.c.bf16 %v878, %v814
  %v2196 = vpack.c.bf16 %v879, %v815
  %v2197 = vpack.c.bf16 %v880, %v816
  %v2198 = vpack.c.bf16 %v881, %v817
  %v2199 = vpack.c.bf16 %v882, %v818
  %v2200 = vpack.c.bf16 %v883, %v819
  %v2201 = vpack.c.bf16 %v884, %v820
  %v2202 = vpack.c.bf16 %v885, %v821
  %v2203 = vpack.c.bf16 %v886, %v822
  %v2204 = vpack.c.bf16 %v887, %v823
  %v2205 = vpack.c.bf16 %v888, %v824
  %v2206 = vpack.c.bf16 %v970, %v906
  %v2207 = vpack.c.bf16 %v1002, %v938
  %v2208 = vpack.c.bf16 %v1003, %v939
  %v2209 = vpack.c.bf16 %v1004, %v940
  %v2210 = vpack.c.bf16 %v1005, %v941
  %v2211 = vpack.c.bf16 %v1006, %v942
  %v2212 = vpack.c.bf16 %v1007, %v943
  %v2213 = vpack.c.bf16 %v1008, %v944
  %v2214 = vpack.c.bf16 %v1009, %v945
  %v2215 = vpack.c.bf16 %v1010, %v946
  %v2216 = vpack.c.bf16 %v1011, %v947
  %v2217 = vpack.c.bf16 %v1012, %v948
  %v2218 = vpack.c.bf16 %v1013, %v949
  %v2219 = vpack.c.bf16 %v1014, %v950
  %v2220 = vpack.c.bf16 %v1015, %v951
  %v2221 = vpack.c.bf16 %v1016, %v952
  %v2222 = vpack.c.bf16 %v1433, %v1401
  %v2223 = vpack.c.bf16 %v1768, %v1753
  %v2224 = vpack.c.bf16 %v1769, %v1754
  %v2225 = vpack.c.bf16 %v1770, %v1755
  %v2226 = vpack.c.bf16 %v1771, %v1756
  %v2227 = vpack.c.bf16 %v1772, %v1757
  %v2228 = vpack.c.bf16 %v1773, %v1758
  %v2229 = vpack.c.bf16 %v1774, %v1759
  %v2230 = vpack.c.bf16 %v1775, %v1760
  %v2231 = vpack.c.bf16 %v1776, %v1761
  %v2232 = vpack.c.bf16 %v1777, %v1762
  %v2233 = vpack.c.bf16 %v1778, %v1763
  %v2234 = vpack.c.bf16 %v1779, %v1764
  %v2235 = vpack.c.bf16 %v1780, %v1765
  %v2236 = vpack.c.bf16 %v1781, %v1766
  %v2237 = vpack.c.bf16 %v1782, %v1767
  %v2238 = vpack.c.bf16 %v1497, %v1465
  %v2239 = vpack.c.bf16 %v1798, %v1783
  %v2240 = vpack.c.bf16 %v1799, %v1784
  %v2241 = vpack.c.bf16 %v1800, %v1785
  %v2242 = vpack.c.bf16 %v1801, %v1786
  %v2243 = vpack.c.bf16 %v1802, %v1787
  %v2244 = vpack.c.bf16 %v1803, %v1788
  %v2245 = vpack.c.bf16 %v1804, %v1789
  %v2246 = vpack.c.bf16 %v1805, %v1790
  %v2247 = vpack.c.bf16 %v1806, %v1791
  %v2248 = vpack.c.bf16 %v1807, %v1792
  %v2249 = vpack.c.bf16 %v1808, %v1793
  %v2250 = vpack.c.bf16 %v1809, %v1794
  %v2251 = vpack.c.bf16 %v1810, %v1795
  %v2252 = vpack.c.bf16 %v1811, %v1796
  %v2253 = vpack.c.bf16 %v1812, %v1797
  %v2254 = vpack.c.bf16 %v1561, %v1529
  %v2255 = vpack.c.bf16 %v1828, %v1813
  %v2256 = vpack.c.bf16 %v1829, %v1814
  %v2257 = vpack.c.bf16 %v1830, %v1815
  %v2258 = vpack.c.bf16 %v1831, %v1816
  %v2259 = vpack.c.bf16 %v1832, %v1817
  %v2260 = vpack.c.bf16 %v1833, %v1818
  %v2261 = vpack.c.bf16 %v1834, %v1819
  %v2262 = vpack.c.bf16 %v1835, %v1820
  %v2263 = vpack.c.bf16 %v1836, %v1821
  %v2264 = vpack.c.bf16 %v1837, %v1822
  %v2265 = vpack.c.bf16 %v1838, %v1823
  %v2266 = vpack.c.bf16 %v1839, %v1824
  %v2267 = vpack.c.bf16 %v1840, %v1825
  %v2268 = vpack.c.bf16 %v1841, %v1826
  %v2269 = vpack.c.bf16 %v1842, %v1827
  %v2270 = vpack.c.bf16 %v1625, %v1593
  %v2271 = vpack.c.bf16 %v1858, %v1843
  %v2272 = vpack.c.bf16 %v1859, %v1844
  %v2273 = vpack.c.bf16 %v1860, %v1845
  %v2274 = vpack.c.bf16 %v1861, %v1846
  %v2275 = vpack.c.bf16 %v1862, %v1847
  %v2276 = vpack.c.bf16 %v1863, %v1848
  %v2277 = vpack.c.bf16 %v1864, %v1849
  %v2278 = vpack.c.bf16 %v1865, %v1850
  %v2279 = vpack.c.bf16 %v1866, %v1851
  %v2280 = vpack.c.bf16 %v1867, %v1852
  %v2281 = vpack.c.bf16 %v1868, %v1853
  %v2282 = vpack.c.bf16 %v1869, %v1854
  %v2283 = vpack.c.bf16 %v1870, %v1855
  %v2284 = vpack.c.bf16 %v1871, %v1856
  %v2285 = vpack.c.bf16 %v1872, %v1857
  %v2286 = vpack.c.bf16 %v1689, %v1657
  %v2287 = vpack.c.bf16 %v1888, %v1873
  %v2288 = vpack.c.bf16 %v1889, %v1874
  %v2289 = vpack.c.bf16 %v1890, %v1875
  %v2290 = vpack.c.bf16 %v1891, %v1876
  %v2291 = vpack.c.bf16 %v1892, %v1877
  %v2292 = vpack.c.bf16 %v1893, %v1878
  %v2293 = vpack.c.bf16 %v1894, %v1879
  %v2294 = vpack.c.bf16 %v1895, %v1880
  %v2295 = vpack.c.bf16 %v1896, %v1881
  %v2296 = vpack.c.bf16 %v1897, %v1882
  %v2297 = vpack.c.bf16 %v1898, %v1883
  %v2298 = vpack.c.bf16 %v1899, %v1884
  %v2299 = vpack.c.bf16 %v1900, %v1885
  %v2300 = vpack.c.bf16 %v1901, %v1886
  %v2301 = vpack.c.bf16 %v1902, %v1887
  %v2302 = vpack.c.bf16 %v1721, %v1721
  %v2303 = vpack.c.bf16 %v1903, %v1903
  %v2304 = vpack.c.bf16 %v1904, %v1904
  %v2305 = vpack.c.bf16 %v1905, %v1905
  %v2306 = vpack.c.bf16 %v1906, %v1906
  %v2307 = vpack.c.bf16 %v1907, %v1907
  %v2308 = vpack.c.bf16 %v1908, %v1908
  %v2309 = vpack.c.bf16 %v1909, %v1909
  %v2310 = vpack.c.bf16 %v1910, %v1910
  %v2311 = vpack.c.bf16 %v1911, %v1911
  %v2312 = vpack.c.bf16 %v1912, %v1912
  %v2313 = vpack.c.bf16 %v1913, %v1913
  %v2314 = vpack.c.bf16 %v1914, %v1914
  %v2315 = vpack.c.bf16 %v1915, %v1915
  %v2316 = vpack.c.bf16 %v1916, %v1916
  %v2317 = vpack.c.bf16 %v1917, %v1917
  %v2318 = vld [vmem:[%s1] sm:$0xff]
  %v2320 = vunpack.c.l.b16 %v2318
  %v2321 = vunpack.c.h.b16 %v2318
  %v2322 = vpack.c.b16 %v2320, %v2320
  %v2323 = vpack.c.b16 %v2321, %v2321
  %2549 = vrot.lane.b32.xlu0 %v2094, 111
  %v2550 = vpop.permute.xlu0 %2549
  %2551 = vrot.lane.b32.xlu0 %v2095, 111
  %v2552 = vpop.permute.xlu0 %2551
  %2553 = vrot.lane.b32.xlu0 %v2096, 111
  %v2554 = vpop.permute.xlu0 %2553
  %2555 = vrot.lane.b32.xlu0 %v2097, 111
  %v2556 = vpop.permute.xlu0 %2555
  %2557 = vrot.lane.b32.xlu0 %v2098, 111
  %v2558 = vpop.permute.xlu0 %2557
  %2559 = vrot.lane.b32.xlu0 %v2099, 111
  %v2560 = vpop.permute.xlu0 %2559
  %2561 = vrot.lane.b32.xlu0 %v2100, 111
  %v2562 = vpop.permute.xlu0 %2561
  %2563 = vrot.lane.b32.xlu0 %v2101, 111
  %v2564 = vpop.permute.xlu0 %2563
  %2565 = vrot.lane.b32.xlu0 %v2102, 111
  %v2566 = vpop.permute.xlu0 %2565
  %2567 = vrot.lane.b32.xlu0 %v2103, 111
  %v2568 = vpop.permute.xlu0 %2567
  %2569 = vrot.lane.b32.xlu0 %v2104, 111
  %v2570 = vpop.permute.xlu0 %2569
  %2571 = vrot.lane.b32.xlu0 %v2105, 111
  %v2572 = vpop.permute.xlu0 %2571
  %2573 = vrot.lane.b32.xlu0 %v2106, 111
  %v2574 = vpop.permute.xlu0 %2573
  %2575 = vrot.lane.b32.xlu0 %v2107, 111
  %v2576 = vpop.permute.xlu0 %2575
  %2577 = vrot.lane.b32.xlu0 %v2108, 111
  %v2578 = vpop.permute.xlu0 %2577
  %2579 = vrot.lane.b32.xlu0 %v2109, 111
  %v2580 = vpop.permute.xlu0 %2579
  %2581 = vrot.lane.b32.xlu0 %v2110, 111
  %v2582 = vpop.permute.xlu0 %2581
  %2583 = vrot.lane.b32.xlu0 %v2111, 111
  %v2584 = vpop.permute.xlu0 %2583
  %2585 = vrot.lane.b32.xlu0 %v2112, 111
  %v2586 = vpop.permute.xlu0 %2585
  %2587 = vrot.lane.b32.xlu0 %v2113, 111
  %v2588 = vpop.permute.xlu0 %2587
  %2589 = vrot.lane.b32.xlu0 %v2114, 111
  %v2590 = vpop.permute.xlu0 %2589
  %2591 = vrot.lane.b32.xlu0 %v2115, 111
  %v2592 = vpop.permute.xlu0 %2591
  %2593 = vrot.lane.b32.xlu0 %v2116, 111
  %v2594 = vpop.permute.xlu0 %2593
  %2595 = vrot.lane.b32.xlu0 %v2117, 111
  %v2596 = vpop.permute.xlu0 %2595
  %2597 = vrot.lane.b32.xlu0 %v2118, 111
  %v2598 = vpop.permute.xlu0 %2597
  %2599 = vrot.lane.b32.xlu0 %v2119, 111
  %v2600 = vpop.permute.xlu0 %2599
  %2601 = vrot.lane.b32.xlu0 %v2120, 111
  %v2602 = vpop.permute.xlu0 %2601
  %2603 = vrot.lane.b32.xlu0 %v2121, 111
  %v2604 = vpop.permute.xlu0 %2603
  %2605 = vrot.lane.b32.xlu0 %v2122, 111
  %v2606 = vpop.permute.xlu0 %2605
  %2607 = vrot.lane.b32.xlu0 %v2123, 111
  %v2608 = vpop.permute.xlu0 %2607
  %2609 = vrot.lane.b32.xlu0 %v2124, 111
  %v2610 = vpop.permute.xlu0 %2609
  %2611 = vrot.lane.b32.xlu0 %v2125, 111
  %v2612 = vpop.permute.xlu0 %2611
  %2613 = vrot.lane.b32.xlu0 %v2126, 111
  %v2614 = vpop.permute.xlu0 %2613
  %2615 = vrot.lane.b32.xlu0 %v2127, 111
  %v2616 = vpop.permute.xlu0 %2615
  %2617 = vrot.lane.b32.xlu0 %v2128, 111
  %v2618 = vpop.permute.xlu0 %2617
  %2619 = vrot.lane.b32.xlu0 %v2129, 111
  %v2620 = vpop.permute.xlu0 %2619
  %2621 = vrot.lane.b32.xlu0 %v2130, 111
  %v2622 = vpop.permute.xlu0 %2621
  %2623 = vrot.lane.b32.xlu0 %v2131, 111
  %v2624 = vpop.permute.xlu0 %2623
  %2625 = vrot.lane.b32.xlu0 %v2132, 111
  %v2626 = vpop.permute.xlu0 %2625
  %2627 = vrot.lane.b32.xlu0 %v2133, 111
  %v2628 = vpop.permute.xlu0 %2627
  %2629 = vrot.lane.b32.xlu0 %v2134, 111
  %v2630 = vpop.permute.xlu0 %2629
  %2631 = vrot.lane.b32.xlu0 %v2135, 111
  %v2632 = vpop.permute.xlu0 %2631
  %2633 = vrot.lane.b32.xlu0 %v2136, 111
  %v2634 = vpop.permute.xlu0 %2633
  %2635 = vrot.lane.b32.xlu0 %v2137, 111
  %v2636 = vpop.permute.xlu0 %2635
  %2637 = vrot.lane.b32.xlu0 %v2138, 111
  %v2638 = vpop.permute.xlu0 %2637
  %2639 = vrot.lane.b32.xlu0 %v2139, 111
  %v2640 = vpop.permute.xlu0 %2639
  %2641 = vrot.lane.b32.xlu0 %v2140, 111
  %v2642 = vpop.permute.xlu0 %2641
  %2643 = vrot.lane.b32.xlu0 %v2141, 111
  %v2644 = vpop.permute.xlu0 %2643
  %2645 = vrot.lane.b32.xlu0 %v2142, 111
  %v2646 = vpop.permute.xlu0 %2645
  %2647 = vrot.lane.b32.xlu0 %v2143, 111
  %v2648 = vpop.permute.xlu0 %2647
  %2649 = vrot.lane.b32.xlu0 %v2144, 111
  %v2650 = vpop.permute.xlu0 %2649
  %2651 = vrot.lane.b32.xlu0 %v2145, 111
  %v2652 = vpop.permute.xlu0 %2651
  %2653 = vrot.lane.b32.xlu0 %v2146, 111
  %v2654 = vpop.permute.xlu0 %2653
  %2655 = vrot.lane.b32.xlu0 %v2147, 111
  %v2656 = vpop.permute.xlu0 %2655
  %2657 = vrot.lane.b32.xlu0 %v2148, 111
  %v2658 = vpop.permute.xlu0 %2657
  %2659 = vrot.lane.b32.xlu0 %v2149, 111
  %v2660 = vpop.permute.xlu0 %2659
  %2661 = vrot.lane.b32.xlu0 %v2150, 111
  %v2662 = vpop.permute.xlu0 %2661
  %2663 = vrot.lane.b32.xlu0 %v2151, 111
  %v2664 = vpop.permute.xlu0 %2663
  %2665 = vrot.lane.b32.xlu0 %v2152, 111
  %v2666 = vpop.permute.xlu0 %2665
  %2667 = vrot.lane.b32.xlu0 %v2153, 111
  %v2668 = vpop.permute.xlu0 %2667
  %2669 = vrot.lane.b32.xlu0 %v2154, 111
  %v2670 = vpop.permute.xlu0 %2669
  %2671 = vrot.lane.b32.xlu0 %v2155, 111
  %v2672 = vpop.permute.xlu0 %2671
  %2673 = vrot.lane.b32.xlu0 %v2156, 111
  %v2674 = vpop.permute.xlu0 %2673
  %2675 = vrot.lane.b32.xlu0 %v2157, 111
  %v2676 = vpop.permute.xlu0 %2675
  %2677 = vrot.lane.b32.xlu0 %v2158, 111
  %v2678 = vpop.permute.xlu0 %2677
  %2679 = vrot.lane.b32.xlu0 %v2159, 111
  %v2680 = vpop.permute.xlu0 %2679
  %2681 = vrot.lane.b32.xlu0 %v2160, 111
  %v2682 = vpop.permute.xlu0 %2681
  %2683 = vrot.lane.b32.xlu0 %v2161, 111
  %v2684 = vpop.permute.xlu0 %2683
  %2685 = vrot.lane.b32.xlu0 %v2162, 111
  %v2686 = vpop.permute.xlu0 %2685
  %2687 = vrot.lane.b32.xlu0 %v2163, 111
  %v2688 = vpop.permute.xlu0 %2687
  %2689 = vrot.lane.b32.xlu0 %v2164, 111
  %v2690 = vpop.permute.xlu0 %2689
  %2691 = vrot.lane.b32.xlu0 %v2165, 111
  %v2692 = vpop.permute.xlu0 %2691
  %2693 = vrot.lane.b32.xlu0 %v2166, 111
  %v2694 = vpop.permute.xlu0 %2693
  %2695 = vrot.lane.b32.xlu0 %v2167, 111
  %v2696 = vpop.permute.xlu0 %2695
  %2697 = vrot.lane.b32.xlu0 %v2168, 111
  %v2698 = vpop.permute.xlu0 %2697
  %2699 = vrot.lane.b32.xlu0 %v2169, 111
  %v2700 = vpop.permute.xlu0 %2699
  %2701 = vrot.lane.b32.xlu0 %v2170, 111
  %v2702 = vpop.permute.xlu0 %2701
  %2703 = vrot.lane.b32.xlu0 %v2171, 111
  %v2704 = vpop.permute.xlu0 %2703
  %2705 = vrot.lane.b32.xlu0 %v2172, 111
  %v2706 = vpop.permute.xlu0 %2705
  %2707 = vrot.lane.b32.xlu0 %v2173, 111
  %v2708 = vpop.permute.xlu0 %2707
  %2709 = vrot.lane.b32.xlu0 %v2174, 111
  %v2710 = vpop.permute.xlu0 %2709
  %2711 = vrot.lane.b32.xlu0 %v2175, 111
  %v2712 = vpop.permute.xlu0 %2711
  %2713 = vrot.lane.b32.xlu0 %v2176, 111
  %v2714 = vpop.permute.xlu0 %2713
  %2715 = vrot.lane.b32.xlu0 %v2177, 111
  %v2716 = vpop.permute.xlu0 %2715
  %2717 = vrot.lane.b32.xlu0 %v2178, 111
  %v2718 = vpop.permute.xlu0 %2717
  %2719 = vrot.lane.b32.xlu0 %v2179, 111
  %v2720 = vpop.permute.xlu0 %2719
  %2721 = vrot.lane.b32.xlu0 %v2180, 111
  %v2722 = vpop.permute.xlu0 %2721
  %2723 = vrot.lane.b32.xlu0 %v2181, 111
  %v2724 = vpop.permute.xlu0 %2723
  %2725 = vrot.lane.b32.xlu0 %v2182, 111
  %v2726 = vpop.permute.xlu0 %2725
  %2727 = vrot.lane.b32.xlu0 %v2183, 111
  %v2728 = vpop.permute.xlu0 %2727
  %2729 = vrot.lane.b32.xlu0 %v2184, 111
  %v2730 = vpop.permute.xlu0 %2729
  %2731 = vrot.lane.b32.xlu0 %v2185, 111
  %v2732 = vpop.permute.xlu0 %2731
  %2733 = vrot.lane.b32.xlu0 %v2186, 111
  %v2734 = vpop.permute.xlu0 %2733
  %2735 = vrot.lane.b32.xlu0 %v2187, 111
  %v2736 = vpop.permute.xlu0 %2735
  %2737 = vrot.lane.b32.xlu0 %v2188, 111
  %v2738 = vpop.permute.xlu0 %2737
  %2739 = vrot.lane.b32.xlu0 %v2189, 111
  %v2740 = vpop.permute.xlu0 %2739
  %2741 = vrot.lane.b32.xlu0 %v2190, 111
  %v2742 = vpop.permute.xlu0 %2741
  %2743 = vrot.lane.b32.xlu0 %v2191, 111
  %v2744 = vpop.permute.xlu0 %2743
  %2745 = vrot.lane.b32.xlu0 %v2192, 111
  %v2746 = vpop.permute.xlu0 %2745
  %2747 = vrot.lane.b32.xlu0 %v2193, 111
  %v2748 = vpop.permute.xlu0 %2747
  %2749 = vrot.lane.b32.xlu0 %v2194, 111
  %v2750 = vpop.permute.xlu0 %2749
  %2751 = vrot.lane.b32.xlu0 %v2195, 111
  %v2752 = vpop.permute.xlu0 %2751
  %2753 = vrot.lane.b32.xlu0 %v2196, 111
  %v2754 = vpop.permute.xlu0 %2753
  %2755 = vrot.lane.b32.xlu0 %v2197, 111
  %v2756 = vpop.permute.xlu0 %2755
  %2757 = vrot.lane.b32.xlu0 %v2198, 111
  %v2758 = vpop.permute.xlu0 %2757
  %2759 = vrot.lane.b32.xlu0 %v2199, 111
  %v2760 = vpop.permute.xlu0 %2759
  %2761 = vrot.lane.b32.xlu0 %v2200, 111
  %v2762 = vpop.permute.xlu0 %2761
  %2763 = vrot.lane.b32.xlu0 %v2201, 111
  %v2764 = vpop.permute.xlu0 %2763
  %2765 = vrot.lane.b32.xlu0 %v2202, 111
  %v2766 = vpop.permute.xlu0 %2765
  %2767 = vrot.lane.b32.xlu0 %v2203, 111
  %v2768 = vpop.permute.xlu0 %2767
  %2769 = vrot.lane.b32.xlu0 %v2204, 111
  %v2770 = vpop.permute.xlu0 %2769
  %2771 = vrot.lane.b32.xlu0 %v2205, 111
  %v2772 = vpop.permute.xlu0 %2771
  %2773 = vrot.lane.b32.xlu0 %v2206, 111
  %v2774 = vpop.permute.xlu0 %2773
  %2775 = vrot.lane.b32.xlu0 %v2207, 111
  %v2776 = vpop.permute.xlu0 %2775
  %2777 = vrot.lane.b32.xlu0 %v2208, 111
  %v2778 = vpop.permute.xlu0 %2777
  %2779 = vrot.lane.b32.xlu0 %v2209, 111
  %v2780 = vpop.permute.xlu0 %2779
  %2781 = vrot.lane.b32.xlu0 %v2210, 111
  %v2782 = vpop.permute.xlu0 %2781
  %2783 = vrot.lane.b32.xlu0 %v2211, 111
  %v2784 = vpop.permute.xlu0 %2783
  %2785 = vrot.lane.b32.xlu0 %v2212, 111
  %v2786 = vpop.permute.xlu0 %2785
  %2787 = vrot.lane.b32.xlu0 %v2213, 111
  %v2788 = vpop.permute.xlu0 %2787
  %2789 = vrot.lane.b32.xlu0 %v2214, 111
  %v2790 = vpop.permute.xlu0 %2789
  %2791 = vrot.lane.b32.xlu0 %v2215, 111
  %v2792 = vpop.permute.xlu0 %2791
  %2793 = vrot.lane.b32.xlu0 %v2216, 111
  %v2794 = vpop.permute.xlu0 %2793
  %2795 = vrot.lane.b32.xlu0 %v2217, 111
  %v2796 = vpop.permute.xlu0 %2795
  %2797 = vrot.lane.b32.xlu0 %v2218, 111
  %v2798 = vpop.permute.xlu0 %2797
  %2799 = vrot.lane.b32.xlu0 %v2219, 111
  %v2800 = vpop.permute.xlu0 %2799
  %2801 = vrot.lane.b32.xlu0 %v2220, 111
  %v2802 = vpop.permute.xlu0 %2801
  %2803 = vrot.lane.b32.xlu0 %v2221, 111
  %v2804 = vpop.permute.xlu0 %2803
  %2805 = vrot.lane.b32.xlu0 %v2222, 111
  %v2806 = vpop.permute.xlu0 %2805
  %2807 = vrot.lane.b32.xlu0 %v2223, 111
  %v2808 = vpop.permute.xlu0 %2807
  %2809 = vrot.lane.b32.xlu0 %v2224, 111
  %v2810 = vpop.permute.xlu0 %2809
  %2811 = vrot.lane.b32.xlu0 %v2225, 111
  %v2812 = vpop.permute.xlu0 %2811
  %2813 = vrot.lane.b32.xlu0 %v2226, 111
  %v2814 = vpop.permute.xlu0 %2813
  %2815 = vrot.lane.b32.xlu0 %v2227, 111
  %v2816 = vpop.permute.xlu0 %2815
  %2817 = vrot.lane.b32.xlu0 %v2228, 111
  %v2818 = vpop.permute.xlu0 %2817
  %2819 = vrot.lane.b32.xlu0 %v2229, 111
  %v2820 = vpop.permute.xlu0 %2819
  %2821 = vrot.lane.b32.xlu0 %v2230, 111
  %v2822 = vpop.permute.xlu0 %2821
  %2823 = vrot.lane.b32.xlu0 %v2231, 111
  %v2824 = vpop.permute.xlu0 %2823
  %2825 = vrot.lane.b32.xlu0 %v2232, 111
  %v2826 = vpop.permute.xlu0 %2825
  %2827 = vrot.lane.b32.xlu0 %v2233, 111
  %v2828 = vpop.permute.xlu0 %2827
  %2829 = vrot.lane.b32.xlu0 %v2234, 111
  %v2830 = vpop.permute.xlu0 %2829
  %2831 = vrot.lane.b32.xlu0 %v2235, 111
  %v2832 = vpop.permute.xlu0 %2831
  %2833 = vrot.lane.b32.xlu0 %v2236, 111
  %v2834 = vpop.permute.xlu0 %2833
  %2835 = vrot.lane.b32.xlu0 %v2237, 111
  %v2836 = vpop.permute.xlu0 %2835
  %2837 = vrot.lane.b32.xlu0 %v2238, 111
  %v2838 = vpop.permute.xlu0 %2837
  %2839 = vrot.lane.b32.xlu0 %v2239, 111
  %v2840 = vpop.permute.xlu0 %2839
  %2841 = vrot.lane.b32.xlu0 %v2240, 111
  %v2842 = vpop.permute.xlu0 %2841
  %2843 = vrot.lane.b32.xlu0 %v2241, 111
  %v2844 = vpop.permute.xlu0 %2843
  %2845 = vrot.lane.b32.xlu0 %v2242, 111
  %v2846 = vpop.permute.xlu0 %2845
  %2847 = vrot.lane.b32.xlu0 %v2243, 111
  %v2848 = vpop.permute.xlu0 %2847
  %2849 = vrot.lane.b32.xlu0 %v2244, 111
  %v2850 = vpop.permute.xlu0 %2849
  %2851 = vrot.lane.b32.xlu0 %v2245, 111
  %v2852 = vpop.permute.xlu0 %2851
  %2853 = vrot.lane.b32.xlu0 %v2246, 111
  %v2854 = vpop.permute.xlu0 %2853
  %2855 = vrot.lane.b32.xlu0 %v2247, 111
  %v2856 = vpop.permute.xlu0 %2855
  %2857 = vrot.lane.b32.xlu0 %v2248, 111
  %v2858 = vpop.permute.xlu0 %2857
  %2859 = vrot.lane.b32.xlu0 %v2249, 111
  %v2860 = vpop.permute.xlu0 %2859
  %2861 = vrot.lane.b32.xlu0 %v2250, 111
  %v2862 = vpop.permute.xlu0 %2861
  %2863 = vrot.lane.b32.xlu0 %v2251, 111
  %v2864 = vpop.permute.xlu0 %2863
  %2865 = vrot.lane.b32.xlu0 %v2252, 111
  %v2866 = vpop.permute.xlu0 %2865
  %2867 = vrot.lane.b32.xlu0 %v2253, 111
  %v2868 = vpop.permute.xlu0 %2867
  %2869 = vrot.lane.b32.xlu0 %v2254, 111
  %v2870 = vpop.permute.xlu0 %2869
  %2871 = vrot.lane.b32.xlu0 %v2255, 111
  %v2872 = vpop.permute.xlu0 %2871
  %2873 = vrot.lane.b32.xlu0 %v2256, 111
  %v2874 = vpop.permute.xlu0 %2873
  %2875 = vrot.lane.b32.xlu0 %v2257, 111
  %v2876 = vpop.permute.xlu0 %2875
  %2877 = vrot.lane.b32.xlu0 %v2258, 111
  %v2878 = vpop.permute.xlu0 %2877
  %2879 = vrot.lane.b32.xlu0 %v2259, 111
  %v2880 = vpop.permute.xlu0 %2879
  %2881 = vrot.lane.b32.xlu0 %v2260, 111
  %v2882 = vpop.permute.xlu0 %2881
  %2883 = vrot.lane.b32.xlu0 %v2261, 111
  %v2884 = vpop.permute.xlu0 %2883
  %2885 = vrot.lane.b32.xlu0 %v2262, 111
  %v2886 = vpop.permute.xlu0 %2885
  %2887 = vrot.lane.b32.xlu0 %v2263, 111
  %v2888 = vpop.permute.xlu0 %2887
  %2889 = vrot.lane.b32.xlu0 %v2264, 111
  %v2890 = vpop.permute.xlu0 %2889
  %2891 = vrot.lane.b32.xlu0 %v2265, 111
  %v2892 = vpop.permute.xlu0 %2891
  %2893 = vrot.lane.b32.xlu0 %v2266, 111
  %v2894 = vpop.permute.xlu0 %2893
  %2895 = vrot.lane.b32.xlu0 %v2267, 111
  %v2896 = vpop.permute.xlu0 %2895
  %2897 = vrot.lane.b32.xlu0 %v2268, 111
  %v2898 = vpop.permute.xlu0 %2897
  %2899 = vrot.lane.b32.xlu0 %v2269, 111
  %v2900 = vpop.permute.xlu0 %2899
  %2901 = vrot.lane.b32.xlu0 %v2270, 111
  %v2902 = vpop.permute.xlu0 %2901
  %2903 = vrot.lane.b32.xlu0 %v2271, 111
  %v2904 = vpop.permute.xlu0 %2903
  %2905 = vrot.lane.b32.xlu0 %v2272, 111
  %v2906 = vpop.permute.xlu0 %2905
  %2907 = vrot.lane.b32.xlu0 %v2273, 111
  %v2908 = vpop.permute.xlu0 %2907
  %2909 = vrot.lane.b32.xlu0 %v2274, 111
  %v2910 = vpop.permute.xlu0 %2909
  %2911 = vrot.lane.b32.xlu0 %v2275, 111
  %v2912 = vpop.permute.xlu0 %2911
  %2913 = vrot.lane.b32.xlu0 %v2276, 111
  %v2914 = vpop.permute.xlu0 %2913
  %2915 = vrot.lane.b32.xlu0 %v2277, 111
  %v2916 = vpop.permute.xlu0 %2915
  %2917 = vrot.lane.b32.xlu0 %v2278, 111
  %v2918 = vpop.permute.xlu0 %2917
  %2919 = vrot.lane.b32.xlu0 %v2279, 111
  %v2920 = vpop.permute.xlu0 %2919
  %2921 = vrot.lane.b32.xlu0 %v2280, 111
  %v2922 = vpop.permute.xlu0 %2921
  %2923 = vrot.lane.b32.xlu0 %v2281, 111
  %v2924 = vpop.permute.xlu0 %2923
  %2925 = vrot.lane.b32.xlu0 %v2282, 111
  %v2926 = vpop.permute.xlu0 %2925
  %2927 = vrot.lane.b32.xlu0 %v2283, 111
  %v2928 = vpop.permute.xlu0 %2927
  %2929 = vrot.lane.b32.xlu0 %v2284, 111
  %v2930 = vpop.permute.xlu0 %2929
  %2931 = vrot.lane.b32.xlu0 %v2285, 111
  %v2932 = vpop.permute.xlu0 %2931
  %2933 = vrot.lane.b32.xlu0 %v2286, 111
  %v2934 = vpop.permute.xlu0 %2933
  %2935 = vrot.lane.b32.xlu0 %v2287, 111
  %v2936 = vpop.permute.xlu0 %2935
  %2937 = vrot.lane.b32.xlu0 %v2288, 111
  %v2938 = vpop.permute.xlu0 %2937
  %2939 = vrot.lane.b32.xlu0 %v2289, 111
  %v2940 = vpop.permute.xlu0 %2939
  %2941 = vrot.lane.b32.xlu0 %v2290, 111
  %v2942 = vpop.permute.xlu0 %2941
  %2943 = vrot.lane.b32.xlu0 %v2291, 111
  %v2944 = vpop.permute.xlu0 %2943
  %2945 = vrot.lane.b32.xlu0 %v2292, 111
  %v2946 = vpop.permute.xlu0 %2945
  %2947 = vrot.lane.b32.xlu0 %v2293, 111
  %v2948 = vpop.permute.xlu0 %2947
  %2949 = vrot.lane.b32.xlu0 %v2294, 111
  %v2950 = vpop.permute.xlu0 %2949
  %2951 = vrot.lane.b32.xlu0 %v2295, 111
  %v2952 = vpop.permute.xlu0 %2951
  %2953 = vrot.lane.b32.xlu0 %v2296, 111
  %v2954 = vpop.permute.xlu0 %2953
  %2955 = vrot.lane.b32.xlu0 %v2297, 111
  %v2956 = vpop.permute.xlu0 %2955
  %2957 = vrot.lane.b32.xlu0 %v2298, 111
  %v2958 = vpop.permute.xlu0 %2957
  %2959 = vrot.lane.b32.xlu0 %v2299, 111
  %v2960 = vpop.permute.xlu0 %2959
  %2961 = vrot.lane.b32.xlu0 %v2300, 111
  %v2962 = vpop.permute.xlu0 %2961
  %2963 = vrot.lane.b32.xlu0 %v2301, 111
  %v2964 = vpop.permute.xlu0 %2963
  %2965 = vrot.lane.b32.xlu0 %v2302, 111
  %v2966 = vpop.permute.xlu0 %2965
  %2967 = vrot.lane.b32.xlu0 %v2303, 111
  %v2968 = vpop.permute.xlu0 %2967
  %2969 = vrot.lane.b32.xlu0 %v2304, 111
  %v2970 = vpop.permute.xlu0 %2969
  %2971 = vrot.lane.b32.xlu0 %v2305, 111
  %v2972 = vpop.permute.xlu0 %2971
  %2973 = vrot.lane.b32.xlu0 %v2306, 111
  %v2974 = vpop.permute.xlu0 %2973
  %2975 = vrot.lane.b32.xlu0 %v2307, 111
  %v2976 = vpop.permute.xlu0 %2975
  %2977 = vrot.lane.b32.xlu0 %v2308, 111
  %v2978 = vpop.permute.xlu0 %2977
  %2979 = vrot.lane.b32.xlu0 %v2309, 111
  %v2980 = vpop.permute.xlu0 %2979
  %2981 = vrot.lane.b32.xlu0 %v2310, 111
  %v2982 = vpop.permute.xlu0 %2981
  %2983 = vrot.lane.b32.xlu0 %v2311, 111
  %v2984 = vpop.permute.xlu0 %2983
  %2985 = vrot.lane.b32.xlu0 %v2312, 111
  %v2986 = vpop.permute.xlu0 %2985
  %2987 = vrot.lane.b32.xlu0 %v2313, 111
  %v2988 = vpop.permute.xlu0 %2987
  %2989 = vrot.lane.b32.xlu0 %v2314, 111
  %v2990 = vpop.permute.xlu0 %2989
  %2991 = vrot.lane.b32.xlu0 %v2315, 111
  %v2992 = vpop.permute.xlu0 %2991
  %2993 = vrot.lane.b32.xlu0 %v2316, 111
  %v2994 = vpop.permute.xlu0 %2993
  %2995 = vrot.lane.b32.xlu0 %v2317, 111
  %v2996 = vpop.permute.xlu0 %2995
  %vm2997 = vcmask 908288
  %v2998 = vsel %vm2997, %v2550, %v2552
  %v2999 = vsel %vm2997, %v2552, %v2554
  %v3000 = vsel %vm2997, %v2554, %v2556
  %v3001 = vsel %vm2997, %v2556, %v2558
  %v3002 = vsel %vm2997, %v2558, %v2560
  %v3003 = vsel %vm2997, %v2560, %v2562
  %v3004 = vsel %vm2997, %v2562, %v2564
  %v3005 = vsel %vm2997, %v2564, %v2566
  %v3006 = vsel %vm2997, %v2566, %v2568
  %v3007 = vsel %vm2997, %v2568, %v2570
  %v3008 = vsel %vm2997, %v2570, %v2572
  %v3009 = vsel %vm2997, %v2572, %v2574
  %v3010 = vsel %vm2997, %v2574, %v2576
  %v3011 = vsel %vm2997, %v2576, %v2578
  %v3012 = vsel %vm2997, %v2578, %v2580
  %v3013 = vsel %vm2997, %v2582, %v2584
  %v3014 = vsel %vm2997, %v2584, %v2586
  %v3015 = vsel %vm2997, %v2586, %v2588
  %v3016 = vsel %vm2997, %v2588, %v2590
  %v3017 = vsel %vm2997, %v2590, %v2592
  %v3018 = vsel %vm2997, %v2592, %v2594
  %v3019 = vsel %vm2997, %v2594, %v2596
  %v3020 = vsel %vm2997, %v2596, %v2598
  %v3021 = vsel %vm2997, %v2598, %v2600
  %v3022 = vsel %vm2997, %v2600, %v2602
  %v3023 = vsel %vm2997, %v2602, %v2604
  %v3024 = vsel %vm2997, %v2604, %v2606
  %v3025 = vsel %vm2997, %v2606, %v2608
  %v3026 = vsel %vm2997, %v2608, %v2610
  %v3027 = vsel %vm2997, %v2610, %v2612
  %v3028 = vsel %vm2997, %v2614, %v2616
  %v3029 = vsel %vm2997, %v2616, %v2618
  %v3030 = vsel %vm2997, %v2618, %v2620
  %v3031 = vsel %vm2997, %v2620, %v2622
  %v3032 = vsel %vm2997, %v2622, %v2624
  %v3033 = vsel %vm2997, %v2624, %v2626
  %v3034 = vsel %vm2997, %v2626, %v2628
  %v3035 = vsel %vm2997, %v2628, %v2630
  %v3036 = vsel %vm2997, %v2630, %v2632
  %v3037 = vsel %vm2997, %v2632, %v2634
  %v3038 = vsel %vm2997, %v2634, %v2636
  %v3039 = vsel %vm2997, %v2636, %v2638
  %v3040 = vsel %vm2997, %v2638, %v2640
  %v3041 = vsel %vm2997, %v2640, %v2642
  %v3042 = vsel %vm2997, %v2642, %v2644
  %v3043 = vsel %vm2997, %v2646, %v2648
  %v3044 = vsel %vm2997, %v2648, %v2650
  %v3045 = vsel %vm2997, %v2650, %v2652
  %v3046 = vsel %vm2997, %v2652, %v2654
  %v3047 = vsel %vm2997, %v2654, %v2656
  %v3048 = vsel %vm2997, %v2656, %v2658
  %v3049 = vsel %vm2997, %v2658, %v2660
  %v3050 = vsel %vm2997, %v2660, %v2662
  %v3051 = vsel %vm2997, %v2662, %v2664
  %v3052 = vsel %vm2997, %v2664, %v2666
  %v3053 = vsel %vm2997, %v2666, %v2668
  %v3054 = vsel %vm2997, %v2668, %v2670
  %v3055 = vsel %vm2997, %v2670, %v2672
  %v3056 = vsel %vm2997, %v2672, %v2674
  %v3057 = vsel %vm2997, %v2674, %v2676
  %v3058 = vsel %vm2997, %v2678, %v2680
  %v3059 = vsel %vm2997, %v2680, %v2682
  %v3060 = vsel %vm2997, %v2682, %v2684
  %v3061 = vsel %vm2997, %v2684, %v2686
  %v3062 = vsel %vm2997, %v2686, %v2688
  %v3063 = vsel %vm2997, %v2688, %v2690
  %v3064 = vsel %vm2997, %v2690, %v2692
  %v3065 = vsel %vm2997, %v2692, %v2694
  %v3066 = vsel %vm2997, %v2694, %v2696
  %v3067 = vsel %vm2997, %v2696, %v2698
  %v3068 = vsel %vm2997, %v2698, %v2700
  %v3069 = vsel %vm2997, %v2700, %v2702
  %v3070 = vsel %vm2997, %v2702, %v2704
  %v3071 = vsel %vm2997, %v2704, %v2706
  %v3072 = vsel %vm2997, %v2706, %v2708
  %v3073 = vsel %vm2997, %v2710, %v2712
  %v3074 = vsel %vm2997, %v2712, %v2714
  %v3075 = vsel %vm2997, %v2714, %v2716
  %v3076 = vsel %vm2997, %v2716, %v2718
  %v3077 = vsel %vm2997, %v2718, %v2720
  %v3078 = vsel %vm2997, %v2720, %v2722
  %v3079 = vsel %vm2997, %v2722, %v2724
  %v3080 = vsel %vm2997, %v2724, %v2726
  %v3081 = vsel %vm2997, %v2726, %v2728
  %v3082 = vsel %vm2997, %v2728, %v2730
  %v3083 = vsel %vm2997, %v2730, %v2732
  %v3084 = vsel %vm2997, %v2732, %v2734
  %v3085 = vsel %vm2997, %v2734, %v2736
  %v3086 = vsel %vm2997, %v2736, %v2738
  %v3087 = vsel %vm2997, %v2738, %v2740
  %v3088 = vsel %vm2997, %v2742, %v2744
  %v3089 = vsel %vm2997, %v2744, %v2746
  %v3090 = vsel %vm2997, %v2746, %v2748
  %v3091 = vsel %vm2997, %v2748, %v2750
  %v3092 = vsel %vm2997, %v2750, %v2752
  %v3093 = vsel %vm2997, %v2752, %v2754
  %v3094 = vsel %vm2997, %v2754, %v2756
  %v3095 = vsel %vm2997, %v2756, %v2758
  %v3096 = vsel %vm2997, %v2758, %v2760
  %v3097 = vsel %vm2997, %v2760, %v2762
  %v3098 = vsel %vm2997, %v2762, %v2764
  %v3099 = vsel %vm2997, %v2764, %v2766
  %v3100 = vsel %vm2997, %v2766, %v2768
  %v3101 = vsel %vm2997, %v2768, %v2770
  %v3102 = vsel %vm2997, %v2770, %v2772
  %v3103 = vsel %vm2997, %v2774, %v2776
  %v3104 = vsel %vm2997, %v2776, %v2778
  %v3105 = vsel %vm2997, %v2778, %v2780
  %v3106 = vsel %vm2997, %v2780, %v2782
  %v3107 = vsel %vm2997, %v2782, %v2784
  %v3108 = vsel %vm2997, %v2784, %v2786
  %v3109 = vsel %vm2997, %v2786, %v2788
  %v3110 = vsel %vm2997, %v2788, %v2790
  %v3111 = vsel %vm2997, %v2790, %v2792
  %v3112 = vsel %vm2997, %v2792, %v2794
  %v3113 = vsel %vm2997, %v2794, %v2796
  %v3114 = vsel %vm2997, %v2796, %v2798
  %v3115 = vsel %vm2997, %v2798, %v2800
  %v3116 = vsel %vm2997, %v2800, %v2802
  %v3117 = vsel %vm2997, %v2802, %v2804
  %v3118 = vsel %vm2997, %v2806, %v2808
  %v3119 = vsel %vm2997, %v2808, %v2810
  %v3120 = vsel %vm2997, %v2810, %v2812
  %v3121 = vsel %vm2997, %v2812, %v2814
  %v3122 = vsel %vm2997, %v2814, %v2816
  %v3123 = vsel %vm2997, %v2816, %v2818
  %v3124 = vsel %vm2997, %v2818, %v2820
  %v3125 = vsel %vm2997, %v2820, %v2822
  %v3126 = vsel %vm2997, %v2822, %v2824
  %v3127 = vsel %vm2997, %v2824, %v2826
  %v3128 = vsel %vm2997, %v2826, %v2828
  %v3129 = vsel %vm2997, %v2828, %v2830
  %v3130 = vsel %vm2997, %v2830, %v2832
  %v3131 = vsel %vm2997, %v2832, %v2834
  %v3132 = vsel %vm2997, %v2834, %v2836
  %v3133 = vsel %vm2997, %v2838, %v2840
  %v3134 = vsel %vm2997, %v2840, %v2842
  %v3135 = vsel %vm2997, %v2842, %v2844
  %v3136 = vsel %vm2997, %v2844, %v2846
  %v3137 = vsel %vm2997, %v2846, %v2848
  %v3138 = vsel %vm2997, %v2848, %v2850
  %v3139 = vsel %vm2997, %v2850, %v2852
  %v3140 = vsel %vm2997, %v2852, %v2854
  %v3141 = vsel %vm2997, %v2854, %v2856
  %v3142 = vsel %vm2997, %v2856, %v2858
  %v3143 = vsel %vm2997, %v2858, %v2860
  %v3144 = vsel %vm2997, %v2860, %v2862
  %v3145 = vsel %vm2997, %v2862, %v2864
  %v3146 = vsel %vm2997, %v2864, %v2866
  %v3147 = vsel %vm2997, %v2866, %v2868
  %v3148 = vsel %vm2997, %v2870, %v2872
  %v3149 = vsel %vm2997, %v2872, %v2874
  %v3150 = vsel %vm2997, %v2874, %v2876
  %v3151 = vsel %vm2997, %v2876, %v2878
  %v3152 = vsel %vm2997, %v2878, %v2880
  %v3153 = vsel %vm2997, %v2880, %v2882
  %v3154 = vsel %vm2997, %v2882, %v2884
  %v3155 = vsel %vm2997, %v2884, %v2886
  %v3156 = vsel %vm2997, %v2886, %v2888
  %v3157 = vsel %vm2997, %v2888, %v2890
  %v3158 = vsel %vm2997, %v2890, %v2892
  %v3159 = vsel %vm2997, %v2892, %v2894
  %v3160 = vsel %vm2997, %v2894, %v2896
  %v3161 = vsel %vm2997, %v2896, %v2898
  %v3162 = vsel %vm2997, %v2898, %v2900
  %v3163 = vsel %vm2997, %v2902, %v2904
  %v3164 = vsel %vm2997, %v2904, %v2906
  %v3165 = vsel %vm2997, %v2906, %v2908
  %v3166 = vsel %vm2997, %v2908, %v2910
  %v3167 = vsel %vm2997, %v2910, %v2912
  %v3168 = vsel %vm2997, %v2912, %v2914
  %v3169 = vsel %vm2997, %v2914, %v2916
  %v3170 = vsel %vm2997, %v2916, %v2918
  %v3171 = vsel %vm2997, %v2918, %v2920
  %v3172 = vsel %vm2997, %v2920, %v2922
  %v3173 = vsel %vm2997, %v2922, %v2924
  %v3174 = vsel %vm2997, %v2924, %v2926
  %v3175 = vsel %vm2997, %v2926, %v2928
  %v3176 = vsel %vm2997, %v2928, %v2930
  %v3177 = vsel %vm2997, %v2930, %v2932
  %v3178 = vsel %vm2997, %v2934, %v2936
  %v3179 = vsel %vm2997, %v2936, %v2938
  %v3180 = vsel %vm2997, %v2938, %v2940
  %v3181 = vsel %vm2997, %v2940, %v2942
  %v3182 = vsel %vm2997, %v2942, %v2944
  %v3183 = vsel %vm2997, %v2944, %v2946
  %v3184 = vsel %vm2997, %v2946, %v2948
  %v3185 = vsel %vm2997, %v2948, %v2950
  %v3186 = vsel %vm2997, %v2950, %v2952
  %v3187 = vsel %vm2997, %v2952, %v2954
  %v3188 = vsel %vm2997, %v2954, %v2956
  %v3189 = vsel %vm2997, %v2956, %v2958
  %v3190 = vsel %vm2997, %v2958, %v2960
  %v3191 = vsel %vm2997, %v2960, %v2962
  %v3192 = vsel %vm2997, %v2962, %v2964
  %v3193 = vsel %vm2997, %v2966, %v2968
  %v3194 = vsel %vm2997, %v2968, %v2970
  %v3195 = vsel %vm2997, %v2970, %v2972
  %v3196 = vsel %vm2997, %v2972, %v2974
  %v3197 = vsel %vm2997, %v2974, %v2976
  %v3198 = vsel %vm2997, %v2976, %v2978
  %v3199 = vsel %vm2997, %v2978, %v2980
  %v3200 = vsel %vm2997, %v2980, %v2982
  %v3201 = vsel %vm2997, %v2982, %v2984
  %v3202 = vsel %vm2997, %v2984, %v2986
  %v3203 = vsel %vm2997, %v2986, %v2988
  %v3204 = vsel %vm2997, %v2988, %v2990
  %v3205 = vsel %vm2997, %v2990, %v2992
  %v3206 = vsel %vm2997, %v2992, %v2994
  %v3207 = vsel %vm2997, %v2994, %v2996
  %vm3416 = vcmask 719872
  %v3418 = vsel %vm3416, %v2323, 0
  %vm3420 = vcmask 1043456
  %v3422 = vsel %vm3420, %v3193, 0
  %v3425 = vsel %vm3420, %v3194, 0
  %v3428 = vsel %vm3420, %v3195, 0
  %v3431 = vsel %vm3420, %v3196, 0
  %v3434 = vsel %vm3420, %v3197, 0
  %v3437 = vsel %vm3420, %v3198, 0
  %v3440 = vsel %vm3420, %v3199, 0
  %v3443 = vsel %vm3420, %v3200, 0
  %v3446 = vsel %vm3420, %v3201, 0
  %v3449 = vsel %vm3420, %v3202, 0
  %v3452 = vsel %vm3420, %v3203, 0
  %v3455 = vsel %vm3420, %v3204, 0
  %v3458 = vsel %vm3420, %v3205, 0
  %v3461 = vsel %vm3420, %v3206, 0
  %v3464 = vsel %vm3420, %v3207, 0
  %v3467 = vsel %vm3420, %v2996, 0
  %3469 = vmatprep.subr.bf16.mxu0 %v3104
  %3470 = vmatpush1.bf16.msra.mxu0 %v3103
  %3471 = vmatprep.subr.bf16.mxu0 %v3089
  %3472 = vmatpush1.bf16.msra.mxu0 %v3088
  %3473 = vmatprep.subr.bf16.mxu0 %v3074
  %3474 = vmatpush1.bf16.msra.mxu0 %v3073
  %3475 = vmatprep.subr.bf16.mxu0 %v3059
  %3476 = vmatpush1.bf16.msra.mxu0 %v3058
  %3477 = vmatprep.subr.bf16.mxu0 %v3044
  %3478 = vmatpush1.bf16.msra.mxu0 %v3043
  %3479 = vmatprep.subr.bf16.mxu0 %v3029
  %3480 = vmatpush1.bf16.msra.mxu0 %v3028
  %3481 = vmatprep.subr.bf16.mxu0 %v3014
  %3482 = vmatpush1.bf16.msra.mxu0 %v3013
  %3483 = vmatprep.subr.bf16.mxu0 %v2999
  %3484 = vmatpush1.bf16.msra.mxu0 %v2998
  %3485 = vmatprep.subr.bf16.mxu0 0
  %3486 = vmatpush2.bf16.msra.mxu0 0
  %3487 = vmatprep.subr.bf16.mxu0 0
  %3488 = vmatpush2.bf16.msra.mxu0 0
  %3489 = vmatprep.subr.bf16.mxu0 %v3425
  %3490 = vmatpush2.bf16.msra.mxu0 %v3422
  %3491 = vmatprep.subr.bf16.mxu0 %v3179
  %3492 = vmatpush2.bf16.msra.mxu0 %v3178
  %3493 = vmatprep.subr.bf16.mxu0 %v3164
  %3494 = vmatpush2.bf16.msra.mxu0 %v3163
  %3495 = vmatprep.subr.bf16.mxu0 %v3149
  %3496 = vmatpush2.bf16.msra.mxu0 %v3148
  %3497 = vmatprep.subr.bf16.mxu0 %v3134
  %3498 = vmatpush2.bf16.msra.mxu0 %v3133
  %3499 = vmatprep.subr.bf16.mxu0 %v3119
  %3500 = vmatpush2.bf16.msra.mxu0 %v3118
  %3501 = vmatprep.mubr.bf16.mxu0 %v3418
  %3502 = vmatmul.mubr.bf16.gmra.mxu0 %v2322
  %v3503 = vpop.f32.mrf.mxu0
  %v3504 = vadd.f32 0.0, %v3503
  %v3505 = vpop.f32.mrf.mxu0
  %v3506 = vadd.f32 0.0, %v3505
  %v3507 = vpop.f32.mrf.mxu0
  %v3508 = vpop.f32.mrf.mxu0
  %3509 = vdwg.mxu0
  %3510 = vmatprep.subr.bf16.mxu0 %v3106
  %3511 = vmatpush1.bf16.msra.mxu0 %v3105
  %3512 = vmatprep.subr.bf16.mxu0 %v3091
  %3513 = vmatpush1.bf16.msra.mxu0 %v3090
  %3514 = vmatprep.subr.bf16.mxu0 %v3076
  %3515 = vmatpush1.bf16.msra.mxu0 %v3075
  %3516 = vmatprep.subr.bf16.mxu0 %v3061
  %3517 = vmatpush1.bf16.msra.mxu0 %v3060
  %3518 = vmatprep.subr.bf16.mxu0 %v3046
  %3519 = vmatpush1.bf16.msra.mxu0 %v3045
  %3520 = vmatprep.subr.bf16.mxu0 %v3031
  %3521 = vmatpush1.bf16.msra.mxu0 %v3030
  %3522 = vmatprep.subr.bf16.mxu0 %v3016
  %3523 = vmatpush1.bf16.msra.mxu0 %v3015
  %3524 = vmatprep.subr.bf16.mxu0 %v3001
  %3525 = vmatpush1.bf16.msra.mxu0 %v3000
  %3526 = vmatprep.subr.bf16.mxu0 0
  %3527 = vmatpush2.bf16.msra.mxu0 0
  %3528 = vmatprep.subr.bf16.mxu0 0
  %3529 = vmatpush2.bf16.msra.mxu0 0
  %3530 = vmatprep.subr.bf16.mxu0 %v3431
  %3531 = vmatpush2.bf16.msra.mxu0 %v3428
  %3532 = vmatprep.subr.bf16.mxu0 %v3181
  %3533 = vmatpush2.bf16.msra.mxu0 %v3180
  %3534 = vmatprep.subr.bf16.mxu0 %v3166
  %3535 = vmatpush2.bf16.msra.mxu0 %v3165
  %3536 = vmatprep.subr.bf16.mxu0 %v3151
  %3537 = vmatpush2.bf16.msra.mxu0 %v3150
  %3538 = vmatprep.subr.bf16.mxu0 %v3136
  %3539 = vmatpush2.bf16.msra.mxu0 %v3135
  %3540 = vmatprep.subr.bf16.mxu0 %v3121
  %3541 = vmatpush2.bf16.msra.mxu0 %v3120
  %3542 = vmatprep.mubr.bf16.mxu0 %v3418
  %3543 = vmatmul.mubr.bf16.gmra.mxu0 %v2322
  %v3544 = vpop.f32.mrf.mxu0
  %v3545 = vadd.f32 0.0, %v3544
  %v3546 = vpop.f32.mrf.mxu0
  %v3547 = vadd.f32 0.0, %v3546
  %v3548 = vpop.f32.mrf.mxu0
  %v3549 = vpop.f32.mrf.mxu0
  %3550 = vdwg.mxu0
  %3551 = vmatprep.subr.bf16.mxu0 %v3108
  %3552 = vmatpush1.bf16.msra.mxu0 %v3107
  %3553 = vmatprep.subr.bf16.mxu0 %v3093
  %3554 = vmatpush1.bf16.msra.mxu0 %v3092
  %3555 = vmatprep.subr.bf16.mxu0 %v3078
  %3556 = vmatpush1.bf16.msra.mxu0 %v3077
  %3557 = vmatprep.subr.bf16.mxu0 %v3063
  %3558 = vmatpush1.bf16.msra.mxu0 %v3062
  %3559 = vmatprep.subr.bf16.mxu0 %v3048
  %3560 = vmatpush1.bf16.msra.mxu0 %v3047
  %3561 = vmatprep.subr.bf16.mxu0 %v3033
  %3562 = vmatpush1.bf16.msra.mxu0 %v3032
  %3563 = vmatprep.subr.bf16.mxu0 %v3018
  %3564 = vmatpush1.bf16.msra.mxu0 %v3017
  %3565 = vmatprep.subr.bf16.mxu0 %v3003
  %3566 = vmatpush1.bf16.msra.mxu0 %v3002
  %3567 = vmatprep.subr.bf16.mxu0 0
  %3568 = vmatpush2.bf16.msra.mxu0 0
  %3569 = vmatprep.subr.bf16.mxu0 0
  %3570 = vmatpush2.bf16.msra.mxu0 0
  %3571 = vmatprep.subr.bf16.mxu0 %v3437
  %3572 = vmatpush2.bf16.msra.mxu0 %v3434
  %3573 = vmatprep.subr.bf16.mxu0 %v3183
  %3574 = vmatpush2.bf16.msra.mxu0 %v3182
  %3575 = vmatprep.subr.bf16.mxu0 %v3168
  %3576 = vmatpush2.bf16.msra.mxu0 %v3167
  %3577 = vmatprep.subr.bf16.mxu0 %v3153
  %3578 = vmatpush2.bf16.msra.mxu0 %v3152
  %3579 = vmatprep.subr.bf16.mxu0 %v3138
  %3580 = vmatpush2.bf16.msra.mxu0 %v3137
  %3581 = vmatprep.subr.bf16.mxu0 %v3123
  %3582 = vmatpush2.bf16.msra.mxu0 %v3122
  %3583 = vmatprep.mubr.bf16.mxu0 %v3418
  %3584 = vmatmul.mubr.bf16.gmra.mxu0 %v2322
  %v3585 = vpop.f32.mrf.mxu0
  %v3586 = vadd.f32 0.0, %v3585
  %v3587 = vpop.f32.mrf.mxu0
  %v3588 = vadd.f32 0.0, %v3587
  %v3589 = vpop.f32.mrf.mxu0
  %v3590 = vpop.f32.mrf.mxu0
  %3591 = vdwg.mxu0
  %3592 = vmatprep.subr.bf16.mxu0 %v3110
  %3593 = vmatpush1.bf16.msra.mxu0 %v3109
  %3594 = vmatprep.subr.bf16.mxu0 %v3095
  %3595 = vmatpush1.bf16.msra.mxu0 %v3094
  %3596 = vmatprep.subr.bf16.mxu0 %v3080
  %3597 = vmatpush1.bf16.msra.mxu0 %v3079
  %3598 = vmatprep.subr.bf16.mxu0 %v3065
  %3599 = vmatpush1.bf16.msra.mxu0 %v3064
  %3600 = vmatprep.subr.bf16.mxu0 %v3050
  %3601 = vmatpush1.bf16.msra.mxu0 %v3049
  %3602 = vmatprep.subr.bf16.mxu0 %v3035
  %3603 = vmatpush1.bf16.msra.mxu0 %v3034
  %3604 = vmatprep.subr.bf16.mxu0 %v3020
  %3605 = vmatpush1.bf16.msra.mxu0 %v3019
  %3606 = vmatprep.subr.bf16.mxu0 %v3005
  %3607 = vmatpush1.bf16.msra.mxu0 %v3004
  %3608 = vmatprep.subr.bf16.mxu0 0
  %3609 = vmatpush2.bf16.msra.mxu0 0
  %3610 = vmatprep.subr.bf16.mxu0 0
  %3611 = vmatpush2.bf16.msra.mxu0 0
  %3612 = vmatprep.subr.bf16.mxu0 %v3443
  %3613 = vmatpush2.bf16.msra.mxu0 %v3440
  %3614 = vmatprep.subr.bf16.mxu0 %v3185
  %3615 = vmatpush2.bf16.msra.mxu0 %v3184
  %3616 = vmatprep.subr.bf16.mxu0 %v3170
  %3617 = vmatpush2.bf16.msra.mxu0 %v3169
  %3618 = vmatprep.subr.bf16.mxu0 %v3155
  %3619 = vmatpush2.bf16.msra.mxu0 %v3154
  %3620 = vmatprep.subr.bf16.mxu0 %v3140
  %3621 = vmatpush2.bf16.msra.mxu0 %v3139
  %3622 = vmatprep.subr.bf16.mxu0 %v3125
  %3623 = vmatpush2.bf16.msra.mxu0 %v3124
  %3624 = vmatprep.mubr.bf16.mxu0 %v3418
  %3625 = vmatmul.mubr.bf16.gmra.mxu0 %v2322
  %v3626 = vpop.f32.mrf.mxu0
  %v3627 = vadd.f32 0.0, %v3626
  %v3628 = vpop.f32.mrf.mxu0
  %v3629 = vadd.f32 0.0, %v3628
  %v3630 = vpop.f32.mrf.mxu0
  %v3631 = vpop.f32.mrf.mxu0
  %3632 = vdwg.mxu0
  %3633 = vmatprep.subr.bf16.mxu0 %v3112
  %3634 = vmatpush1.bf16.msra.mxu0 %v3111
  %3635 = vmatprep.subr.bf16.mxu0 %v3097
  %3636 = vmatpush1.bf16.msra.mxu0 %v3096
  %3637 = vmatprep.subr.bf16.mxu0 %v3082
  %3638 = vmatpush1.bf16.msra.mxu0 %v3081
  %3639 = vmatprep.subr.bf16.mxu0 %v3067
  %3640 = vmatpush1.bf16.msra.mxu0 %v3066
  %3641 = vmatprep.subr.bf16.mxu0 %v3052
  %3642 = vmatpush1.bf16.msra.mxu0 %v3051
  %3643 = vmatprep.subr.bf16.mxu0 %v3037
  %3644 = vmatpush1.bf16.msra.mxu0 %v3036
  %3645 = vmatprep.subr.bf16.mxu0 %v3022
  %3646 = vmatpush1.bf16.msra.mxu0 %v3021
  %3647 = vmatprep.subr.bf16.mxu0 %v3007
  %3648 = vmatpush1.bf16.msra.mxu0 %v3006
  %3649 = vmatprep.subr.bf16.mxu0 0
  %3650 = vmatpush2.bf16.msra.mxu0 0
  %3651 = vmatprep.subr.bf16.mxu0 0
  %3652 = vmatpush2.bf16.msra.mxu0 0
  %3653 = vmatprep.subr.bf16.mxu0 %v3449
  %3654 = vmatpush2.bf16.msra.mxu0 %v3446
  %3655 = vmatprep.subr.bf16.mxu0 %v3187
  %3656 = vmatpush2.bf16.msra.mxu0 %v3186
  %3657 = vmatprep.subr.bf16.mxu0 %v3172
  %3658 = vmatpush2.bf16.msra.mxu0 %v3171
  %3659 = vmatprep.subr.bf16.mxu0 %v3157
  %3660 = vmatpush2.bf16.msra.mxu0 %v3156
  %3661 = vmatprep.subr.bf16.mxu0 %v3142
  %3662 = vmatpush2.bf16.msra.mxu0 %v3141
  %3663 = vmatprep.subr.bf16.mxu0 %v3127
  %3664 = vmatpush2.bf16.msra.mxu0 %v3126
  %3665 = vmatprep.mubr.bf16.mxu0 %v3418
  %3666 = vmatmul.mubr.bf16.gmra.mxu0 %v2322
  %v3667 = vpop.f32.mrf.mxu0
  %v3668 = vadd.f32 0.0, %v3667
  %v3669 = vpop.f32.mrf.mxu0
  %v3670 = vadd.f32 0.0, %v3669
  %v3671 = vpop.f32.mrf.mxu0
  %v3672 = vpop.f32.mrf.mxu0
  %3673 = vdwg.mxu0
  %3674 = vmatprep.subr.bf16.mxu0 %v3114
  %3675 = vmatpush1.bf16.msra.mxu0 %v3113
  %3676 = vmatprep.subr.bf16.mxu0 %v3099
  %3677 = vmatpush1.bf16.msra.mxu0 %v3098
  %3678 = vmatprep.subr.bf16.mxu0 %v3084
  %3679 = vmatpush1.bf16.msra.mxu0 %v3083
  %3680 = vmatprep.subr.bf16.mxu0 %v3069
  %3681 = vmatpush1.bf16.msra.mxu0 %v3068
  %3682 = vmatprep.subr.bf16.mxu0 %v3054
  %3683 = vmatpush1.bf16.msra.mxu0 %v3053
  %3684 = vmatprep.subr.bf16.mxu0 %v3039
  %3685 = vmatpush1.bf16.msra.mxu0 %v3038
  %3686 = vmatprep.subr.bf16.mxu0 %v3024
  %3687 = vmatpush1.bf16.msra.mxu0 %v3023
  %3688 = vmatprep.subr.bf16.mxu0 %v3009
  %3689 = vmatpush1.bf16.msra.mxu0 %v3008
  %3690 = vmatprep.subr.bf16.mxu0 0
  %3691 = vmatpush2.bf16.msra.mxu0 0
  %3692 = vmatprep.subr.bf16.mxu0 0
  %3693 = vmatpush2.bf16.msra.mxu0 0
  %3694 = vmatprep.subr.bf16.mxu0 %v3455
  %3695 = vmatpush2.bf16.msra.mxu0 %v3452
  %3696 = vmatprep.subr.bf16.mxu0 %v3189
  %3697 = vmatpush2.bf16.msra.mxu0 %v3188
  %3698 = vmatprep.subr.bf16.mxu0 %v3174
  %3699 = vmatpush2.bf16.msra.mxu0 %v3173
  %3700 = vmatprep.subr.bf16.mxu0 %v3159
  %3701 = vmatpush2.bf16.msra.mxu0 %v3158
  %3702 = vmatprep.subr.bf16.mxu0 %v3144
  %3703 = vmatpush2.bf16.msra.mxu0 %v3143
  %3704 = vmatprep.subr.bf16.mxu0 %v3129
  %3705 = vmatpush2.bf16.msra.mxu0 %v3128
  %3706 = vmatprep.mubr.bf16.mxu0 %v3418
  %3707 = vmatmul.mubr.bf16.gmra.mxu0 %v2322
  %v3708 = vpop.f32.mrf.mxu0
  %v3709 = vadd.f32 0.0, %v3708
  %v3710 = vpop.f32.mrf.mxu0
  %v3711 = vadd.f32 0.0, %v3710
  %v3712 = vpop.f32.mrf.mxu0
  %v3713 = vpop.f32.mrf.mxu0
  %3714 = vdwg.mxu0
  %3715 = vmatprep.subr.bf16.mxu0 %v3116
  %3716 = vmatpush1.bf16.msra.mxu0 %v3115
  %3717 = vmatprep.subr.bf16.mxu0 %v3101
  %3718 = vmatpush1.bf16.msra.mxu0 %v3100
  %3719 = vmatprep.subr.bf16.mxu0 %v3086
  %3720 = vmatpush1.bf16.msra.mxu0 %v3085
  %3721 = vmatprep.subr.bf16.mxu0 %v3071
  %3722 = vmatpush1.bf16.msra.mxu0 %v3070
  %3723 = vmatprep.subr.bf16.mxu0 %v3056
  %3724 = vmatpush1.bf16.msra.mxu0 %v3055
  %3725 = vmatprep.subr.bf16.mxu0 %v3041
  %3726 = vmatpush1.bf16.msra.mxu0 %v3040
  %3727 = vmatprep.subr.bf16.mxu0 %v3026
  %3728 = vmatpush1.bf16.msra.mxu0 %v3025
  %3729 = vmatprep.subr.bf16.mxu0 %v3011
  %3730 = vmatpush1.bf16.msra.mxu0 %v3010
  %3731 = vmatprep.subr.bf16.mxu0 0
  %3732 = vmatpush2.bf16.msra.mxu0 0
  %3733 = vmatprep.subr.bf16.mxu0 0
  %3734 = vmatpush2.bf16.msra.mxu0 0
  %3735 = vmatprep.subr.bf16.mxu0 %v3461
  %3736 = vmatpush2.bf16.msra.mxu0 %v3458
  %3737 = vmatprep.subr.bf16.mxu0 %v3191
  %3738 = vmatpush2.bf16.msra.mxu0 %v3190
  %3739 = vmatprep.subr.bf16.mxu0 %v3176
  %3740 = vmatpush2.bf16.msra.mxu0 %v3175
  %3741 = vmatprep.subr.bf16.mxu0 %v3161
  %3742 = vmatpush2.bf16.msra.mxu0 %v3160
  %3743 = vmatprep.subr.bf16.mxu0 %v3146
  %3744 = vmatpush2.bf16.msra.mxu0 %v3145
  %3745 = vmatprep.subr.bf16.mxu0 %v3131
  %3746 = vmatpush2.bf16.msra.mxu0 %v3130
  %3747 = vmatprep.mubr.bf16.mxu0 %v3418
  %3748 = vmatmul.mubr.bf16.gmra.mxu0 %v2322
  %v3749 = vpop.f32.mrf.mxu0
  %v3750 = vadd.f32 0.0, %v3749
  %v3751 = vpop.f32.mrf.mxu0
  %v3752 = vadd.f32 0.0, %v3751
  %v3753 = vpop.f32.mrf.mxu0
  %v3754 = vpop.f32.mrf.mxu0
  %3755 = vdwg.mxu0
  %3756 = vmatprep.subr.bf16.mxu0 %v2804
  %3757 = vmatpush1.bf16.msra.mxu0 %v3117
  %3758 = vmatprep.subr.bf16.mxu0 %v2772
  %3759 = vmatpush1.bf16.msra.mxu0 %v3102
  %3760 = vmatprep.subr.bf16.mxu0 %v2740
  %3761 = vmatpush1.bf16.msra.mxu0 %v3087
  %3762 = vmatprep.subr.bf16.mxu0 %v2708
  %3763 = vmatpush1.bf16.msra.mxu0 %v3072
  %3764 = vmatprep.subr.bf16.mxu0 %v2676
  %3765 = vmatpush1.bf16.msra.mxu0 %v3057
  %3766 = vmatprep.subr.bf16.mxu0 %v2644
  %3767 = vmatpush1.bf16.msra.mxu0 %v3042
  %3768 = vmatprep.subr.bf16.mxu0 %v2612
  %3769 = vmatpush1.bf16.msra.mxu0 %v3027
  %3770 = vmatprep.subr.bf16.mxu0 %v2580
  %3771 = vmatpush1.bf16.msra.mxu0 %v3012
  %3772 = vmatprep.subr.bf16.mxu0 0
  %3773 = vmatpush2.bf16.msra.mxu0 0
  %3774 = vmatprep.subr.bf16.mxu0 0
  %3775 = vmatpush2.bf16.msra.mxu0 0
  %3776 = vmatprep.subr.bf16.mxu0 %v3467
  %3777 = vmatpush2.bf16.msra.mxu0 %v3464
  %3778 = vmatprep.subr.bf16.mxu0 %v2964
  %3779 = vmatpush2.bf16.msra.mxu0 %v3192
  %3780 = vmatprep.subr.bf16.mxu0 %v2932
  %3781 = vmatpush2.bf16.msra.mxu0 %v3177
  %3782 = vmatprep.subr.bf16.mxu0 %v2900
  %3783 = vmatpush2.bf16.msra.mxu0 %v3162
  %3784 = vmatprep.subr.bf16.mxu0 %v2868
  %3785 = vmatpush2.bf16.msra.mxu0 %v3147
  %3786 = vmatprep.subr.bf16.mxu0 %v2836
  %3787 = vmatpush2.bf16.msra.mxu0 %v3132
  %3788 = vmatprep.mubr.bf16.mxu0 %v3418
  %3789 = vmatmul.mubr.bf16.gmra.mxu0 %v2322
  %v3790 = vpop.f32.mrf.mxu0
  %v3791 = vadd.f32 0.0, %v3790
  %v3792 = vpop.f32.mrf.mxu0
  %v3793 = vadd.f32 0.0, %v3792
  %v3794 = vpop.f32.mrf.mxu0
  %v3795 = vpop.f32.mrf.mxu0
  %3796 = vdwg.mxu0
  %v3799 = vlaneseq
  %v3800 = vshrl.u32 %v3799, 7
  %v3801 = vsub.s32 0, %v3800
  %v3802 = vrot.slane %v24, %v3801
  %v3803 = vlaneseq
  %v3804 = vshrl.u32 %v3803, 7
  %v3805 = vsub.s32 1, %v3804
  %v3806 = vrot.slane %v24, %v3805
  %v3807 = vlaneseq
  %v3808 = vshrl.u32 %v3807, 7
  %v3809 = vsub.s32 2, %v3808
  %v3810 = vrot.slane %v24, %v3809
  %v3811 = vlaneseq
  %v3812 = vshrl.u32 %v3811, 7
  %v3813 = vsub.s32 3, %v3812
  %v3814 = vrot.slane %v24, %v3813
  %v3815 = vlaneseq
  %v3816 = vshrl.u32 %v3815, 7
  %v3817 = vsub.s32 4, %v3816
  %v3818 = vrot.slane %v24, %v3817
  %v3819 = vlaneseq
  %v3820 = vshrl.u32 %v3819, 7
  %v3821 = vsub.s32 5, %v3820
  %v3822 = vrot.slane %v24, %v3821
  %v3823 = vlaneseq
  %v3824 = vshrl.u32 %v3823, 7
  %v3825 = vsub.s32 6, %v3824
  %v3826 = vrot.slane %v24, %v3825
  %v3827 = vlaneseq
  %v3828 = vshrl.u32 %v3827, 7
  %v3829 = vsub.s32 7, %v3828
  %v3830 = vrot.slane %v24, %v3829
  %v3831 = vlaneseq
  %v3832 = vshrl.u32 %v3831, 7
  %v3833 = vsub.s32 0, %v3832
  %v3834 = vrot.slane %v25, %v3833
  %v3835 = vlaneseq
  %v3836 = vshrl.u32 %v3835, 7
  %v3837 = vsub.s32 1, %v3836
  %v3838 = vrot.slane %v25, %v3837
  %v3839 = vlaneseq
  %v3840 = vshrl.u32 %v3839, 7
  %v3841 = vsub.s32 2, %v3840
  %v3842 = vrot.slane %v25, %v3841
  %v3843 = vlaneseq
  %v3844 = vshrl.u32 %v3843, 7
  %v3845 = vsub.s32 3, %v3844
  %v3846 = vrot.slane %v25, %v3845
  %v3847 = vlaneseq
  %v3848 = vshrl.u32 %v3847, 7
  %v3849 = vsub.s32 4, %v3848
  %v3850 = vrot.slane %v25, %v3849
  %v3851 = vlaneseq
  %v3852 = vshrl.u32 %v3851, 7
  %v3853 = vsub.s32 5, %v3852
  %v3854 = vrot.slane %v25, %v3853
  %v3855 = vlaneseq
  %v3856 = vshrl.u32 %v3855, 7
  %v3857 = vsub.s32 6, %v3856
  %v3858 = vrot.slane %v25, %v3857
  %v3859 = vlaneseq
  %v3860 = vshrl.u32 %v3859, 7
  %v3861 = vsub.s32 7, %v3860
  %v3862 = vrot.slane %v25, %v3861
  %v3879 = vmul.f32 %v3504, %v3802
  %v3880 = vmul.f32 %v3506, %v3806
  %v3881 = vmul.f32 %v3545, %v3810
  %v3882 = vmul.f32 %v3547, %v3814
  %v3883 = vmul.f32 %v3586, %v3818
  %v3884 = vmul.f32 %v3588, %v3822
  %v3885 = vmul.f32 %v3627, %v3826
  %v3886 = vmul.f32 %v3629, %v3830
  %v3887 = vmul.f32 %v3668, %v3834
  %v3888 = vmul.f32 %v3670, %v3838
  %v3889 = vmul.f32 %v3709, %v3842
  %v3890 = vmul.f32 %v3711, %v3846
  %v3891 = vmul.f32 %v3750, %v3850
  %v3892 = vmul.f32 %v3752, %v3854
  %v3893 = vmul.f32 %v3791, %v3858
  %v3894 = vmul.f32 %v3793, %v3862
  %v3895 = vadd.f32 %v3879, %v3880
  %v3896 = vadd.f32 %v3895, %v3881
  %v3897 = vadd.f32 %v3896, %v3882
  %v3898 = vadd.f32 %v3897, %v3883
  %v3899 = vadd.f32 %v3898, %v3884
  %v3900 = vadd.f32 %v3899, %v3885
  %v3901 = vadd.f32 %v3900, %v3886
  %v3902 = vadd.f32 %v3901, %v3887
  %v3903 = vadd.f32 %v3902, %v3888
  %v3904 = vadd.f32 %v3903, %v3889
  %v3905 = vadd.f32 %v3904, %v3890
  %v3906 = vadd.f32 %v3905, %v3891
  %v3907 = vadd.f32 %v3906, %v3892
  %v3908 = vadd.f32 %v3907, %v3893
  %vm3909 = vcmask 654336
  %v3910 = vsel %vm3909, %v3894, 0.0
  %v3911 = vadd.f32 %v3908, %v3910
  %3912 = vadd.xlane.f32.xlu0 %v3911
  %v3913 = vpop.xlane.xlu0 %3912
  %v3914 = vmul.f32 %v3913, 0.0009765625
  %v3915 = vmul.f32 %v3879, %v3504
  %v3916 = vmul.f32 %v3880, %v3506
  %v3917 = vmul.f32 %v3881, %v3545
  %v3918 = vmul.f32 %v3882, %v3547
  %v3919 = vmul.f32 %v3883, %v3586
  %v3920 = vmul.f32 %v3884, %v3588
  %v3921 = vmul.f32 %v3885, %v3627
  %v3922 = vmul.f32 %v3886, %v3629
  %v3923 = vmul.f32 %v3887, %v3668
  %v3924 = vmul.f32 %v3888, %v3670
  %v3925 = vmul.f32 %v3889, %v3709
  %v3926 = vmul.f32 %v3890, %v3711
  %v3927 = vmul.f32 %v3891, %v3750
  %v3928 = vmul.f32 %v3892, %v3752
  %v3929 = vmul.f32 %v3893, %v3791
  %v3930 = vmul.f32 %v3894, %v3793
  %v3931 = vadd.f32 %v3915, %v3916
  %v3932 = vadd.f32 %v3931, %v3917
  %v3933 = vadd.f32 %v3932, %v3918
  %v3934 = vadd.f32 %v3933, %v3919
  %v3935 = vadd.f32 %v3934, %v3920
  %v3936 = vadd.f32 %v3935, %v3921
  %v3937 = vadd.f32 %v3936, %v3922
  %v3938 = vadd.f32 %v3937, %v3923
  %v3939 = vadd.f32 %v3938, %v3924
  %v3940 = vadd.f32 %v3939, %v3925
  %v3941 = vadd.f32 %v3940, %v3926
  %v3942 = vadd.f32 %v3941, %v3927
  %v3943 = vadd.f32 %v3942, %v3928
  %v3944 = vadd.f32 %v3943, %v3929
  %v3945 = vsel %vm3909, %v3930, 0.0
  %v3946 = vadd.f32 %v3944, %v3945
  %3947 = vadd.xlane.f32.xlu0 %v3946
  %v3948 = vpop.xlane.xlu0 %3947
  %v3949 = vmul.f32 %v3948, 0.0009765625
  %v3950 = vmul.f32 %v3914, %v3914
  %v3951 = vsub.f32 %v3949, %v3950
  %v3952 = vld [vmem:[%s3] sm:$0xff]
  %v3953 = vadd.f32 %v3951, 1e-05
  %v3954 = vrsqrt.pop %v3953
  %v3955 = vmul.f32 %v3952, %v3954
  %v3956 = vld [vmem:[%s4] sm:$0xff]
  %v3957 = vmul.f32 %v3914, %v3955
  %v3958 = vsub.f32 %v3956, %v3957
  %3960 = vset.pattern.permute.xlu0 0
  %3961 = vperm.xlu0 %3960, %v3955
  %v3962 = vpop.permute.xlu0 %3961
  %v3964 = vmul.f32 %v3504, %v3962
  %v3965 = vmul.f32 %v3506, %v3962
  %v3966 = vmul.f32 %v3545, %v3962
  %v3967 = vmul.f32 %v3547, %v3962
  %v3968 = vmul.f32 %v3586, %v3962
  %v3969 = vmul.f32 %v3588, %v3962
  %v3970 = vmul.f32 %v3627, %v3962
  %v3971 = vmul.f32 %v3629, %v3962
  %v3972 = vmul.f32 %v3668, %v3962
  %v3973 = vmul.f32 %v3670, %v3962
  %v3974 = vmul.f32 %v3709, %v3962
  %v3975 = vmul.f32 %v3711, %v3962
  %v3976 = vmul.f32 %v3750, %v3962
  %v3977 = vmul.f32 %v3752, %v3962
  %v3978 = vmul.f32 %v3791, %v3962
  %v3979 = vmul.f32 %v3793, %v3962
  %3981 = vset.pattern.permute.xlu0 0
  %3982 = vperm.xlu0 %3981, %v3958
  %v3983 = vpop.permute.xlu0 %3982
  %v3985 = vadd.f32 %v3964, %v3983
  %v3986 = vadd.f32 %v3965, %v3983
  %v3987 = vadd.f32 %v3966, %v3983
  %v3988 = vadd.f32 %v3967, %v3983
  %v3989 = vadd.f32 %v3968, %v3983
  %v3990 = vadd.f32 %v3969, %v3983
  %v3991 = vadd.f32 %v3970, %v3983
  %v3992 = vadd.f32 %v3971, %v3983
  %v3993 = vadd.f32 %v3972, %v3983
  %v3994 = vadd.f32 %v3973, %v3983
  %v3995 = vadd.f32 %v3974, %v3983
  %v3996 = vadd.f32 %v3975, %v3983
  %v3997 = vadd.f32 %v3976, %v3983
  %v3998 = vadd.f32 %v3977, %v3983
  %v3999 = vadd.f32 %v3978, %v3983
  %v4000 = vadd.f32 %v3979, %v3983
  %vm4001 = vcmp.ge.f32.partialorder %v3985, 0.0
  %vm4002 = vcmp.ge.f32.partialorder %v3986, 0.0
  %vm4003 = vcmp.ge.f32.partialorder %v3987, 0.0
  %vm4004 = vcmp.ge.f32.partialorder %v3988, 0.0
  %vm4005 = vcmp.ge.f32.partialorder %v3989, 0.0
  %vm4006 = vcmp.ge.f32.partialorder %v3990, 0.0
  %vm4007 = vcmp.ge.f32.partialorder %v3991, 0.0
  %vm4008 = vcmp.ge.f32.partialorder %v3992, 0.0
  %vm4009 = vcmp.ge.f32.partialorder %v3993, 0.0
  %vm4010 = vcmp.ge.f32.partialorder %v3994, 0.0
  %vm4011 = vcmp.ge.f32.partialorder %v3995, 0.0
  %vm4012 = vcmp.ge.f32.partialorder %v3996, 0.0
  %vm4013 = vcmp.ge.f32.partialorder %v3997, 0.0
  %vm4014 = vcmp.ge.f32.partialorder %v3998, 0.0
  %vm4015 = vcmp.ge.f32.partialorder %v3999, 0.0
  %vm4016 = vcmp.ge.f32.partialorder %v4000, 0.0
  %v4017 = vmul.f32 %v3985, 0.2
  %v4018 = vmul.f32 %v3986, 0.2
  %v4019 = vmul.f32 %v3987, 0.2
  %v4020 = vmul.f32 %v3988, 0.2
  %v4021 = vmul.f32 %v3989, 0.2
  %v4022 = vmul.f32 %v3990, 0.2
  %v4023 = vmul.f32 %v3991, 0.2
  %v4024 = vmul.f32 %v3992, 0.2
  %v4025 = vmul.f32 %v3993, 0.2
  %v4026 = vmul.f32 %v3994, 0.2
  %v4027 = vmul.f32 %v3995, 0.2
  %v4028 = vmul.f32 %v3996, 0.2
  %v4029 = vmul.f32 %v3997, 0.2
  %v4030 = vmul.f32 %v3998, 0.2
  %v4031 = vmul.f32 %v3999, 0.2
  %v4032 = vmul.f32 %v4000, 0.2
  %v4033 = vsel %vm4001, %v3985, %v4017
  %v4034 = vsel %vm4002, %v3986, %v4018
  %v4035 = vsel %vm4003, %v3987, %v4019
  %v4036 = vsel %vm4004, %v3988, %v4020
  %v4037 = vsel %vm4005, %v3989, %v4021
  %v4038 = vsel %vm4006, %v3990, %v4022
  %v4039 = vsel %vm4007, %v3991, %v4023
  %v4040 = vsel %vm4008, %v3992, %v4024
  %v4041 = vsel %vm4009, %v3993, %v4025
  %v4042 = vsel %vm4010, %v3994, %v4026
  %v4043 = vsel %vm4011, %v3995, %v4027
  %v4044 = vsel %vm4012, %v3996, %v4028
  %v4045 = vsel %vm4013, %v3997, %v4029
  %v4046 = vsel %vm4014, %v3998, %v4030
  %v4047 = vsel %vm4015, %v3999, %v4031
  %v4048 = vsel %vm4016, %v4000, %v4032
  %4049 = vst [vmem:[#allocation2] sm:$0xff] 0.0
  %vm4050 = vcmask 1048192
  %4051 = vst.msk [vmem:[#allocation2 + $0x80] sm:$0xff] %vm4050, 0.0
  %4052 = vst.msk [vmem:[#allocation2 + $0x88] sm:$0xff] %vm3909, 0.0
  %v4053 = vmul.f32 %v4033, %v3802
  %v4054 = vmul.f32 %v4034, %v3806
  %v4055 = vmul.f32 %v4035, %v3810
  %v4056 = vmul.f32 %v4036, %v3814
  %v4057 = vmul.f32 %v4037, %v3818
  %v4058 = vmul.f32 %v4038, %v3822
  %v4059 = vmul.f32 %v4039, %v3826
  %v4060 = vmul.f32 %v4040, %v3830
  %v4061 = vmul.f32 %v4041, %v3834
  %v4062 = vmul.f32 %v4042, %v3838
  %v4063 = vmul.f32 %v4043, %v3842
  %v4064 = vmul.f32 %v4044, %v3846
  %v4065 = vmul.f32 %v4045, %v3850
  %v4066 = vmul.f32 %v4046, %v3854
  %v4067 = vmul.f32 %v4047, %v3858
  %v4068 = vmul.f32 %v4048, %v3862
  %4069 = vst [vmem:[#allocation2 + $0x8] sm:$0xff] %v4053
  %4070 = vst [vmem:[#allocation2 + $0x10] sm:$0xff] %v4054
  %4071 = vst [vmem:[#allocation2 + $0x18] sm:$0xff] %v4055
  %4072 = vst [vmem:[#allocation2 + $0x20] sm:$0xff] %v4056
  %4073 = vst [vmem:[#allocation2 + $0x28] sm:$0xff] %v4057
  %4074 = vst [vmem:[#allocation2 + $0x30] sm:$0xff] %v4058
  %4075 = vst [vmem:[#allocation2 + $0x38] sm:$0xff] %v4059
  %4076 = vst [vmem:[#allocation2 + $0x40] sm:$0xff] %v4060
  %4077 = vst [vmem:[#allocation2 + $0x48] sm:$0xff] %v4061
  %4078 = vst [vmem:[#allocation2 + $0x50] sm:$0xff] %v4062
  %4079 = vst [vmem:[#allocation2 + $0x58] sm:$0xff] %v4063
  %4080 = vst [vmem:[#allocation2 + $0x60] sm:$0xff] %v4064
  %4081 = vst [vmem:[#allocation2 + $0x68] sm:$0xff] %v4065
  %4082 = vst [vmem:[#allocation2 + $0x70] sm:$0xff] %v4066
  %4083 = vst [vmem:[#allocation2 + $0x78] sm:$0xff] %v4067
  %4084 = vst.msk [vmem:[#allocation2 + $0x80] sm:$0xff] %vm3909, %v4068
  %v4085 = vld [vmem:[#allocation2] sm:$0xff]
  %v4086 = vld [vmem:[#allocation2 + $0x8] sm:$0xff]
  %v4087 = vld [vmem:[#allocation2 + $0x10] sm:$0xff]
  %v4088 = vld [vmem:[#allocation2 + $0x18] sm:$0xff]
  %v4089 = vld [vmem:[#allocation2 + $0x20] sm:$0xff]
  %v4090 = vld [vmem:[#allocation2 + $0x28] sm:$0xff]
  %v4091 = vld [vmem:[#allocation2 + $0x30] sm:$0xff]
  %v4092 = vld [vmem:[#allocation2 + $0x38] sm:$0xff]
  %v4093 = vld [vmem:[#allocation2 + $0x40] sm:$0xff]
  %v4094 = vld [vmem:[#allocation2 + $0x48] sm:$0xff]
  %v4095 = vld [vmem:[#allocation2 + $0x50] sm:$0xff]
  %v4096 = vld [vmem:[#allocation2 + $0x58] sm:$0xff]
  %v4097 = vld [vmem:[#allocation2 + $0x60] sm:$0xff]
  %v4098 = vld [vmem:[#allocation2 + $0x68] sm:$0xff]
  %v4099 = vld [vmem:[#allocation2 + $0x70] sm:$0xff]
  %v4100 = vld [vmem:[#allocation2 + $0x78] sm:$0xff]
  %v4101 = vld [vmem:[#allocation2 + $0x80] sm:$0xff]
  %v4102 = vld [vmem:[#allocation2 + $0x88] sm:$0xff]
  %4119 = vrot.lane.b32.xlu0 %v4085, 127
  %v4120 = vpop.permute.xlu0 %4119
  %4121 = vrot.lane.b32.xlu0 %v4086, 127
  %v4122 = vpop.permute.xlu0 %4121
  %4123 = vrot.lane.b32.xlu0 %v4087, 127
  %v4124 = vpop.permute.xlu0 %4123
  %4125 = vrot.lane.b32.xlu0 %v4088, 127
  %v4126 = vpop.permute.xlu0 %4125
  %4127 = vrot.lane.b32.xlu0 %v4089, 127
  %v4128 = vpop.permute.xlu0 %4127
  %4129 = vrot.lane.b32.xlu0 %v4090, 127
  %v4130 = vpop.permute.xlu0 %4129
  %4131 = vrot.lane.b32.xlu0 %v4091, 127
  %v4132 = vpop.permute.xlu0 %4131
  %4133 = vrot.lane.b32.xlu0 %v4092, 127
  %v4134 = vpop.permute.xlu0 %4133
  %4135 = vrot.lane.b32.xlu0 %v4093, 127
  %v4136 = vpop.permute.xlu0 %4135
  %4137 = vrot.lane.b32.xlu0 %v4094, 127
  %v4138 = vpop.permute.xlu0 %4137
  %4139 = vrot.lane.b32.xlu0 %v4095, 127
  %v4140 = vpop.permute.xlu0 %4139
  %4141 = vrot.lane.b32.xlu0 %v4096, 127
  %v4142 = vpop.permute.xlu0 %4141
  %4143 = vrot.lane.b32.xlu0 %v4097, 127
  %v4144 = vpop.permute.xlu0 %4143
  %4145 = vrot.lane.b32.xlu0 %v4098, 127
  %v4146 = vpop.permute.xlu0 %4145
  %4147 = vrot.lane.b32.xlu0 %v4099, 127
  %v4148 = vpop.permute.xlu0 %4147
  %4149 = vrot.lane.b32.xlu0 %v4100, 127
  %v4150 = vpop.permute.xlu0 %4149
  %v4151 = vsel %vm92, %v4120, %v4122
  %v4152 = vsel %vm92, %v4122, %v4124
  %v4153 = vsel %vm92, %v4124, %v4126
  %v4154 = vsel %vm92, %v4126, %v4128
  %v4155 = vsel %vm92, %v4128, %v4130
  %v4156 = vsel %vm92, %v4130, %v4132
  %v4157 = vsel %vm92, %v4132, %v4134
  %v4158 = vsel %vm92, %v4134, %v4136
  %v4159 = vsel %vm92, %v4136, %v4138
  %v4160 = vsel %vm92, %v4138, %v4140
  %v4161 = vsel %vm92, %v4140, %v4142
  %v4162 = vsel %vm92, %v4142, %v4144
  %v4163 = vsel %vm92, %v4144, %v4146
  %v4164 = vsel %vm92, %v4146, %v4148
  %v4165 = vsel %vm92, %v4148, %v4150
  %4182 = vrot.lane.b32.xlu0 %v4085, 126
  %v4183 = vpop.permute.xlu0 %4182
  %4184 = vrot.lane.b32.xlu0 %v4086, 126
  %v4185 = vpop.permute.xlu0 %4184
  %4186 = vrot.lane.b32.xlu0 %v4087, 126
  %v4187 = vpop.permute.xlu0 %4186
  %4188 = vrot.lane.b32.xlu0 %v4088, 126
  %v4189 = vpop.permute.xlu0 %4188
  %4190 = vrot.lane.b32.xlu0 %v4089, 126
  %v4191 = vpop.permute.xlu0 %4190
  %4192 = vrot.lane.b32.xlu0 %v4090, 126
  %v4193 = vpop.permute.xlu0 %4192
  %4194 = vrot.lane.b32.xlu0 %v4091, 126
  %v4195 = vpop.permute.xlu0 %4194
  %4196 = vrot.lane.b32.xlu0 %v4092, 126
  %v4197 = vpop.permute.xlu0 %4196
  %4198 = vrot.lane.b32.xlu0 %v4093, 126
  %v4199 = vpop.permute.xlu0 %4198
  %4200 = vrot.lane.b32.xlu0 %v4094, 126
  %v4201 = vpop.permute.xlu0 %4200
  %4202 = vrot.lane.b32.xlu0 %v4095, 126
  %v4203 = vpop.permute.xlu0 %4202
  %4204 = vrot.lane.b32.xlu0 %v4096, 126
  %v4205 = vpop.permute.xlu0 %4204
  %4206 = vrot.lane.b32.xlu0 %v4097, 126
  %v4207 = vpop.permute.xlu0 %4206
  %4208 = vrot.lane.b32.xlu0 %v4098, 126
  %v4209 = vpop.permute.xlu0 %4208
  %4210 = vrot.lane.b32.xlu0 %v4099, 126
  %v4211 = vpop.permute.xlu0 %4210
  %4212 = vrot.lane.b32.xlu0 %v4100, 126
  %v4213 = vpop.permute.xlu0 %4212
  %v4214 = vsel %vm156, %v4183, %v4185
  %v4215 = vsel %vm156, %v4185, %v4187
  %v4216 = vsel %vm156, %v4187, %v4189
  %v4217 = vsel %vm156, %v4189, %v4191
  %v4218 = vsel %vm156, %v4191, %v4193
  %v4219 = vsel %vm156, %v4193, %v4195
  %v4220 = vsel %vm156, %v4195, %v4197
  %v4221 = vsel %vm156, %v4197, %v4199
  %v4222 = vsel %vm156, %v4199, %v4201
  %v4223 = vsel %vm156, %v4201, %v4203
  %v4224 = vsel %vm156, %v4203, %v4205
  %v4225 = vsel %vm156, %v4205, %v4207
  %v4226 = vsel %vm156, %v4207, %v4209
  %v4227 = vsel %vm156, %v4209, %v4211
  %v4228 = vsel %vm156, %v4211, %v4213
  %4245 = vrot.lane.b32.xlu0 %v4085, 118
  %v4246 = vpop.permute.xlu0 %4245
  %4247 = vrot.lane.b32.xlu0 %v4086, 118
  %v4248 = vpop.permute.xlu0 %4247
  %4249 = vrot.lane.b32.xlu0 %v4087, 118
  %v4250 = vpop.permute.xlu0 %4249
  %4251 = vrot.lane.b32.xlu0 %v4088, 118
  %v4252 = vpop.permute.xlu0 %4251
  %4253 = vrot.lane.b32.xlu0 %v4089, 118
  %v4254 = vpop.permute.xlu0 %4253
  %4255 = vrot.lane.b32.xlu0 %v4090, 118
  %v4256 = vpop.permute.xlu0 %4255
  %4257 = vrot.lane.b32.xlu0 %v4091, 118
  %v4258 = vpop.permute.xlu0 %4257
  %4259 = vrot.lane.b32.xlu0 %v4092, 118
  %v4260 = vpop.permute.xlu0 %4259
  %4261 = vrot.lane.b32.xlu0 %v4093, 118
  %v4262 = vpop.permute.xlu0 %4261
  %4263 = vrot.lane.b32.xlu0 %v4094, 118
  %v4264 = vpop.permute.xlu0 %4263
  %4265 = vrot.lane.b32.xlu0 %v4095, 118
  %v4266 = vpop.permute.xlu0 %4265
  %4267 = vrot.lane.b32.xlu0 %v4096, 118
  %v4268 = vpop.permute.xlu0 %4267
  %4269 = vrot.lane.b32.xlu0 %v4097, 118
  %v4270 = vpop.permute.xlu0 %4269
  %4271 = vrot.lane.b32.xlu0 %v4098, 118
  %v4272 = vpop.permute.xlu0 %4271
  %4273 = vrot.lane.b32.xlu0 %v4099, 118
  %v4274 = vpop.permute.xlu0 %4273
  %4275 = vrot.lane.b32.xlu0 %v4100, 118
  %v4276 = vpop.permute.xlu0 %4275
  %v4277 = vsel %vm220, %v4246, %v4248
  %v4278 = vsel %vm220, %v4248, %v4250
  %v4279 = vsel %vm220, %v4250, %v4252
  %v4280 = vsel %vm220, %v4252, %v4254
  %v4281 = vsel %vm220, %v4254, %v4256
  %v4282 = vsel %vm220, %v4256, %v4258
  %v4283 = vsel %vm220, %v4258, %v4260
  %v4284 = vsel %vm220, %v4260, %v4262
  %v4285 = vsel %vm220, %v4262, %v4264
  %v4286 = vsel %vm220, %v4264, %v4266
  %v4287 = vsel %vm220, %v4266, %v4268
  %v4288 = vsel %vm220, %v4268, %v4270
  %v4289 = vsel %vm220, %v4270, %v4272
  %v4290 = vsel %vm220, %v4272, %v4274
  %v4291 = vsel %vm220, %v4274, %v4276
  %4308 = vrot.lane.b32.xlu0 %v4085, 117
  %v4309 = vpop.permute.xlu0 %4308
  %4310 = vrot.lane.b32.xlu0 %v4086, 117
  %v4311 = vpop.permute.xlu0 %4310
  %4312 = vrot.lane.b32.xlu0 %v4087, 117
  %v4313 = vpop.permute.xlu0 %4312
  %4314 = vrot.lane.b32.xlu0 %v4088, 117
  %v4315 = vpop.permute.xlu0 %4314
  %4316 = vrot.lane.b32.xlu0 %v4089, 117
  %v4317 = vpop.permute.xlu0 %4316
  %4318 = vrot.lane.b32.xlu0 %v4090, 117
  %v4319 = vpop.permute.xlu0 %4318
  %4320 = vrot.lane.b32.xlu0 %v4091, 117
  %v4321 = vpop.permute.xlu0 %4320
  %4322 = vrot.lane.b32.xlu0 %v4092, 117
  %v4323 = vpop.permute.xlu0 %4322
  %4324 = vrot.lane.b32.xlu0 %v4093, 117
  %v4325 = vpop.permute.xlu0 %4324
  %4326 = vrot.lane.b32.xlu0 %v4094, 117
  %v4327 = vpop.permute.xlu0 %4326
  %4328 = vrot.lane.b32.xlu0 %v4095, 117
  %v4329 = vpop.permute.xlu0 %4328
  %4330 = vrot.lane.b32.xlu0 %v4096, 117
  %v4331 = vpop.permute.xlu0 %4330
  %4332 = vrot.lane.b32.xlu0 %v4097, 117
  %v4333 = vpop.permute.xlu0 %4332
  %4334 = vrot.lane.b32.xlu0 %v4098, 117
  %v4335 = vpop.permute.xlu0 %4334
  %4336 = vrot.lane.b32.xlu0 %v4099, 117
  %v4337 = vpop.permute.xlu0 %4336
  %4338 = vrot.lane.b32.xlu0 %v4100, 117
  %v4339 = vpop.permute.xlu0 %4338
  %v4340 = vsel %vm284, %v4309, %v4311
  %v4341 = vsel %vm284, %v4311, %v4313
  %v4342 = vsel %vm284, %v4313, %v4315
  %v4343 = vsel %vm284, %v4315, %v4317
  %v4344 = vsel %vm284, %v4317, %v4319
  %v4345 = vsel %vm284, %v4319, %v4321
  %v4346 = vsel %vm284, %v4321, %v4323
  %v4347 = vsel %vm284, %v4323, %v4325
  %v4348 = vsel %vm284, %v4325, %v4327
  %v4349 = vsel %vm284, %v4327, %v4329
  %v4350 = vsel %vm284, %v4329, %v4331
  %v4351 = vsel %vm284, %v4331, %v4333
  %v4352 = vsel %vm284, %v4333, %v4335
  %v4353 = vsel %vm284, %v4335, %v4337
  %v4354 = vsel %vm284, %v4337, %v4339
  %4371 = vrot.lane.b32.xlu0 %v4085, 116
  %v4372 = vpop.permute.xlu0 %4371
  %4373 = vrot.lane.b32.xlu0 %v4086, 116
  %v4374 = vpop.permute.xlu0 %4373
  %4375 = vrot.lane.b32.xlu0 %v4087, 116
  %v4376 = vpop.permute.xlu0 %4375
  %4377 = vrot.lane.b32.xlu0 %v4088, 116
  %v4378 = vpop.permute.xlu0 %4377
  %4379 = vrot.lane.b32.xlu0 %v4089, 116
  %v4380 = vpop.permute.xlu0 %4379
  %4381 = vrot.lane.b32.xlu0 %v4090, 116
  %v4382 = vpop.permute.xlu0 %4381
  %4383 = vrot.lane.b32.xlu0 %v4091, 116
  %v4384 = vpop.permute.xlu0 %4383
  %4385 = vrot.lane.b32.xlu0 %v4092, 116
  %v4386 = vpop.permute.xlu0 %4385
  %4387 = vrot.lane.b32.xlu0 %v4093, 116
  %v4388 = vpop.permute.xlu0 %4387
  %4389 = vrot.lane.b32.xlu0 %v4094, 116
  %v4390 = vpop.permute.xlu0 %4389
  %4391 = vrot.lane.b32.xlu0 %v4095, 116
  %v4392 = vpop.permute.xlu0 %4391
  %4393 = vrot.lane.b32.xlu0 %v4096, 116
  %v4394 = vpop.permute.xlu0 %4393
  %4395 = vrot.lane.b32.xlu0 %v4097, 116
  %v4396 = vpop.permute.xlu0 %4395
  %4397 = vrot.lane.b32.xlu0 %v4098, 116
  %v4398 = vpop.permute.xlu0 %4397
  %4399 = vrot.lane.b32.xlu0 %v4099, 116
  %v4400 = vpop.permute.xlu0 %4399
  %4401 = vrot.lane.b32.xlu0 %v4100, 116
  %v4402 = vpop.permute.xlu0 %4401
  %v4403 = vsel %vm348, %v4372, %v4374
  %v4404 = vsel %vm348, %v4374, %v4376
  %v4405 = vsel %vm348, %v4376, %v4378
  %v4406 = vsel %vm348, %v4378, %v4380
  %v4407 = vsel %vm348, %v4380, %v4382
  %v4408 = vsel %vm348, %v4382, %v4384
  %v4409 = vsel %vm348, %v4384, %v4386
  %v4410 = vsel %vm348, %v4386, %v4388
  %v4411 = vsel %vm348, %v4388, %v4390
  %v4412 = vsel %vm348, %v4390, %v4392
  %v4413 = vsel %vm348, %v4392, %v4394
  %v4414 = vsel %vm348, %v4394, %v4396
  %v4415 = vsel %vm348, %v4396, %v4398
  %v4416 = vsel %vm348, %v4398, %v4400
  %v4417 = vsel %vm348, %v4400, %v4402
  %4434 = vrot.lane.b32.xlu0 %v4085, 108
  %v4435 = vpop.permute.xlu0 %4434
  %4436 = vrot.lane.b32.xlu0 %v4086, 108
  %v4437 = vpop.permute.xlu0 %4436
  %4438 = vrot.lane.b32.xlu0 %v4087, 108
  %v4439 = vpop.permute.xlu0 %4438
  %4440 = vrot.lane.b32.xlu0 %v4088, 108
  %v4441 = vpop.permute.xlu0 %4440
  %4442 = vrot.lane.b32.xlu0 %v4089, 108
  %v4443 = vpop.permute.xlu0 %4442
  %4444 = vrot.lane.b32.xlu0 %v4090, 108
  %v4445 = vpop.permute.xlu0 %4444
  %4446 = vrot.lane.b32.xlu0 %v4091, 108
  %v4447 = vpop.permute.xlu0 %4446
  %4448 = vrot.lane.b32.xlu0 %v4092, 108
  %v4449 = vpop.permute.xlu0 %4448
  %4450 = vrot.lane.b32.xlu0 %v4093, 108
  %v4451 = vpop.permute.xlu0 %4450
  %4452 = vrot.lane.b32.xlu0 %v4094, 108
  %v4453 = vpop.permute.xlu0 %4452
  %4454 = vrot.lane.b32.xlu0 %v4095, 108
  %v4455 = vpop.permute.xlu0 %4454
  %4456 = vrot.lane.b32.xlu0 %v4096, 108
  %v4457 = vpop.permute.xlu0 %4456
  %4458 = vrot.lane.b32.xlu0 %v4097, 108
  %v4459 = vpop.permute.xlu0 %4458
  %4460 = vrot.lane.b32.xlu0 %v4098, 108
  %v4461 = vpop.permute.xlu0 %4460
  %4462 = vrot.lane.b32.xlu0 %v4099, 108
  %v4463 = vpop.permute.xlu0 %4462
  %4464 = vrot.lane.b32.xlu0 %v4100, 108
  %v4465 = vpop.permute.xlu0 %4464
  %v4466 = vsel %vm412, %v4435, %v4437
  %v4467 = vsel %vm412, %v4437, %v4439
  %v4468 = vsel %vm412, %v4439, %v4441
  %v4469 = vsel %vm412, %v4441, %v4443
  %v4470 = vsel %vm412, %v4443, %v4445
  %v4471 = vsel %vm412, %v4445, %v4447
  %v4472 = vsel %vm412, %v4447, %v4449
  %v4473 = vsel %vm412, %v4449, %v4451
  %v4474 = vsel %vm412, %v4451, %v4453
  %v4475 = vsel %vm412, %v4453, %v4455
  %v4476 = vsel %vm412, %v4455, %v4457
  %v4477 = vsel %vm412, %v4457, %v4459
  %v4478 = vsel %vm412, %v4459, %v4461
  %v4479 = vsel %vm412, %v4461, %v4463
  %v4480 = vsel %vm412, %v4463, %v4465
  %4497 = vrot.lane.b32.xlu0 %v4085, 107
  %v4498 = vpop.permute.xlu0 %4497
  %4499 = vrot.lane.b32.xlu0 %v4086, 107
  %v4500 = vpop.permute.xlu0 %4499
  %4501 = vrot.lane.b32.xlu0 %v4087, 107
  %v4502 = vpop.permute.xlu0 %4501
  %4503 = vrot.lane.b32.xlu0 %v4088, 107
  %v4504 = vpop.permute.xlu0 %4503
  %4505 = vrot.lane.b32.xlu0 %v4089, 107
  %v4506 = vpop.permute.xlu0 %4505
  %4507 = vrot.lane.b32.xlu0 %v4090, 107
  %v4508 = vpop.permute.xlu0 %4507
  %4509 = vrot.lane.b32.xlu0 %v4091, 107
  %v4510 = vpop.permute.xlu0 %4509
  %4511 = vrot.lane.b32.xlu0 %v4092, 107
  %v4512 = vpop.permute.xlu0 %4511
  %4513 = vrot.lane.b32.xlu0 %v4093, 107
  %v4514 = vpop.permute.xlu0 %4513
  %4515 = vrot.lane.b32.xlu0 %v4094, 107
  %v4516 = vpop.permute.xlu0 %4515
  %4517 = vrot.lane.b32.xlu0 %v4095, 107
  %v4518 = vpop.permute.xlu0 %4517
  %4519 = vrot.lane.b32.xlu0 %v4096, 107
  %v4520 = vpop.permute.xlu0 %4519
  %4521 = vrot.lane.b32.xlu0 %v4097, 107
  %v4522 = vpop.permute.xlu0 %4521
  %4523 = vrot.lane.b32.xlu0 %v4098, 107
  %v4524 = vpop.permute.xlu0 %4523
  %4525 = vrot.lane.b32.xlu0 %v4099, 107
  %v4526 = vpop.permute.xlu0 %4525
  %4527 = vrot.lane.b32.xlu0 %v4100, 107
  %v4528 = vpop.permute.xlu0 %4527
  %v4529 = vsel %vm476, %v4498, %v4500
  %v4530 = vsel %vm476, %v4500, %v4502
  %v4531 = vsel %vm476, %v4502, %v4504
  %v4532 = vsel %vm476, %v4504, %v4506
  %v4533 = vsel %vm476, %v4506, %v4508
  %v4534 = vsel %vm476, %v4508, %v4510
  %v4535 = vsel %vm476, %v4510, %v4512
  %v4536 = vsel %vm476, %v4512, %v4514
  %v4537 = vsel %vm476, %v4514, %v4516
  %v4538 = vsel %vm476, %v4516, %v4518
  %v4539 = vsel %vm476, %v4518, %v4520
  %v4540 = vsel %vm476, %v4520, %v4522
  %v4541 = vsel %vm476, %v4522, %v4524
  %v4542 = vsel %vm476, %v4524, %v4526
  %v4543 = vsel %vm476, %v4526, %v4528
  %4560 = vrot.lane.b32.xlu0 %v4085, 106
  %v4561 = vpop.permute.xlu0 %4560
  %4562 = vrot.lane.b32.xlu0 %v4086, 106
  %v4563 = vpop.permute.xlu0 %4562
  %4564 = vrot.lane.b32.xlu0 %v4087, 106
  %v4565 = vpop.permute.xlu0 %4564
  %4566 = vrot.lane.b32.xlu0 %v4088, 106
  %v4567 = vpop.permute.xlu0 %4566
  %4568 = vrot.lane.b32.xlu0 %v4089, 106
  %v4569 = vpop.permute.xlu0 %4568
  %4570 = vrot.lane.b32.xlu0 %v4090, 106
  %v4571 = vpop.permute.xlu0 %4570
  %4572 = vrot.lane.b32.xlu0 %v4091, 106
  %v4573 = vpop.permute.xlu0 %4572
  %4574 = vrot.lane.b32.xlu0 %v4092, 106
  %v4575 = vpop.permute.xlu0 %4574
  %4576 = vrot.lane.b32.xlu0 %v4093, 106
  %v4577 = vpop.permute.xlu0 %4576
  %4578 = vrot.lane.b32.xlu0 %v4094, 106
  %v4579 = vpop.permute.xlu0 %4578
  %4580 = vrot.lane.b32.xlu0 %v4095, 106
  %v4581 = vpop.permute.xlu0 %4580
  %4582 = vrot.lane.b32.xlu0 %v4096, 106
  %v4583 = vpop.permute.xlu0 %4582
  %4584 = vrot.lane.b32.xlu0 %v4097, 106
  %v4585 = vpop.permute.xlu0 %4584
  %4586 = vrot.lane.b32.xlu0 %v4098, 106
  %v4587 = vpop.permute.xlu0 %4586
  %4588 = vrot.lane.b32.xlu0 %v4099, 106
  %v4589 = vpop.permute.xlu0 %4588
  %4590 = vrot.lane.b32.xlu0 %v4100, 106
  %v4591 = vpop.permute.xlu0 %4590
  %v4592 = vsel %vm540, %v4561, %v4563
  %v4593 = vsel %vm540, %v4563, %v4565
  %v4594 = vsel %vm540, %v4565, %v4567
  %v4595 = vsel %vm540, %v4567, %v4569
  %v4596 = vsel %vm540, %v4569, %v4571
  %v4597 = vsel %vm540, %v4571, %v4573
  %v4598 = vsel %vm540, %v4573, %v4575
  %v4599 = vsel %vm540, %v4575, %v4577
  %v4600 = vsel %vm540, %v4577, %v4579
  %v4601 = vsel %vm540, %v4579, %v4581
  %v4602 = vsel %vm540, %v4581, %v4583
  %v4603 = vsel %vm540, %v4583, %v4585
  %v4604 = vsel %vm540, %v4585, %v4587
  %v4605 = vsel %vm540, %v4587, %v4589
  %v4606 = vsel %vm540, %v4589, %v4591
  %4624 = vrot.lane.b32.xlu0 %v4085, 28
  %v4625 = vpop.permute.xlu0 %4624
  %4626 = vrot.lane.b32.xlu0 %v4086, 28
  %v4627 = vpop.permute.xlu0 %4626
  %4628 = vrot.lane.b32.xlu0 %v4087, 28
  %v4629 = vpop.permute.xlu0 %4628
  %4630 = vrot.lane.b32.xlu0 %v4088, 28
  %v4631 = vpop.permute.xlu0 %4630
  %4632 = vrot.lane.b32.xlu0 %v4089, 28
  %v4633 = vpop.permute.xlu0 %4632
  %4634 = vrot.lane.b32.xlu0 %v4090, 28
  %v4635 = vpop.permute.xlu0 %4634
  %4636 = vrot.lane.b32.xlu0 %v4091, 28
  %v4637 = vpop.permute.xlu0 %4636
  %4638 = vrot.lane.b32.xlu0 %v4092, 28
  %v4639 = vpop.permute.xlu0 %4638
  %4640 = vrot.lane.b32.xlu0 %v4093, 28
  %v4641 = vpop.permute.xlu0 %4640
  %4642 = vrot.lane.b32.xlu0 %v4094, 28
  %v4643 = vpop.permute.xlu0 %4642
  %4644 = vrot.lane.b32.xlu0 %v4095, 28
  %v4645 = vpop.permute.xlu0 %4644
  %4646 = vrot.lane.b32.xlu0 %v4096, 28
  %v4647 = vpop.permute.xlu0 %4646
  %4648 = vrot.lane.b32.xlu0 %v4097, 28
  %v4649 = vpop.permute.xlu0 %4648
  %4650 = vrot.lane.b32.xlu0 %v4098, 28
  %v4651 = vpop.permute.xlu0 %4650
  %4652 = vrot.lane.b32.xlu0 %v4099, 28
  %v4653 = vpop.permute.xlu0 %4652
  %4654 = vrot.lane.b32.xlu0 %v4100, 28
  %v4655 = vpop.permute.xlu0 %4654
  %4656 = vrot.lane.b32.xlu0 %v4101, 28
  %v4657 = vpop.permute.xlu0 %4656
  %v4658 = vsel %vm607, %v4625, %v4627
  %v4659 = vsel %vm607, %v4627, %v4629
  %v4660 = vsel %vm607, %v4629, %v4631
  %v4661 = vsel %vm607, %v4631, %v4633
  %v4662 = vsel %vm607, %v4633, %v4635
  %v4663 = vsel %vm607, %v4635, %v4637
  %v4664 = vsel %vm607, %v4637, %v4639
  %v4665 = vsel %vm607, %v4639, %v4641
  %v4666 = vsel %vm607, %v4641, %v4643
  %v4667 = vsel %vm607, %v4643, %v4645
  %v4668 = vsel %vm607, %v4645, %v4647
  %v4669 = vsel %vm607, %v4647, %v4649
  %v4670 = vsel %vm607, %v4649, %v4651
  %v4671 = vsel %vm607, %v4651, %v4653
  %v4672 = vsel %vm607, %v4653, %v4655
  %v4673 = vsel %vm607, %v4655, %v4657
  %4690 = vrot.lane.b32.xlu0 %v4085, 27
  %v4691 = vpop.permute.xlu0 %4690
  %4692 = vrot.lane.b32.xlu0 %v4086, 27
  %v4693 = vpop.permute.xlu0 %4692
  %4694 = vrot.lane.b32.xlu0 %v4087, 27
  %v4695 = vpop.permute.xlu0 %4694
  %4696 = vrot.lane.b32.xlu0 %v4088, 27
  %v4697 = vpop.permute.xlu0 %4696
  %4698 = vrot.lane.b32.xlu0 %v4089, 27
  %v4699 = vpop.permute.xlu0 %4698
  %4700 = vrot.lane.b32.xlu0 %v4090, 27
  %v4701 = vpop.permute.xlu0 %4700
  %4702 = vrot.lane.b32.xlu0 %v4091, 27
  %v4703 = vpop.permute.xlu0 %4702
  %4704 = vrot.lane.b32.xlu0 %v4092, 27
  %v4705 = vpop.permute.xlu0 %4704
  %4706 = vrot.lane.b32.xlu0 %v4093, 27
  %v4707 = vpop.permute.xlu0 %4706
  %4708 = vrot.lane.b32.xlu0 %v4094, 27
  %v4709 = vpop.permute.xlu0 %4708
  %4710 = vrot.lane.b32.xlu0 %v4095, 27
  %v4711 = vpop.permute.xlu0 %4710
  %4712 = vrot.lane.b32.xlu0 %v4096, 27
  %v4713 = vpop.permute.xlu0 %4712
  %4714 = vrot.lane.b32.xlu0 %v4097, 27
  %v4715 = vpop.permute.xlu0 %4714
  %4716 = vrot.lane.b32.xlu0 %v4098, 27
  %v4717 = vpop.permute.xlu0 %4716
  %4718 = vrot.lane.b32.xlu0 %v4099, 27
  %v4719 = vpop.permute.xlu0 %4718
  %4720 = vrot.lane.b32.xlu0 %v4100, 27
  %v4721 = vpop.permute.xlu0 %4720
  %4722 = vrot.lane.b32.xlu0 %v4101, 27
  %v4723 = vpop.permute.xlu0 %4722
  %v4724 = vsel %vm674, %v4691, %v4693
  %v4725 = vsel %vm674, %v4693, %v4695
  %v4726 = vsel %vm674, %v4695, %v4697
  %v4727 = vsel %vm674, %v4697, %v4699
  %v4728 = vsel %vm674, %v4699, %v4701
  %v4729 = vsel %vm674, %v4701, %v4703
  %v4730 = vsel %vm674, %v4703, %v4705
  %v4731 = vsel %vm674, %v4705, %v4707
  %v4732 = vsel %vm674, %v4707, %v4709
  %v4733 = vsel %vm674, %v4709, %v4711
  %v4734 = vsel %vm674, %v4711, %v4713
  %v4735 = vsel %vm674, %v4713, %v4715
  %v4736 = vsel %vm674, %v4715, %v4717
  %v4737 = vsel %vm674, %v4717, %v4719
  %v4738 = vsel %vm674, %v4719, %v4721
  %v4739 = vsel %vm674, %v4721, %v4723
  %4756 = vrot.lane.b32.xlu0 %v4085, 26
  %v4757 = vpop.permute.xlu0 %4756
  %4758 = vrot.lane.b32.xlu0 %v4086, 26
  %v4759 = vpop.permute.xlu0 %4758
  %4760 = vrot.lane.b32.xlu0 %v4087, 26
  %v4761 = vpop.permute.xlu0 %4760
  %4762 = vrot.lane.b32.xlu0 %v4088, 26
  %v4763 = vpop.permute.xlu0 %4762
  %4764 = vrot.lane.b32.xlu0 %v4089, 26
  %v4765 = vpop.permute.xlu0 %4764
  %4766 = vrot.lane.b32.xlu0 %v4090, 26
  %v4767 = vpop.permute.xlu0 %4766
  %4768 = vrot.lane.b32.xlu0 %v4091, 26
  %v4769 = vpop.permute.xlu0 %4768
  %4770 = vrot.lane.b32.xlu0 %v4092, 26
  %v4771 = vpop.permute.xlu0 %4770
  %4772 = vrot.lane.b32.xlu0 %v4093, 26
  %v4773 = vpop.permute.xlu0 %4772
  %4774 = vrot.lane.b32.xlu0 %v4094, 26
  %v4775 = vpop.permute.xlu0 %4774
  %4776 = vrot.lane.b32.xlu0 %v4095, 26
  %v4777 = vpop.permute.xlu0 %4776
  %4778 = vrot.lane.b32.xlu0 %v4096, 26
  %v4779 = vpop.permute.xlu0 %4778
  %4780 = vrot.lane.b32.xlu0 %v4097, 26
  %v4781 = vpop.permute.xlu0 %4780
  %4782 = vrot.lane.b32.xlu0 %v4098, 26
  %v4783 = vpop.permute.xlu0 %4782
  %4784 = vrot.lane.b32.xlu0 %v4099, 26
  %v4785 = vpop.permute.xlu0 %4784
  %4786 = vrot.lane.b32.xlu0 %v4100, 26
  %v4787 = vpop.permute.xlu0 %4786
  %4788 = vrot.lane.b32.xlu0 %v4101, 26
  %v4789 = vpop.permute.xlu0 %4788
  %v4790 = vsel %vm741, %v4757, %v4759
  %v4791 = vsel %vm741, %v4759, %v4761
  %v4792 = vsel %vm741, %v4761, %v4763
  %v4793 = vsel %vm741, %v4763, %v4765
  %v4794 = vsel %vm741, %v4765, %v4767
  %v4795 = vsel %vm741, %v4767, %v4769
  %v4796 = vsel %vm741, %v4769, %v4771
  %v4797 = vsel %vm741, %v4771, %v4773
  %v4798 = vsel %vm741, %v4773, %v4775
  %v4799 = vsel %vm741, %v4775, %v4777
  %v4800 = vsel %vm741, %v4777, %v4779
  %v4801 = vsel %vm741, %v4779, %v4781
  %v4802 = vsel %vm741, %v4781, %v4783
  %v4803 = vsel %vm741, %v4783, %v4785
  %v4804 = vsel %vm741, %v4785, %v4787
  %v4805 = vsel %vm741, %v4787, %v4789
  %4822 = vrot.lane.b32.xlu0 %v4085, 18
  %v4823 = vpop.permute.xlu0 %4822
  %4824 = vrot.lane.b32.xlu0 %v4086, 18
  %v4825 = vpop.permute.xlu0 %4824
  %4826 = vrot.lane.b32.xlu0 %v4087, 18
  %v4827 = vpop.permute.xlu0 %4826
  %4828 = vrot.lane.b32.xlu0 %v4088, 18
  %v4829 = vpop.permute.xlu0 %4828
  %4830 = vrot.lane.b32.xlu0 %v4089, 18
  %v4831 = vpop.permute.xlu0 %4830
  %4832 = vrot.lane.b32.xlu0 %v4090, 18
  %v4833 = vpop.permute.xlu0 %4832
  %4834 = vrot.lane.b32.xlu0 %v4091, 18
  %v4835 = vpop.permute.xlu0 %4834
  %4836 = vrot.lane.b32.xlu0 %v4092, 18
  %v4837 = vpop.permute.xlu0 %4836
  %4838 = vrot.lane.b32.xlu0 %v4093, 18
  %v4839 = vpop.permute.xlu0 %4838
  %4840 = vrot.lane.b32.xlu0 %v4094, 18
  %v4841 = vpop.permute.xlu0 %4840
  %4842 = vrot.lane.b32.xlu0 %v4095, 18
  %v4843 = vpop.permute.xlu0 %4842
  %4844 = vrot.lane.b32.xlu0 %v4096, 18
  %v4845 = vpop.permute.xlu0 %4844
  %4846 = vrot.lane.b32.xlu0 %v4097, 18
  %v4847 = vpop.permute.xlu0 %4846
  %4848 = vrot.lane.b32.xlu0 %v4098, 18
  %v4849 = vpop.permute.xlu0 %4848
  %4850 = vrot.lane.b32.xlu0 %v4099, 18
  %v4851 = vpop.permute.xlu0 %4850
  %4852 = vrot.lane.b32.xlu0 %v4100, 18
  %v4853 = vpop.permute.xlu0 %4852
  %4854 = vrot.lane.b32.xlu0 %v4101, 18
  %v4855 = vpop.permute.xlu0 %4854
  %v4856 = vsel %vm808, %v4823, %v4825
  %v4857 = vsel %vm808, %v4825, %v4827
  %v4858 = vsel %vm808, %v4827, %v4829
  %v4859 = vsel %vm808, %v4829, %v4831
  %v4860 = vsel %vm808, %v4831, %v4833
  %v4861 = vsel %vm808, %v4833, %v4835
  %v4862 = vsel %vm808, %v4835, %v4837
  %v4863 = vsel %vm808, %v4837, %v4839
  %v4864 = vsel %vm808, %v4839, %v4841
  %v4865 = vsel %vm808, %v4841, %v4843
  %v4866 = vsel %vm808, %v4843, %v4845
  %v4867 = vsel %vm808, %v4845, %v4847
  %v4868 = vsel %vm808, %v4847, %v4849
  %v4869 = vsel %vm808, %v4849, %v4851
  %v4870 = vsel %vm808, %v4851, %v4853
  %v4871 = vsel %vm808, %v4853, %v4855
  %4888 = vrot.lane.b32.xlu0 %v4086, 17
  %v4889 = vpop.permute.xlu0 %4888
  %4890 = vrot.lane.b32.xlu0 %v4087, 17
  %v4891 = vpop.permute.xlu0 %4890
  %4892 = vrot.lane.b32.xlu0 %v4088, 17
  %v4893 = vpop.permute.xlu0 %4892
  %4894 = vrot.lane.b32.xlu0 %v4089, 17
  %v4895 = vpop.permute.xlu0 %4894
  %4896 = vrot.lane.b32.xlu0 %v4090, 17
  %v4897 = vpop.permute.xlu0 %4896
  %4898 = vrot.lane.b32.xlu0 %v4091, 17
  %v4899 = vpop.permute.xlu0 %4898
  %4900 = vrot.lane.b32.xlu0 %v4092, 17
  %v4901 = vpop.permute.xlu0 %4900
  %4902 = vrot.lane.b32.xlu0 %v4093, 17
  %v4903 = vpop.permute.xlu0 %4902
  %4904 = vrot.lane.b32.xlu0 %v4094, 17
  %v4905 = vpop.permute.xlu0 %4904
  %4906 = vrot.lane.b32.xlu0 %v4095, 17
  %v4907 = vpop.permute.xlu0 %4906
  %4908 = vrot.lane.b32.xlu0 %v4096, 17
  %v4909 = vpop.permute.xlu0 %4908
  %4910 = vrot.lane.b32.xlu0 %v4097, 17
  %v4911 = vpop.permute.xlu0 %4910
  %4912 = vrot.lane.b32.xlu0 %v4098, 17
  %v4913 = vpop.permute.xlu0 %4912
  %4914 = vrot.lane.b32.xlu0 %v4099, 17
  %v4915 = vpop.permute.xlu0 %4914
  %4916 = vrot.lane.b32.xlu0 %v4100, 17
  %v4917 = vpop.permute.xlu0 %4916
  %4918 = vrot.lane.b32.xlu0 %v4101, 17
  %v4919 = vpop.permute.xlu0 %4918
  %v4920 = vsel %vm873, %v4889, %v4891
  %v4921 = vsel %vm873, %v4891, %v4893
  %v4922 = vsel %vm873, %v4893, %v4895
  %v4923 = vsel %vm873, %v4895, %v4897
  %v4924 = vsel %vm873, %v4897, %v4899
  %v4925 = vsel %vm873, %v4899, %v4901
  %v4926 = vsel %vm873, %v4901, %v4903
  %v4927 = vsel %vm873, %v4903, %v4905
  %v4928 = vsel %vm873, %v4905, %v4907
  %v4929 = vsel %vm873, %v4907, %v4909
  %v4930 = vsel %vm873, %v4909, %v4911
  %v4931 = vsel %vm873, %v4911, %v4913
  %v4932 = vsel %vm873, %v4913, %v4915
  %v4933 = vsel %vm873, %v4915, %v4917
  %v4934 = vsel %vm873, %v4917, %v4919
  %4951 = vrot.lane.b32.xlu0 %v4086, 16
  %v4952 = vpop.permute.xlu0 %4951
  %4953 = vrot.lane.b32.xlu0 %v4087, 16
  %v4954 = vpop.permute.xlu0 %4953
  %4955 = vrot.lane.b32.xlu0 %v4088, 16
  %v4956 = vpop.permute.xlu0 %4955
  %4957 = vrot.lane.b32.xlu0 %v4089, 16
  %v4958 = vpop.permute.xlu0 %4957
  %4959 = vrot.lane.b32.xlu0 %v4090, 16
  %v4960 = vpop.permute.xlu0 %4959
  %4961 = vrot.lane.b32.xlu0 %v4091, 16
  %v4962 = vpop.permute.xlu0 %4961
  %4963 = vrot.lane.b32.xlu0 %v4092, 16
  %v4964 = vpop.permute.xlu0 %4963
  %4965 = vrot.lane.b32.xlu0 %v4093, 16
  %v4966 = vpop.permute.xlu0 %4965
  %4967 = vrot.lane.b32.xlu0 %v4094, 16
  %v4968 = vpop.permute.xlu0 %4967
  %4969 = vrot.lane.b32.xlu0 %v4095, 16
  %v4970 = vpop.permute.xlu0 %4969
  %4971 = vrot.lane.b32.xlu0 %v4096, 16
  %v4972 = vpop.permute.xlu0 %4971
  %4973 = vrot.lane.b32.xlu0 %v4097, 16
  %v4974 = vpop.permute.xlu0 %4973
  %4975 = vrot.lane.b32.xlu0 %v4098, 16
  %v4976 = vpop.permute.xlu0 %4975
  %4977 = vrot.lane.b32.xlu0 %v4099, 16
  %v4978 = vpop.permute.xlu0 %4977
  %4979 = vrot.lane.b32.xlu0 %v4100, 16
  %v4980 = vpop.permute.xlu0 %4979
  %4981 = vrot.lane.b32.xlu0 %v4101, 16
  %v4982 = vpop.permute.xlu0 %4981
  %v4983 = vsel %vm937, %v4952, %v4954
  %v4984 = vsel %vm937, %v4954, %v4956
  %v4985 = vsel %vm937, %v4956, %v4958
  %v4986 = vsel %vm937, %v4958, %v4960
  %v4987 = vsel %vm937, %v4960, %v4962
  %v4988 = vsel %vm937, %v4962, %v4964
  %v4989 = vsel %vm937, %v4964, %v4966
  %v4990 = vsel %vm937, %v4966, %v4968
  %v4991 = vsel %vm937, %v4968, %v4970
  %v4992 = vsel %vm937, %v4970, %v4972
  %v4993 = vsel %vm937, %v4972, %v4974
  %v4994 = vsel %vm937, %v4974, %v4976
  %v4995 = vsel %vm937, %v4976, %v4978
  %v4996 = vsel %vm937, %v4978, %v4980
  %v4997 = vsel %vm937, %v4980, %v4982
  %5014 = vrot.lane.b32.xlu0 %v4086, 8
  %v5015 = vpop.permute.xlu0 %5014
  %5016 = vrot.lane.b32.xlu0 %v4087, 8
  %v5017 = vpop.permute.xlu0 %5016
  %5018 = vrot.lane.b32.xlu0 %v4088, 8
  %v5019 = vpop.permute.xlu0 %5018
  %5020 = vrot.lane.b32.xlu0 %v4089, 8
  %v5021 = vpop.permute.xlu0 %5020
  %5022 = vrot.lane.b32.xlu0 %v4090, 8
  %v5023 = vpop.permute.xlu0 %5022
  %5024 = vrot.lane.b32.xlu0 %v4091, 8
  %v5025 = vpop.permute.xlu0 %5024
  %5026 = vrot.lane.b32.xlu0 %v4092, 8
  %v5027 = vpop.permute.xlu0 %5026
  %5028 = vrot.lane.b32.xlu0 %v4093, 8
  %v5029 = vpop.permute.xlu0 %5028
  %5030 = vrot.lane.b32.xlu0 %v4094, 8
  %v5031 = vpop.permute.xlu0 %5030
  %5032 = vrot.lane.b32.xlu0 %v4095, 8
  %v5033 = vpop.permute.xlu0 %5032
  %5034 = vrot.lane.b32.xlu0 %v4096, 8
  %v5035 = vpop.permute.xlu0 %5034
  %5036 = vrot.lane.b32.xlu0 %v4097, 8
  %v5037 = vpop.permute.xlu0 %5036
  %5038 = vrot.lane.b32.xlu0 %v4098, 8
  %v5039 = vpop.permute.xlu0 %5038
  %5040 = vrot.lane.b32.xlu0 %v4099, 8
  %v5041 = vpop.permute.xlu0 %5040
  %5042 = vrot.lane.b32.xlu0 %v4100, 8
  %v5043 = vpop.permute.xlu0 %5042
  %5044 = vrot.lane.b32.xlu0 %v4101, 8
  %v5045 = vpop.permute.xlu0 %5044
  %v5046 = vsel %vm1001, %v5015, %v5017
  %v5047 = vsel %vm1001, %v5017, %v5019
  %v5048 = vsel %vm1001, %v5019, %v5021
  %v5049 = vsel %vm1001, %v5021, %v5023
  %v5050 = vsel %vm1001, %v5023, %v5025
  %v5051 = vsel %vm1001, %v5025, %v5027
  %v5052 = vsel %vm1001, %v5027, %v5029
  %v5053 = vsel %vm1001, %v5029, %v5031
  %v5054 = vsel %vm1001, %v5031, %v5033
  %v5055 = vsel %vm1001, %v5033, %v5035
  %v5056 = vsel %vm1001, %v5035, %v5037
  %v5057 = vsel %vm1001, %v5037, %v5039
  %v5058 = vsel %vm1001, %v5039, %v5041
  %v5059 = vsel %vm1001, %v5041, %v5043
  %v5060 = vsel %vm1001, %v5043, %v5045
  %5077 = vrot.lane.b32.xlu0 %v4101, 127
  %v5078 = vpop.permute.xlu0 %5077
  %v5079 = vsel %vm92, %v4150, %v5078
  %5081 = vrot.lane.b32.xlu0 %v4086, 49
  %v5082 = vpop.permute.xlu0 %5081
  %5083 = vrot.lane.b32.xlu0 %v4087, 49
  %v5084 = vpop.permute.xlu0 %5083
  %5085 = vrot.lane.b32.xlu0 %v4088, 49
  %v5086 = vpop.permute.xlu0 %5085
  %5087 = vrot.lane.b32.xlu0 %v4089, 49
  %v5088 = vpop.permute.xlu0 %5087
  %5089 = vrot.lane.b32.xlu0 %v4090, 49
  %v5090 = vpop.permute.xlu0 %5089
  %5091 = vrot.lane.b32.xlu0 %v4091, 49
  %v5092 = vpop.permute.xlu0 %5091
  %5093 = vrot.lane.b32.xlu0 %v4092, 49
  %v5094 = vpop.permute.xlu0 %5093
  %5095 = vrot.lane.b32.xlu0 %v4093, 49
  %v5096 = vpop.permute.xlu0 %5095
  %5097 = vrot.lane.b32.xlu0 %v4094, 49
  %v5098 = vpop.permute.xlu0 %5097
  %5099 = vrot.lane.b32.xlu0 %v4095, 49
  %v5100 = vpop.permute.xlu0 %5099
  %5101 = vrot.lane.b32.xlu0 %v4096, 49
  %v5102 = vpop.permute.xlu0 %5101
  %5103 = vrot.lane.b32.xlu0 %v4097, 49
  %v5104 = vpop.permute.xlu0 %5103
  %5105 = vrot.lane.b32.xlu0 %v4098, 49
  %v5106 = vpop.permute.xlu0 %5105
  %5107 = vrot.lane.b32.xlu0 %v4099, 49
  %v5108 = vpop.permute.xlu0 %5107
  %5109 = vrot.lane.b32.xlu0 %v4100, 49
  %v5110 = vpop.permute.xlu0 %5109
  %5111 = vrot.lane.b32.xlu0 %v4101, 49
  %v5112 = vpop.permute.xlu0 %5111
  %5113 = vrot.lane.b32.xlu0 %v4102, 49
  %v5114 = vpop.permute.xlu0 %5113
  %v5115 = vsel %vm1071, %v5082, %v5084
  %v5116 = vsel %vm1071, %v5084, %v5086
  %v5117 = vsel %vm1071, %v5086, %v5088
  %v5118 = vsel %vm1071, %v5088, %v5090
  %v5119 = vsel %vm1071, %v5090, %v5092
  %v5120 = vsel %vm1071, %v5092, %v5094
  %v5121 = vsel %vm1071, %v5094, %v5096
  %v5122 = vsel %vm1071, %v5096, %v5098
  %v5123 = vsel %vm1071, %v5098, %v5100
  %v5124 = vsel %vm1071, %v5100, %v5102
  %v5125 = vsel %vm1071, %v5102, %v5104
  %v5126 = vsel %vm1071, %v5104, %v5106
  %v5127 = vsel %vm1071, %v5106, %v5108
  %v5128 = vsel %vm1071, %v5108, %v5110
  %v5129 = vsel %vm1071, %v5110, %v5112
  %v5130 = vsel %vm1071, %v5112, %v5114
  %5131 = vrot.lane.b32.xlu0 %v4086, 48
  %v5132 = vpop.permute.xlu0 %5131
  %5133 = vrot.lane.b32.xlu0 %v4087, 48
  %v5134 = vpop.permute.xlu0 %5133
  %5135 = vrot.lane.b32.xlu0 %v4088, 48
  %v5136 = vpop.permute.xlu0 %5135
  %5137 = vrot.lane.b32.xlu0 %v4089, 48
  %v5138 = vpop.permute.xlu0 %5137
  %5139 = vrot.lane.b32.xlu0 %v4090, 48
  %v5140 = vpop.permute.xlu0 %5139
  %5141 = vrot.lane.b32.xlu0 %v4091, 48
  %v5142 = vpop.permute.xlu0 %5141
  %5143 = vrot.lane.b32.xlu0 %v4092, 48
  %v5144 = vpop.permute.xlu0 %5143
  %5145 = vrot.lane.b32.xlu0 %v4093, 48
  %v5146 = vpop.permute.xlu0 %5145
  %5147 = vrot.lane.b32.xlu0 %v4094, 48
  %v5148 = vpop.permute.xlu0 %5147
  %5149 = vrot.lane.b32.xlu0 %v4095, 48
  %v5150 = vpop.permute.xlu0 %5149
  %5151 = vrot.lane.b32.xlu0 %v4096, 48
  %v5152 = vpop.permute.xlu0 %5151
  %5153 = vrot.lane.b32.xlu0 %v4097, 48
  %v5154 = vpop.permute.xlu0 %5153
  %5155 = vrot.lane.b32.xlu0 %v4098, 48
  %v5156 = vpop.permute.xlu0 %5155
  %5157 = vrot.lane.b32.xlu0 %v4099, 48
  %v5158 = vpop.permute.xlu0 %5157
  %5159 = vrot.lane.b32.xlu0 %v4100, 48
  %v5160 = vpop.permute.xlu0 %5159
  %5161 = vrot.lane.b32.xlu0 %v4101, 48
  %v5162 = vpop.permute.xlu0 %5161
  %5163 = vrot.lane.b32.xlu0 %v4102, 48
  %v5164 = vpop.permute.xlu0 %5163
  %v5165 = vsel %vm1122, %v5132, %v5134
  %v5166 = vsel %vm1122, %v5134, %v5136
  %v5167 = vsel %vm1122, %v5136, %v5138
  %v5168 = vsel %vm1122, %v5138, %v5140
  %v5169 = vsel %vm1122, %v5140, %v5142
  %v5170 = vsel %vm1122, %v5142, %v5144
  %v5171 = vsel %vm1122, %v5144, %v5146
  %v5172 = vsel %vm1122, %v5146, %v5148
  %v5173 = vsel %vm1122, %v5148, %v5150
  %v5174 = vsel %vm1122, %v5150, %v5152
  %v5175 = vsel %vm1122, %v5152, %v5154
  %v5176 = vsel %vm1122, %v5154, %v5156
  %v5177 = vsel %vm1122, %v5156, %v5158
  %v5178 = vsel %vm1122, %v5158, %v5160
  %v5179 = vsel %vm1122, %v5160, %v5162
  %v5180 = vsel %vm1122, %v5162, %v5164
  %5181 = vrot.lane.b32.xlu0 %v4086, 47
  %v5182 = vpop.permute.xlu0 %5181
  %5183 = vrot.lane.b32.xlu0 %v4087, 47
  %v5184 = vpop.permute.xlu0 %5183
  %5185 = vrot.lane.b32.xlu0 %v4088, 47
  %v5186 = vpop.permute.xlu0 %5185
  %5187 = vrot.lane.b32.xlu0 %v4089, 47
  %v5188 = vpop.permute.xlu0 %5187
  %5189 = vrot.lane.b32.xlu0 %v4090, 47
  %v5190 = vpop.permute.xlu0 %5189
  %5191 = vrot.lane.b32.xlu0 %v4091, 47
  %v5192 = vpop.permute.xlu0 %5191
  %5193 = vrot.lane.b32.xlu0 %v4092, 47
  %v5194 = vpop.permute.xlu0 %5193
  %5195 = vrot.lane.b32.xlu0 %v4093, 47
  %v5196 = vpop.permute.xlu0 %5195
  %5197 = vrot.lane.b32.xlu0 %v4094, 47
  %v5198 = vpop.permute.xlu0 %5197
  %5199 = vrot.lane.b32.xlu0 %v4095, 47
  %v5200 = vpop.permute.xlu0 %5199
  %5201 = vrot.lane.b32.xlu0 %v4096, 47
  %v5202 = vpop.permute.xlu0 %5201
  %5203 = vrot.lane.b32.xlu0 %v4097, 47
  %v5204 = vpop.permute.xlu0 %5203
  %5205 = vrot.lane.b32.xlu0 %v4098, 47
  %v5206 = vpop.permute.xlu0 %5205
  %5207 = vrot.lane.b32.xlu0 %v4099, 47
  %v5208 = vpop.permute.xlu0 %5207
  %5209 = vrot.lane.b32.xlu0 %v4100, 47
  %v5210 = vpop.permute.xlu0 %5209
  %5211 = vrot.lane.b32.xlu0 %v4101, 47
  %v5212 = vpop.permute.xlu0 %5211
  %5213 = vrot.lane.b32.xlu0 %v4102, 47
  %v5214 = vpop.permute.xlu0 %5213
  %v5215 = vsel %vm1173, %v5182, %v5184
  %v5216 = vsel %vm1173, %v5184, %v5186
  %v5217 = vsel %vm1173, %v5186, %v5188
  %v5218 = vsel %vm1173, %v5188, %v5190
  %v5219 = vsel %vm1173, %v5190, %v5192
  %v5220 = vsel %vm1173, %v5192, %v5194
  %v5221 = vsel %vm1173, %v5194, %v5196
  %v5222 = vsel %vm1173, %v5196, %v5198
  %v5223 = vsel %vm1173, %v5198, %v5200
  %v5224 = vsel %vm1173, %v5200, %v5202
  %v5225 = vsel %vm1173, %v5202, %v5204
  %v5226 = vsel %vm1173, %v5204, %v5206
  %v5227 = vsel %vm1173, %v5206, %v5208
  %v5228 = vsel %vm1173, %v5208, %v5210
  %v5229 = vsel %vm1173, %v5210, %v5212
  %v5230 = vsel %vm1173, %v5212, %v5214
  %5231 = vrot.lane.b32.xlu0 %v4086, 39
  %v5232 = vpop.permute.xlu0 %5231
  %5233 = vrot.lane.b32.xlu0 %v4087, 39
  %v5234 = vpop.permute.xlu0 %5233
  %5235 = vrot.lane.b32.xlu0 %v4088, 39
  %v5236 = vpop.permute.xlu0 %5235
  %5237 = vrot.lane.b32.xlu0 %v4089, 39
  %v5238 = vpop.permute.xlu0 %5237
  %5239 = vrot.lane.b32.xlu0 %v4090, 39
  %v5240 = vpop.permute.xlu0 %5239
  %5241 = vrot.lane.b32.xlu0 %v4091, 39
  %v5242 = vpop.permute.xlu0 %5241
  %5243 = vrot.lane.b32.xlu0 %v4092, 39
  %v5244 = vpop.permute.xlu0 %5243
  %5245 = vrot.lane.b32.xlu0 %v4093, 39
  %v5246 = vpop.permute.xlu0 %5245
  %5247 = vrot.lane.b32.xlu0 %v4094, 39
  %v5248 = vpop.permute.xlu0 %5247
  %5249 = vrot.lane.b32.xlu0 %v4095, 39
  %v5250 = vpop.permute.xlu0 %5249
  %5251 = vrot.lane.b32.xlu0 %v4096, 39
  %v5252 = vpop.permute.xlu0 %5251
  %5253 = vrot.lane.b32.xlu0 %v4097, 39
  %v5254 = vpop.permute.xlu0 %5253
  %5255 = vrot.lane.b32.xlu0 %v4098, 39
  %v5256 = vpop.permute.xlu0 %5255
  %5257 = vrot.lane.b32.xlu0 %v4099, 39
  %v5258 = vpop.permute.xlu0 %5257
  %5259 = vrot.lane.b32.xlu0 %v4100, 39
  %v5260 = vpop.permute.xlu0 %5259
  %5261 = vrot.lane.b32.xlu0 %v4101, 39
  %v5262 = vpop.permute.xlu0 %5261
  %5263 = vrot.lane.b32.xlu0 %v4102, 39
  %v5264 = vpop.permute.xlu0 %5263
  %v5265 = vsel %vm1224, %v5232, %v5234
  %v5266 = vsel %vm1224, %v5234, %v5236
  %v5267 = vsel %vm1224, %v5236, %v5238
  %v5268 = vsel %vm1224, %v5238, %v5240
  %v5269 = vsel %vm1224, %v5240, %v5242
  %v5270 = vsel %vm1224, %v5242, %v5244
  %v5271 = vsel %vm1224, %v5244, %v5246
  %v5272 = vsel %vm1224, %v5246, %v5248
  %v5273 = vsel %vm1224, %v5248, %v5250
  %v5274 = vsel %vm1224, %v5250, %v5252
  %v5275 = vsel %vm1224, %v5252, %v5254
  %v5276 = vsel %vm1224, %v5254, %v5256
  %v5277 = vsel %vm1224, %v5256, %v5258
  %v5278 = vsel %vm1224, %v5258, %v5260
  %v5279 = vsel %vm1224, %v5260, %v5262
  %v5280 = vsel %vm1224, %v5262, %v5264
  %5281 = vrot.lane.b32.xlu0 %v4086, 38
  %v5282 = vpop.permute.xlu0 %5281
  %5283 = vrot.lane.b32.xlu0 %v4087, 38
  %v5284 = vpop.permute.xlu0 %5283
  %5285 = vrot.lane.b32.xlu0 %v4088, 38
  %v5286 = vpop.permute.xlu0 %5285
  %5287 = vrot.lane.b32.xlu0 %v4089, 38
  %v5288 = vpop.permute.xlu0 %5287
  %5289 = vrot.lane.b32.xlu0 %v4090, 38
  %v5290 = vpop.permute.xlu0 %5289
  %5291 = vrot.lane.b32.xlu0 %v4091, 38
  %v5292 = vpop.permute.xlu0 %5291
  %5293 = vrot.lane.b32.xlu0 %v4092, 38
  %v5294 = vpop.permute.xlu0 %5293
  %5295 = vrot.lane.b32.xlu0 %v4093, 38
  %v5296 = vpop.permute.xlu0 %5295
  %5297 = vrot.lane.b32.xlu0 %v4094, 38
  %v5298 = vpop.permute.xlu0 %5297
  %5299 = vrot.lane.b32.xlu0 %v4095, 38
  %v5300 = vpop.permute.xlu0 %5299
  %5301 = vrot.lane.b32.xlu0 %v4096, 38
  %v5302 = vpop.permute.xlu0 %5301
  %5303 = vrot.lane.b32.xlu0 %v4097, 38
  %v5304 = vpop.permute.xlu0 %5303
  %5305 = vrot.lane.b32.xlu0 %v4098, 38
  %v5306 = vpop.permute.xlu0 %5305
  %5307 = vrot.lane.b32.xlu0 %v4099, 38
  %v5308 = vpop.permute.xlu0 %5307
  %5309 = vrot.lane.b32.xlu0 %v4100, 38
  %v5310 = vpop.permute.xlu0 %5309
  %5311 = vrot.lane.b32.xlu0 %v4101, 38
  %v5312 = vpop.permute.xlu0 %5311
  %5313 = vrot.lane.b32.xlu0 %v4102, 38
  %v5314 = vpop.permute.xlu0 %5313
  %v5315 = vsel %vm1275, %v5282, %v5284
  %v5316 = vsel %vm1275, %v5284, %v5286
  %v5317 = vsel %vm1275, %v5286, %v5288
  %v5318 = vsel %vm1275, %v5288, %v5290
  %v5319 = vsel %vm1275, %v5290, %v5292
  %v5320 = vsel %vm1275, %v5292, %v5294
  %v5321 = vsel %vm1275, %v5294, %v5296
  %v5322 = vsel %vm1275, %v5296, %v5298
  %v5323 = vsel %vm1275, %v5298, %v5300
  %v5324 = vsel %vm1275, %v5300, %v5302
  %v5325 = vsel %vm1275, %v5302, %v5304
  %v5326 = vsel %vm1275, %v5304, %v5306
  %v5327 = vsel %vm1275, %v5306, %v5308
  %v5328 = vsel %vm1275, %v5308, %v5310
  %v5329 = vsel %vm1275, %v5310, %v5312
  %v5330 = vsel %vm1275, %v5312, %v5314
  %5331 = vrot.lane.b32.xlu0 %v4086, 37
  %v5332 = vpop.permute.xlu0 %5331
  %5333 = vrot.lane.b32.xlu0 %v4087, 37
  %v5334 = vpop.permute.xlu0 %5333
  %5335 = vrot.lane.b32.xlu0 %v4088, 37
  %v5336 = vpop.permute.xlu0 %5335
  %5337 = vrot.lane.b32.xlu0 %v4089, 37
  %v5338 = vpop.permute.xlu0 %5337
  %5339 = vrot.lane.b32.xlu0 %v4090, 37
  %v5340 = vpop.permute.xlu0 %5339
  %5341 = vrot.lane.b32.xlu0 %v4091, 37
  %v5342 = vpop.permute.xlu0 %5341
  %5343 = vrot.lane.b32.xlu0 %v4092, 37
  %v5344 = vpop.permute.xlu0 %5343
  %5345 = vrot.lane.b32.xlu0 %v4093, 37
  %v5346 = vpop.permute.xlu0 %5345
  %5347 = vrot.lane.b32.xlu0 %v4094, 37
  %v5348 = vpop.permute.xlu0 %5347
  %5349 = vrot.lane.b32.xlu0 %v4095, 37
  %v5350 = vpop.permute.xlu0 %5349
  %5351 = vrot.lane.b32.xlu0 %v4096, 37
  %v5352 = vpop.permute.xlu0 %5351
  %5353 = vrot.lane.b32.xlu0 %v4097, 37
  %v5354 = vpop.permute.xlu0 %5353
  %5355 = vrot.lane.b32.xlu0 %v4098, 37
  %v5356 = vpop.permute.xlu0 %5355
  %5357 = vrot.lane.b32.xlu0 %v4099, 37
  %v5358 = vpop.permute.xlu0 %5357
  %5359 = vrot.lane.b32.xlu0 %v4100, 37
  %v5360 = vpop.permute.xlu0 %5359
  %5361 = vrot.lane.b32.xlu0 %v4101, 37
  %v5362 = vpop.permute.xlu0 %5361
  %5363 = vrot.lane.b32.xlu0 %v4102, 37
  %v5364 = vpop.permute.xlu0 %5363
  %v5365 = vsel %vm1326, %v5332, %v5334
  %v5366 = vsel %vm1326, %v5334, %v5336
  %v5367 = vsel %vm1326, %v5336, %v5338
  %v5368 = vsel %vm1326, %v5338, %v5340
  %v5369 = vsel %vm1326, %v5340, %v5342
  %v5370 = vsel %vm1326, %v5342, %v5344
  %v5371 = vsel %vm1326, %v5344, %v5346
  %v5372 = vsel %vm1326, %v5346, %v5348
  %v5373 = vsel %vm1326, %v5348, %v5350
  %v5374 = vsel %vm1326, %v5350, %v5352
  %v5375 = vsel %vm1326, %v5352, %v5354
  %v5376 = vsel %vm1326, %v5354, %v5356
  %v5377 = vsel %vm1326, %v5356, %v5358
  %v5378 = vsel %vm1326, %v5358, %v5360
  %v5379 = vsel %vm1326, %v5360, %v5362
  %v5380 = vsel %vm1326, %v5362, %v5364
  %5381 = vrot.lane.b32.xlu0 %v4086, 29
  %v5382 = vpop.permute.xlu0 %5381
  %5383 = vrot.lane.b32.xlu0 %v4087, 29
  %v5384 = vpop.permute.xlu0 %5383
  %5385 = vrot.lane.b32.xlu0 %v4088, 29
  %v5386 = vpop.permute.xlu0 %5385
  %5387 = vrot.lane.b32.xlu0 %v4089, 29
  %v5388 = vpop.permute.xlu0 %5387
  %5389 = vrot.lane.b32.xlu0 %v4090, 29
  %v5390 = vpop.permute.xlu0 %5389
  %5391 = vrot.lane.b32.xlu0 %v4091, 29
  %v5392 = vpop.permute.xlu0 %5391
  %5393 = vrot.lane.b32.xlu0 %v4092, 29
  %v5394 = vpop.permute.xlu0 %5393
  %5395 = vrot.lane.b32.xlu0 %v4093, 29
  %v5396 = vpop.permute.xlu0 %5395
  %5397 = vrot.lane.b32.xlu0 %v4094, 29
  %v5398 = vpop.permute.xlu0 %5397
  %5399 = vrot.lane.b32.xlu0 %v4095, 29
  %v5400 = vpop.permute.xlu0 %5399
  %5401 = vrot.lane.b32.xlu0 %v4096, 29
  %v5402 = vpop.permute.xlu0 %5401
  %5403 = vrot.lane.b32.xlu0 %v4097, 29
  %v5404 = vpop.permute.xlu0 %5403
  %5405 = vrot.lane.b32.xlu0 %v4098, 29
  %v5406 = vpop.permute.xlu0 %5405
  %5407 = vrot.lane.b32.xlu0 %v4099, 29
  %v5408 = vpop.permute.xlu0 %5407
  %5409 = vrot.lane.b32.xlu0 %v4100, 29
  %v5410 = vpop.permute.xlu0 %5409
  %5411 = vrot.lane.b32.xlu0 %v4101, 29
  %v5412 = vpop.permute.xlu0 %5411
  %5413 = vrot.lane.b32.xlu0 %v4102, 29
  %v5414 = vpop.permute.xlu0 %5413
  %v5415 = vsel %vm1377, %v5382, %v5384
  %v5416 = vsel %vm1377, %v5384, %v5386
  %v5417 = vsel %vm1377, %v5386, %v5388
  %v5418 = vsel %vm1377, %v5388, %v5390
  %v5419 = vsel %vm1377, %v5390, %v5392
  %v5420 = vsel %vm1377, %v5392, %v5394
  %v5421 = vsel %vm1377, %v5394, %v5396
  %v5422 = vsel %vm1377, %v5396, %v5398
  %v5423 = vsel %vm1377, %v5398, %v5400
  %v5424 = vsel %vm1377, %v5400, %v5402
  %v5425 = vsel %vm1377, %v5402, %v5404
  %v5426 = vsel %vm1377, %v5404, %v5406
  %v5427 = vsel %vm1377, %v5406, %v5408
  %v5428 = vsel %vm1377, %v5408, %v5410
  %v5429 = vsel %vm1377, %v5410, %v5412
  %v5430 = vsel %vm1377, %v5412, %v5414
  %5431 = vrot.lane.b32.xlu0 %v4102, 28
  %v5432 = vpop.permute.xlu0 %5431
  %v5433 = vsel %vm607, %v4657, %v5432
  %5434 = vrot.lane.b32.xlu0 %v4102, 27
  %v5435 = vpop.permute.xlu0 %5434
  %v5436 = vsel %vm674, %v4723, %v5435
  %5437 = vrot.lane.b32.xlu0 %v4086, 7
  %v5438 = vpop.permute.xlu0 %5437
  %5439 = vrot.lane.b32.xlu0 %v4087, 7
  %v5440 = vpop.permute.xlu0 %5439
  %5441 = vrot.lane.b32.xlu0 %v4088, 7
  %v5442 = vpop.permute.xlu0 %5441
  %5443 = vrot.lane.b32.xlu0 %v4089, 7
  %v5444 = vpop.permute.xlu0 %5443
  %5445 = vrot.lane.b32.xlu0 %v4090, 7
  %v5446 = vpop.permute.xlu0 %5445
  %5447 = vrot.lane.b32.xlu0 %v4091, 7
  %v5448 = vpop.permute.xlu0 %5447
  %5449 = vrot.lane.b32.xlu0 %v4092, 7
  %v5450 = vpop.permute.xlu0 %5449
  %5451 = vrot.lane.b32.xlu0 %v4093, 7
  %v5452 = vpop.permute.xlu0 %5451
  %5453 = vrot.lane.b32.xlu0 %v4094, 7
  %v5454 = vpop.permute.xlu0 %5453
  %5455 = vrot.lane.b32.xlu0 %v4095, 7
  %v5456 = vpop.permute.xlu0 %5455
  %5457 = vrot.lane.b32.xlu0 %v4096, 7
  %v5458 = vpop.permute.xlu0 %5457
  %5459 = vrot.lane.b32.xlu0 %v4097, 7
  %v5460 = vpop.permute.xlu0 %5459
  %5461 = vrot.lane.b32.xlu0 %v4098, 7
  %v5462 = vpop.permute.xlu0 %5461
  %5463 = vrot.lane.b32.xlu0 %v4099, 7
  %v5464 = vpop.permute.xlu0 %5463
  %5465 = vrot.lane.b32.xlu0 %v4100, 7
  %v5466 = vpop.permute.xlu0 %5465
  %5467 = vrot.lane.b32.xlu0 %v4101, 7
  %v5468 = vpop.permute.xlu0 %5467
  %5469 = vrot.lane.b32.xlu0 %v4152, 7
  %v5470 = vpop.permute.xlu0 %5469
  %5471 = vrot.lane.b32.xlu0 %v4153, 7
  %v5472 = vpop.permute.xlu0 %5471
  %5473 = vrot.lane.b32.xlu0 %v4154, 7
  %v5474 = vpop.permute.xlu0 %5473
  %5475 = vrot.lane.b32.xlu0 %v4155, 7
  %v5476 = vpop.permute.xlu0 %5475
  %5477 = vrot.lane.b32.xlu0 %v4156, 7
  %v5478 = vpop.permute.xlu0 %5477
  %5479 = vrot.lane.b32.xlu0 %v4157, 7
  %v5480 = vpop.permute.xlu0 %5479
  %5481 = vrot.lane.b32.xlu0 %v4158, 7
  %v5482 = vpop.permute.xlu0 %5481
  %5483 = vrot.lane.b32.xlu0 %v4159, 7
  %v5484 = vpop.permute.xlu0 %5483
  %5485 = vrot.lane.b32.xlu0 %v4160, 7
  %v5486 = vpop.permute.xlu0 %5485
  %5487 = vrot.lane.b32.xlu0 %v4161, 7
  %v5488 = vpop.permute.xlu0 %5487
  %5489 = vrot.lane.b32.xlu0 %v4162, 7
  %v5490 = vpop.permute.xlu0 %5489
  %5491 = vrot.lane.b32.xlu0 %v4163, 7
  %v5492 = vpop.permute.xlu0 %5491
  %5493 = vrot.lane.b32.xlu0 %v4164, 7
  %v5494 = vpop.permute.xlu0 %5493
  %5495 = vrot.lane.b32.xlu0 %v4165, 7
  %v5496 = vpop.permute.xlu0 %5495
  %5497 = vrot.lane.b32.xlu0 %v5079, 7
  %v5498 = vpop.permute.xlu0 %5497
  %5499 = vrot.lane.b32.xlu0 %v5078, 7
  %v5500 = vpop.permute.xlu0 %5499
  %5501 = vrot.lane.b32.xlu0 %v5115, 7
  %v5502 = vpop.permute.xlu0 %5501
  %5503 = vrot.lane.b32.xlu0 %v5116, 7
  %v5504 = vpop.permute.xlu0 %5503
  %5505 = vrot.lane.b32.xlu0 %v5117, 7
  %v5506 = vpop.permute.xlu0 %5505
  %5507 = vrot.lane.b32.xlu0 %v5118, 7
  %v5508 = vpop.permute.xlu0 %5507
  %5509 = vrot.lane.b32.xlu0 %v5119, 7
  %v5510 = vpop.permute.xlu0 %5509
  %5511 = vrot.lane.b32.xlu0 %v5120, 7
  %v5512 = vpop.permute.xlu0 %5511
  %5513 = vrot.lane.b32.xlu0 %v5121, 7
  %v5514 = vpop.permute.xlu0 %5513
  %5515 = vrot.lane.b32.xlu0 %v5122, 7
  %v5516 = vpop.permute.xlu0 %5515
  %5517 = vrot.lane.b32.xlu0 %v5123, 7
  %v5518 = vpop.permute.xlu0 %5517
  %5519 = vrot.lane.b32.xlu0 %v5124, 7
  %v5520 = vpop.permute.xlu0 %5519
  %5521 = vrot.lane.b32.xlu0 %v5125, 7
  %v5522 = vpop.permute.xlu0 %5521
  %5523 = vrot.lane.b32.xlu0 %v5126, 7
  %v5524 = vpop.permute.xlu0 %5523
  %5525 = vrot.lane.b32.xlu0 %v5127, 7
  %v5526 = vpop.permute.xlu0 %5525
  %5527 = vrot.lane.b32.xlu0 %v5128, 7
  %v5528 = vpop.permute.xlu0 %5527
  %5529 = vrot.lane.b32.xlu0 %v5129, 7
  %v5530 = vpop.permute.xlu0 %5529
  %5531 = vrot.lane.b32.xlu0 %v5130, 7
  %v5532 = vpop.permute.xlu0 %5531
  %5533 = vrot.lane.b32.xlu0 %v5165, 7
  %v5534 = vpop.permute.xlu0 %5533
  %5535 = vrot.lane.b32.xlu0 %v5166, 7
  %v5536 = vpop.permute.xlu0 %5535
  %5537 = vrot.lane.b32.xlu0 %v5167, 7
  %v5538 = vpop.permute.xlu0 %5537
  %5539 = vrot.lane.b32.xlu0 %v5168, 7
  %v5540 = vpop.permute.xlu0 %5539
  %5541 = vrot.lane.b32.xlu0 %v5169, 7
  %v5542 = vpop.permute.xlu0 %5541
  %5543 = vrot.lane.b32.xlu0 %v5170, 7
  %v5544 = vpop.permute.xlu0 %5543
  %5545 = vrot.lane.b32.xlu0 %v5171, 7
  %v5546 = vpop.permute.xlu0 %5545
  %5547 = vrot.lane.b32.xlu0 %v5172, 7
  %v5548 = vpop.permute.xlu0 %5547
  %5549 = vrot.lane.b32.xlu0 %v5173, 7
  %v5550 = vpop.permute.xlu0 %5549
  %5551 = vrot.lane.b32.xlu0 %v5174, 7
  %v5552 = vpop.permute.xlu0 %5551
  %5553 = vrot.lane.b32.xlu0 %v5175, 7
  %v5554 = vpop.permute.xlu0 %5553
  %5555 = vrot.lane.b32.xlu0 %v5176, 7
  %v5556 = vpop.permute.xlu0 %5555
  %5557 = vrot.lane.b32.xlu0 %v5177, 7
  %v5558 = vpop.permute.xlu0 %5557
  %5559 = vrot.lane.b32.xlu0 %v5178, 7
  %v5560 = vpop.permute.xlu0 %5559
  %5561 = vrot.lane.b32.xlu0 %v5179, 7
  %v5562 = vpop.permute.xlu0 %5561
  %5563 = vrot.lane.b32.xlu0 %v5180, 7
  %v5564 = vpop.permute.xlu0 %5563
  %5565 = vrot.lane.b32.xlu0 %v5215, 7
  %v5566 = vpop.permute.xlu0 %5565
  %5567 = vrot.lane.b32.xlu0 %v5216, 7
  %v5568 = vpop.permute.xlu0 %5567
  %5569 = vrot.lane.b32.xlu0 %v5217, 7
  %v5570 = vpop.permute.xlu0 %5569
  %5571 = vrot.lane.b32.xlu0 %v5218, 7
  %v5572 = vpop.permute.xlu0 %5571
  %5573 = vrot.lane.b32.xlu0 %v5219, 7
  %v5574 = vpop.permute.xlu0 %5573
  %5575 = vrot.lane.b32.xlu0 %v5220, 7
  %v5576 = vpop.permute.xlu0 %5575
  %5577 = vrot.lane.b32.xlu0 %v5221, 7
  %v5578 = vpop.permute.xlu0 %5577
  %5579 = vrot.lane.b32.xlu0 %v5222, 7
  %v5580 = vpop.permute.xlu0 %5579
  %5581 = vrot.lane.b32.xlu0 %v5223, 7
  %v5582 = vpop.permute.xlu0 %5581
  %5583 = vrot.lane.b32.xlu0 %v5224, 7
  %v5584 = vpop.permute.xlu0 %5583
  %5585 = vrot.lane.b32.xlu0 %v5225, 7
  %v5586 = vpop.permute.xlu0 %5585
  %5587 = vrot.lane.b32.xlu0 %v5226, 7
  %v5588 = vpop.permute.xlu0 %5587
  %5589 = vrot.lane.b32.xlu0 %v5227, 7
  %v5590 = vpop.permute.xlu0 %5589
  %5591 = vrot.lane.b32.xlu0 %v5228, 7
  %v5592 = vpop.permute.xlu0 %5591
  %5593 = vrot.lane.b32.xlu0 %v5229, 7
  %v5594 = vpop.permute.xlu0 %5593
  %5595 = vrot.lane.b32.xlu0 %v5230, 7
  %v5596 = vpop.permute.xlu0 %5595
  %5597 = vrot.lane.b32.xlu0 %v5265, 7
  %v5598 = vpop.permute.xlu0 %5597
  %5599 = vrot.lane.b32.xlu0 %v5266, 7
  %v5600 = vpop.permute.xlu0 %5599
  %5601 = vrot.lane.b32.xlu0 %v5267, 7
  %v5602 = vpop.permute.xlu0 %5601
  %5603 = vrot.lane.b32.xlu0 %v5268, 7
  %v5604 = vpop.permute.xlu0 %5603
  %5605 = vrot.lane.b32.xlu0 %v5269, 7
  %v5606 = vpop.permute.xlu0 %5605
  %5607 = vrot.lane.b32.xlu0 %v5270, 7
  %v5608 = vpop.permute.xlu0 %5607
  %5609 = vrot.lane.b32.xlu0 %v5271, 7
  %v5610 = vpop.permute.xlu0 %5609
  %5611 = vrot.lane.b32.xlu0 %v5272, 7
  %v5612 = vpop.permute.xlu0 %5611
  %5613 = vrot.lane.b32.xlu0 %v5273, 7
  %v5614 = vpop.permute.xlu0 %5613
  %5615 = vrot.lane.b32.xlu0 %v5274, 7
  %v5616 = vpop.permute.xlu0 %5615
  %5617 = vrot.lane.b32.xlu0 %v5275, 7
  %v5618 = vpop.permute.xlu0 %5617
  %5619 = vrot.lane.b32.xlu0 %v5276, 7
  %v5620 = vpop.permute.xlu0 %5619
  %5621 = vrot.lane.b32.xlu0 %v5277, 7
  %v5622 = vpop.permute.xlu0 %5621
  %5623 = vrot.lane.b32.xlu0 %v5278, 7
  %v5624 = vpop.permute.xlu0 %5623
  %5625 = vrot.lane.b32.xlu0 %v5279, 7
  %v5626 = vpop.permute.xlu0 %5625
  %5627 = vrot.lane.b32.xlu0 %v5280, 7
  %v5628 = vpop.permute.xlu0 %5627
  %5629 = vrot.lane.b32.xlu0 %v5315, 7
  %v5630 = vpop.permute.xlu0 %5629
  %5631 = vrot.lane.b32.xlu0 %v5316, 7
  %v5632 = vpop.permute.xlu0 %5631
  %5633 = vrot.lane.b32.xlu0 %v5317, 7
  %v5634 = vpop.permute.xlu0 %5633
  %5635 = vrot.lane.b32.xlu0 %v5318, 7
  %v5636 = vpop.permute.xlu0 %5635
  %5637 = vrot.lane.b32.xlu0 %v5319, 7
  %v5638 = vpop.permute.xlu0 %5637
  %5639 = vrot.lane.b32.xlu0 %v5320, 7
  %v5640 = vpop.permute.xlu0 %5639
  %5641 = vrot.lane.b32.xlu0 %v5321, 7
  %v5642 = vpop.permute.xlu0 %5641
  %5643 = vrot.lane.b32.xlu0 %v5322, 7
  %v5644 = vpop.permute.xlu0 %5643
  %5645 = vrot.lane.b32.xlu0 %v5323, 7
  %v5646 = vpop.permute.xlu0 %5645
  %5647 = vrot.lane.b32.xlu0 %v5324, 7
  %v5648 = vpop.permute.xlu0 %5647
  %5649 = vrot.lane.b32.xlu0 %v5325, 7
  %v5650 = vpop.permute.xlu0 %5649
  %5651 = vrot.lane.b32.xlu0 %v5326, 7
  %v5652 = vpop.permute.xlu0 %5651
  %5653 = vrot.lane.b32.xlu0 %v5327, 7
  %v5654 = vpop.permute.xlu0 %5653
  %5655 = vrot.lane.b32.xlu0 %v5328, 7
  %v5656 = vpop.permute.xlu0 %5655
  %5657 = vrot.lane.b32.xlu0 %v5329, 7
  %v5658 = vpop.permute.xlu0 %5657
  %5659 = vrot.lane.b32.xlu0 %v5330, 7
  %v5660 = vpop.permute.xlu0 %5659
  %5661 = vrot.lane.b32.xlu0 %v5365, 7
  %v5662 = vpop.permute.xlu0 %5661
  %5663 = vrot.lane.b32.xlu0 %v5366, 7
  %v5664 = vpop.permute.xlu0 %5663
  %5665 = vrot.lane.b32.xlu0 %v5367, 7
  %v5666 = vpop.permute.xlu0 %5665
  %5667 = vrot.lane.b32.xlu0 %v5368, 7
  %v5668 = vpop.permute.xlu0 %5667
  %5669 = vrot.lane.b32.xlu0 %v5369, 7
  %v5670 = vpop.permute.xlu0 %5669
  %5671 = vrot.lane.b32.xlu0 %v5370, 7
  %v5672 = vpop.permute.xlu0 %5671
  %5673 = vrot.lane.b32.xlu0 %v5371, 7
  %v5674 = vpop.permute.xlu0 %5673
  %5675 = vrot.lane.b32.xlu0 %v5372, 7
  %v5676 = vpop.permute.xlu0 %5675
  %5677 = vrot.lane.b32.xlu0 %v5373, 7
  %v5678 = vpop.permute.xlu0 %5677
  %5679 = vrot.lane.b32.xlu0 %v5374, 7
  %v5680 = vpop.permute.xlu0 %5679
  %5681 = vrot.lane.b32.xlu0 %v5375, 7
  %v5682 = vpop.permute.xlu0 %5681
  %5683 = vrot.lane.b32.xlu0 %v5376, 7
  %v5684 = vpop.permute.xlu0 %5683
  %5685 = vrot.lane.b32.xlu0 %v5377, 7
  %v5686 = vpop.permute.xlu0 %5685
  %5687 = vrot.lane.b32.xlu0 %v5378, 7
  %v5688 = vpop.permute.xlu0 %5687
  %5689 = vrot.lane.b32.xlu0 %v5379, 7
  %v5690 = vpop.permute.xlu0 %5689
  %5691 = vrot.lane.b32.xlu0 %v5380, 7
  %v5692 = vpop.permute.xlu0 %5691
  %5693 = vrot.lane.b32.xlu0 %v5415, 7
  %v5694 = vpop.permute.xlu0 %5693
  %5695 = vrot.lane.b32.xlu0 %v5416, 7
  %v5696 = vpop.permute.xlu0 %5695
  %5697 = vrot.lane.b32.xlu0 %v5417, 7
  %v5698 = vpop.permute.xlu0 %5697
  %5699 = vrot.lane.b32.xlu0 %v5418, 7
  %v5700 = vpop.permute.xlu0 %5699
  %5701 = vrot.lane.b32.xlu0 %v5419, 7
  %v5702 = vpop.permute.xlu0 %5701
  %5703 = vrot.lane.b32.xlu0 %v5420, 7
  %v5704 = vpop.permute.xlu0 %5703
  %5705 = vrot.lane.b32.xlu0 %v5421, 7
  %v5706 = vpop.permute.xlu0 %5705
  %5707 = vrot.lane.b32.xlu0 %v5422, 7
  %v5708 = vpop.permute.xlu0 %5707
  %5709 = vrot.lane.b32.xlu0 %v5423, 7
  %v5710 = vpop.permute.xlu0 %5709
  %5711 = vrot.lane.b32.xlu0 %v5424, 7
  %v5712 = vpop.permute.xlu0 %5711
  %5713 = vrot.lane.b32.xlu0 %v5425, 7
  %v5714 = vpop.permute.xlu0 %5713
  %5715 = vrot.lane.b32.xlu0 %v5426, 7
  %v5716 = vpop.permute.xlu0 %5715
  %5717 = vrot.lane.b32.xlu0 %v5427, 7
  %v5718 = vpop.permute.xlu0 %5717
  %5719 = vrot.lane.b32.xlu0 %v5428, 7
  %v5720 = vpop.permute.xlu0 %5719
  %5721 = vrot.lane.b32.xlu0 %v5429, 7
  %v5722 = vpop.permute.xlu0 %5721
  %5723 = vrot.lane.b32.xlu0 %v5430, 7
  %v5724 = vpop.permute.xlu0 %5723
  %5725 = vrot.lane.b32.xlu0 %v4659, 7
  %v5726 = vpop.permute.xlu0 %5725
  %5727 = vrot.lane.b32.xlu0 %v4660, 7
  %v5728 = vpop.permute.xlu0 %5727
  %5729 = vrot.lane.b32.xlu0 %v4661, 7
  %v5730 = vpop.permute.xlu0 %5729
  %5731 = vrot.lane.b32.xlu0 %v4662, 7
  %v5732 = vpop.permute.xlu0 %5731
  %5733 = vrot.lane.b32.xlu0 %v4663, 7
  %v5734 = vpop.permute.xlu0 %5733
  %5735 = vrot.lane.b32.xlu0 %v4664, 7
  %v5736 = vpop.permute.xlu0 %5735
  %5737 = vrot.lane.b32.xlu0 %v4665, 7
  %v5738 = vpop.permute.xlu0 %5737
  %5739 = vrot.lane.b32.xlu0 %v4666, 7
  %v5740 = vpop.permute.xlu0 %5739
  %5741 = vrot.lane.b32.xlu0 %v4667, 7
  %v5742 = vpop.permute.xlu0 %5741
  %5743 = vrot.lane.b32.xlu0 %v4668, 7
  %v5744 = vpop.permute.xlu0 %5743
  %5745 = vrot.lane.b32.xlu0 %v4669, 7
  %v5746 = vpop.permute.xlu0 %5745
  %5747 = vrot.lane.b32.xlu0 %v4670, 7
  %v5748 = vpop.permute.xlu0 %5747
  %5749 = vrot.lane.b32.xlu0 %v4671, 7
  %v5750 = vpop.permute.xlu0 %5749
  %5751 = vrot.lane.b32.xlu0 %v4672, 7
  %v5752 = vpop.permute.xlu0 %5751
  %5753 = vrot.lane.b32.xlu0 %v4673, 7
  %v5754 = vpop.permute.xlu0 %5753
  %5755 = vrot.lane.b32.xlu0 %v5433, 7
  %v5756 = vpop.permute.xlu0 %5755
  %5757 = vrot.lane.b32.xlu0 %v4725, 7
  %v5758 = vpop.permute.xlu0 %5757
  %5759 = vrot.lane.b32.xlu0 %v4726, 7
  %v5760 = vpop.permute.xlu0 %5759
  %5761 = vrot.lane.b32.xlu0 %v4727, 7
  %v5762 = vpop.permute.xlu0 %5761
  %5763 = vrot.lane.b32.xlu0 %v4728, 7
  %v5764 = vpop.permute.xlu0 %5763
  %5765 = vrot.lane.b32.xlu0 %v4729, 7
  %v5766 = vpop.permute.xlu0 %5765
  %5767 = vrot.lane.b32.xlu0 %v4730, 7
  %v5768 = vpop.permute.xlu0 %5767
  %5769 = vrot.lane.b32.xlu0 %v4731, 7
  %v5770 = vpop.permute.xlu0 %5769
  %5771 = vrot.lane.b32.xlu0 %v4732, 7
  %v5772 = vpop.permute.xlu0 %5771
  %5773 = vrot.lane.b32.xlu0 %v4733, 7
  %v5774 = vpop.permute.xlu0 %5773
  %5775 = vrot.lane.b32.xlu0 %v4734, 7
  %v5776 = vpop.permute.xlu0 %5775
  %5777 = vrot.lane.b32.xlu0 %v4735, 7
  %v5778 = vpop.permute.xlu0 %5777
  %5779 = vrot.lane.b32.xlu0 %v4736, 7
  %v5780 = vpop.permute.xlu0 %5779
  %5781 = vrot.lane.b32.xlu0 %v4737, 7
  %v5782 = vpop.permute.xlu0 %5781
  %5783 = vrot.lane.b32.xlu0 %v4738, 7
  %v5784 = vpop.permute.xlu0 %5783
  %5785 = vrot.lane.b32.xlu0 %v4739, 7
  %v5786 = vpop.permute.xlu0 %5785
  %5787 = vrot.lane.b32.xlu0 %v5436, 7
  %v5788 = vpop.permute.xlu0 %5787
  %v5789 = vsel %vm1752, %v5438, %v5440
  %v5790 = vsel %vm1752, %v5440, %v5442
  %v5791 = vsel %vm1752, %v5442, %v5444
  %v5792 = vsel %vm1752, %v5444, %v5446
  %v5793 = vsel %vm1752, %v5446, %v5448
  %v5794 = vsel %vm1752, %v5448, %v5450
  %v5795 = vsel %vm1752, %v5450, %v5452
  %v5796 = vsel %vm1752, %v5452, %v5454
  %v5797 = vsel %vm1752, %v5454, %v5456
  %v5798 = vsel %vm1752, %v5456, %v5458
  %v5799 = vsel %vm1752, %v5458, %v5460
  %v5800 = vsel %vm1752, %v5460, %v5462
  %v5801 = vsel %vm1752, %v5462, %v5464
  %v5802 = vsel %vm1752, %v5464, %v5466
  %v5803 = vsel %vm1752, %v5466, %v5468
  %v5804 = vsel %vm1752, %v5470, %v5472
  %v5805 = vsel %vm1752, %v5472, %v5474
  %v5806 = vsel %vm1752, %v5474, %v5476
  %v5807 = vsel %vm1752, %v5476, %v5478
  %v5808 = vsel %vm1752, %v5478, %v5480
  %v5809 = vsel %vm1752, %v5480, %v5482
  %v5810 = vsel %vm1752, %v5482, %v5484
  %v5811 = vsel %vm1752, %v5484, %v5486
  %v5812 = vsel %vm1752, %v5486, %v5488
  %v5813 = vsel %vm1752, %v5488, %v5490
  %v5814 = vsel %vm1752, %v5490, %v5492
  %v5815 = vsel %vm1752, %v5492, %v5494
  %v5816 = vsel %vm1752, %v5494, %v5496
  %v5817 = vsel %vm1752, %v5496, %v5498
  %v5818 = vsel %vm1752, %v5498, %v5500
  %v5819 = vsel %vm1752, %v5502, %v5504
  %v5820 = vsel %vm1752, %v5504, %v5506
  %v5821 = vsel %vm1752, %v5506, %v5508
  %v5822 = vsel %vm1752, %v5508, %v5510
  %v5823 = vsel %vm1752, %v5510, %v5512
  %v5824 = vsel %vm1752, %v5512, %v5514
  %v5825 = vsel %vm1752, %v5514, %v5516
  %v5826 = vsel %vm1752, %v5516, %v5518
  %v5827 = vsel %vm1752, %v5518, %v5520
  %v5828 = vsel %vm1752, %v5520, %v5522
  %v5829 = vsel %vm1752, %v5522, %v5524
  %v5830 = vsel %vm1752, %v5524, %v5526
  %v5831 = vsel %vm1752, %v5526, %v5528
  %v5832 = vsel %vm1752, %v5528, %v5530
  %v5833 = vsel %vm1752, %v5530, %v5532
  %v5834 = vsel %vm1752, %v5534, %v5536
  %v5835 = vsel %vm1752, %v5536, %v5538
  %v5836 = vsel %vm1752, %v5538, %v5540
  %v5837 = vsel %vm1752, %v5540, %v5542
  %v5838 = vsel %vm1752, %v5542, %v5544
  %v5839 = vsel %vm1752, %v5544, %v5546
  %v5840 = vsel %vm1752, %v5546, %v5548
  %v5841 = vsel %vm1752, %v5548, %v5550
  %v5842 = vsel %vm1752, %v5550, %v5552
  %v5843 = vsel %vm1752, %v5552, %v5554
  %v5844 = vsel %vm1752, %v5554, %v5556
  %v5845 = vsel %vm1752, %v5556, %v5558
  %v5846 = vsel %vm1752, %v5558, %v5560
  %v5847 = vsel %vm1752, %v5560, %v5562
  %v5848 = vsel %vm1752, %v5562, %v5564
  %v5849 = vsel %vm1752, %v5566, %v5568
  %v5850 = vsel %vm1752, %v5568, %v5570
  %v5851 = vsel %vm1752, %v5570, %v5572
  %v5852 = vsel %vm1752, %v5572, %v5574
  %v5853 = vsel %vm1752, %v5574, %v5576
  %v5854 = vsel %vm1752, %v5576, %v5578
  %v5855 = vsel %vm1752, %v5578, %v5580
  %v5856 = vsel %vm1752, %v5580, %v5582
  %v5857 = vsel %vm1752, %v5582, %v5584
  %v5858 = vsel %vm1752, %v5584, %v5586
  %v5859 = vsel %vm1752, %v5586, %v5588
  %v5860 = vsel %vm1752, %v5588, %v5590
  %v5861 = vsel %vm1752, %v5590, %v5592
  %v5862 = vsel %vm1752, %v5592, %v5594
  %v5863 = vsel %vm1752, %v5594, %v5596
  %v5864 = vsel %vm1752, %v5598, %v5600
  %v5865 = vsel %vm1752, %v5600, %v5602
  %v5866 = vsel %vm1752, %v5602, %v5604
  %v5867 = vsel %vm1752, %v5604, %v5606
  %v5868 = vsel %vm1752, %v5606, %v5608
  %v5869 = vsel %vm1752, %v5608, %v5610
  %v5870 = vsel %vm1752, %v5610, %v5612
  %v5871 = vsel %vm1752, %v5612, %v5614
  %v5872 = vsel %vm1752, %v5614, %v5616
  %v5873 = vsel %vm1752, %v5616, %v5618
  %v5874 = vsel %vm1752, %v5618, %v5620
  %v5875 = vsel %vm1752, %v5620, %v5622
  %v5876 = vsel %vm1752, %v5622, %v5624
  %v5877 = vsel %vm1752, %v5624, %v5626
  %v5878 = vsel %vm1752, %v5626, %v5628
  %v5879 = vsel %vm1752, %v5630, %v5632
  %v5880 = vsel %vm1752, %v5632, %v5634
  %v5881 = vsel %vm1752, %v5634, %v5636
  %v5882 = vsel %vm1752, %v5636, %v5638
  %v5883 = vsel %vm1752, %v5638, %v5640
  %v5884 = vsel %vm1752, %v5640, %v5642
  %v5885 = vsel %vm1752, %v5642, %v5644
  %v5886 = vsel %vm1752, %v5644, %v5646
  %v5887 = vsel %vm1752, %v5646, %v5648
  %v5888 = vsel %vm1752, %v5648, %v5650
  %v5889 = vsel %vm1752, %v5650, %v5652
  %v5890 = vsel %vm1752, %v5652, %v5654
  %v5891 = vsel %vm1752, %v5654, %v5656
  %v5892 = vsel %vm1752, %v5656, %v5658
  %v5893 = vsel %vm1752, %v5658, %v5660
  %v5894 = vsel %vm1752, %v5662, %v5664
  %v5895 = vsel %vm1752, %v5664, %v5666
  %v5896 = vsel %vm1752, %v5666, %v5668
  %v5897 = vsel %vm1752, %v5668, %v5670
  %v5898 = vsel %vm1752, %v5670, %v5672
  %v5899 = vsel %vm1752, %v5672, %v5674
  %v5900 = vsel %vm1752, %v5674, %v5676
  %v5901 = vsel %vm1752, %v5676, %v5678
  %v5902 = vsel %vm1752, %v5678, %v5680
  %v5903 = vsel %vm1752, %v5680, %v5682
  %v5904 = vsel %vm1752, %v5682, %v5684
  %v5905 = vsel %vm1752, %v5684, %v5686
  %v5906 = vsel %vm1752, %v5686, %v5688
  %v5907 = vsel %vm1752, %v5688, %v5690
  %v5908 = vsel %vm1752, %v5690, %v5692
  %v5909 = vsel %vm1752, %v5694, %v5696
  %v5910 = vsel %vm1752, %v5696, %v5698
  %v5911 = vsel %vm1752, %v5698, %v5700
  %v5912 = vsel %vm1752, %v5700, %v5702
  %v5913 = vsel %vm1752, %v5702, %v5704
  %v5914 = vsel %vm1752, %v5704, %v5706
  %v5915 = vsel %vm1752, %v5706, %v5708
  %v5916 = vsel %vm1752, %v5708, %v5710
  %v5917 = vsel %vm1752, %v5710, %v5712
  %v5918 = vsel %vm1752, %v5712, %v5714
  %v5919 = vsel %vm1752, %v5714, %v5716
  %v5920 = vsel %vm1752, %v5716, %v5718
  %v5921 = vsel %vm1752, %v5718, %v5720
  %v5922 = vsel %vm1752, %v5720, %v5722
  %v5923 = vsel %vm1752, %v5722, %v5724
  %v5924 = vsel %vm1752, %v5726, %v5728
  %v5925 = vsel %vm1752, %v5728, %v5730
  %v5926 = vsel %vm1752, %v5730, %v5732
  %v5927 = vsel %vm1752, %v5732, %v5734
  %v5928 = vsel %vm1752, %v5734, %v5736
  %v5929 = vsel %vm1752, %v5736, %v5738
  %v5930 = vsel %vm1752, %v5738, %v5740
  %v5931 = vsel %vm1752, %v5740, %v5742
  %v5932 = vsel %vm1752, %v5742, %v5744
  %v5933 = vsel %vm1752, %v5744, %v5746
  %v5934 = vsel %vm1752, %v5746, %v5748
  %v5935 = vsel %vm1752, %v5748, %v5750
  %v5936 = vsel %vm1752, %v5750, %v5752
  %v5937 = vsel %vm1752, %v5752, %v5754
  %v5938 = vsel %vm1752, %v5754, %v5756
  %v5939 = vsel %vm1752, %v5758, %v5760
  %v5940 = vsel %vm1752, %v5760, %v5762
  %v5941 = vsel %vm1752, %v5762, %v5764
  %v5942 = vsel %vm1752, %v5764, %v5766
  %v5943 = vsel %vm1752, %v5766, %v5768
  %v5944 = vsel %vm1752, %v5768, %v5770
  %v5945 = vsel %vm1752, %v5770, %v5772
  %v5946 = vsel %vm1752, %v5772, %v5774
  %v5947 = vsel %vm1752, %v5774, %v5776
  %v5948 = vsel %vm1752, %v5776, %v5778
  %v5949 = vsel %vm1752, %v5778, %v5780
  %v5950 = vsel %vm1752, %v5780, %v5782
  %v5951 = vsel %vm1752, %v5782, %v5784
  %v5952 = vsel %vm1752, %v5784, %v5786
  %v5953 = vsel %vm1752, %v5786, %v5788
  %v6130 = vpack.c.bf16 %v4151, %v4085
  %v6131 = vpack.c.bf16 %v4152, %v4086
  %v6132 = vpack.c.bf16 %v4153, %v4087
  %v6133 = vpack.c.bf16 %v4154, %v4088
  %v6134 = vpack.c.bf16 %v4155, %v4089
  %v6135 = vpack.c.bf16 %v4156, %v4090
  %v6136 = vpack.c.bf16 %v4157, %v4091
  %v6137 = vpack.c.bf16 %v4158, %v4092
  %v6138 = vpack.c.bf16 %v4159, %v4093
  %v6139 = vpack.c.bf16 %v4160, %v4094
  %v6140 = vpack.c.bf16 %v4161, %v4095
  %v6141 = vpack.c.bf16 %v4162, %v4096
  %v6142 = vpack.c.bf16 %v4163, %v4097
  %v6143 = vpack.c.bf16 %v4164, %v4098
  %v6144 = vpack.c.bf16 %v4165, %v4099
  %v6145 = vpack.c.bf16 %v4150, %v4100
  %v6146 = vpack.c.bf16 %v4277, %v4214
  %v6147 = vpack.c.bf16 %v4278, %v4215
  %v6148 = vpack.c.bf16 %v4279, %v4216
  %v6149 = vpack.c.bf16 %v4280, %v4217
  %v6150 = vpack.c.bf16 %v4281, %v4218
  %v6151 = vpack.c.bf16 %v4282, %v4219
  %v6152 = vpack.c.bf16 %v4283, %v4220
  %v6153 = vpack.c.bf16 %v4284, %v4221
  %v6154 = vpack.c.bf16 %v4285, %v4222
  %v6155 = vpack.c.bf16 %v4286, %v4223
  %v6156 = vpack.c.bf16 %v4287, %v4224
  %v6157 = vpack.c.bf16 %v4288, %v4225
  %v6158 = vpack.c.bf16 %v4289, %v4226
  %v6159 = vpack.c.bf16 %v4290, %v4227
  %v6160 = vpack.c.bf16 %v4291, %v4228
  %v6161 = vpack.c.bf16 %v4276, %v4213
  %v6162 = vpack.c.bf16 %v4403, %v4340
  %v6163 = vpack.c.bf16 %v4404, %v4341
  %v6164 = vpack.c.bf16 %v4405, %v4342
  %v6165 = vpack.c.bf16 %v4406, %v4343
  %v6166 = vpack.c.bf16 %v4407, %v4344
  %v6167 = vpack.c.bf16 %v4408, %v4345
  %v6168 = vpack.c.bf16 %v4409, %v4346
  %v6169 = vpack.c.bf16 %v4410, %v4347
  %v6170 = vpack.c.bf16 %v4411, %v4348
  %v6171 = vpack.c.bf16 %v4412, %v4349
  %v6172 = vpack.c.bf16 %v4413, %v4350
  %v6173 = vpack.c.bf16 %v4414, %v4351
  %v6174 = vpack.c.bf16 %v4415, %v4352
  %v6175 = vpack.c.bf16 %v4416, %v4353
  %v6176 = vpack.c.bf16 %v4417, %v4354
  %v6177 = vpack.c.bf16 %v4402, %v4339
  %v6178 = vpack.c.bf16 %v4529, %v4466
  %v6179 = vpack.c.bf16 %v4530, %v4467
  %v6180 = vpack.c.bf16 %v4531, %v4468
  %v6181 = vpack.c.bf16 %v4532, %v4469
  %v6182 = vpack.c.bf16 %v4533, %v4470
  %v6183 = vpack.c.bf16 %v4534, %v4471
  %v6184 = vpack.c.bf16 %v4535, %v4472
  %v6185 = vpack.c.bf16 %v4536, %v4473
  %v6186 = vpack.c.bf16 %v4537, %v4474
  %v6187 = vpack.c.bf16 %v4538, %v4475
  %v6188 = vpack.c.bf16 %v4539, %v4476
  %v6189 = vpack.c.bf16 %v4540, %v4477
  %v6190 = vpack.c.bf16 %v4541, %v4478
  %v6191 = vpack.c.bf16 %v4542, %v4479
  %v6192 = vpack.c.bf16 %v4543, %v4480
  %v6193 = vpack.c.bf16 %v4528, %v4465
  %v6194 = vpack.c.bf16 %v4658, %v4592
  %v6195 = vpack.c.bf16 %v4659, %v4593
  %v6196 = vpack.c.bf16 %v4660, %v4594
  %v6197 = vpack.c.bf16 %v4661, %v4595
  %v6198 = vpack.c.bf16 %v4662, %v4596
  %v6199 = vpack.c.bf16 %v4663, %v4597
  %v6200 = vpack.c.bf16 %v4664, %v4598
  %v6201 = vpack.c.bf16 %v4665, %v4599
  %v6202 = vpack.c.bf16 %v4666, %v4600
  %v6203 = vpack.c.bf16 %v4667, %v4601
  %v6204 = vpack.c.bf16 %v4668, %v4602
  %v6205 = vpack.c.bf16 %v4669, %v4603
  %v6206 = vpack.c.bf16 %v4670, %v4604
  %v6207 = vpack.c.bf16 %v4671, %v4605
  %v6208 = vpack.c.bf16 %v4672, %v4606
  %v6209 = vpack.c.bf16 %v4673, %v4591
  %v6210 = vpack.c.bf16 %v4790, %v4724
  %v6211 = vpack.c.bf16 %v4791, %v4725
  %v6212 = vpack.c.bf16 %v4792, %v4726
  %v6213 = vpack.c.bf16 %v4793, %v4727
  %v6214 = vpack.c.bf16 %v4794, %v4728
  %v6215 = vpack.c.bf16 %v4795, %v4729
  %v6216 = vpack.c.bf16 %v4796, %v4730
  %v6217 = vpack.c.bf16 %v4797, %v4731
  %v6218 = vpack.c.bf16 %v4798, %v4732
  %v6219 = vpack.c.bf16 %v4799, %v4733
  %v6220 = vpack.c.bf16 %v4800, %v4734
  %v6221 = vpack.c.bf16 %v4801, %v4735
  %v6222 = vpack.c.bf16 %v4802, %v4736
  %v6223 = vpack.c.bf16 %v4803, %v4737
  %v6224 = vpack.c.bf16 %v4804, %v4738
  %v6225 = vpack.c.bf16 %v4805, %v4739
  %v6226 = vpack.c.bf16 %v4889, %v4856
  %v6227 = vpack.c.bf16 %v4920, %v4857
  %v6228 = vpack.c.bf16 %v4921, %v4858
  %v6229 = vpack.c.bf16 %v4922, %v4859
  %v6230 = vpack.c.bf16 %v4923, %v4860
  %v6231 = vpack.c.bf16 %v4924, %v4861
  %v6232 = vpack.c.bf16 %v4925, %v4862
  %v6233 = vpack.c.bf16 %v4926, %v4863
  %v6234 = vpack.c.bf16 %v4927, %v4864
  %v6235 = vpack.c.bf16 %v4928, %v4865
  %v6236 = vpack.c.bf16 %v4929, %v4866
  %v6237 = vpack.c.bf16 %v4930, %v4867
  %v6238 = vpack.c.bf16 %v4931, %v4868
  %v6239 = vpack.c.bf16 %v4932, %v4869
  %v6240 = vpack.c.bf16 %v4933, %v4870
  %v6241 = vpack.c.bf16 %v4934, %v4871
  %v6242 = vpack.c.bf16 %v5015, %v4952
  %v6243 = vpack.c.bf16 %v5046, %v4983
  %v6244 = vpack.c.bf16 %v5047, %v4984
  %v6245 = vpack.c.bf16 %v5048, %v4985
  %v6246 = vpack.c.bf16 %v5049, %v4986
  %v6247 = vpack.c.bf16 %v5050, %v4987
  %v6248 = vpack.c.bf16 %v5051, %v4988
  %v6249 = vpack.c.bf16 %v5052, %v4989
  %v6250 = vpack.c.bf16 %v5053, %v4990
  %v6251 = vpack.c.bf16 %v5054, %v4991
  %v6252 = vpack.c.bf16 %v5055, %v4992
  %v6253 = vpack.c.bf16 %v5056, %v4993
  %v6254 = vpack.c.bf16 %v5057, %v4994
  %v6255 = vpack.c.bf16 %v5058, %v4995
  %v6256 = vpack.c.bf16 %v5059, %v4996
  %v6257 = vpack.c.bf16 %v5060, %v4997
  %v6258 = vpack.c.bf16 %v5470, %v5438
  %v6259 = vpack.c.bf16 %v5804, %v5789
  %v6260 = vpack.c.bf16 %v5805, %v5790
  %v6261 = vpack.c.bf16 %v5806, %v5791
  %v6262 = vpack.c.bf16 %v5807, %v5792
  %v6263 = vpack.c.bf16 %v5808, %v5793
  %v6264 = vpack.c.bf16 %v5809, %v5794
  %v6265 = vpack.c.bf16 %v5810, %v5795
  %v6266 = vpack.c.bf16 %v5811, %v5796
  %v6267 = vpack.c.bf16 %v5812, %v5797
  %v6268 = vpack.c.bf16 %v5813, %v5798
  %v6269 = vpack.c.bf16 %v5814, %v5799
  %v6270 = vpack.c.bf16 %v5815, %v5800
  %v6271 = vpack.c.bf16 %v5816, %v5801
  %v6272 = vpack.c.bf16 %v5817, %v5802
  %v6273 = vpack.c.bf16 %v5818, %v5803
  %v6274 = vpack.c.bf16 %v5534, %v5502
  %v6275 = vpack.c.bf16 %v5834, %v5819
  %v6276 = vpack.c.bf16 %v5835, %v5820
  %v6277 = vpack.c.bf16 %v5836, %v5821
  %v6278 = vpack.c.bf16 %v5837, %v5822
  %v6279 = vpack.c.bf16 %v5838, %v5823
  %v6280 = vpack.c.bf16 %v5839, %v5824
  %v6281 = vpack.c.bf16 %v5840, %v5825
  %v6282 = vpack.c.bf16 %v5841, %v5826
  %v6283 = vpack.c.bf16 %v5842, %v5827
  %v6284 = vpack.c.bf16 %v5843, %v5828
  %v6285 = vpack.c.bf16 %v5844, %v5829
  %v6286 = vpack.c.bf16 %v5845, %v5830
  %v6287 = vpack.c.bf16 %v5846, %v5831
  %v6288 = vpack.c.bf16 %v5847, %v5832
  %v6289 = vpack.c.bf16 %v5848, %v5833
  %v6290 = vpack.c.bf16 %v5598, %v5566
  %v6291 = vpack.c.bf16 %v5864, %v5849
  %v6292 = vpack.c.bf16 %v5865, %v5850
  %v6293 = vpack.c.bf16 %v5866, %v5851
  %v6294 = vpack.c.bf16 %v5867, %v5852
  %v6295 = vpack.c.bf16 %v5868, %v5853
  %v6296 = vpack.c.bf16 %v5869, %v5854
  %v6297 = vpack.c.bf16 %v5870, %v5855
  %v6298 = vpack.c.bf16 %v5871, %v5856
  %v6299 = vpack.c.bf16 %v5872, %v5857
  %v6300 = vpack.c.bf16 %v5873, %v5858
  %v6301 = vpack.c.bf16 %v5874, %v5859
  %v6302 = vpack.c.bf16 %v5875, %v5860
  %v6303 = vpack.c.bf16 %v5876, %v5861
  %v6304 = vpack.c.bf16 %v5877, %v5862
  %v6305 = vpack.c.bf16 %v5878, %v5863
  %v6306 = vpack.c.bf16 %v5662, %v5630
  %v6307 = vpack.c.bf16 %v5894, %v5879
  %v6308 = vpack.c.bf16 %v5895, %v5880
  %v6309 = vpack.c.bf16 %v5896, %v5881
  %v6310 = vpack.c.bf16 %v5897, %v5882
  %v6311 = vpack.c.bf16 %v5898, %v5883
  %v6312 = vpack.c.bf16 %v5899, %v5884
  %v6313 = vpack.c.bf16 %v5900, %v5885
  %v6314 = vpack.c.bf16 %v5901, %v5886
  %v6315 = vpack.c.bf16 %v5902, %v5887
  %v6316 = vpack.c.bf16 %v5903, %v5888
  %v6317 = vpack.c.bf16 %v5904, %v5889
  %v6318 = vpack.c.bf16 %v5905, %v5890
  %v6319 = vpack.c.bf16 %v5906, %v5891
  %v6320 = vpack.c.bf16 %v5907, %v5892
  %v6321 = vpack.c.bf16 %v5908, %v5893
  %v6322 = vpack.c.bf16 %v5726, %v5694
  %v6323 = vpack.c.bf16 %v5924, %v5909
  %v6324 = vpack.c.bf16 %v5925, %v5910
  %v6325 = vpack.c.bf16 %v5926, %v5911
  %v6326 = vpack.c.bf16 %v5927, %v5912
  %v6327 = vpack.c.bf16 %v5928, %v5913
  %v6328 = vpack.c.bf16 %v5929, %v5914
  %v6329 = vpack.c.bf16 %v5930, %v5915
  %v6330 = vpack.c.bf16 %v5931, %v5916
  %v6331 = vpack.c.bf16 %v5932, %v5917
  %v6332 = vpack.c.bf16 %v5933, %v5918
  %v6333 = vpack.c.bf16 %v5934, %v5919
  %v6334 = vpack.c.bf16 %v5935, %v5920
  %v6335 = vpack.c.bf16 %v5936, %v5921
  %v6336 = vpack.c.bf16 %v5937, %v5922
  %v6337 = vpack.c.bf16 %v5938, %v5923
  %v6338 = vpack.c.bf16 %v5758, %v5758
  %v6339 = vpack.c.bf16 %v5939, %v5939
  %v6340 = vpack.c.bf16 %v5940, %v5940
  %v6341 = vpack.c.bf16 %v5941, %v5941
  %v6342 = vpack.c.bf16 %v5942, %v5942
  %v6343 = vpack.c.bf16 %v5943, %v5943
  %v6344 = vpack.c.bf16 %v5944, %v5944
  %v6345 = vpack.c.bf16 %v5945, %v5945
  %v6346 = vpack.c.bf16 %v5946, %v5946
  %v6347 = vpack.c.bf16 %v5947, %v5947
  %v6348 = vpack.c.bf16 %v5948, %v5948
  %v6349 = vpack.c.bf16 %v5949, %v5949
  %v6350 = vpack.c.bf16 %v5950, %v5950
  %v6351 = vpack.c.bf16 %v5951, %v5951
  %v6352 = vpack.c.bf16 %v5952, %v5952
  %v6353 = vpack.c.bf16 %v5953, %v5953
  %v6354 = vld [vmem:[%s2] sm:$0xff]
  %v6356 = vunpack.c.l.b16 %v6354
  %v6357 = vunpack.c.h.b16 %v6354
  %v6358 = vpack.c.b16 %v6356, %v6356
  %v6359 = vpack.c.b16 %v6357, %v6357
  %6585 = vrot.lane.b32.xlu0 %v6130, 111
  %v6586 = vpop.permute.xlu0 %6585
  %6587 = vrot.lane.b32.xlu0 %v6131, 111
  %v6588 = vpop.permute.xlu0 %6587
  %6589 = vrot.lane.b32.xlu0 %v6132, 111
  %v6590 = vpop.permute.xlu0 %6589
  %6591 = vrot.lane.b32.xlu0 %v6133, 111
  %v6592 = vpop.permute.xlu0 %6591
  %6593 = vrot.lane.b32.xlu0 %v6134, 111
  %v6594 = vpop.permute.xlu0 %6593
  %6595 = vrot.lane.b32.xlu0 %v6135, 111
  %v6596 = vpop.permute.xlu0 %6595
  %6597 = vrot.lane.b32.xlu0 %v6136, 111
  %v6598 = vpop.permute.xlu0 %6597
  %6599 = vrot.lane.b32.xlu0 %v6137, 111
  %v6600 = vpop.permute.xlu0 %6599
  %6601 = vrot.lane.b32.xlu0 %v6138, 111
  %v6602 = vpop.permute.xlu0 %6601
  %6603 = vrot.lane.b32.xlu0 %v6139, 111
  %v6604 = vpop.permute.xlu0 %6603
  %6605 = vrot.lane.b32.xlu0 %v6140, 111
  %v6606 = vpop.permute.xlu0 %6605
  %6607 = vrot.lane.b32.xlu0 %v6141, 111
  %v6608 = vpop.permute.xlu0 %6607
  %6609 = vrot.lane.b32.xlu0 %v6142, 111
  %v6610 = vpop.permute.xlu0 %6609
  %6611 = vrot.lane.b32.xlu0 %v6143, 111
  %v6612 = vpop.permute.xlu0 %6611
  %6613 = vrot.lane.b32.xlu0 %v6144, 111
  %v6614 = vpop.permute.xlu0 %6613
  %6615 = vrot.lane.b32.xlu0 %v6145, 111
  %v6616 = vpop.permute.xlu0 %6615
  %6617 = vrot.lane.b32.xlu0 %v6146, 111
  %v6618 = vpop.permute.xlu0 %6617
  %6619 = vrot.lane.b32.xlu0 %v6147, 111
  %v6620 = vpop.permute.xlu0 %6619
  %6621 = vrot.lane.b32.xlu0 %v6148, 111
  %v6622 = vpop.permute.xlu0 %6621
  %6623 = vrot.lane.b32.xlu0 %v6149, 111
  %v6624 = vpop.permute.xlu0 %6623
  %6625 = vrot.lane.b32.xlu0 %v6150, 111
  %v6626 = vpop.permute.xlu0 %6625
  %6627 = vrot.lane.b32.xlu0 %v6151, 111
  %v6628 = vpop.permute.xlu0 %6627
  %6629 = vrot.lane.b32.xlu0 %v6152, 111
  %v6630 = vpop.permute.xlu0 %6629
  %6631 = vrot.lane.b32.xlu0 %v6153, 111
  %v6632 = vpop.permute.xlu0 %6631
  %6633 = vrot.lane.b32.xlu0 %v6154, 111
  %v6634 = vpop.permute.xlu0 %6633
  %6635 = vrot.lane.b32.xlu0 %v6155, 111
  %v6636 = vpop.permute.xlu0 %6635
  %6637 = vrot.lane.b32.xlu0 %v6156, 111
  %v6638 = vpop.permute.xlu0 %6637
  %6639 = vrot.lane.b32.xlu0 %v6157, 111
  %v6640 = vpop.permute.xlu0 %6639
  %6641 = vrot.lane.b32.xlu0 %v6158, 111
  %v6642 = vpop.permute.xlu0 %6641
  %6643 = vrot.lane.b32.xlu0 %v6159, 111
  %v6644 = vpop.permute.xlu0 %6643
  %6645 = vrot.lane.b32.xlu0 %v6160, 111
  %v6646 = vpop.permute.xlu0 %6645
  %6647 = vrot.lane.b32.xlu0 %v6161, 111
  %v6648 = vpop.permute.xlu0 %6647
  %6649 = vrot.lane.b32.xlu0 %v6162, 111
  %v6650 = vpop.permute.xlu0 %6649
  %6651 = vrot.lane.b32.xlu0 %v6163, 111
  %v6652 = vpop.permute.xlu0 %6651
  %6653 = vrot.lane.b32.xlu0 %v6164, 111
  %v6654 = vpop.permute.xlu0 %6653
  %6655 = vrot.lane.b32.xlu0 %v6165, 111
  %v6656 = vpop.permute.xlu0 %6655
  %6657 = vrot.lane.b32.xlu0 %v6166, 111
  %v6658 = vpop.permute.xlu0 %6657
  %6659 = vrot.lane.b32.xlu0 %v6167, 111
  %v6660 = vpop.permute.xlu0 %6659
  %6661 = vrot.lane.b32.xlu0 %v6168, 111
  %v6662 = vpop.permute.xlu0 %6661
  %6663 = vrot.lane.b32.xlu0 %v6169, 111
  %v6664 = vpop.permute.xlu0 %6663
  %6665 = vrot.lane.b32.xlu0 %v6170, 111
  %v6666 = vpop.permute.xlu0 %6665
  %6667 = vrot.lane.b32.xlu0 %v6171, 111
  %v6668 = vpop.permute.xlu0 %6667
  %6669 = vrot.lane.b32.xlu0 %v6172, 111
  %v6670 = vpop.permute.xlu0 %6669
  %6671 = vrot.lane.b32.xlu0 %v6173, 111
  %v6672 = vpop.permute.xlu0 %6671
  %6673 = vrot.lane.b32.xlu0 %v6174, 111
  %v6674 = vpop.permute.xlu0 %6673
  %6675 = vrot.lane.b32.xlu0 %v6175, 111
  %v6676 = vpop.permute.xlu0 %6675
  %6677 = vrot.lane.b32.xlu0 %v6176, 111
  %v6678 = vpop.permute.xlu0 %6677
  %6679 = vrot.lane.b32.xlu0 %v6177, 111
  %v6680 = vpop.permute.xlu0 %6679
  %6681 = vrot.lane.b32.xlu0 %v6178, 111
  %v6682 = vpop.permute.xlu0 %6681
  %6683 = vrot.lane.b32.xlu0 %v6179, 111
  %v6684 = vpop.permute.xlu0 %6683
  %6685 = vrot.lane.b32.xlu0 %v6180, 111
  %v6686 = vpop.permute.xlu0 %6685
  %6687 = vrot.lane.b32.xlu0 %v6181, 111
  %v6688 = vpop.permute.xlu0 %6687
  %6689 = vrot.lane.b32.xlu0 %v6182, 111
  %v6690 = vpop.permute.xlu0 %6689
  %6691 = vrot.lane.b32.xlu0 %v6183, 111
  %v6692 = vpop.permute.xlu0 %6691
  %6693 = vrot.lane.b32.xlu0 %v6184, 111
  %v6694 = vpop.permute.xlu0 %6693
  %6695 = vrot.lane.b32.xlu0 %v6185, 111
  %v6696 = vpop.permute.xlu0 %6695
  %6697 = vrot.lane.b32.xlu0 %v6186, 111
  %v6698 = vpop.permute.xlu0 %6697
  %6699 = vrot.lane.b32.xlu0 %v6187, 111
  %v6700 = vpop.permute.xlu0 %6699
  %6701 = vrot.lane.b32.xlu0 %v6188, 111
  %v6702 = vpop.permute.xlu0 %6701
  %6703 = vrot.lane.b32.xlu0 %v6189, 111
  %v6704 = vpop.permute.xlu0 %6703
  %6705 = vrot.lane.b32.xlu0 %v6190, 111
  %v6706 = vpop.permute.xlu0 %6705
  %6707 = vrot.lane.b32.xlu0 %v6191, 111
  %v6708 = vpop.permute.xlu0 %6707
  %6709 = vrot.lane.b32.xlu0 %v6192, 111
  %v6710 = vpop.permute.xlu0 %6709
  %6711 = vrot.lane.b32.xlu0 %v6193, 111
  %v6712 = vpop.permute.xlu0 %6711
  %6713 = vrot.lane.b32.xlu0 %v6194, 111
  %v6714 = vpop.permute.xlu0 %6713
  %6715 = vrot.lane.b32.xlu0 %v6195, 111
  %v6716 = vpop.permute.xlu0 %6715
  %6717 = vrot.lane.b32.xlu0 %v6196, 111
  %v6718 = vpop.permute.xlu0 %6717
  %6719 = vrot.lane.b32.xlu0 %v6197, 111
  %v6720 = vpop.permute.xlu0 %6719
  %6721 = vrot.lane.b32.xlu0 %v6198, 111
  %v6722 = vpop.permute.xlu0 %6721
  %6723 = vrot.lane.b32.xlu0 %v6199, 111
  %v6724 = vpop.permute.xlu0 %6723
  %6725 = vrot.lane.b32.xlu0 %v6200, 111
  %v6726 = vpop.permute.xlu0 %6725
  %6727 = vrot.lane.b32.xlu0 %v6201, 111
  %v6728 = vpop.permute.xlu0 %6727
  %6729 = vrot.lane.b32.xlu0 %v6202, 111
  %v6730 = vpop.permute.xlu0 %6729
  %6731 = vrot.lane.b32.xlu0 %v6203, 111
  %v6732 = vpop.permute.xlu0 %6731
  %6733 = vrot.lane.b32.xlu0 %v6204, 111
  %v6734 = vpop.permute.xlu0 %6733
  %6735 = vrot.lane.b32.xlu0 %v6205, 111
  %v6736 = vpop.permute.xlu0 %6735
  %6737 = vrot.lane.b32.xlu0 %v6206, 111
  %v6738 = vpop.permute.xlu0 %6737
  %6739 = vrot.lane.b32.xlu0 %v6207, 111
  %v6740 = vpop.permute.xlu0 %6739
  %6741 = vrot.lane.b32.xlu0 %v6208, 111
  %v6742 = vpop.permute.xlu0 %6741
  %6743 = vrot.lane.b32.xlu0 %v6209, 111
  %v6744 = vpop.permute.xlu0 %6743
  %6745 = vrot.lane.b32.xlu0 %v6210, 111
  %v6746 = vpop.permute.xlu0 %6745
  %6747 = vrot.lane.b32.xlu0 %v6211, 111
  %v6748 = vpop.permute.xlu0 %6747
  %6749 = vrot.lane.b32.xlu0 %v6212, 111
  %v6750 = vpop.permute.xlu0 %6749
  %6751 = vrot.lane.b32.xlu0 %v6213, 111
  %v6752 = vpop.permute.xlu0 %6751
  %6753 = vrot.lane.b32.xlu0 %v6214, 111
  %v6754 = vpop.permute.xlu0 %6753
  %6755 = vrot.lane.b32.xlu0 %v6215, 111
  %v6756 = vpop.permute.xlu0 %6755
  %6757 = vrot.lane.b32.xlu0 %v6216, 111
  %v6758 = vpop.permute.xlu0 %6757
  %6759 = vrot.lane.b32.xlu0 %v6217, 111
  %v6760 = vpop.permute.xlu0 %6759
  %6761 = vrot.lane.b32.xlu0 %v6218, 111
  %v6762 = vpop.permute.xlu0 %6761
  %6763 = vrot.lane.b32.xlu0 %v6219, 111
  %v6764 = vpop.permute.xlu0 %6763
  %6765 = vrot.lane.b32.xlu0 %v6220, 111
  %v6766 = vpop.permute.xlu0 %6765
  %6767 = vrot.lane.b32.xlu0 %v6221, 111
  %v6768 = vpop.permute.xlu0 %6767
  %6769 = vrot.lane.b32.xlu0 %v6222, 111
  %v6770 = vpop.permute.xlu0 %6769
  %6771 = vrot.lane.b32.xlu0 %v6223, 111
  %v6772 = vpop.permute.xlu0 %6771
  %6773 = vrot.lane.b32.xlu0 %v6224, 111
  %v6774 = vpop.permute.xlu0 %6773
  %6775 = vrot.lane.b32.xlu0 %v6225, 111
  %v6776 = vpop.permute.xlu0 %6775
  %6777 = vrot.lane.b32.xlu0 %v6226, 111
  %v6778 = vpop.permute.xlu0 %6777
  %6779 = vrot.lane.b32.xlu0 %v6227, 111
  %v6780 = vpop.permute.xlu0 %6779
  %6781 = vrot.lane.b32.xlu0 %v6228, 111
  %v6782 = vpop.permute.xlu0 %6781
  %6783 = vrot.lane.b32.xlu0 %v6229, 111
  %v6784 = vpop.permute.xlu0 %6783
  %6785 = vrot.lane.b32.xlu0 %v6230, 111
  %v6786 = vpop.permute.xlu0 %6785
  %6787 = vrot.lane.b32.xlu0 %v6231, 111
  %v6788 = vpop.permute.xlu0 %6787
  %6789 = vrot.lane.b32.xlu0 %v6232, 111
  %v6790 = vpop.permute.xlu0 %6789
  %6791 = vrot.lane.b32.xlu0 %v6233, 111
  %v6792 = vpop.permute.xlu0 %6791
  %6793 = vrot.lane.b32.xlu0 %v6234, 111
  %v6794 = vpop.permute.xlu0 %6793
  %6795 = vrot.lane.b32.xlu0 %v6235, 111
  %v6796 = vpop.permute.xlu0 %6795
  %6797 = vrot.lane.b32.xlu0 %v6236, 111
  %v6798 = vpop.permute.xlu0 %6797
  %6799 = vrot.lane.b32.xlu0 %v6237, 111
  %v6800 = vpop.permute.xlu0 %6799
  %6801 = vrot.lane.b32.xlu0 %v6238, 111
  %v6802 = vpop.permute.xlu0 %6801
  %6803 = vrot.lane.b32.xlu0 %v6239, 111
  %v6804 = vpop.permute.xlu0 %6803
  %6805 = vrot.lane.b32.xlu0 %v6240, 111
  %v6806 = vpop.permute.xlu0 %6805
  %6807 = vrot.lane.b32.xlu0 %v6241, 111
  %v6808 = vpop.permute.xlu0 %6807
  %6809 = vrot.lane.b32.xlu0 %v6242, 111
  %v6810 = vpop.permute.xlu0 %6809
  %6811 = vrot.lane.b32.xlu0 %v6243, 111
  %v6812 = vpop.permute.xlu0 %6811
  %6813 = vrot.lane.b32.xlu0 %v6244, 111
  %v6814 = vpop.permute.xlu0 %6813
  %6815 = vrot.lane.b32.xlu0 %v6245, 111
  %v6816 = vpop.permute.xlu0 %6815
  %6817 = vrot.lane.b32.xlu0 %v6246, 111
  %v6818 = vpop.permute.xlu0 %6817
  %6819 = vrot.lane.b32.xlu0 %v6247, 111
  %v6820 = vpop.permute.xlu0 %6819
  %6821 = vrot.lane.b32.xlu0 %v6248, 111
  %v6822 = vpop.permute.xlu0 %6821
  %6823 = vrot.lane.b32.xlu0 %v6249, 111
  %v6824 = vpop.permute.xlu0 %6823
  %6825 = vrot.lane.b32.xlu0 %v6250, 111
  %v6826 = vpop.permute.xlu0 %6825
  %6827 = vrot.lane.b32.xlu0 %v6251, 111
  %v6828 = vpop.permute.xlu0 %6827
  %6829 = vrot.lane.b32.xlu0 %v6252, 111
  %v6830 = vpop.permute.xlu0 %6829
  %6831 = vrot.lane.b32.xlu0 %v6253, 111
  %v6832 = vpop.permute.xlu0 %6831
  %6833 = vrot.lane.b32.xlu0 %v6254, 111
  %v6834 = vpop.permute.xlu0 %6833
  %6835 = vrot.lane.b32.xlu0 %v6255, 111
  %v6836 = vpop.permute.xlu0 %6835
  %6837 = vrot.lane.b32.xlu0 %v6256, 111
  %v6838 = vpop.permute.xlu0 %6837
  %6839 = vrot.lane.b32.xlu0 %v6257, 111
  %v6840 = vpop.permute.xlu0 %6839
  %6841 = vrot.lane.b32.xlu0 %v6258, 111
  %v6842 = vpop.permute.xlu0 %6841
  %6843 = vrot.lane.b32.xlu0 %v6259, 111
  %v6844 = vpop.permute.xlu0 %6843
  %6845 = vrot.lane.b32.xlu0 %v6260, 111
  %v6846 = vpop.permute.xlu0 %6845
  %6847 = vrot.lane.b32.xlu0 %v6261, 111
  %v6848 = vpop.permute.xlu0 %6847
  %6849 = vrot.lane.b32.xlu0 %v6262, 111
  %v6850 = vpop.permute.xlu0 %6849
  %6851 = vrot.lane.b32.xlu0 %v6263, 111
  %v6852 = vpop.permute.xlu0 %6851
  %6853 = vrot.lane.b32.xlu0 %v6264, 111
  %v6854 = vpop.permute.xlu0 %6853
  %6855 = vrot.lane.b32.xlu0 %v6265, 111
  %v6856 = vpop.permute.xlu0 %6855
  %6857 = vrot.lane.b32.xlu0 %v6266, 111
  %v6858 = vpop.permute.xlu0 %6857
  %6859 = vrot.lane.b32.xlu0 %v6267, 111
  %v6860 = vpop.permute.xlu0 %6859
  %6861 = vrot.lane.b32.xlu0 %v6268, 111
  %v6862 = vpop.permute.xlu0 %6861
  %6863 = vrot.lane.b32.xlu0 %v6269, 111
  %v6864 = vpop.permute.xlu0 %6863
  %6865 = vrot.lane.b32.xlu0 %v6270, 111
  %v6866 = vpop.permute.xlu0 %6865
  %6867 = vrot.lane.b32.xlu0 %v6271, 111
  %v6868 = vpop.permute.xlu0 %6867
  %6869 = vrot.lane.b32.xlu0 %v6272, 111
  %v6870 = vpop.permute.xlu0 %6869
  %6871 = vrot.lane.b32.xlu0 %v6273, 111
  %v6872 = vpop.permute.xlu0 %6871
  %6873 = vrot.lane.b32.xlu0 %v6274, 111
  %v6874 = vpop.permute.xlu0 %6873
  %6875 = vrot.lane.b32.xlu0 %v6275, 111
  %v6876 = vpop.permute.xlu0 %6875
  %6877 = vrot.lane.b32.xlu0 %v6276, 111
  %v6878 = vpop.permute.xlu0 %6877
  %6879 = vrot.lane.b32.xlu0 %v6277, 111
  %v6880 = vpop.permute.xlu0 %6879
  %6881 = vrot.lane.b32.xlu0 %v6278, 111
  %v6882 = vpop.permute.xlu0 %6881
  %6883 = vrot.lane.b32.xlu0 %v6279, 111
  %v6884 = vpop.permute.xlu0 %6883
  %6885 = vrot.lane.b32.xlu0 %v6280, 111
  %v6886 = vpop.permute.xlu0 %6885
  %6887 = vrot.lane.b32.xlu0 %v6281, 111
  %v6888 = vpop.permute.xlu0 %6887
  %6889 = vrot.lane.b32.xlu0 %v6282, 111
  %v6890 = vpop.permute.xlu0 %6889
  %6891 = vrot.lane.b32.xlu0 %v6283, 111
  %v6892 = vpop.permute.xlu0 %6891
  %6893 = vrot.lane.b32.xlu0 %v6284, 111
  %v6894 = vpop.permute.xlu0 %6893
  %6895 = vrot.lane.b32.xlu0 %v6285, 111
  %v6896 = vpop.permute.xlu0 %6895
  %6897 = vrot.lane.b32.xlu0 %v6286, 111
  %v6898 = vpop.permute.xlu0 %6897
  %6899 = vrot.lane.b32.xlu0 %v6287, 111
  %v6900 = vpop.permute.xlu0 %6899
  %6901 = vrot.lane.b32.xlu0 %v6288, 111
  %v6902 = vpop.permute.xlu0 %6901
  %6903 = vrot.lane.b32.xlu0 %v6289, 111
  %v6904 = vpop.permute.xlu0 %6903
  %6905 = vrot.lane.b32.xlu0 %v6290, 111
  %v6906 = vpop.permute.xlu0 %6905
  %6907 = vrot.lane.b32.xlu0 %v6291, 111
  %v6908 = vpop.permute.xlu0 %6907
  %6909 = vrot.lane.b32.xlu0 %v6292, 111
  %v6910 = vpop.permute.xlu0 %6909
  %6911 = vrot.lane.b32.xlu0 %v6293, 111
  %v6912 = vpop.permute.xlu0 %6911
  %6913 = vrot.lane.b32.xlu0 %v6294, 111
  %v6914 = vpop.permute.xlu0 %6913
  %6915 = vrot.lane.b32.xlu0 %v6295, 111
  %v6916 = vpop.permute.xlu0 %6915
  %6917 = vrot.lane.b32.xlu0 %v6296, 111
  %v6918 = vpop.permute.xlu0 %6917
  %6919 = vrot.lane.b32.xlu0 %v6297, 111
  %v6920 = vpop.permute.xlu0 %6919
  %6921 = vrot.lane.b32.xlu0 %v6298, 111
  %v6922 = vpop.permute.xlu0 %6921
  %6923 = vrot.lane.b32.xlu0 %v6299, 111
  %v6924 = vpop.permute.xlu0 %6923
  %6925 = vrot.lane.b32.xlu0 %v6300, 111
  %v6926 = vpop.permute.xlu0 %6925
  %6927 = vrot.lane.b32.xlu0 %v6301, 111
  %v6928 = vpop.permute.xlu0 %6927
  %6929 = vrot.lane.b32.xlu0 %v6302, 111
  %v6930 = vpop.permute.xlu0 %6929
  %6931 = vrot.lane.b32.xlu0 %v6303, 111
  %v6932 = vpop.permute.xlu0 %6931
  %6933 = vrot.lane.b32.xlu0 %v6304, 111
  %v6934 = vpop.permute.xlu0 %6933
  %6935 = vrot.lane.b32.xlu0 %v6305, 111
  %v6936 = vpop.permute.xlu0 %6935
  %6937 = vrot.lane.b32.xlu0 %v6306, 111
  %v6938 = vpop.permute.xlu0 %6937
  %6939 = vrot.lane.b32.xlu0 %v6307, 111
  %v6940 = vpop.permute.xlu0 %6939
  %6941 = vrot.lane.b32.xlu0 %v6308, 111
  %v6942 = vpop.permute.xlu0 %6941
  %6943 = vrot.lane.b32.xlu0 %v6309, 111
  %v6944 = vpop.permute.xlu0 %6943
  %6945 = vrot.lane.b32.xlu0 %v6310, 111
  %v6946 = vpop.permute.xlu0 %6945
  %6947 = vrot.lane.b32.xlu0 %v6311, 111
  %v6948 = vpop.permute.xlu0 %6947
  %6949 = vrot.lane.b32.xlu0 %v6312, 111
  %v6950 = vpop.permute.xlu0 %6949
  %6951 = vrot.lane.b32.xlu0 %v6313, 111
  %v6952 = vpop.permute.xlu0 %6951
  %6953 = vrot.lane.b32.xlu0 %v6314, 111
  %v6954 = vpop.permute.xlu0 %6953
  %6955 = vrot.lane.b32.xlu0 %v6315, 111
  %v6956 = vpop.permute.xlu0 %6955
  %6957 = vrot.lane.b32.xlu0 %v6316, 111
  %v6958 = vpop.permute.xlu0 %6957
  %6959 = vrot.lane.b32.xlu0 %v6317, 111
  %v6960 = vpop.permute.xlu0 %6959
  %6961 = vrot.lane.b32.xlu0 %v6318, 111
  %v6962 = vpop.permute.xlu0 %6961
  %6963 = vrot.lane.b32.xlu0 %v6319, 111
  %v6964 = vpop.permute.xlu0 %6963
  %6965 = vrot.lane.b32.xlu0 %v6320, 111
  %v6966 = vpop.permute.xlu0 %6965
  %6967 = vrot.lane.b32.xlu0 %v6321, 111
  %v6968 = vpop.permute.xlu0 %6967
  %6969 = vrot.lane.b32.xlu0 %v6322, 111
  %v6970 = vpop.permute.xlu0 %6969
  %6971 = vrot.lane.b32.xlu0 %v6323, 111
  %v6972 = vpop.permute.xlu0 %6971
  %6973 = vrot.lane.b32.xlu0 %v6324, 111
  %v6974 = vpop.permute.xlu0 %6973
  %6975 = vrot.lane.b32.xlu0 %v6325, 111
  %v6976 = vpop.permute.xlu0 %6975
  %6977 = vrot.lane.b32.xlu0 %v6326, 111
  %v6978 = vpop.permute.xlu0 %6977
  %6979 = vrot.lane.b32.xlu0 %v6327, 111
  %v6980 = vpop.permute.xlu0 %6979
  %6981 = vrot.lane.b32.xlu0 %v6328, 111
  %v6982 = vpop.permute.xlu0 %6981
  %6983 = vrot.lane.b32.xlu0 %v6329, 111
  %v6984 = vpop.permute.xlu0 %6983
  %6985 = vrot.lane.b32.xlu0 %v6330, 111
  %v6986 = vpop.permute.xlu0 %6985
  %6987 = vrot.lane.b32.xlu0 %v6331, 111
  %v6988 = vpop.permute.xlu0 %6987
  %6989 = vrot.lane.b32.xlu0 %v6332, 111
  %v6990 = vpop.permute.xlu0 %6989
  %6991 = vrot.lane.b32.xlu0 %v6333, 111
  %v6992 = vpop.permute.xlu0 %6991
  %6993 = vrot.lane.b32.xlu0 %v6334, 111
  %v6994 = vpop.permute.xlu0 %6993
  %6995 = vrot.lane.b32.xlu0 %v6335, 111
  %v6996 = vpop.permute.xlu0 %6995
  %6997 = vrot.lane.b32.xlu0 %v6336, 111
  %v6998 = vpop.permute.xlu0 %6997
  %6999 = vrot.lane.b32.xlu0 %v6337, 111
  %v7000 = vpop.permute.xlu0 %6999
  %7001 = vrot.lane.b32.xlu0 %v6338, 111
  %v7002 = vpop.permute.xlu0 %7001
  %7003 = vrot.lane.b32.xlu0 %v6339, 111
  %v7004 = vpop.permute.xlu0 %7003
  %7005 = vrot.lane.b32.xlu0 %v6340, 111
  %v7006 = vpop.permute.xlu0 %7005
  %7007 = vrot.lane.b32.xlu0 %v6341, 111
  %v7008 = vpop.permute.xlu0 %7007
  %7009 = vrot.lane.b32.xlu0 %v6342, 111
  %v7010 = vpop.permute.xlu0 %7009
  %7011 = vrot.lane.b32.xlu0 %v6343, 111
  %v7012 = vpop.permute.xlu0 %7011
  %7013 = vrot.lane.b32.xlu0 %v6344, 111
  %v7014 = vpop.permute.xlu0 %7013
  %7015 = vrot.lane.b32.xlu0 %v6345, 111
  %v7016 = vpop.permute.xlu0 %7015
  %7017 = vrot.lane.b32.xlu0 %v6346, 111
  %v7018 = vpop.permute.xlu0 %7017
  %7019 = vrot.lane.b32.xlu0 %v6347, 111
  %v7020 = vpop.permute.xlu0 %7019
  %7021 = vrot.lane.b32.xlu0 %v6348, 111
  %v7022 = vpop.permute.xlu0 %7021
  %7023 = vrot.lane.b32.xlu0 %v6349, 111
  %v7024 = vpop.permute.xlu0 %7023
  %7025 = vrot.lane.b32.xlu0 %v6350, 111
  %v7026 = vpop.permute.xlu0 %7025
  %7027 = vrot.lane.b32.xlu0 %v6351, 111
  %v7028 = vpop.permute.xlu0 %7027
  %7029 = vrot.lane.b32.xlu0 %v6352, 111
  %v7030 = vpop.permute.xlu0 %7029
  %7031 = vrot.lane.b32.xlu0 %v6353, 111
  %v7032 = vpop.permute.xlu0 %7031
  %v7033 = vsel %vm2997, %v6586, %v6588
  %v7034 = vsel %vm2997, %v6588, %v6590
  %v7035 = vsel %vm2997, %v6590, %v6592
  %v7036 = vsel %vm2997, %v6592, %v6594
  %v7037 = vsel %vm2997, %v6594, %v6596
  %v7038 = vsel %vm2997, %v6596, %v6598
  %v7039 = vsel %vm2997, %v6598, %v6600
  %v7040 = vsel %vm2997, %v6600, %v6602
  %v7041 = vsel %vm2997, %v6602, %v6604
  %v7042 = vsel %vm2997, %v6604, %v6606
  %v7043 = vsel %vm2997, %v6606, %v6608
  %v7044 = vsel %vm2997, %v6608, %v6610
  %v7045 = vsel %vm2997, %v6610, %v6612
  %v7046 = vsel %vm2997, %v6612, %v6614
  %v7047 = vsel %vm2997, %v6614, %v6616
  %v7048 = vsel %vm2997, %v6618, %v6620
  %v7049 = vsel %vm2997, %v6620, %v6622
  %v7050 = vsel %vm2997, %v6622, %v6624
  %v7051 = vsel %vm2997, %v6624, %v6626
  %v7052 = vsel %vm2997, %v6626, %v6628
  %v7053 = vsel %vm2997, %v6628, %v6630
  %v7054 = vsel %vm2997, %v6630, %v6632
  %v7055 = vsel %vm2997, %v6632, %v6634
  %v7056 = vsel %vm2997, %v6634, %v6636
  %v7057 = vsel %vm2997, %v6636, %v6638
  %v7058 = vsel %vm2997, %v6638, %v6640
  %v7059 = vsel %vm2997, %v6640, %v6642
  %v7060 = vsel %vm2997, %v6642, %v6644
  %v7061 = vsel %vm2997, %v6644, %v6646
  %v7062 = vsel %vm2997, %v6646, %v6648
  %v7063 = vsel %vm2997, %v6650, %v6652
  %v7064 = vsel %vm2997, %v6652, %v6654
  %v7065 = vsel %vm2997, %v6654, %v6656
  %v7066 = vsel %vm2997, %v6656, %v6658
  %v7067 = vsel %vm2997, %v6658, %v6660
  %v7068 = vsel %vm2997, %v6660, %v6662
  %v7069 = vsel %vm2997, %v6662, %v6664
  %v7070 = vsel %vm2997, %v6664, %v6666
  %v7071 = vsel %vm2997, %v6666, %v6668
  %v7072 = vsel %vm2997, %v6668, %v6670
  %v7073 = vsel %vm2997, %v6670, %v6672
  %v7074 = vsel %vm2997, %v6672, %v6674
  %v7075 = vsel %vm2997, %v6674, %v6676
  %v7076 = vsel %vm2997, %v6676, %v6678
  %v7077 = vsel %vm2997, %v6678, %v6680
  %v7078 = vsel %vm2997, %v6682, %v6684
  %v7079 = vsel %vm2997, %v6684, %v6686
  %v7080 = vsel %vm2997, %v6686, %v6688
  %v7081 = vsel %vm2997, %v6688, %v6690
  %v7082 = vsel %vm2997, %v6690, %v6692
  %v7083 = vsel %vm2997, %v6692, %v6694
  %v7084 = vsel %vm2997, %v6694, %v6696
  %v7085 = vsel %vm2997, %v6696, %v6698
  %v7086 = vsel %vm2997, %v6698, %v6700
  %v7087 = vsel %vm2997, %v6700, %v6702
  %v7088 = vsel %vm2997, %v6702, %v6704
  %v7089 = vsel %vm2997, %v6704, %v6706
  %v7090 = vsel %vm2997, %v6706, %v6708
  %v7091 = vsel %vm2997, %v6708, %v6710
  %v7092 = vsel %vm2997, %v6710, %v6712
  %v7093 = vsel %vm2997, %v6714, %v6716
  %v7094 = vsel %vm2997, %v6716, %v6718
  %v7095 = vsel %vm2997, %v6718, %v6720
  %v7096 = vsel %vm2997, %v6720, %v6722
  %v7097 = vsel %vm2997, %v6722, %v6724
  %v7098 = vsel %vm2997, %v6724, %v6726
  %v7099 = vsel %vm2997, %v6726, %v6728
  %v7100 = vsel %vm2997, %v6728, %v6730
  %v7101 = vsel %vm2997, %v6730, %v6732
  %v7102 = vsel %vm2997, %v6732, %v6734
  %v7103 = vsel %vm2997, %v6734, %v6736
  %v7104 = vsel %vm2997, %v6736, %v6738
  %v7105 = vsel %vm2997, %v6738, %v6740
  %v7106 = vsel %vm2997, %v6740, %v6742
  %v7107 = vsel %vm2997, %v6742, %v6744
  %v7108 = vsel %vm2997, %v6746, %v6748
  %v7109 = vsel %vm2997, %v6748, %v6750
  %v7110 = vsel %vm2997, %v6750, %v6752
  %v7111 = vsel %vm2997, %v6752, %v6754
  %v7112 = vsel %vm2997, %v6754, %v6756
  %v7113 = vsel %vm2997, %v6756, %v6758
  %v7114 = vsel %vm2997, %v6758, %v6760
  %v7115 = vsel %vm2997, %v6760, %v6762
  %v7116 = vsel %vm2997, %v6762, %v6764
  %v7117 = vsel %vm2997, %v6764, %v6766
  %v7118 = vsel %vm2997, %v6766, %v6768
  %v7119 = vsel %vm2997, %v6768, %v6770
  %v7120 = vsel %vm2997, %v6770, %v6772
  %v7121 = vsel %vm2997, %v6772, %v6774
  %v7122 = vsel %vm2997, %v6774, %v6776
  %v7123 = vsel %vm2997, %v6778, %v6780
  %v7124 = vsel %vm2997, %v6780, %v6782
  %v7125 = vsel %vm2997, %v6782, %v6784
  %v7126 = vsel %vm2997, %v6784, %v6786
  %v7127 = vsel %vm2997, %v6786, %v6788
  %v7128 = vsel %vm2997, %v6788, %v6790
  %v7129 = vsel %vm2997, %v6790, %v6792
  %v7130 = vsel %vm2997, %v6792, %v6794
  %v7131 = vsel %vm2997, %v6794, %v6796
  %v7132 = vsel %vm2997, %v6796, %v6798
  %v7133 = vsel %vm2997, %v6798, %v6800
  %v7134 = vsel %vm2997, %v6800, %v6802
  %v7135 = vsel %vm2997, %v6802, %v6804
  %v7136 = vsel %vm2997, %v6804, %v6806
  %v7137 = vsel %vm2997, %v6806, %v6808
  %v7138 = vsel %vm2997, %v6810, %v6812
  %v7139 = vsel %vm2997, %v6812, %v6814
  %v7140 = vsel %vm2997, %v6814, %v6816
  %v7141 = vsel %vm2997, %v6816, %v6818
  %v7142 = vsel %vm2997, %v6818, %v6820
  %v7143 = vsel %vm2997, %v6820, %v6822
  %v7144 = vsel %vm2997, %v6822, %v6824
  %v7145 = vsel %vm2997, %v6824, %v6826
  %v7146 = vsel %vm2997, %v6826, %v6828
  %v7147 = vsel %vm2997, %v6828, %v6830
  %v7148 = vsel %vm2997, %v6830, %v6832
  %v7149 = vsel %vm2997, %v6832, %v6834
  %v7150 = vsel %vm2997, %v6834, %v6836
  %v7151 = vsel %vm2997, %v6836, %v6838
  %v7152 = vsel %vm2997, %v6838, %v6840
  %v7153 = vsel %vm2997, %v6842, %v6844
  %v7154 = vsel %vm2997, %v6844, %v6846
  %v7155 = vsel %vm2997, %v6846, %v6848
  %v7156 = vsel %vm2997, %v6848, %v6850
  %v7157 = vsel %vm2997, %v6850, %v6852
  %v7158 = vsel %vm2997, %v6852, %v6854
  %v7159 = vsel %vm2997, %v6854, %v6856
  %v7160 = vsel %vm2997, %v6856, %v6858
  %v7161 = vsel %vm2997, %v6858, %v6860
  %v7162 = vsel %vm2997, %v6860, %v6862
  %v7163 = vsel %vm2997, %v6862, %v6864
  %v7164 = vsel %vm2997, %v6864, %v6866
  %v7165 = vsel %vm2997, %v6866, %v6868
  %v7166 = vsel %vm2997, %v6868, %v6870
  %v7167 = vsel %vm2997, %v6870, %v6872
  %v7168 = vsel %vm2997, %v6874, %v6876
  %v7169 = vsel %vm2997, %v6876, %v6878
  %v7170 = vsel %vm2997, %v6878, %v6880
  %v7171 = vsel %vm2997, %v6880, %v6882
  %v7172 = vsel %vm2997, %v6882, %v6884
  %v7173 = vsel %vm2997, %v6884, %v6886
  %v7174 = vsel %vm2997, %v6886, %v6888
  %v7175 = vsel %vm2997, %v6888, %v6890
  %v7176 = vsel %vm2997, %v6890, %v6892
  %v7177 = vsel %vm2997, %v6892, %v6894
  %v7178 = vsel %vm2997, %v6894, %v6896
  %v7179 = vsel %vm2997, %v6896, %v6898
  %v7180 = vsel %vm2997, %v6898, %v6900
  %v7181 = vsel %vm2997, %v6900, %v6902
  %v7182 = vsel %vm2997, %v6902, %v6904
  %v7183 = vsel %vm2997, %v6906, %v6908
  %v7184 = vsel %vm2997, %v6908, %v6910
  %v7185 = vsel %vm2997, %v6910, %v6912
  %v7186 = vsel %vm2997, %v6912, %v6914
  %v7187 = vsel %vm2997, %v6914, %v6916
  %v7188 = vsel %vm2997, %v6916, %v6918
  %v7189 = vsel %vm2997, %v6918, %v6920
  %v7190 = vsel %vm2997, %v6920, %v6922
  %v7191 = vsel %vm2997, %v6922, %v6924
  %v7192 = vsel %vm2997, %v6924, %v6926
  %v7193 = vsel %vm2997, %v6926, %v6928
  %v7194 = vsel %vm2997, %v6928, %v6930
  %v7195 = vsel %vm2997, %v6930, %v6932
  %v7196 = vsel %vm2997, %v6932, %v6934
  %v7197 = vsel %vm2997, %v6934, %v6936
  %v7198 = vsel %vm2997, %v6938, %v6940
  %v7199 = vsel %vm2997, %v6940, %v6942
  %v7200 = vsel %vm2997, %v6942, %v6944
  %v7201 = vsel %vm2997, %v6944, %v6946
  %v7202 = vsel %vm2997, %v6946, %v6948
  %v7203 = vsel %vm2997, %v6948, %v6950
  %v7204 = vsel %vm2997, %v6950, %v6952
  %v7205 = vsel %vm2997, %v6952, %v6954
  %v7206 = vsel %vm2997, %v6954, %v6956
  %v7207 = vsel %vm2997, %v6956, %v6958
  %v7208 = vsel %vm2997, %v6958, %v6960
  %v7209 = vsel %vm2997, %v6960, %v6962
  %v7210 = vsel %vm2997, %v6962, %v6964
  %v7211 = vsel %vm2997, %v6964, %v6966
  %v7212 = vsel %vm2997, %v6966, %v6968
  %v7213 = vsel %vm2997, %v6970, %v6972
  %v7214 = vsel %vm2997, %v6972, %v6974
  %v7215 = vsel %vm2997, %v6974, %v6976
  %v7216 = vsel %vm2997, %v6976, %v6978
  %v7217 = vsel %vm2997, %v6978, %v6980
  %v7218 = vsel %vm2997, %v6980, %v6982
  %v7219 = vsel %vm2997, %v6982, %v6984
  %v7220 = vsel %vm2997, %v6984, %v6986
  %v7221 = vsel %vm2997, %v6986, %v6988
  %v7222 = vsel %vm2997, %v6988, %v6990
  %v7223 = vsel %vm2997, %v6990, %v6992
  %v7224 = vsel %vm2997, %v6992, %v6994
  %v7225 = vsel %vm2997, %v6994, %v6996
  %v7226 = vsel %vm2997, %v6996, %v6998
  %v7227 = vsel %vm2997, %v6998, %v7000
  %v7228 = vsel %vm2997, %v7002, %v7004
  %v7229 = vsel %vm2997, %v7004, %v7006
  %v7230 = vsel %vm2997, %v7006, %v7008
  %v7231 = vsel %vm2997, %v7008, %v7010
  %v7232 = vsel %vm2997, %v7010, %v7012
  %v7233 = vsel %vm2997, %v7012, %v7014
  %v7234 = vsel %vm2997, %v7014, %v7016
  %v7235 = vsel %vm2997, %v7016, %v7018
  %v7236 = vsel %vm2997, %v7018, %v7020
  %v7237 = vsel %vm2997, %v7020, %v7022
  %v7238 = vsel %vm2997, %v7022, %v7024
  %v7239 = vsel %vm2997, %v7024, %v7026
  %v7240 = vsel %vm2997, %v7026, %v7028
  %v7241 = vsel %vm2997, %v7028, %v7030
  %v7242 = vsel %vm2997, %v7030, %v7032
  %v7452 = vsel %vm3416, %v6359, 0
  %v7455 = vsel %vm3420, %v7228, 0
  %v7458 = vsel %vm3420, %v7229, 0
  %v7461 = vsel %vm3420, %v7230, 0
  %v7464 = vsel %vm3420, %v7231, 0
  %v7467 = vsel %vm3420, %v7232, 0
  %v7470 = vsel %vm3420, %v7233, 0
  %v7473 = vsel %vm3420, %v7234, 0
  %v7476 = vsel %vm3420, %v7235, 0
  %v7479 = vsel %vm3420, %v7236, 0
  %v7482 = vsel %vm3420, %v7237, 0
  %v7485 = vsel %vm3420, %v7238, 0
  %v7488 = vsel %vm3420, %v7239, 0
  %v7491 = vsel %vm3420, %v7240, 0
  %v7494 = vsel %vm3420, %v7241, 0
  %v7497 = vsel %vm3420, %v7242, 0
  %v7500 = vsel %vm3420, %v7032, 0
  %7502 = vmatprep.subr.bf16.mxu0 %v7139
  %7503 = vmatpush1.bf16.msra.mxu0 %v7138
  %7504 = vmatprep.subr.bf16.mxu0 %v7124
  %7505 = vmatpush1.bf16.msra.mxu0 %v7123
  %7506 = vmatprep.subr.bf16.mxu0 %v7109
  %7507 = vmatpush1.bf16.msra.mxu0 %v7108
  %7508 = vmatprep.subr.bf16.mxu0 %v7094
  %7509 = vmatpush1.bf16.msra.mxu0 %v7093
  %7510 = vmatprep.subr.bf16.mxu0 %v7079
  %7511 = vmatpush1.bf16.msra.mxu0 %v7078
  %7512 = vmatprep.subr.bf16.mxu0 %v7064
  %7513 = vmatpush1.bf16.msra.mxu0 %v7063
  %7514 = vmatprep.subr.bf16.mxu0 %v7049
  %7515 = vmatpush1.bf16.msra.mxu0 %v7048
  %7516 = vmatprep.subr.bf16.mxu0 %v7034
  %7517 = vmatpush1.bf16.msra.mxu0 %v7033
  %7518 = vmatprep.subr.bf16.mxu0 0
  %7519 = vmatpush2.bf16.msra.mxu0 0
  %7520 = vmatprep.subr.bf16.mxu0 0
  %7521 = vmatpush2.bf16.msra.mxu0 0
  %7522 = vmatprep.subr.bf16.mxu0 %v7458
  %7523 = vmatpush2.bf16.msra.mxu0 %v7455
  %7524 = vmatprep.subr.bf16.mxu0 %v7214
  %7525 = vmatpush2.bf16.msra.mxu0 %v7213
  %7526 = vmatprep.subr.bf16.mxu0 %v7199
  %7527 = vmatpush2.bf16.msra.mxu0 %v7198
  %7528 = vmatprep.subr.bf16.mxu0 %v7184
  %7529 = vmatpush2.bf16.msra.mxu0 %v7183
  %7530 = vmatprep.subr.bf16.mxu0 %v7169
  %7531 = vmatpush2.bf16.msra.mxu0 %v7168
  %7532 = vmatprep.subr.bf16.mxu0 %v7154
  %7533 = vmatpush2.bf16.msra.mxu0 %v7153
  %7534 = vmatprep.mubr.bf16.mxu0 %v7452
  %7535 = vmatmul.mubr.bf16.gmra.mxu0 %v6358
  %v7536 = vpop.f32.mrf.mxu0
  %v7537 = vadd.f32 0.0, %v7536
  %v7538 = vpop.f32.mrf.mxu0
  %v7539 = vadd.f32 0.0, %v7538
  %v7540 = vpop.f32.mrf.mxu0
  %v7541 = vpop.f32.mrf.mxu0
  %7542 = vdwg.mxu0
  %7543 = vmatprep.subr.bf16.mxu0 %v7141
  %7544 = vmatpush1.bf16.msra.mxu0 %v7140
  %7545 = vmatprep.subr.bf16.mxu0 %v7126
  %7546 = vmatpush1.bf16.msra.mxu0 %v7125
  %7547 = vmatprep.subr.bf16.mxu0 %v7111
  %7548 = vmatpush1.bf16.msra.mxu0 %v7110
  %7549 = vmatprep.subr.bf16.mxu0 %v7096
  %7550 = vmatpush1.bf16.msra.mxu0 %v7095
  %7551 = vmatprep.subr.bf16.mxu0 %v7081
  %7552 = vmatpush1.bf16.msra.mxu0 %v7080
  %7553 = vmatprep.subr.bf16.mxu0 %v7066
  %7554 = vmatpush1.bf16.msra.mxu0 %v7065
  %7555 = vmatprep.subr.bf16.mxu0 %v7051
  %7556 = vmatpush1.bf16.msra.mxu0 %v7050
  %7557 = vmatprep.subr.bf16.mxu0 %v7036
  %7558 = vmatpush1.bf16.msra.mxu0 %v7035
  %7559 = vmatprep.subr.bf16.mxu0 0
  %7560 = vmatpush2.bf16.msra.mxu0 0
  %7561 = vmatprep.subr.bf16.mxu0 0
  %7562 = vmatpush2.bf16.msra.mxu0 0
  %7563 = vmatprep.subr.bf16.mxu0 %v7464
  %7564 = vmatpush2.bf16.msra.mxu0 %v7461
  %7565 = vmatprep.subr.bf16.mxu0 %v7216
  %7566 = vmatpush2.bf16.msra.mxu0 %v7215
  %7567 = vmatprep.subr.bf16.mxu0 %v7201
  %7568 = vmatpush2.bf16.msra.mxu0 %v7200
  %7569 = vmatprep.subr.bf16.mxu0 %v7186
  %7570 = vmatpush2.bf16.msra.mxu0 %v7185
  %7571 = vmatprep.subr.bf16.mxu0 %v7171
  %7572 = vmatpush2.bf16.msra.mxu0 %v7170
  %7573 = vmatprep.subr.bf16.mxu0 %v7156
  %7574 = vmatpush2.bf16.msra.mxu0 %v7155
  %7575 = vmatprep.mubr.bf16.mxu0 %v7452
  %7576 = vmatmul.mubr.bf16.gmra.mxu0 %v6358
  %v7577 = vpop.f32.mrf.mxu0
  %v7578 = vadd.f32 0.0, %v7577
  %v7579 = vpop.f32.mrf.mxu0
  %v7580 = vadd.f32 0.0, %v7579
  %v7581 = vpop.f32.mrf.mxu0
  %v7582 = vpop.f32.mrf.mxu0
  %7583 = vdwg.mxu0
  %7584 = vmatprep.subr.bf16.mxu0 %v7143
  %7585 = vmatpush1.bf16.msra.mxu0 %v7142
  %7586 = vmatprep.subr.bf16.mxu0 %v7128
  %7587 = vmatpush1.bf16.msra.mxu0 %v7127
  %7588 = vmatprep.subr.bf16.mxu0 %v7113
  %7589 = vmatpush1.bf16.msra.mxu0 %v7112
  %7590 = vmatprep.subr.bf16.mxu0 %v7098
  %7591 = vmatpush1.bf16.msra.mxu0 %v7097
  %7592 = vmatprep.subr.bf16.mxu0 %v7083
  %7593 = vmatpush1.bf16.msra.mxu0 %v7082
  %7594 = vmatprep.subr.bf16.mxu0 %v7068
  %7595 = vmatpush1.bf16.msra.mxu0 %v7067
  %7596 = vmatprep.subr.bf16.mxu0 %v7053
  %7597 = vmatpush1.bf16.msra.mxu0 %v7052
  %7598 = vmatprep.subr.bf16.mxu0 %v7038
  %7599 = vmatpush1.bf16.msra.mxu0 %v7037
  %7600 = vmatprep.subr.bf16.mxu0 0
  %7601 = vmatpush2.bf16.msra.mxu0 0
  %7602 = vmatprep.subr.bf16.mxu0 0
  %7603 = vmatpush2.bf16.msra.mxu0 0
  %7604 = vmatprep.subr.bf16.mxu0 %v7470
  %7605 = vmatpush2.bf16.msra.mxu0 %v7467
  %7606 = vmatprep.subr.bf16.mxu0 %v7218
  %7607 = vmatpush2.bf16.msra.mxu0 %v7217
  %7608 = vmatprep.subr.bf16.mxu0 %v7203
  %7609 = vmatpush2.bf16.msra.mxu0 %v7202
  %7610 = vmatprep.subr.bf16.mxu0 %v7188
  %7611 = vmatpush2.bf16.msra.mxu0 %v7187
  %7612 = vmatprep.subr.bf16.mxu0 %v7173
  %7613 = vmatpush2.bf16.msra.mxu0 %v7172
  %7614 = vmatprep.subr.bf16.mxu0 %v7158
  %7615 = vmatpush2.bf16.msra.mxu0 %v7157
  %7616 = vmatprep.mubr.bf16.mxu0 %v7452
  %7617 = vmatmul.mubr.bf16.gmra.mxu0 %v6358
  %v7618 = vpop.f32.mrf.mxu0
  %v7619 = vadd.f32 0.0, %v7618
  %v7620 = vpop.f32.mrf.mxu0
  %v7621 = vadd.f32 0.0, %v7620
  %v7622 = vpop.f32.mrf.mxu0
  %v7623 = vpop.f32.mrf.mxu0
  %7624 = vdwg.mxu0
  %7625 = vmatprep.subr.bf16.mxu0 %v7145
  %7626 = vmatpush1.bf16.msra.mxu0 %v7144
  %7627 = vmatprep.subr.bf16.mxu0 %v7130
  %7628 = vmatpush1.bf16.msra.mxu0 %v7129
  %7629 = vmatprep.subr.bf16.mxu0 %v7115
  %7630 = vmatpush1.bf16.msra.mxu0 %v7114
  %7631 = vmatprep.subr.bf16.mxu0 %v7100
  %7632 = vmatpush1.bf16.msra.mxu0 %v7099
  %7633 = vmatprep.subr.bf16.mxu0 %v7085
  %7634 = vmatpush1.bf16.msra.mxu0 %v7084
  %7635 = vmatprep.subr.bf16.mxu0 %v7070
  %7636 = vmatpush1.bf16.msra.mxu0 %v7069
  %7637 = vmatprep.subr.bf16.mxu0 %v7055
  %7638 = vmatpush1.bf16.msra.mxu0 %v7054
  %7639 = vmatprep.subr.bf16.mxu0 %v7040
  %7640 = vmatpush1.bf16.msra.mxu0 %v7039
  %7641 = vmatprep.subr.bf16.mxu0 0
  %7642 = vmatpush2.bf16.msra.mxu0 0
  %7643 = vmatprep.subr.bf16.mxu0 0
  %7644 = vmatpush2.bf16.msra.mxu0 0
  %7645 = vmatprep.subr.bf16.mxu0 %v7476
  %7646 = vmatpush2.bf16.msra.mxu0 %v7473
  %7647 = vmatprep.subr.bf16.mxu0 %v7220
  %7648 = vmatpush2.bf16.msra.mxu0 %v7219
  %7649 = vmatprep.subr.bf16.mxu0 %v7205
  %7650 = vmatpush2.bf16.msra.mxu0 %v7204
  %7651 = vmatprep.subr.bf16.mxu0 %v7190
  %7652 = vmatpush2.bf16.msra.mxu0 %v7189
  %7653 = vmatprep.subr.bf16.mxu0 %v7175
  %7654 = vmatpush2.bf16.msra.mxu0 %v7174
  %7655 = vmatprep.subr.bf16.mxu0 %v7160
  %7656 = vmatpush2.bf16.msra.mxu0 %v7159
  %7657 = vmatprep.mubr.bf16.mxu0 %v7452
  %7658 = vmatmul.mubr.bf16.gmra.mxu0 %v6358
  %v7659 = vpop.f32.mrf.mxu0
  %v7660 = vadd.f32 0.0, %v7659
  %v7661 = vpop.f32.mrf.mxu0
  %v7662 = vadd.f32 0.0, %v7661
  %v7663 = vpop.f32.mrf.mxu0
  %v7664 = vpop.f32.mrf.mxu0
  %7665 = vdwg.mxu0
  %7666 = vmatprep.subr.bf16.mxu0 %v7147
  %7667 = vmatpush1.bf16.msra.mxu0 %v7146
  %7668 = vmatprep.subr.bf16.mxu0 %v7132
  %7669 = vmatpush1.bf16.msra.mxu0 %v7131
  %7670 = vmatprep.subr.bf16.mxu0 %v7117
  %7671 = vmatpush1.bf16.msra.mxu0 %v7116
  %7672 = vmatprep.subr.bf16.mxu0 %v7102
  %7673 = vmatpush1.bf16.msra.mxu0 %v7101
  %7674 = vmatprep.subr.bf16.mxu0 %v7087
  %7675 = vmatpush1.bf16.msra.mxu0 %v7086
  %7676 = vmatprep.subr.bf16.mxu0 %v7072
  %7677 = vmatpush1.bf16.msra.mxu0 %v7071
  %7678 = vmatprep.subr.bf16.mxu0 %v7057
  %7679 = vmatpush1.bf16.msra.mxu0 %v7056
  %7680 = vmatprep.subr.bf16.mxu0 %v7042
  %7681 = vmatpush1.bf16.msra.mxu0 %v7041
  %7682 = vmatprep.subr.bf16.mxu0 0
  %7683 = vmatpush2.bf16.msra.mxu0 0
  %7684 = vmatprep.subr.bf16.mxu0 0
  %7685 = vmatpush2.bf16.msra.mxu0 0
  %7686 = vmatprep.subr.bf16.mxu0 %v7482
  %7687 = vmatpush2.bf16.msra.mxu0 %v7479
  %7688 = vmatprep.subr.bf16.mxu0 %v7222
  %7689 = vmatpush2.bf16.msra.mxu0 %v7221
  %7690 = vmatprep.subr.bf16.mxu0 %v7207
  %7691 = vmatpush2.bf16.msra.mxu0 %v7206
  %7692 = vmatprep.subr.bf16.mxu0 %v7192
  %7693 = vmatpush2.bf16.msra.mxu0 %v7191
  %7694 = vmatprep.subr.bf16.mxu0 %v7177
  %7695 = vmatpush2.bf16.msra.mxu0 %v7176
  %7696 = vmatprep.subr.bf16.mxu0 %v7162
  %7697 = vmatpush2.bf16.msra.mxu0 %v7161
  %7698 = vmatprep.mubr.bf16.mxu0 %v7452
  %7699 = vmatmul.mubr.bf16.gmra.mxu0 %v6358
  %v7700 = vpop.f32.mrf.mxu0
  %v7701 = vadd.f32 0.0, %v7700
  %v7702 = vpop.f32.mrf.mxu0
  %v7703 = vadd.f32 0.0, %v7702
  %v7704 = vpop.f32.mrf.mxu0
  %v7705 = vpop.f32.mrf.mxu0
  %7706 = vdwg.mxu0
  %7707 = vmatprep.subr.bf16.mxu0 %v7149
  %7708 = vmatpush1.bf16.msra.mxu0 %v7148
  %7709 = vmatprep.subr.bf16.mxu0 %v7134
  %7710 = vmatpush1.bf16.msra.mxu0 %v7133
  %7711 = vmatprep.subr.bf16.mxu0 %v7119
  %7712 = vmatpush1.bf16.msra.mxu0 %v7118
  %7713 = vmatprep.subr.bf16.mxu0 %v7104
  %7714 = vmatpush1.bf16.msra.mxu0 %v7103
  %7715 = vmatprep.subr.bf16.mxu0 %v7089
  %7716 = vmatpush1.bf16.msra.mxu0 %v7088
  %7717 = vmatprep.subr.bf16.mxu0 %v7074
  %7718 = vmatpush1.bf16.msra.mxu0 %v7073
  %7719 = vmatprep.subr.bf16.mxu0 %v7059
  %7720 = vmatpush1.bf16.msra.mxu0 %v7058
  %7721 = vmatprep.subr.bf16.mxu0 %v7044
  %7722 = vmatpush1.bf16.msra.mxu0 %v7043
  %7723 = vmatprep.subr.bf16.mxu0 0
  %7724 = vmatpush2.bf16.msra.mxu0 0
  %7725 = vmatprep.subr.bf16.mxu0 0
  %7726 = vmatpush2.bf16.msra.mxu0 0
  %7727 = vmatprep.subr.bf16.mxu0 %v7488
  %7728 = vmatpush2.bf16.msra.mxu0 %v7485
  %7729 = vmatprep.subr.bf16.mxu0 %v7224
  %7730 = vmatpush2.bf16.msra.mxu0 %v7223
  %7731 = vmatprep.subr.bf16.mxu0 %v7209
  %7732 = vmatpush2.bf16.msra.mxu0 %v7208
  %7733 = vmatprep.subr.bf16.mxu0 %v7194
  %7734 = vmatpush2.bf16.msra.mxu0 %v7193
  %7735 = vmatprep.subr.bf16.mxu0 %v7179
  %7736 = vmatpush2.bf16.msra.mxu0 %v7178
  %7737 = vmatprep.subr.bf16.mxu0 %v7164
  %7738 = vmatpush2.bf16.msra.mxu0 %v7163
  %7739 = vmatprep.mubr.bf16.mxu0 %v7452
  %7740 = vmatmul.mubr.bf16.gmra.mxu0 %v6358
  %v7741 = vpop.f32.mrf.mxu0
  %v7742 = vadd.f32 0.0, %v7741
  %v7743 = vpop.f32.mrf.mxu0
  %v7744 = vadd.f32 0.0, %v7743
  %v7745 = vpop.f32.mrf.mxu0
  %v7746 = vpop.f32.mrf.mxu0
  %7747 = vdwg.mxu0
  %7748 = vmatprep.subr.bf16.mxu0 %v7151
  %7749 = vmatpush1.bf16.msra.mxu0 %v7150
  %7750 = vmatprep.subr.bf16.mxu0 %v7136
  %7751 = vmatpush1.bf16.msra.mxu0 %v7135
  %7752 = vmatprep.subr.bf16.mxu0 %v7121
  %7753 = vmatpush1.bf16.msra.mxu0 %v7120
  %7754 = vmatprep.subr.bf16.mxu0 %v7106
  %7755 = vmatpush1.bf16.msra.mxu0 %v7105
  %7756 = vmatprep.subr.bf16.mxu0 %v7091
  %7757 = vmatpush1.bf16.msra.mxu0 %v7090
  %7758 = vmatprep.subr.bf16.mxu0 %v7076
  %7759 = vmatpush1.bf16.msra.mxu0 %v7075
  %7760 = vmatprep.subr.bf16.mxu0 %v7061
  %7761 = vmatpush1.bf16.msra.mxu0 %v7060
  %7762 = vmatprep.subr.bf16.mxu0 %v7046
  %7763 = vmatpush1.bf16.msra.mxu0 %v7045
  %7764 = vmatprep.subr.bf16.mxu0 0
  %7765 = vmatpush2.bf16.msra.mxu0 0
  %7766 = vmatprep.subr.bf16.mxu0 0
  %7767 = vmatpush2.bf16.msra.mxu0 0
  %7768 = vmatprep.subr.bf16.mxu0 %v7494
  %7769 = vmatpush2.bf16.msra.mxu0 %v7491
  %7770 = vmatprep.subr.bf16.mxu0 %v7226
  %7771 = vmatpush2.bf16.msra.mxu0 %v7225
  %7772 = vmatprep.subr.bf16.mxu0 %v7211
  %7773 = vmatpush2.bf16.msra.mxu0 %v7210
  %7774 = vmatprep.subr.bf16.mxu0 %v7196
  %7775 = vmatpush2.bf16.msra.mxu0 %v7195
  %7776 = vmatprep.subr.bf16.mxu0 %v7181
  %7777 = vmatpush2.bf16.msra.mxu0 %v7180
  %7778 = vmatprep.subr.bf16.mxu0 %v7166
  %7779 = vmatpush2.bf16.msra.mxu0 %v7165
  %7780 = vmatprep.mubr.bf16.mxu0 %v7452
  %7781 = vmatmul.mubr.bf16.gmra.mxu0 %v6358
  %v7782 = vpop.f32.mrf.mxu0
  %v7783 = vadd.f32 0.0, %v7782
  %v7784 = vpop.f32.mrf.mxu0
  %v7785 = vadd.f32 0.0, %v7784
  %v7786 = vpop.f32.mrf.mxu0
  %v7787 = vpop.f32.mrf.mxu0
  %7788 = vdwg.mxu0
  %7789 = vmatprep.subr.bf16.mxu0 %v6840
  %7790 = vmatpush1.bf16.msra.mxu0 %v7152
  %7791 = vmatprep.subr.bf16.mxu0 %v6808
  %7792 = vmatpush1.bf16.msra.mxu0 %v7137
  %7793 = vmatprep.subr.bf16.mxu0 %v6776
  %7794 = vmatpush1.bf16.msra.mxu0 %v7122
  %7795 = vmatprep.subr.bf16.mxu0 %v6744
  %7796 = vmatpush1.bf16.msra.mxu0 %v7107
  %7797 = vmatprep.subr.bf16.mxu0 %v6712
  %7798 = vmatpush1.bf16.msra.mxu0 %v7092
  %7799 = vmatprep.subr.bf16.mxu0 %v6680
  %7800 = vmatpush1.bf16.msra.mxu0 %v7077
  %7801 = vmatprep.subr.bf16.mxu0 %v6648
  %7802 = vmatpush1.bf16.msra.mxu0 %v7062
  %7803 = vmatprep.subr.bf16.mxu0 %v6616
  %7804 = vmatpush1.bf16.msra.mxu0 %v7047
  %7805 = vmatprep.subr.bf16.mxu0 0
  %7806 = vmatpush2.bf16.msra.mxu0 0
  %7807 = vmatprep.subr.bf16.mxu0 0
  %7808 = vmatpush2.bf16.msra.mxu0 0
  %7809 = vmatprep.subr.bf16.mxu0 %v7500
  %7810 = vmatpush2.bf16.msra.mxu0 %v7497
  %7811 = vmatprep.subr.bf16.mxu0 %v7000
  %7812 = vmatpush2.bf16.msra.mxu0 %v7227
  %7813 = vmatprep.subr.bf16.mxu0 %v6968
  %7814 = vmatpush2.bf16.msra.mxu0 %v7212
  %7815 = vmatprep.subr.bf16.mxu0 %v6936
  %7816 = vmatpush2.bf16.msra.mxu0 %v7197
  %7817 = vmatprep.subr.bf16.mxu0 %v6904
  %7818 = vmatpush2.bf16.msra.mxu0 %v7182
  %7819 = vmatprep.subr.bf16.mxu0 %v6872
  %7820 = vmatpush2.bf16.msra.mxu0 %v7167
  %7821 = vmatprep.mubr.bf16.mxu0 %v7452
  %7822 = vmatmul.mubr.bf16.gmra.mxu0 %v6358
  %v7823 = vpop.f32.mrf.mxu0
  %v7824 = vadd.f32 0.0, %v7823
  %v7825 = vpop.f32.mrf.mxu0
  %v7826 = vadd.f32 0.0, %v7825
  %v7827 = vpop.f32.mrf.mxu0
  %v7828 = vpop.f32.mrf.mxu0
  %7829 = vdwg.mxu0
  %v7830 = vmul.f32 %v7537, %v3802
  %v7831 = vmul.f32 %v7539, %v3806
  %v7832 = vmul.f32 %v7578, %v3810
  %v7833 = vmul.f32 %v7580, %v3814
  %v7834 = vmul.f32 %v7619, %v3818
  %v7835 = vmul.f32 %v7621, %v3822
  %v7836 = vmul.f32 %v7660, %v3826
  %v7837 = vmul.f32 %v7662, %v3830
  %v7838 = vmul.f32 %v7701, %v3834
  %v7839 = vmul.f32 %v7703, %v3838
  %v7840 = vmul.f32 %v7742, %v3842
  %v7841 = vmul.f32 %v7744, %v3846
  %v7842 = vmul.f32 %v7783, %v3850
  %v7843 = vmul.f32 %v7785, %v3854
  %v7844 = vmul.f32 %v7824, %v3858
  %v7845 = vmul.f32 %v7826, %v3862
  %v7846 = vadd.f32 %v7830, %v7831
  %v7847 = vadd.f32 %v7846, %v7832
  %v7848 = vadd.f32 %v7847, %v7833
  %v7849 = vadd.f32 %v7848, %v7834
  %v7850 = vadd.f32 %v7849, %v7835
  %v7851 = vadd.f32 %v7850, %v7836
  %v7852 = vadd.f32 %v7851, %v7837
  %v7853 = vadd.f32 %v7852, %v7838
  %v7854 = vadd.f32 %v7853, %v7839
  %v7855 = vadd.f32 %v7854, %v7840
  %v7856 = vadd.f32 %v7855, %v7841
  %v7857 = vadd.f32 %v7856, %v7842
  %v7858 = vadd.f32 %v7857, %v7843
  %v7859 = vadd.f32 %v7858, %v7844
  %v7860 = vsel %vm3909, %v7845, 0.0
  %v7861 = vadd.f32 %v7859, %v7860
  %7862 = vadd.xlane.f32.xlu0 %v7861
  %v7863 = vpop.xlane.xlu0 %7862
  %v7864 = vmul.f32 %v7863, 0.0009765625
  %v7865 = vmul.f32 %v7830, %v7537
  %v7866 = vmul.f32 %v7831, %v7539
  %v7867 = vmul.f32 %v7832, %v7578
  %v7868 = vmul.f32 %v7833, %v7580
  %v7869 = vmul.f32 %v7834, %v7619
  %v7870 = vmul.f32 %v7835, %v7621
  %v7871 = vmul.f32 %v7836, %v7660
  %v7872 = vmul.f32 %v7837, %v7662
  %v7873 = vmul.f32 %v7838, %v7701
  %v7874 = vmul.f32 %v7839, %v7703
  %v7875 = vmul.f32 %v7840, %v7742
  %v7876 = vmul.f32 %v7841, %v7744
  %v7877 = vmul.f32 %v7842, %v7783
  %v7878 = vmul.f32 %v7843, %v7785
  %v7879 = vmul.f32 %v7844, %v7824
  %v7880 = vmul.f32 %v7845, %v7826
  %v7881 = vadd.f32 %v7865, %v7866
  %v7882 = vadd.f32 %v7881, %v7867
  %v7883 = vadd.f32 %v7882, %v7868
  %v7884 = vadd.f32 %v7883, %v7869
  %v7885 = vadd.f32 %v7884, %v7870
  %v7886 = vadd.f32 %v7885, %v7871
  %v7887 = vadd.f32 %v7886, %v7872
  %v7888 = vadd.f32 %v7887, %v7873
  %v7889 = vadd.f32 %v7888, %v7874
  %v7890 = vadd.f32 %v7889, %v7875
  %v7891 = vadd.f32 %v7890, %v7876
  %v7892 = vadd.f32 %v7891, %v7877
  %v7893 = vadd.f32 %v7892, %v7878
  %v7894 = vadd.f32 %v7893, %v7879
  %v7895 = vsel %vm3909, %v7880, 0.0
  %v7896 = vadd.f32 %v7894, %v7895
  %7897 = vadd.xlane.f32.xlu0 %v7896
  %v7898 = vpop.xlane.xlu0 %7897
  %v7899 = vmul.f32 %v7898, 0.0009765625
  %v7900 = vmul.f32 %v7864, %v7864
  %v7901 = vsub.f32 %v7899, %v7900
  %v7902 = vld [vmem:[%s3] sm:$0xff]
  %v7903 = vadd.f32 %v7901, 1e-05
  %v7904 = vrsqrt.pop %v7903
  %v7905 = vmul.f32 %v7902, %v7904
  %v7906 = vld [vmem:[%s4] sm:$0xff]
  %v7907 = vmul.f32 %v7864, %v7905
  %v7908 = vsub.f32 %v7906, %v7907
  %7910 = vset.pattern.permute.xlu0 0
  %7911 = vperm.xlu0 %7910, %v7905
  %v7912 = vpop.permute.xlu0 %7911
  %v7914 = vmul.f32 %v7537, %v7912
  %v7915 = vmul.f32 %v7539, %v7912
  %v7916 = vmul.f32 %v7578, %v7912
  %v7917 = vmul.f32 %v7580, %v7912
  %v7918 = vmul.f32 %v7619, %v7912
  %v7919 = vmul.f32 %v7621, %v7912
  %v7920 = vmul.f32 %v7660, %v7912
  %v7921 = vmul.f32 %v7662, %v7912
  %v7922 = vmul.f32 %v7701, %v7912
  %v7923 = vmul.f32 %v7703, %v7912
  %v7924 = vmul.f32 %v7742, %v7912
  %v7925 = vmul.f32 %v7744, %v7912
  %v7926 = vmul.f32 %v7783, %v7912
  %v7927 = vmul.f32 %v7785, %v7912
  %v7928 = vmul.f32 %v7824, %v7912
  %v7929 = vmul.f32 %v7826, %v7912
  %7931 = vset.pattern.permute.xlu0 0
  %7932 = vperm.xlu0 %7931, %v7908
  %v7933 = vpop.permute.xlu0 %7932
  %v7935 = vadd.f32 %v7914, %v7933
  %v7936 = vadd.f32 %v7915, %v7933
  %v7937 = vadd.f32 %v7916, %v7933
  %v7938 = vadd.f32 %v7917, %v7933
  %v7939 = vadd.f32 %v7918, %v7933
  %v7940 = vadd.f32 %v7919, %v7933
  %v7941 = vadd.f32 %v7920, %v7933
  %v7942 = vadd.f32 %v7921, %v7933
  %v7943 = vadd.f32 %v7922, %v7933
  %v7944 = vadd.f32 %v7923, %v7933
  %v7945 = vadd.f32 %v7924, %v7933
  %v7946 = vadd.f32 %v7925, %v7933
  %v7947 = vadd.f32 %v7926, %v7933
  %v7948 = vadd.f32 %v7927, %v7933
  %v7949 = vadd.f32 %v7928, %v7933
  %v7950 = vadd.f32 %v7929, %v7933
  %vm7951 = vcmp.ge.f32.partialorder %v7935, 0.0
  %vm7952 = vcmp.ge.f32.partialorder %v7936, 0.0
  %vm7953 = vcmp.ge.f32.partialorder %v7937, 0.0
  %vm7954 = vcmp.ge.f32.partialorder %v7938, 0.0
  %vm7955 = vcmp.ge.f32.partialorder %v7939, 0.0
  %vm7956 = vcmp.ge.f32.partialorder %v7940, 0.0
  %vm7957 = vcmp.ge.f32.partialorder %v7941, 0.0
  %vm7958 = vcmp.ge.f32.partialorder %v7942, 0.0
  %vm7959 = vcmp.ge.f32.partialorder %v7943, 0.0
  %vm7960 = vcmp.ge.f32.partialorder %v7944, 0.0
  %vm7961 = vcmp.ge.f32.partialorder %v7945, 0.0
  %vm7962 = vcmp.ge.f32.partialorder %v7946, 0.0
  %vm7963 = vcmp.ge.f32.partialorder %v7947, 0.0
  %vm7964 = vcmp.ge.f32.partialorder %v7948, 0.0
  %vm7965 = vcmp.ge.f32.partialorder %v7949, 0.0
  %vm7966 = vcmp.ge.f32.partialorder %v7950, 0.0
  %v7967 = vmul.f32 %v7935, 0.2
  %v7968 = vmul.f32 %v7936, 0.2
  %v7969 = vmul.f32 %v7937, 0.2
  %v7970 = vmul.f32 %v7938, 0.2
  %v7971 = vmul.f32 %v7939, 0.2
  %v7972 = vmul.f32 %v7940, 0.2
  %v7973 = vmul.f32 %v7941, 0.2
  %v7974 = vmul.f32 %v7942, 0.2
  %v7975 = vmul.f32 %v7943, 0.2
  %v7976 = vmul.f32 %v7944, 0.2
  %v7977 = vmul.f32 %v7945, 0.2
  %v7978 = vmul.f32 %v7946, 0.2
  %v7979 = vmul.f32 %v7947, 0.2
  %v7980 = vmul.f32 %v7948, 0.2
  %v7981 = vmul.f32 %v7949, 0.2
  %v7982 = vmul.f32 %v7950, 0.2
  %v7983 = vsel %vm7951, %v7935, %v7967
  %v7984 = vsel %vm7952, %v7936, %v7968
  %v7985 = vsel %vm7953, %v7937, %v7969
  %v7986 = vsel %vm7954, %v7938, %v7970
  %v7987 = vsel %vm7955, %v7939, %v7971
  %v7988 = vsel %vm7956, %v7940, %v7972
  %v7989 = vsel %vm7957, %v7941, %v7973
  %v7990 = vsel %vm7958, %v7942, %v7974
  %v7991 = vsel %vm7959, %v7943, %v7975
  %v7992 = vsel %vm7960, %v7944, %v7976
  %v7993 = vsel %vm7961, %v7945, %v7977
  %v7994 = vsel %vm7962, %v7946, %v7978
  %v7995 = vsel %vm7963, %v7947, %v7979
  %v7996 = vsel %vm7964, %v7948, %v7980
  %v7997 = vsel %vm7965, %v7949, %v7981
  %v7998 = vsel %vm7966, %v7950, %v7982
  %8015 = vrot.lane.b32.xlu0 %v7983, 127
  %v8016 = vpop.permute.xlu0 %8015
  %8017 = vrot.lane.b32.xlu0 %v7984, 127
  %v8018 = vpop.permute.xlu0 %8017
  %8019 = vrot.lane.b32.xlu0 %v7985, 127
  %v8020 = vpop.permute.xlu0 %8019
  %8021 = vrot.lane.b32.xlu0 %v7986, 127
  %v8022 = vpop.permute.xlu0 %8021
  %8023 = vrot.lane.b32.xlu0 %v7987, 127
  %v8024 = vpop.permute.xlu0 %8023
  %8025 = vrot.lane.b32.xlu0 %v7988, 127
  %v8026 = vpop.permute.xlu0 %8025
  %8027 = vrot.lane.b32.xlu0 %v7989, 127
  %v8028 = vpop.permute.xlu0 %8027
  %8029 = vrot.lane.b32.xlu0 %v7990, 127
  %v8030 = vpop.permute.xlu0 %8029
  %8031 = vrot.lane.b32.xlu0 %v7991, 127
  %v8032 = vpop.permute.xlu0 %8031
  %8033 = vrot.lane.b32.xlu0 %v7992, 127
  %v8034 = vpop.permute.xlu0 %8033
  %8035 = vrot.lane.b32.xlu0 %v7993, 127
  %v8036 = vpop.permute.xlu0 %8035
  %8037 = vrot.lane.b32.xlu0 %v7994, 127
  %v8038 = vpop.permute.xlu0 %8037
  %8039 = vrot.lane.b32.xlu0 %v7995, 127
  %v8040 = vpop.permute.xlu0 %8039
  %8041 = vrot.lane.b32.xlu0 %v7996, 127
  %v8042 = vpop.permute.xlu0 %8041
  %8043 = vrot.lane.b32.xlu0 %v7997, 127
  %v8044 = vpop.permute.xlu0 %8043
  %8045 = vrot.lane.b32.xlu0 %v7998, 127
  %v8046 = vpop.permute.xlu0 %8045
  %v8047 = vsel %vm92, %v8016, %v8018
  %v8048 = vsel %vm92, %v8018, %v8020
  %v8049 = vsel %vm92, %v8020, %v8022
  %v8050 = vsel %vm92, %v8022, %v8024
  %v8051 = vsel %vm92, %v8024, %v8026
  %v8052 = vsel %vm92, %v8026, %v8028
  %v8053 = vsel %vm92, %v8028, %v8030
  %v8054 = vsel %vm92, %v8030, %v8032
  %v8055 = vsel %vm92, %v8032, %v8034
  %v8056 = vsel %vm92, %v8034, %v8036
  %v8057 = vsel %vm92, %v8036, %v8038
  %v8058 = vsel %vm92, %v8038, %v8040
  %v8059 = vsel %vm92, %v8040, %v8042
  %v8060 = vsel %vm92, %v8042, %v8044
  %v8061 = vsel %vm92, %v8044, %v8046
  %v8078 = vmax.f32 %v7983, %v8047
  %v8079 = vmax.f32 %v7984, %v8048
  %v8080 = vmax.f32 %v7985, %v8049
  %v8081 = vmax.f32 %v7986, %v8050
  %v8082 = vmax.f32 %v7987, %v8051
  %v8083 = vmax.f32 %v7988, %v8052
  %v8084 = vmax.f32 %v7989, %v8053
  %v8085 = vmax.f32 %v7990, %v8054
  %v8086 = vmax.f32 %v7991, %v8055
  %v8087 = vmax.f32 %v7992, %v8056
  %v8088 = vmax.f32 %v7993, %v8057
  %v8089 = vmax.f32 %v7994, %v8058
  %v8090 = vmax.f32 %v7995, %v8059
  %v8091 = vmax.f32 %v7996, %v8060
  %v8092 = vmax.f32 %v7997, %v8061
  %v8093 = vmax.f32 %v7998, %v8046
  %8110 = vrot.lane.b32.xlu0 %v8078, 118
  %v8111 = vpop.permute.xlu0 %8110
  %8112 = vrot.lane.b32.xlu0 %v8079, 118
  %v8113 = vpop.permute.xlu0 %8112
  %8114 = vrot.lane.b32.xlu0 %v8080, 118
  %v8115 = vpop.permute.xlu0 %8114
  %8116 = vrot.lane.b32.xlu0 %v8081, 118
  %v8117 = vpop.permute.xlu0 %8116
  %8118 = vrot.lane.b32.xlu0 %v8082, 118
  %v8119 = vpop.permute.xlu0 %8118
  %8120 = vrot.lane.b32.xlu0 %v8083, 118
  %v8121 = vpop.permute.xlu0 %8120
  %8122 = vrot.lane.b32.xlu0 %v8084, 118
  %v8123 = vpop.permute.xlu0 %8122
  %8124 = vrot.lane.b32.xlu0 %v8085, 118
  %v8125 = vpop.permute.xlu0 %8124
  %8126 = vrot.lane.b32.xlu0 %v8086, 118
  %v8127 = vpop.permute.xlu0 %8126
  %8128 = vrot.lane.b32.xlu0 %v8087, 118
  %v8129 = vpop.permute.xlu0 %8128
  %8130 = vrot.lane.b32.xlu0 %v8088, 118
  %v8131 = vpop.permute.xlu0 %8130
  %8132 = vrot.lane.b32.xlu0 %v8089, 118
  %v8133 = vpop.permute.xlu0 %8132
  %8134 = vrot.lane.b32.xlu0 %v8090, 118
  %v8135 = vpop.permute.xlu0 %8134
  %8136 = vrot.lane.b32.xlu0 %v8091, 118
  %v8137 = vpop.permute.xlu0 %8136
  %8138 = vrot.lane.b32.xlu0 %v8092, 118
  %v8139 = vpop.permute.xlu0 %8138
  %8140 = vrot.lane.b32.xlu0 %v8093, 118
  %v8141 = vpop.permute.xlu0 %8140
  %v8142 = vsel %vm220, %v8111, %v8113
  %v8143 = vsel %vm220, %v8113, %v8115
  %v8144 = vsel %vm220, %v8115, %v8117
  %v8145 = vsel %vm220, %v8117, %v8119
  %v8146 = vsel %vm220, %v8119, %v8121
  %v8147 = vsel %vm220, %v8121, %v8123
  %v8148 = vsel %vm220, %v8123, %v8125
  %v8149 = vsel %vm220, %v8125, %v8127
  %v8150 = vsel %vm220, %v8127, %v8129
  %v8151 = vsel %vm220, %v8129, %v8131
  %v8152 = vsel %vm220, %v8131, %v8133
  %v8153 = vsel %vm220, %v8133, %v8135
  %v8154 = vsel %vm220, %v8135, %v8137
  %v8155 = vsel %vm220, %v8137, %v8139
  %v8156 = vsel %vm220, %v8139, %v8141
  %v8173 = vmax.f32 %v8078, %v8142
  %v8174 = vmax.f32 %v8079, %v8143
  %v8175 = vmax.f32 %v8080, %v8144
  %v8176 = vmax.f32 %v8081, %v8145
  %v8177 = vmax.f32 %v8082, %v8146
  %v8178 = vmax.f32 %v8083, %v8147
  %v8179 = vmax.f32 %v8084, %v8148
  %v8180 = vmax.f32 %v8085, %v8149
  %v8181 = vmax.f32 %v8086, %v8150
  %v8182 = vmax.f32 %v8087, %v8151
  %v8183 = vmax.f32 %v8088, %v8152
  %v8184 = vmax.f32 %v8089, %v8153
  %v8185 = vmax.f32 %v8090, %v8154
  %v8186 = vmax.f32 %v8091, %v8155
  %v8187 = vmax.f32 %v8092, %v8156
  %v8188 = vmax.f32 %v8093, %v8141
  %8205 = vrot.lane.b32.xlu0 %v8173, 28
  %v8206 = vpop.permute.xlu0 %8205
  %8207 = vrot.lane.b32.xlu0 %v8174, 28
  %v8208 = vpop.permute.xlu0 %8207
  %8209 = vrot.lane.b32.xlu0 %v8175, 28
  %v8210 = vpop.permute.xlu0 %8209
  %8211 = vrot.lane.b32.xlu0 %v8176, 28
  %v8212 = vpop.permute.xlu0 %8211
  %8213 = vrot.lane.b32.xlu0 %v8177, 28
  %v8214 = vpop.permute.xlu0 %8213
  %8215 = vrot.lane.b32.xlu0 %v8178, 28
  %v8216 = vpop.permute.xlu0 %8215
  %8217 = vrot.lane.b32.xlu0 %v8179, 28
  %v8218 = vpop.permute.xlu0 %8217
  %8219 = vrot.lane.b32.xlu0 %v8180, 28
  %v8220 = vpop.permute.xlu0 %8219
  %8221 = vrot.lane.b32.xlu0 %v8181, 28
  %v8222 = vpop.permute.xlu0 %8221
  %8223 = vrot.lane.b32.xlu0 %v8182, 28
  %v8224 = vpop.permute.xlu0 %8223
  %8225 = vrot.lane.b32.xlu0 %v8183, 28
  %v8226 = vpop.permute.xlu0 %8225
  %8227 = vrot.lane.b32.xlu0 %v8184, 28
  %v8228 = vpop.permute.xlu0 %8227
  %8229 = vrot.lane.b32.xlu0 %v8185, 28
  %v8230 = vpop.permute.xlu0 %8229
  %8231 = vrot.lane.b32.xlu0 %v8186, 28
  %v8232 = vpop.permute.xlu0 %8231
  %8233 = vrot.lane.b32.xlu0 %v8187, 28
  %v8234 = vpop.permute.xlu0 %8233
  %8235 = vrot.lane.b32.xlu0 %v8188, 28
  %v8236 = vpop.permute.xlu0 %8235
  %v8237 = vsel %vm607, %v8206, %v8208
  %v8238 = vsel %vm607, %v8208, %v8210
  %v8239 = vsel %vm607, %v8210, %v8212
  %v8240 = vsel %vm607, %v8212, %v8214
  %v8241 = vsel %vm607, %v8214, %v8216
  %v8242 = vsel %vm607, %v8216, %v8218
  %v8243 = vsel %vm607, %v8218, %v8220
  %v8244 = vsel %vm607, %v8220, %v8222
  %v8245 = vsel %vm607, %v8222, %v8224
  %v8246 = vsel %vm607, %v8224, %v8226
  %v8247 = vsel %vm607, %v8226, %v8228
  %v8248 = vsel %vm607, %v8228, %v8230
  %v8249 = vsel %vm607, %v8230, %v8232
  %v8250 = vsel %vm607, %v8232, %v8234
  %v8251 = vsel %vm607, %v8234, %v8236
  %v8267 = vmax.f32 %v8173, %v8237
  %v8268 = vmax.f32 %v8174, %v8238
  %v8269 = vmax.f32 %v8175, %v8239
  %v8270 = vmax.f32 %v8176, %v8240
  %v8271 = vmax.f32 %v8177, %v8241
  %v8272 = vmax.f32 %v8178, %v8242
  %v8273 = vmax.f32 %v8179, %v8243
  %v8274 = vmax.f32 %v8180, %v8244
  %v8275 = vmax.f32 %v8181, %v8245
  %v8276 = vmax.f32 %v8182, %v8246
  %v8277 = vmax.f32 %v8183, %v8247
  %v8278 = vmax.f32 %v8184, %v8248
  %v8279 = vmax.f32 %v8185, %v8249
  %v8280 = vmax.f32 %v8186, %v8250
  %v8281 = vmax.f32 %v8187, %v8251
  %8282 = vst [vmem:[%s6] sm:$0xff] %v8267
  %8283 = vst [vmem:[%s6 + $0x8] sm:$0xff] %v8268
  %8284 = vst [vmem:[%s6 + $0x10] sm:$0xff] %v8269
  %8285 = vst [vmem:[%s6 + $0x18] sm:$0xff] %v8270
  %8286 = vst [vmem:[%s6 + $0x20] sm:$0xff] %v8271
  %8287 = vst [vmem:[%s6 + $0x28] sm:$0xff] %v8272
  %8288 = vst [vmem:[%s6 + $0x30] sm:$0xff] %v8273
  %8289 = vst [vmem:[%s6 + $0x38] sm:$0xff] %v8274
  %8290 = vst [vmem:[%s6 + $0x40] sm:$0xff] %v8275
  %8291 = vst [vmem:[%s6 + $0x48] sm:$0xff] %v8276
  %8292 = vst [vmem:[%s6 + $0x50] sm:$0xff] %v8277
  %8293 = vst [vmem:[%s6 + $0x58] sm:$0xff] %v8278
  %8294 = vst [vmem:[%s6 + $0x60] sm:$0xff] %v8279
  %8295 = vst [vmem:[%s6 + $0x68] sm:$0xff] %v8280
  %vm8296 = vcmask 793600
  %8297 = vst.msk [vmem:[%s6 + $0x70] sm:$0xff] %vm8296, %v8281
  %vm8298 = vcmask 1048328
  %8299 = vst.msk [vmem:[%s6 + $0x70] sm:$0xff] %vm8298, 0.0
  %8300 = vst.msk [vmem:[%s6 + $0x78] sm:$0xff] %vm3909, 0.0
  // Predicated region
  $region26: #{contracting_block_3d.1} parent=0 // pred_check
    _
  $region27: #{contracting_block_3d.1} parent=0 // pred_check_branch
    %8302 = sbr.rel (0) target = $region29
  $region28: #{contracting_block_3d.1} parent=0 // pred_region
    _
  $region29: #{contracting_block_3d.1} parent=0 // pred_fallthru
    _
  // Predicated region
  $region30: #{contracting_block_3d.1} parent=0 // pred_check
    _
  $region31: #{contracting_block_3d.1} parent=0 // pred_check_branch
    %8304 = sbr.rel (0) target = $region33
  $region32: #{contracting_block_3d.1} parent=0 // pred_region
    _
  $region33: #{contracting_block_3d.1} parent=0 // pred_fallthru
    _

</llo_original>
